<compile_context>
chip_gen: v6e
topology: v6e:2x2x1
jax: 0.10.0
libtpu: 0.0.40
codegen_flags: <defaults>
</compile_context>

<pallas_src>
import functools

import jax
import jax.numpy as jnp
import numpy as np
from jax.experimental import pallas as pl
from jax.experimental.pallas import tpu as pltpu


# ----------------------------------------------------------------------------
# The single fused kernel
# ----------------------------------------------------------------------------
def fused_kernel(
    # data
    ta_ref, ca_ref, tgeo_ref, cgeo_ref,
    # 0/1 incidence matrices (edge row r = t*B + b)
    ra_ref, rb_ref, rat_ref, rbt_ref,
    # cnn_linear
    cw_ref, cb_ref,
    # edge_in_mlp
    eiw1_ref, eib1_ref, eiw2_ref, eib2_ref,
    # edge_mlp (W1 pre-split by input block: [edge | init | node_a | node_b])
    ew1e_ref, ew1i_ref, ew1a_ref, ew1b_ref, eb1_ref, ew2_ref, eb2_ref,
    # node_mlp (W1 pre-split: [messages | node])
    nw1m_ref, nw1n_ref, nb1_ref, nw2_ref, nb2_ref,
    # classifier
    clw1_ref, clb1_ref, clw2_ref, clb2_ref,
    # output
    out_ref,
    *, num_steps):
    f32 = jnp.float32

    def mm(a, b):
        return jnp.dot(a, b, preferred_element_type=f32)

    def relu(x):
        return jnp.maximum(x, 0.0)

    ra = ra_ref[...]      # (TB, T)
    rb = rb_ref[...]      # (TB, B)
    rat = rat_ref[...]    # (T, TB)
    rbt = rbt_ref[...]    # (B, TB)

    # ---- cosine distance (MXU) + flat extraction ----
    ta_app = ta_ref[...]  # (T, R)
    ca_app = ca_ref[...]  # (B, R)
    tn = ta_app * jax.lax.rsqrt(
        jnp.maximum(jnp.sum(ta_app * ta_app, axis=-1, keepdims=True), 1e-24))
    cn = ca_app * jax.lax.rsqrt(
        jnp.maximum(jnp.sum(ca_app * ca_app, axis=-1, keepdims=True), 1e-24))
    sim = jax.lax.dot_general(tn, cn, (((1,), (1,)), ((), ())),
                              preferred_element_type=f32)            # (T, B)
    # flat (TB, 1) gather of sim[t, b] at row r = t*B + b, done on the MXU/VPU
    dist_reid = 1.0 - jnp.sum(mm(ra, sim) * rb, axis=-1, keepdims=True)

    # ---- geometric pairwise features, directly in flat (TB, 1) layout ----
    tg = mm(ra, tgeo_ref[...])    # (TB, 5): [cx, cy, w, h, t] of the track side
    cg = mm(rb, cgeo_ref[...])    # (TB, 5): detection side
    inv_denom = 2.0 / (tg[:, 2:3] + cg[:, 2:3])
    dist_x = (tg[:, 0:1] - cg[:, 0:1]) * inv_denom
    dist_y = (tg[:, 1:2] - cg[:, 1:2]) * inv_denom
    dist_w = jnp.log(tg[:, 2:3] / cg[:, 2:3])
    dist_h = jnp.log(tg[:, 3:4] / cg[:, 3:4])
    dist_t = tg[:, 4:5] - cg[:, 4:5]

    # ---- edge_in_mlp, layer 1 fused with the features (rank-1 updates, K=6) ----
    w1 = eiw1_ref[...]            # (6, E)
    h = eib1_ref[...]             # (1, E) -> broadcasts to (TB, E)
    for k, feat in enumerate((dist_x, dist_y, dist_w, dist_h, dist_t, dist_reid)):
        h = h + feat * w1[k:k + 1, :]
    h = relu(h)
    edge0 = relu(mm(h, eiw2_ref[...]) + eib2_ref[...])                # (TB, E)

    # ---- node input embeddings ----
    cw = cw_ref[...]
    cb = cb_ref[...]
    ta_emb = relu(mm(ta_app, cw) + cb)                                # (T, N)
    ca_emb = relu(mm(ca_app, cw) + cb)                                # (B, N)

    # ---- load message-passing / classifier weights once ----
    ew1e = ew1e_ref[...]; ew1i = ew1i_ref[...]
    ew1a = ew1a_ref[...]; ew1b = ew1b_ref[...]
    eb1 = eb1_ref[...]; ew2 = ew2_ref[...]; eb2 = eb2_ref[...]
    nw1m = nw1m_ref[...]; nw1n = nw1n_ref[...]; nb1 = nb1_ref[...]
    nw2 = nw2_ref[...]; nb2 = nb2_ref[...]
    clw1 = clw1_ref[...]; clb1 = clb1_ref[...]
    clw2 = clw2_ref[...]; clb2 = clb2_ref[...]

    init_contrib = mm(edge0, ew1i) + eb1     # constant across steps -> hoisted
    edge = edge0

    for s in range(num_steps):
        # edge update: concat-matmul rewritten as a sum of block matmuls;
        # node->edge broadcast done as Ra/Rb matmuls (no repeat/tile/reshape).
        h1 = (mm(edge, ew1e) + init_contrib
              + mm(ra, mm(ta_emb, ew1a)) + mm(rb, mm(ca_emb, ew1b)))
        edge = relu(mm(relu(h1), ew2) + eb2)                          # (TB, E)

        # edge->node aggregation folded in (sum over boxes / tracks via Ra^T/Rb^T)
        mess_a = mm(rat, edge)                                        # (T, E)
        mess_b = mm(rbt, edge)                                        # (B, E)
        ta_emb = relu(mm(relu(mm(mess_a, nw1m) + mm(ta_emb, nw1n) + nb1), nw2) + nb2)
        ca_emb = relu(mm(relu(mm(mess_b, nw1m) + mm(ca_emb, nw1n) + nb1), nw2) + nb2)

        # per-step classifier; emit directly as a lane-dense (T, B) slab
        logits = mm(relu(mm(edge, clw1) + clb1), clw2) + clb2         # (TB, 1)
        out_ref[s, :, :] = mm(rat, logits * rb)                       # (T, B)


# ----------------------------------------------------------------------------
# Wrapper
# ----------------------------------------------------------------------------
def _full(shape):
    nd = len(shape)
    return pl.BlockSpec(shape, lambda i, _nd=nd: (0,) * _nd)


def assignment_similarity_forward(params, track_app, current_app,
                                  track_coords, current_coords,
                                  track_t, curr_t, num_steps):
    T = track_app.shape[0]
    B = current_app.shape[0]
    E = params["edge_in_mlp"][2].shape[0]     # edge_dim
    N = params["cnn_linear"][0].shape[1]      # node_dim

    # ---- one-time geometry prep (tiny, layout only) ----
    t_centers = track_coords.reshape(T, 2, 2).mean(axis=1)
    c_centers = current_coords.reshape(B, 2, 2).mean(axis=1)
    t_w = track_coords[:, 2] - track_coords[:, 0]
    t_h = track_coords[:, 3] - track_coords[:, 1]
    c_w = current_coords[:, 2] - current_coords[:, 0]
    c_h = current_coords[:, 3] - current_coords[:, 1]
    tgeo = jnp.stack([t_centers[:, 0], t_centers[:, 1], t_w, t_h,
                      track_t.astype(jnp.float32)], axis=1)           # (T, 5)
    cgeo = jnp.stack([c_centers[:, 0], c_centers[:, 1], c_w, c_h,
                      curr_t.astype(jnp.float32)], axis=1)            # (B, 5)

    # ---- 0/1 incidence matrices for broadcast / aggregation (flat r = t*B + b) ----
    ra_np = np.kron(np.eye(T, dtype=np.float32), np.ones((B, 1), np.float32))   # (TB, T)
    rb_np = np.kron(np.ones((T, 1), np.float32), np.eye(B, dtype=np.float32))   # (TB, B)
    ra = jnp.asarray(ra_np)
    rb = jnp.asarray(rb_np)
    rat = jnp.asarray(np.ascontiguousarray(ra_np.T))                  # (T, TB)
    rbt = jnp.asarray(np.ascontiguousarray(rb_np.T))                  # (B, TB)

    # ---- one-time param prep: split concat-MLP weights into input blocks ----
    cw, cb = params["cnn_linear"]
    eiw1, eib1, eiw2, eib2 = params["edge_in_mlp"]
    ew1, eb1, ew2, eb2 = params["edge_mlp"]
    nw1, nb1, nw2, nb2 = params["node_mlp"]
    clw1, clb1, clw2, clb2 = params["classifier"]
    ew1e = ew1[:E]
    ew1i = ew1[E:2 * E]
    ew1a = ew1[2 * E:2 * E + N]
    ew1b = ew1[2 * E + N:]
    nw1m = nw1[:E]
    nw1n = nw1[E:]

    args = (track_app, current_app, tgeo, cgeo,
            ra, rb, rat, rbt,
            cw, cb,
            eiw1, eib1, eiw2, eib2,
            ew1e, ew1i, ew1a, ew1b, eb1, ew2, eb2,
            nw1m, nw1n, nb1, nw2, nb2,
            clw1, clb1, clw2, clb2)

    kern = functools.partial(fused_kernel, num_steps=num_steps)
    out = pl.pallas_call(
        kern,
        grid=(1,),
        out_shape=jax.ShapeDtypeStruct((num_steps, T, B), jnp.float32),
        in_specs=[_full(a.shape) for a in args],
        out_specs=_full((num_steps, T, B)),
        compiler_params=pltpu.CompilerParams(
            dimension_semantics=("arbitrary",)),
    )(*args)
    return out


# ----------------------------------------------------------------------------
# Pure-JAX reference (mirrors the PyTorch semantics) for validation
# ----------------------------------------------------------------------------
def reference_forward(params, track_app, current_app, track_coords,
                      current_coords, track_t, curr_t, num_steps):
    def linrelu(x, p):
        w, b = p
        return jnp.maximum(x @ w + b, 0.0)

    def mlp2_ref(x, p, final_relu=True):
        w1, b1, w2, b2 = p
        h = jnp.maximum(x @ w1 + b1, 0.0)
        y = h @ w2 + b2
        return jnp.maximum(y, 0.0) if final_relu else y

    tn = track_app / jnp.maximum(
        jnp.linalg.norm(track_app, axis=1, keepdims=True), 1e-12)
    cn = current_app / jnp.maximum(
        jnp.linalg.norm(current_app, axis=1, keepdims=True), 1e-12)
    dist_reid = 1.0 - tn @ cn.T

    tc = track_coords.reshape(-1, 2, 2).mean(1)
    cc = current_coords.reshape(-1, 2, 2).mean(1)
    tw = track_coords[:, 2] - track_coords[:, 0]
    th = track_coords[:, 3] - track_coords[:, 1]
    cw = current_coords[:, 2] - current_coords[:, 0]
    ch = current_coords[:, 3] - current_coords[:, 1]
    denom = (tw[:, None] + cw[None, :]) / 2
    dist_x = (tc[:, 0][:, None] - cc[:, 0][None, :]) / denom
    dist_y = (tc[:, 1][:, None] - cc[:, 1][None, :]) / denom
    dist_w = jnp.log(tw[:, None] / cw[None, :])
    dist_h = jnp.log(th[:, None] / ch[None, :])
    dist_t = (track_t[:, None] - curr_t[None, :]).astype(jnp.float32)
    edge_feats = jnp.stack([dist_x, dist_y, dist_w, dist_h, dist_t, dist_reid], -1)

    T, B = dist_x.shape
    edge_embeds = mlp2_ref(edge_feats, params["edge_in_mlp"])
    init = edge_embeds
    ta = linrelu(track_app, params["cnn_linear"])
    ca = linrelu(current_app, params["cnn_linear"])

    outs = []
    for _ in range(num_steps):
        ee = jnp.concatenate([edge_embeds, init], -1)
        na = jnp.broadcast_to(ta[:, None, :], (T, B, ta.shape[-1]))
        nb = jnp.broadcast_to(ca[None, :, :], (T, B, ca.shape[-1]))
        edge_in = jnp.concatenate([ee, na, nb], -1)
        edge_embeds = mlp2_ref(edge_in, params["edge_mlp"])
        ma = edge_embeds.sum(1)
        mb = edge_embeds.sum(0)
        ta = mlp2_ref(jnp.concatenate([ma, ta], -1), params["node_mlp"])
        ca = mlp2_ref(jnp.concatenate([mb, ca], -1), params["node_mlp"])
        outs.append(mlp2_ref(edge_embeds, params["classifier"], final_relu=False)[..., 0])
    return jnp.stack(outs)


# ----------------------------------------------------------------------------
# Deterministic parameter init (synthetic; matches nn.Linear shapes)
# ----------------------------------------------------------------------------
def init_linear(key, fan_in, fan_out):
    kw, kb = jax.random.split(key)
    bound = float(1.0 / np.sqrt(fan_in))
    w = jax.random.uniform(kw, (fan_in, fan_out), jnp.float32, -bound, bound)
    b = jax.random.uniform(kb, (1, fan_out), jnp.float32, -bound, bound)
    return w, b


def init_params(key, reid_dim, node_dim, edge_dim, edges_in_dim):
    keys = jax.random.split(key, 9)
    cnn = init_linear(keys[0], reid_dim, node_dim)
    ei1 = init_linear(keys[1], edges_in_dim, edge_dim)
    ei2 = init_linear(keys[2], edge_dim, edge_dim)
    em1 = init_linear(keys[3], 2 * node_dim + 2 * edge_dim, edge_dim)
    em2 = init_linear(keys[4], edge_dim, edge_dim)
    nm1 = init_linear(keys[5], node_dim + edge_dim, node_dim)
    nm2 = init_linear(keys[6], node_dim, node_dim)
    c1 = init_linear(keys[7], edge_dim, edge_dim)
    c2 = init_linear(keys[8], edge_dim, 1)
    return {
        "cnn_linear": cnn,
        "edge_in_mlp": ei1 + ei2,
        "edge_mlp": em1 + em2,
        "node_mlp": nm1 + nm2,
        "classifier": c1 + c2,
    }


# ----------------------------------------------------------------------------
if __name__ == "__main__":
    T, B = 8, 8                                   # num_tracks, num_boxes
    reid_dim, node_dim, edge_dim, edges_in_dim = 32, 32, 16, 6
    num_steps = 3

    root = jax.random.PRNGKey(0)
    kp, k1, k2, k3, k4, k5 = jax.random.split(root, 6)

    params = init_params(kp, reid_dim, node_dim, edge_dim, edges_in_dim)

    track_app = jax.random.normal(k1, (T, reid_dim), jnp.float32)
    current_app = jax.random.normal(k2, (B, reid_dim), jnp.float32)

    def make_coords(key, n):
        ka, kb = jax.random.split(key)
        tl = jax.random.uniform(ka, (n, 2), jnp.float32, 0.0, 50.0)
        wh = jax.random.uniform(kb, (n, 2), jnp.float32, 5.0, 30.0)
        return jnp.concatenate([tl, tl + wh], axis=1)   # (n, 4): x1 y1 x2 y2 (w,h > 0)

    track_coords = make_coords(k3, T)
    current_coords = make_coords(k4, B)
    track_t = jax.random.randint(k5, (T,), 0, 5, jnp.int32)
    curr_t = jnp.full((B,), 6, jnp.int32)

    fwd = jax.jit(assignment_similarity_forward, static_argnames=("num_steps",))
    out = fwd(params, track_app, current_app, track_coords, current_coords,
              track_t, curr_t, num_steps=num_steps)
    out = jax.block_until_ready(out)

    with jax.default_matmul_precision("float32"):
        ref = reference_forward(params, track_app, current_app, track_coords,
                                current_coords, track_t, curr_t, num_steps)
    ref = jax.block_until_ready(ref)

    assert out.shape == (num_steps, T, B)
    np.testing.assert_allclose(np.asarray(out), np.asarray(ref), rtol=2e-3, atol=2e-3)
    print("KERNEL_OK")
</pallas_src>

<mosaic_0001>
module attributes {stable_mosaic.version = 11 : i64} {
  func.func @fused_kernel(%arg0: i32, %arg1: memref<8x32xf32, #tpu.memory_space<vmem>>, %arg2: memref<8x32xf32, #tpu.memory_space<vmem>>, %arg3: memref<8x5xf32, #tpu.memory_space<vmem>>, %arg4: memref<8x5xf32, #tpu.memory_space<vmem>>, %arg5: memref<64x8xf32, #tpu.memory_space<vmem>>, %arg6: memref<64x8xf32, #tpu.memory_space<vmem>>, %arg7: memref<8x64xf32, #tpu.memory_space<vmem>>, %arg8: memref<8x64xf32, #tpu.memory_space<vmem>>, %arg9: memref<32x32xf32, #tpu.memory_space<vmem>>, %arg10: memref<1x32xf32, #tpu.memory_space<vmem>>, %arg11: memref<6x16xf32, #tpu.memory_space<vmem>>, %arg12: memref<1x16xf32, #tpu.memory_space<vmem>>, %arg13: memref<16x16xf32, #tpu.memory_space<vmem>>, %arg14: memref<1x16xf32, #tpu.memory_space<vmem>>, %arg15: memref<16x16xf32, #tpu.memory_space<vmem>>, %arg16: memref<16x16xf32, #tpu.memory_space<vmem>>, %arg17: memref<32x16xf32, #tpu.memory_space<vmem>>, %arg18: memref<32x16xf32, #tpu.memory_space<vmem>>, %arg19: memref<1x16xf32, #tpu.memory_space<vmem>>, %arg20: memref<16x16xf32, #tpu.memory_space<vmem>>, %arg21: memref<1x16xf32, #tpu.memory_space<vmem>>, %arg22: memref<16x32xf32, #tpu.memory_space<vmem>>, %arg23: memref<32x32xf32, #tpu.memory_space<vmem>>, %arg24: memref<1x32xf32, #tpu.memory_space<vmem>>, %arg25: memref<32x32xf32, #tpu.memory_space<vmem>>, %arg26: memref<1x32xf32, #tpu.memory_space<vmem>>, %arg27: memref<16x16xf32, #tpu.memory_space<vmem>>, %arg28: memref<1x16xf32, #tpu.memory_space<vmem>>, %arg29: memref<16x1xf32, #tpu.memory_space<vmem>>, %arg30: memref<1x1xf32, #tpu.memory_space<vmem>>, %arg31: memref<3x8x8xf32, #tpu.memory_space<vmem>>) attributes {dimension_semantics = [#tpu.dimension_semantics<arbitrary>], iteration_bounds = array<i64: 1>, scalar_prefetch = 0 : i64, scratch_operands = 0 : i64, tpu.core_type = #tpu.core_type<tc>, window_params = [{pipeline_mode = #tpu.pipeline_mode<synchronous>, transform_indices = @transform_0, window_bounds = array<i64: 8, 32>}, {pipeline_mode = #tpu.pipeline_mode<synchronous>, transform_indices = @transform_1, window_bounds = array<i64: 8, 32>}, {pipeline_mode = #tpu.pipeline_mode<synchronous>, transform_indices = @transform_2, window_bounds = array<i64: 8, 5>}, {pipeline_mode = #tpu.pipeline_mode<synchronous>, transform_indices = @transform_3, window_bounds = array<i64: 8, 5>}, {pipeline_mode = #tpu.pipeline_mode<synchronous>, transform_indices = @transform_4, window_bounds = array<i64: 64, 8>}, {pipeline_mode = #tpu.pipeline_mode<synchronous>, transform_indices = @transform_5, window_bounds = array<i64: 64, 8>}, {pipeline_mode = #tpu.pipeline_mode<synchronous>, transform_indices = @transform_6, window_bounds = array<i64: 8, 64>}, {pipeline_mode = #tpu.pipeline_mode<synchronous>, transform_indices = @transform_7, window_bounds = array<i64: 8, 64>}, {pipeline_mode = #tpu.pipeline_mode<synchronous>, transform_indices = @transform_8, window_bounds = array<i64: 32, 32>}, {pipeline_mode = #tpu.pipeline_mode<synchronous>, transform_indices = @transform_9, window_bounds = array<i64: 1, 32>}, {pipeline_mode = #tpu.pipeline_mode<synchronous>, transform_indices = @transform_10, window_bounds = array<i64: 6, 16>}, {pipeline_mode = #tpu.pipeline_mode<synchronous>, transform_indices = @transform_11, window_bounds = array<i64: 1, 16>}, {pipeline_mode = #tpu.pipeline_mode<synchronous>, transform_indices = @transform_12, window_bounds = array<i64: 16, 16>}, {pipeline_mode = #tpu.pipeline_mode<synchronous>, transform_indices = @transform_13, window_bounds = array<i64: 1, 16>}, {pipeline_mode = #tpu.pipeline_mode<synchronous>, transform_indices = @transform_14, window_bounds = array<i64: 16, 16>}, {pipeline_mode = #tpu.pipeline_mode<synchronous>, transform_indices = @transform_15, window_bounds = array<i64: 16, 16>}, {pipeline_mode = #tpu.pipeline_mode<synchronous>, transform_indices = @transform_16, window_bounds = array<i64: 32, 16>}, {pipeline_mode = #tpu.pipeline_mode<synchronous>, transform_indices = @transform_17, window_bounds = array<i64: 32, 16>}, {pipeline_mode = #tpu.pipeline_mode<synchronous>, transform_indices = @transform_18, window_bounds = array<i64: 1, 16>}, {pipeline_mode = #tpu.pipeline_mode<synchronous>, transform_indices = @transform_19, window_bounds = array<i64: 16, 16>}, {pipeline_mode = #tpu.pipeline_mode<synchronous>, transform_indices = @transform_20, window_bounds = array<i64: 1, 16>}, {pipeline_mode = #tpu.pipeline_mode<synchronous>, transform_indices = @transform_21, window_bounds = array<i64: 16, 32>}, {pipeline_mode = #tpu.pipeline_mode<synchronous>, transform_indices = @transform_22, window_bounds = array<i64: 32, 32>}, {pipeline_mode = #tpu.pipeline_mode<synchronous>, transform_indices = @transform_23, window_bounds = array<i64: 1, 32>}, {pipeline_mode = #tpu.pipeline_mode<synchronous>, transform_indices = @transform_24, window_bounds = array<i64: 32, 32>}, {pipeline_mode = #tpu.pipeline_mode<synchronous>, transform_indices = @transform_25, window_bounds = array<i64: 1, 32>}, {pipeline_mode = #tpu.pipeline_mode<synchronous>, transform_indices = @transform_26, window_bounds = array<i64: 16, 16>}, {pipeline_mode = #tpu.pipeline_mode<synchronous>, transform_indices = @transform_27, window_bounds = array<i64: 1, 16>}, {pipeline_mode = #tpu.pipeline_mode<synchronous>, transform_indices = @transform_28, window_bounds = array<i64: 16, 1>}, {pipeline_mode = #tpu.pipeline_mode<synchronous>, transform_indices = @transform_29, window_bounds = array<i64: 1, 1>}, {pipeline_mode = #tpu.pipeline_mode<synchronous>, transform_indices = @transform_30, window_bounds = array<i64: 3, 8, 8>}]} {
    %c0 = arith.constant 0 : index
    %c0_0 = arith.constant 0 : index
    %0 = vector.load %arg5[%c0, %c0_0] : memref<64x8xf32, #tpu.memory_space<vmem>>, vector<64x8xf32>
    %c0_1 = arith.constant 0 : index
    %c0_2 = arith.constant 0 : index
    %1 = vector.load %arg6[%c0_1, %c0_2] : memref<64x8xf32, #tpu.memory_space<vmem>>, vector<64x8xf32>
    %c0_3 = arith.constant 0 : index
    %c0_4 = arith.constant 0 : index
    %2 = vector.load %arg7[%c0_3, %c0_4] : memref<8x64xf32, #tpu.memory_space<vmem>>, vector<8x64xf32>
    %c0_5 = arith.constant 0 : index
    %c0_6 = arith.constant 0 : index
    %3 = vector.load %arg8[%c0_5, %c0_6] : memref<8x64xf32, #tpu.memory_space<vmem>>, vector<8x64xf32>
    %c0_7 = arith.constant 0 : index
    %c0_8 = arith.constant 0 : index
    %4 = vector.load %arg1[%c0_7, %c0_8] : memref<8x32xf32, #tpu.memory_space<vmem>>, vector<8x32xf32>
    %c0_9 = arith.constant 0 : index
    %c0_10 = arith.constant 0 : index
    %5 = vector.load %arg2[%c0_9, %c0_10] : memref<8x32xf32, #tpu.memory_space<vmem>>, vector<8x32xf32>
    %6 = arith.mulf %4, %4 : vector<8x32xf32>
    %cst = arith.constant dense<0.000000e+00> : vector<8xf32>
    %7 = vector.multi_reduction <add>, %6, %cst [1] : vector<8x32xf32> to vector<8xf32>
    %8 = vector.shape_cast %7 : vector<8xf32> to vector<8x1xf32>
    %cst_11 = arith.constant 1.000000e-24 : f32
    %9 = vector.broadcast %cst_11 : f32 to vector<8x1xf32>
    %10 = arith.maximumf %8, %9 : vector<8x1xf32>
    %11 = math.rsqrt %10 : vector<8x1xf32>
    %12 = vector.broadcast %11 : vector<8x1xf32> to vector<8x32xf32>
    %13 = arith.mulf %4, %12 : vector<8x32xf32>
    %14 = arith.mulf %5, %5 : vector<8x32xf32>
    %cst_12 = arith.constant dense<0.000000e+00> : vector<8xf32>
    %15 = vector.multi_reduction <add>, %14, %cst_12 [1] : vector<8x32xf32> to vector<8xf32>
    %16 = vector.shape_cast %15 : vector<8xf32> to vector<8x1xf32>
    %cst_13 = arith.constant 1.000000e-24 : f32
    %17 = vector.broadcast %cst_13 : f32 to vector<8x1xf32>
    %18 = arith.maximumf %16, %17 : vector<8x1xf32>
    %19 = math.rsqrt %18 : vector<8x1xf32>
    %20 = vector.broadcast %19 : vector<8x1xf32> to vector<8x32xf32>
    %21 = arith.mulf %5, %20 : vector<8x32xf32>
    %cst_14 = arith.constant dense<0.000000e+00> : vector<8x8xf32>
    %22 = tpu.matmul %13, %21, %cst_14 {dimension_numbers = #tpu.dot_dimension_numbers<[1], [1], [0], [0], [0, 0, 1, 0], [], []>} : vector<8x32xf32>, vector<8x32xf32>, vector<8x8xf32> -> vector<8x8xf32>
    %cst_15 = arith.constant dense<0.000000e+00> : vector<64x8xf32>
    %23 = tpu.matmul %0, %22, %cst_15 {dimension_numbers = #tpu.dot_dimension_numbers<[1], [0], [0], [1], [0, 0, 1, 1], [], []>} : vector<64x8xf32>, vector<8x8xf32>, vector<64x8xf32> -> vector<64x8xf32>
    %24 = arith.mulf %23, %1 : vector<64x8xf32>
    %cst_16 = arith.constant dense<0.000000e+00> : vector<64xf32>
    %25 = vector.multi_reduction <add>, %24, %cst_16 [1] : vector<64x8xf32> to vector<64xf32>
    %26 = vector.shape_cast %25 : vector<64xf32> to vector<64x1xf32>
    %cst_17 = arith.constant 1.000000e+00 : f32
    %27 = vector.broadcast %cst_17 : f32 to vector<64x1xf32>
    %28 = arith.subf %27, %26 : vector<64x1xf32>
    %c0_18 = arith.constant 0 : index
    %c0_19 = arith.constant 0 : index
    %29 = vector.load %arg3[%c0_18, %c0_19] : memref<8x5xf32, #tpu.memory_space<vmem>>, vector<8x5xf32>
    %cst_20 = arith.constant dense<0.000000e+00> : vector<64x5xf32>
    %30 = tpu.matmul %0, %29, %cst_20 {dimension_numbers = #tpu.dot_dimension_numbers<[1], [0], [0], [1], [0, 0, 1, 1], [], []>} : vector<64x8xf32>, vector<8x5xf32>, vector<64x5xf32> -> vector<64x5xf32>
    %c0_21 = arith.constant 0 : index
    %c0_22 = arith.constant 0 : index
    %31 = vector.load %arg4[%c0_21, %c0_22] : memref<8x5xf32, #tpu.memory_space<vmem>>, vector<8x5xf32>
    %cst_23 = arith.constant dense<0.000000e+00> : vector<64x5xf32>
    %32 = tpu.matmul %1, %31, %cst_23 {dimension_numbers = #tpu.dot_dimension_numbers<[1], [0], [0], [1], [0, 0, 1, 1], [], []>} : vector<64x8xf32>, vector<8x5xf32>, vector<64x5xf32> -> vector<64x5xf32>
    %33 = vector.extract_strided_slice %30 {offsets = [0, 2], sizes = [64, 1], strides = [1, 1]} : vector<64x5xf32> to vector<64x1xf32>
    %34 = vector.extract_strided_slice %32 {offsets = [0, 2], sizes = [64, 1], strides = [1, 1]} : vector<64x5xf32> to vector<64x1xf32>
    %35 = arith.addf %33, %34 : vector<64x1xf32>
    %cst_24 = arith.constant 2.000000e+00 : f32
    %36 = vector.broadcast %cst_24 : f32 to vector<64x1xf32>
    %37 = arith.divf %36, %35 : vector<64x1xf32>
    %38 = vector.extract_strided_slice %30 {offsets = [0, 0], sizes = [64, 1], strides = [1, 1]} : vector<64x5xf32> to vector<64x1xf32>
    %39 = vector.extract_strided_slice %32 {offsets = [0, 0], sizes = [64, 1], strides = [1, 1]} : vector<64x5xf32> to vector<64x1xf32>
    %40 = arith.subf %38, %39 : vector<64x1xf32>
    %41 = arith.mulf %40, %37 : vector<64x1xf32>
    %42 = vector.extract_strided_slice %30 {offsets = [0, 1], sizes = [64, 1], strides = [1, 1]} : vector<64x5xf32> to vector<64x1xf32>
    %43 = vector.extract_strided_slice %32 {offsets = [0, 1], sizes = [64, 1], strides = [1, 1]} : vector<64x5xf32> to vector<64x1xf32>
    %44 = arith.subf %42, %43 : vector<64x1xf32>
    %45 = arith.mulf %44, %37 : vector<64x1xf32>
    %46 = vector.extract_strided_slice %30 {offsets = [0, 2], sizes = [64, 1], strides = [1, 1]} : vector<64x5xf32> to vector<64x1xf32>
    %47 = vector.extract_strided_slice %32 {offsets = [0, 2], sizes = [64, 1], strides = [1, 1]} : vector<64x5xf32> to vector<64x1xf32>
    %48 = arith.divf %46, %47 : vector<64x1xf32>
    %49 = math.log %48 : vector<64x1xf32>
    %50 = vector.extract_strided_slice %30 {offsets = [0, 3], sizes = [64, 1], strides = [1, 1]} : vector<64x5xf32> to vector<64x1xf32>
    %51 = vector.extract_strided_slice %32 {offsets = [0, 3], sizes = [64, 1], strides = [1, 1]} : vector<64x5xf32> to vector<64x1xf32>
    %52 = arith.divf %50, %51 : vector<64x1xf32>
    %53 = math.log %52 : vector<64x1xf32>
    %54 = vector.extract_strided_slice %30 {offsets = [0, 4], sizes = [64, 1], strides = [1, 1]} : vector<64x5xf32> to vector<64x1xf32>
    %55 = vector.extract_strided_slice %32 {offsets = [0, 4], sizes = [64, 1], strides = [1, 1]} : vector<64x5xf32> to vector<64x1xf32>
    %56 = arith.subf %54, %55 : vector<64x1xf32>
    %c0_25 = arith.constant 0 : index
    %c0_26 = arith.constant 0 : index
    %57 = vector.load %arg11[%c0_25, %c0_26] : memref<6x16xf32, #tpu.memory_space<vmem>>, vector<6x16xf32>
    %c0_27 = arith.constant 0 : index
    %c0_28 = arith.constant 0 : index
    %58 = vector.load %arg12[%c0_27, %c0_28] : memref<1x16xf32, #tpu.memory_space<vmem>>, vector<1x16xf32>
    %59 = vector.extract_strided_slice %57 {offsets = [0, 0], sizes = [1, 16], strides = [1, 1]} : vector<6x16xf32> to vector<1x16xf32>
    %60 = vector.broadcast %41 : vector<64x1xf32> to vector<64x16xf32>
    %61 = vector.broadcast %59 : vector<1x16xf32> to vector<64x16xf32>
    %62 = arith.mulf %60, %61 : vector<64x16xf32>
    %63 = vector.broadcast %58 : vector<1x16xf32> to vector<64x16xf32>
    %64 = arith.addf %63, %62 : vector<64x16xf32>
    %65 = vector.extract_strided_slice %57 {offsets = [1, 0], sizes = [1, 16], strides = [1, 1]} : vector<6x16xf32> to vector<1x16xf32>
    %66 = vector.broadcast %45 : vector<64x1xf32> to vector<64x16xf32>
    %67 = vector.broadcast %65 : vector<1x16xf32> to vector<64x16xf32>
    %68 = arith.mulf %66, %67 : vector<64x16xf32>
    %69 = arith.addf %64, %68 : vector<64x16xf32>
    %70 = vector.extract_strided_slice %57 {offsets = [2, 0], sizes = [1, 16], strides = [1, 1]} : vector<6x16xf32> to vector<1x16xf32>
    %71 = vector.broadcast %49 : vector<64x1xf32> to vector<64x16xf32>
    %72 = vector.broadcast %70 : vector<1x16xf32> to vector<64x16xf32>
    %73 = arith.mulf %71, %72 : vector<64x16xf32>
    %74 = arith.addf %69, %73 : vector<64x16xf32>
    %75 = vector.extract_strided_slice %57 {offsets = [3, 0], sizes = [1, 16], strides = [1, 1]} : vector<6x16xf32> to vector<1x16xf32>
    %76 = vector.broadcast %53 : vector<64x1xf32> to vector<64x16xf32>
    %77 = vector.broadcast %75 : vector<1x16xf32> to vector<64x16xf32>
    %78 = arith.mulf %76, %77 : vector<64x16xf32>
    %79 = arith.addf %74, %78 : vector<64x16xf32>
    %80 = vector.extract_strided_slice %57 {offsets = [4, 0], sizes = [1, 16], strides = [1, 1]} : vector<6x16xf32> to vector<1x16xf32>
    %81 = vector.broadcast %56 : vector<64x1xf32> to vector<64x16xf32>
    %82 = vector.broadcast %80 : vector<1x16xf32> to vector<64x16xf32>
    %83 = arith.mulf %81, %82 : vector<64x16xf32>
    %84 = arith.addf %79, %83 : vector<64x16xf32>
    %85 = vector.extract_strided_slice %57 {offsets = [5, 0], sizes = [1, 16], strides = [1, 1]} : vector<6x16xf32> to vector<1x16xf32>
    %86 = vector.broadcast %28 : vector<64x1xf32> to vector<64x16xf32>
    %87 = vector.broadcast %85 : vector<1x16xf32> to vector<64x16xf32>
    %88 = arith.mulf %86, %87 : vector<64x16xf32>
    %89 = arith.addf %84, %88 : vector<64x16xf32>
    %cst_29 = arith.constant 0.000000e+00 : f32
    %90 = vector.broadcast %cst_29 : f32 to vector<64x16xf32>
    %91 = arith.maximumf %89, %90 : vector<64x16xf32>
    %c0_30 = arith.constant 0 : index
    %c0_31 = arith.constant 0 : index
    %92 = vector.load %arg13[%c0_30, %c0_31] : memref<16x16xf32, #tpu.memory_space<vmem>>, vector<16x16xf32>
    %cst_32 = arith.constant dense<0.000000e+00> : vector<64x16xf32>
    %93 = tpu.matmul %91, %92, %cst_32 {dimension_numbers = #tpu.dot_dimension_numbers<[1], [0], [0], [1], [0, 0, 1, 1], [], []>} : vector<64x16xf32>, vector<16x16xf32>, vector<64x16xf32> -> vector<64x16xf32>
    %c0_33 = arith.constant 0 : index
    %c0_34 = arith.constant 0 : index
    %94 = vector.load %arg14[%c0_33, %c0_34] : memref<1x16xf32, #tpu.memory_space<vmem>>, vector<1x16xf32>
    %95 = vector.broadcast %94 : vector<1x16xf32> to vector<64x16xf32>
    %96 = arith.addf %93, %95 : vector<64x16xf32>
    %cst_35 = arith.constant 0.000000e+00 : f32
    %97 = vector.broadcast %cst_35 : f32 to vector<64x16xf32>
    %98 = arith.maximumf %96, %97 : vector<64x16xf32>
    %c0_36 = arith.constant 0 : index
    %c0_37 = arith.constant 0 : index
    %99 = vector.load %arg9[%c0_36, %c0_37] : memref<32x32xf32, #tpu.memory_space<vmem>>, vector<32x32xf32>
    %c0_38 = arith.constant 0 : index
    %c0_39 = arith.constant 0 : index
    %100 = vector.load %arg10[%c0_38, %c0_39] : memref<1x32xf32, #tpu.memory_space<vmem>>, vector<1x32xf32>
    %cst_40 = arith.constant dense<0.000000e+00> : vector<8x32xf32>
    %101 = tpu.matmul %4, %99, %cst_40 {dimension_numbers = #tpu.dot_dimension_numbers<[1], [0], [0], [1], [0, 0, 1, 1], [], []>} : vector<8x32xf32>, vector<32x32xf32>, vector<8x32xf32> -> vector<8x32xf32>
    %102 = vector.broadcast %100 : vector<1x32xf32> to vector<8x32xf32>
    %103 = arith.addf %101, %102 : vector<8x32xf32>
    %cst_41 = arith.constant 0.000000e+00 : f32
    %104 = vector.broadcast %cst_41 : f32 to vector<8x32xf32>
    %105 = arith.maximumf %103, %104 : vector<8x32xf32>
    %cst_42 = arith.constant dense<0.000000e+00> : vector<8x32xf32>
    %106 = tpu.matmul %5, %99, %cst_42 {dimension_numbers = #tpu.dot_dimension_numbers<[1], [0], [0], [1], [0, 0, 1, 1], [], []>} : vector<8x32xf32>, vector<32x32xf32>, vector<8x32xf32> -> vector<8x32xf32>
    %107 = vector.broadcast %100 : vector<1x32xf32> to vector<8x32xf32>
    %108 = arith.addf %106, %107 : vector<8x32xf32>
    %cst_43 = arith.constant 0.000000e+00 : f32
    %109 = vector.broadcast %cst_43 : f32 to vector<8x32xf32>
    %110 = arith.maximumf %108, %109 : vector<8x32xf32>
    %c0_44 = arith.constant 0 : index
    %c0_45 = arith.constant 0 : index
    %111 = vector.load %arg15[%c0_44, %c0_45] : memref<16x16xf32, #tpu.memory_space<vmem>>, vector<16x16xf32>
    %c0_46 = arith.constant 0 : index
    %c0_47 = arith.constant 0 : index
    %112 = vector.load %arg16[%c0_46, %c0_47] : memref<16x16xf32, #tpu.memory_space<vmem>>, vector<16x16xf32>
    %c0_48 = arith.constant 0 : index
    %c0_49 = arith.constant 0 : index
    %113 = vector.load %arg17[%c0_48, %c0_49] : memref<32x16xf32, #tpu.memory_space<vmem>>, vector<32x16xf32>
    %c0_50 = arith.constant 0 : index
    %c0_51 = arith.constant 0 : index
    %114 = vector.load %arg18[%c0_50, %c0_51] : memref<32x16xf32, #tpu.memory_space<vmem>>, vector<32x16xf32>
    %c0_52 = arith.constant 0 : index
    %c0_53 = arith.constant 0 : index
    %115 = vector.load %arg19[%c0_52, %c0_53] : memref<1x16xf32, #tpu.memory_space<vmem>>, vector<1x16xf32>
    %c0_54 = arith.constant 0 : index
    %c0_55 = arith.constant 0 : index
    %116 = vector.load %arg20[%c0_54, %c0_55] : memref<16x16xf32, #tpu.memory_space<vmem>>, vector<16x16xf32>
    %c0_56 = arith.constant 0 : index
    %c0_57 = arith.constant 0 : index
    %117 = vector.load %arg21[%c0_56, %c0_57] : memref<1x16xf32, #tpu.memory_space<vmem>>, vector<1x16xf32>
    %c0_58 = arith.constant 0 : index
    %c0_59 = arith.constant 0 : index
    %118 = vector.load %arg22[%c0_58, %c0_59] : memref<16x32xf32, #tpu.memory_space<vmem>>, vector<16x32xf32>
    %c0_60 = arith.constant 0 : index
    %c0_61 = arith.constant 0 : index
    %119 = vector.load %arg23[%c0_60, %c0_61] : memref<32x32xf32, #tpu.memory_space<vmem>>, vector<32x32xf32>
    %c0_62 = arith.constant 0 : index
    %c0_63 = arith.constant 0 : index
    %120 = vector.load %arg24[%c0_62, %c0_63] : memref<1x32xf32, #tpu.memory_space<vmem>>, vector<1x32xf32>
    %c0_64 = arith.constant 0 : index
    %c0_65 = arith.constant 0 : index
    %121 = vector.load %arg25[%c0_64, %c0_65] : memref<32x32xf32, #tpu.memory_space<vmem>>, vector<32x32xf32>
    %c0_66 = arith.constant 0 : index
    %c0_67 = arith.constant 0 : index
    %122 = vector.load %arg26[%c0_66, %c0_67] : memref<1x32xf32, #tpu.memory_space<vmem>>, vector<1x32xf32>
    %c0_68 = arith.constant 0 : index
    %c0_69 = arith.constant 0 : index
    %123 = vector.load %arg27[%c0_68, %c0_69] : memref<16x16xf32, #tpu.memory_space<vmem>>, vector<16x16xf32>
    %c0_70 = arith.constant 0 : index
    %c0_71 = arith.constant 0 : index
    %124 = vector.load %arg28[%c0_70, %c0_71] : memref<1x16xf32, #tpu.memory_space<vmem>>, vector<1x16xf32>
    %c0_72 = arith.constant 0 : index
    %c0_73 = arith.constant 0 : index
    %125 = vector.load %arg29[%c0_72, %c0_73] : memref<16x1xf32, #tpu.memory_space<vmem>>, vector<16x1xf32>
    %c0_74 = arith.constant 0 : index
    %c0_75 = arith.constant 0 : index
    %126 = vector.load %arg30[%c0_74, %c0_75] : memref<1x1xf32, #tpu.memory_space<vmem>>, vector<1x1xf32>
    %cst_76 = arith.constant dense<0.000000e+00> : vector<64x16xf32>
    %127 = tpu.matmul %98, %112, %cst_76 {dimension_numbers = #tpu.dot_dimension_numbers<[1], [0], [0], [1], [0, 0, 1, 1], [], []>} : vector<64x16xf32>, vector<16x16xf32>, vector<64x16xf32> -> vector<64x16xf32>
    %128 = vector.broadcast %115 : vector<1x16xf32> to vector<64x16xf32>
    %129 = arith.addf %127, %128 : vector<64x16xf32>
    %cst_77 = arith.constant dense<0.000000e+00> : vector<64x16xf32>
    %130 = tpu.matmul %98, %111, %cst_77 {dimension_numbers = #tpu.dot_dimension_numbers<[1], [0], [0], [1], [0, 0, 1, 1], [], []>} : vector<64x16xf32>, vector<16x16xf32>, vector<64x16xf32> -> vector<64x16xf32>
    %131 = arith.addf %130, %129 : vector<64x16xf32>
    %cst_78 = arith.constant dense<0.000000e+00> : vector<8x16xf32>
    %132 = tpu.matmul %105, %113, %cst_78 {dimension_numbers = #tpu.dot_dimension_numbers<[1], [0], [0], [1], [0, 0, 1, 1], [], []>} : vector<8x32xf32>, vector<32x16xf32>, vector<8x16xf32> -> vector<8x16xf32>
    %cst_79 = arith.constant dense<0.000000e+00> : vector<64x16xf32>
    %133 = tpu.matmul %0, %132, %cst_79 {dimension_numbers = #tpu.dot_dimension_numbers<[1], [0], [0], [1], [0, 0, 1, 1], [], []>} : vector<64x8xf32>, vector<8x16xf32>, vector<64x16xf32> -> vector<64x16xf32>
    %134 = arith.addf %131, %133 : vector<64x16xf32>
    %cst_80 = arith.constant dense<0.000000e+00> : vector<8x16xf32>
    %135 = tpu.matmul %110, %114, %cst_80 {dimension_numbers = #tpu.dot_dimension_numbers<[1], [0], [0], [1], [0, 0, 1, 1], [], []>} : vector<8x32xf32>, vector<32x16xf32>, vector<8x16xf32> -> vector<8x16xf32>
    %cst_81 = arith.constant dense<0.000000e+00> : vector<64x16xf32>
    %136 = tpu.matmul %1, %135, %cst_81 {dimension_numbers = #tpu.dot_dimension_numbers<[1], [0], [0], [1], [0, 0, 1, 1], [], []>} : vector<64x8xf32>, vector<8x16xf32>, vector<64x16xf32> -> vector<64x16xf32>
    %137 = arith.addf %134, %136 : vector<64x16xf32>
    %cst_82 = arith.constant 0.000000e+00 : f32
    %138 = vector.broadcast %cst_82 : f32 to vector<64x16xf32>
    %139 = arith.maximumf %137, %138 : vector<64x16xf32>
    %cst_83 = arith.constant dense<0.000000e+00> : vector<64x16xf32>
    %140 = tpu.matmul %139, %116, %cst_83 {dimension_numbers = #tpu.dot_dimension_numbers<[1], [0], [0], [1], [0, 0, 1, 1], [], []>} : vector<64x16xf32>, vector<16x16xf32>, vector<64x16xf32> -> vector<64x16xf32>
    %141 = vector.broadcast %117 : vector<1x16xf32> to vector<64x16xf32>
    %142 = arith.addf %140, %141 : vector<64x16xf32>
    %cst_84 = arith.constant 0.000000e+00 : f32
    %143 = vector.broadcast %cst_84 : f32 to vector<64x16xf32>
    %144 = arith.maximumf %142, %143 : vector<64x16xf32>
    %cst_85 = arith.constant dense<0.000000e+00> : vector<8x16xf32>
    %145 = tpu.matmul %2, %144, %cst_85 {dimension_numbers = #tpu.dot_dimension_numbers<[1], [0], [0], [1], [0, 0, 1, 1], [], []>} : vector<8x64xf32>, vector<64x16xf32>, vector<8x16xf32> -> vector<8x16xf32>
    %cst_86 = arith.constant dense<0.000000e+00> : vector<8x16xf32>
    %146 = tpu.matmul %3, %144, %cst_86 {dimension_numbers = #tpu.dot_dimension_numbers<[1], [0], [0], [1], [0, 0, 1, 1], [], []>} : vector<8x64xf32>, vector<64x16xf32>, vector<8x16xf32> -> vector<8x16xf32>
    %cst_87 = arith.constant dense<0.000000e+00> : vector<8x32xf32>
    %147 = tpu.matmul %145, %118, %cst_87 {dimension_numbers = #tpu.dot_dimension_numbers<[1], [0], [0], [1], [0, 0, 1, 1], [], []>} : vector<8x16xf32>, vector<16x32xf32>, vector<8x32xf32> -> vector<8x32xf32>
    %cst_88 = arith.constant dense<0.000000e+00> : vector<8x32xf32>
    %148 = tpu.matmul %105, %119, %cst_88 {dimension_numbers = #tpu.dot_dimension_numbers<[1], [0], [0], [1], [0, 0, 1, 1], [], []>} : vector<8x32xf32>, vector<32x32xf32>, vector<8x32xf32> -> vector<8x32xf32>
    %149 = arith.addf %147, %148 : vector<8x32xf32>
    %150 = vector.broadcast %120 : vector<1x32xf32> to vector<8x32xf32>
    %151 = arith.addf %149, %150 : vector<8x32xf32>
    %cst_89 = arith.constant 0.000000e+00 : f32
    %152 = vector.broadcast %cst_89 : f32 to vector<8x32xf32>
    %153 = arith.maximumf %151, %152 : vector<8x32xf32>
    %cst_90 = arith.constant dense<0.000000e+00> : vector<8x32xf32>
    %154 = tpu.matmul %153, %121, %cst_90 {dimension_numbers = #tpu.dot_dimension_numbers<[1], [0], [0], [1], [0, 0, 1, 1], [], []>} : vector<8x32xf32>, vector<32x32xf32>, vector<8x32xf32> -> vector<8x32xf32>
    %155 = vector.broadcast %122 : vector<1x32xf32> to vector<8x32xf32>
    %156 = arith.addf %154, %155 : vector<8x32xf32>
    %cst_91 = arith.constant 0.000000e+00 : f32
    %157 = vector.broadcast %cst_91 : f32 to vector<8x32xf32>
    %158 = arith.maximumf %156, %157 : vector<8x32xf32>
    %cst_92 = arith.constant dense<0.000000e+00> : vector<8x32xf32>
    %159 = tpu.matmul %146, %118, %cst_92 {dimension_numbers = #tpu.dot_dimension_numbers<[1], [0], [0], [1], [0, 0, 1, 1], [], []>} : vector<8x16xf32>, vector<16x32xf32>, vector<8x32xf32> -> vector<8x32xf32>
    %cst_93 = arith.constant dense<0.000000e+00> : vector<8x32xf32>
    %160 = tpu.matmul %110, %119, %cst_93 {dimension_numbers = #tpu.dot_dimension_numbers<[1], [0], [0], [1], [0, 0, 1, 1], [], []>} : vector<8x32xf32>, vector<32x32xf32>, vector<8x32xf32> -> vector<8x32xf32>
    %161 = arith.addf %159, %160 : vector<8x32xf32>
    %162 = vector.broadcast %120 : vector<1x32xf32> to vector<8x32xf32>
    %163 = arith.addf %161, %162 : vector<8x32xf32>
    %cst_94 = arith.constant 0.000000e+00 : f32
    %164 = vector.broadcast %cst_94 : f32 to vector<8x32xf32>
    %165 = arith.maximumf %163, %164 : vector<8x32xf32>
    %cst_95 = arith.constant dense<0.000000e+00> : vector<8x32xf32>
    %166 = tpu.matmul %165, %121, %cst_95 {dimension_numbers = #tpu.dot_dimension_numbers<[1], [0], [0], [1], [0, 0, 1, 1], [], []>} : vector<8x32xf32>, vector<32x32xf32>, vector<8x32xf32> -> vector<8x32xf32>
    %167 = vector.broadcast %122 : vector<1x32xf32> to vector<8x32xf32>
    %168 = arith.addf %166, %167 : vector<8x32xf32>
    %cst_96 = arith.constant 0.000000e+00 : f32
    %169 = vector.broadcast %cst_96 : f32 to vector<8x32xf32>
    %170 = arith.maximumf %168, %169 : vector<8x32xf32>
    %cst_97 = arith.constant dense<0.000000e+00> : vector<64x16xf32>
    %171 = tpu.matmul %144, %123, %cst_97 {dimension_numbers = #tpu.dot_dimension_numbers<[1], [0], [0], [1], [0, 0, 1, 1], [], []>} : vector<64x16xf32>, vector<16x16xf32>, vector<64x16xf32> -> vector<64x16xf32>
    %172 = vector.broadcast %124 : vector<1x16xf32> to vector<64x16xf32>
    %173 = arith.addf %171, %172 : vector<64x16xf32>
    %cst_98 = arith.constant 0.000000e+00 : f32
    %174 = vector.broadcast %cst_98 : f32 to vector<64x16xf32>
    %175 = arith.maximumf %173, %174 : vector<64x16xf32>
    %cst_99 = arith.constant dense<0.000000e+00> : vector<64x1xf32>
    %176 = tpu.matmul %175, %125, %cst_99 {dimension_numbers = #tpu.dot_dimension_numbers<[1], [0], [0], [1], [0, 0, 1, 1], [], []>} : vector<64x16xf32>, vector<16x1xf32>, vector<64x1xf32> -> vector<64x1xf32>
    %177 = vector.broadcast %126 : vector<1x1xf32> to vector<64x1xf32>
    %178 = arith.addf %176, %177 : vector<64x1xf32>
    %179 = vector.broadcast %178 : vector<64x1xf32> to vector<64x8xf32>
    %180 = arith.mulf %179, %1 : vector<64x8xf32>
    %cst_100 = arith.constant dense<0.000000e+00> : vector<8x8xf32>
    %181 = tpu.matmul %2, %180, %cst_100 {dimension_numbers = #tpu.dot_dimension_numbers<[1], [0], [0], [1], [0, 0, 1, 1], [], []>} : vector<8x64xf32>, vector<64x8xf32>, vector<8x8xf32> -> vector<8x8xf32>
    %c0_101 = arith.constant 0 : index
    %c0_102 = arith.constant 0 : index
    %c0_103 = arith.constant 0 : index
    %182 = vector.load %arg31[%c0_101, %c0_102, %c0_103] : memref<3x8x8xf32, #tpu.memory_space<vmem>>, vector<1x8x8xf32>
    %183 = vector.shape_cast %182 : vector<1x8x8xf32> to vector<8x8xf32>
    %184 = vector.shape_cast %181 : vector<8x8xf32> to vector<1x8x8xf32>
    tpu.vector_store %arg31[%c0_101, %c0_102, %c0_103], %184 {strides = array<i32>} : memref<3x8x8xf32, #tpu.memory_space<vmem>>, vector<1x8x8xf32>,
    %cst_104 = arith.constant dense<0.000000e+00> : vector<64x16xf32>
    %185 = tpu.matmul %144, %111, %cst_104 {dimension_numbers = #tpu.dot_dimension_numbers<[1], [0], [0], [1], [0, 0, 1, 1], [], []>} : vector<64x16xf32>, vector<16x16xf32>, vector<64x16xf32> -> vector<64x16xf32>
    %186 = arith.addf %185, %129 : vector<64x16xf32>
    %cst_105 = arith.constant dense<0.000000e+00> : vector<8x16xf32>
    %187 = tpu.matmul %158, %113, %cst_105 {dimension_numbers = #tpu.dot_dimension_numbers<[1], [0], [0], [1], [0, 0, 1, 1], [], []>} : vector<8x32xf32>, vector<32x16xf32>, vector<8x16xf32> -> vector<8x16xf32>
    %cst_106 = arith.constant dense<0.000000e+00> : vector<64x16xf32>
    %188 = tpu.matmul %0, %187, %cst_106 {dimension_numbers = #tpu.dot_dimension_numbers<[1], [0], [0], [1], [0, 0, 1, 1], [], []>} : vector<64x8xf32>, vector<8x16xf32>, vector<64x16xf32> -> vector<64x16xf32>
    %189 = arith.addf %186, %188 : vector<64x16xf32>
    %cst_107 = arith.constant dense<0.000000e+00> : vector<8x16xf32>
    %190 = tpu.matmul %170, %114, %cst_107 {dimension_numbers = #tpu.dot_dimension_numbers<[1], [0], [0], [1], [0, 0, 1, 1], [], []>} : vector<8x32xf32>, vector<32x16xf32>, vector<8x16xf32> -> vector<8x16xf32>
    %cst_108 = arith.constant dense<0.000000e+00> : vector<64x16xf32>
    %191 = tpu.matmul %1, %190, %cst_108 {dimension_numbers = #tpu.dot_dimension_numbers<[1], [0], [0], [1], [0, 0, 1, 1], [], []>} : vector<64x8xf32>, vector<8x16xf32>, vector<64x16xf32> -> vector<64x16xf32>
    %192 = arith.addf %189, %191 : vector<64x16xf32>
    %cst_109 = arith.constant 0.000000e+00 : f32
    %193 = vector.broadcast %cst_109 : f32 to vector<64x16xf32>
    %194 = arith.maximumf %192, %193 : vector<64x16xf32>
    %cst_110 = arith.constant dense<0.000000e+00> : vector<64x16xf32>
    %195 = tpu.matmul %194, %116, %cst_110 {dimension_numbers = #tpu.dot_dimension_numbers<[1], [0], [0], [1], [0, 0, 1, 1], [], []>} : vector<64x16xf32>, vector<16x16xf32>, vector<64x16xf32> -> vector<64x16xf32>
    %196 = vector.broadcast %117 : vector<1x16xf32> to vector<64x16xf32>
    %197 = arith.addf %195, %196 : vector<64x16xf32>
    %cst_111 = arith.constant 0.000000e+00 : f32
    %198 = vector.broadcast %cst_111 : f32 to vector<64x16xf32>
    %199 = arith.maximumf %197, %198 : vector<64x16xf32>
    %cst_112 = arith.constant dense<0.000000e+00> : vector<8x16xf32>
    %200 = tpu.matmul %2, %199, %cst_112 {dimension_numbers = #tpu.dot_dimension_numbers<[1], [0], [0], [1], [0, 0, 1, 1], [], []>} : vector<8x64xf32>, vector<64x16xf32>, vector<8x16xf32> -> vector<8x16xf32>
    %cst_113 = arith.constant dense<0.000000e+00> : vector<8x16xf32>
    %201 = tpu.matmul %3, %199, %cst_113 {dimension_numbers = #tpu.dot_dimension_numbers<[1], [0], [0], [1], [0, 0, 1, 1], [], []>} : vector<8x64xf32>, vector<64x16xf32>, vector<8x16xf32> -> vector<8x16xf32>
    %cst_114 = arith.constant dense<0.000000e+00> : vector<8x32xf32>
    %202 = tpu.matmul %200, %118, %cst_114 {dimension_numbers = #tpu.dot_dimension_numbers<[1], [0], [0], [1], [0, 0, 1, 1], [], []>} : vector<8x16xf32>, vector<16x32xf32>, vector<8x32xf32> -> vector<8x32xf32>
    %cst_115 = arith.constant dense<0.000000e+00> : vector<8x32xf32>
    %203 = tpu.matmul %158, %119, %cst_115 {dimension_numbers = #tpu.dot_dimension_numbers<[1], [0], [0], [1], [0, 0, 1, 1], [], []>} : vector<8x32xf32>, vector<32x32xf32>, vector<8x32xf32> -> vector<8x32xf32>
    %204 = arith.addf %202, %203 : vector<8x32xf32>
    %205 = vector.broadcast %120 : vector<1x32xf32> to vector<8x32xf32>
    %206 = arith.addf %204, %205 : vector<8x32xf32>
    %cst_116 = arith.constant 0.000000e+00 : f32
    %207 = vector.broadcast %cst_116 : f32 to vector<8x32xf32>
    %208 = arith.maximumf %206, %207 : vector<8x32xf32>
    %cst_117 = arith.constant dense<0.000000e+00> : vector<8x32xf32>
    %209 = tpu.matmul %208, %121, %cst_117 {dimension_numbers = #tpu.dot_dimension_numbers<[1], [0], [0], [1], [0, 0, 1, 1], [], []>} : vector<8x32xf32>, vector<32x32xf32>, vector<8x32xf32> -> vector<8x32xf32>
    %210 = vector.broadcast %122 : vector<1x32xf32> to vector<8x32xf32>
    %211 = arith.addf %209, %210 : vector<8x32xf32>
    %cst_118 = arith.constant 0.000000e+00 : f32
    %212 = vector.broadcast %cst_118 : f32 to vector<8x32xf32>
    %213 = arith.maximumf %211, %212 : vector<8x32xf32>
    %cst_119 = arith.constant dense<0.000000e+00> : vector<8x32xf32>
    %214 = tpu.matmul %201, %118, %cst_119 {dimension_numbers = #tpu.dot_dimension_numbers<[1], [0], [0], [1], [0, 0, 1, 1], [], []>} : vector<8x16xf32>, vector<16x32xf32>, vector<8x32xf32> -> vector<8x32xf32>
    %cst_120 = arith.constant dense<0.000000e+00> : vector<8x32xf32>
    %215 = tpu.matmul %170, %119, %cst_120 {dimension_numbers = #tpu.dot_dimension_numbers<[1], [0], [0], [1], [0, 0, 1, 1], [], []>} : vector<8x32xf32>, vector<32x32xf32>, vector<8x32xf32> -> vector<8x32xf32>
    %216 = arith.addf %214, %215 : vector<8x32xf32>
    %217 = vector.broadcast %120 : vector<1x32xf32> to vector<8x32xf32>
    %218 = arith.addf %216, %217 : vector<8x32xf32>
    %cst_121 = arith.constant 0.000000e+00 : f32
    %219 = vector.broadcast %cst_121 : f32 to vector<8x32xf32>
    %220 = arith.maximumf %218, %219 : vector<8x32xf32>
    %cst_122 = arith.constant dense<0.000000e+00> : vector<8x32xf32>
    %221 = tpu.matmul %220, %121, %cst_122 {dimension_numbers = #tpu.dot_dimension_numbers<[1], [0], [0], [1], [0, 0, 1, 1], [], []>} : vector<8x32xf32>, vector<32x32xf32>, vector<8x32xf32> -> vector<8x32xf32>
    %222 = vector.broadcast %122 : vector<1x32xf32> to vector<8x32xf32>
    %223 = arith.addf %221, %222 : vector<8x32xf32>
    %cst_123 = arith.constant 0.000000e+00 : f32
    %224 = vector.broadcast %cst_123 : f32 to vector<8x32xf32>
    %225 = arith.maximumf %223, %224 : vector<8x32xf32>
    %cst_124 = arith.constant dense<0.000000e+00> : vector<64x16xf32>
    %226 = tpu.matmul %199, %123, %cst_124 {dimension_numbers = #tpu.dot_dimension_numbers<[1], [0], [0], [1], [0, 0, 1, 1], [], []>} : vector<64x16xf32>, vector<16x16xf32>, vector<64x16xf32> -> vector<64x16xf32>
    %227 = vector.broadcast %124 : vector<1x16xf32> to vector<64x16xf32>
    %228 = arith.addf %226, %227 : vector<64x16xf32>
    %cst_125 = arith.constant 0.000000e+00 : f32
    %229 = vector.broadcast %cst_125 : f32 to vector<64x16xf32>
    %230 = arith.maximumf %228, %229 : vector<64x16xf32>
    %cst_126 = arith.constant dense<0.000000e+00> : vector<64x1xf32>
    %231 = tpu.matmul %230, %125, %cst_126 {dimension_numbers = #tpu.dot_dimension_numbers<[1], [0], [0], [1], [0, 0, 1, 1], [], []>} : vector<64x16xf32>, vector<16x1xf32>, vector<64x1xf32> -> vector<64x1xf32>
    %232 = vector.broadcast %126 : vector<1x1xf32> to vector<64x1xf32>
    %233 = arith.addf %231, %232 : vector<64x1xf32>
    %234 = vector.broadcast %233 : vector<64x1xf32> to vector<64x8xf32>
    %235 = arith.mulf %234, %1 : vector<64x8xf32>
    %cst_127 = arith.constant dense<0.000000e+00> : vector<8x8xf32>
    %236 = tpu.matmul %2, %235, %cst_127 {dimension_numbers = #tpu.dot_dimension_numbers<[1], [0], [0], [1], [0, 0, 1, 1], [], []>} : vector<8x64xf32>, vector<64x8xf32>, vector<8x8xf32> -> vector<8x8xf32>
    %c1 = arith.constant 1 : index
    %c0_128 = arith.constant 0 : index
    %c0_129 = arith.constant 0 : index
    %237 = vector.load %arg31[%c1, %c0_128, %c0_129] : memref<3x8x8xf32, #tpu.memory_space<vmem>>, vector<1x8x8xf32>
    %238 = vector.shape_cast %237 : vector<1x8x8xf32> to vector<8x8xf32>
    %239 = vector.shape_cast %236 : vector<8x8xf32> to vector<1x8x8xf32>
    tpu.vector_store %arg31[%c1, %c0_128, %c0_129], %239 {strides = array<i32>} : memref<3x8x8xf32, #tpu.memory_space<vmem>>, vector<1x8x8xf32>,
    %cst_130 = arith.constant dense<0.000000e+00> : vector<64x16xf32>
    %240 = tpu.matmul %199, %111, %cst_130 {dimension_numbers = #tpu.dot_dimension_numbers<[1], [0], [0], [1], [0, 0, 1, 1], [], []>} : vector<64x16xf32>, vector<16x16xf32>, vector<64x16xf32> -> vector<64x16xf32>
    %241 = arith.addf %240, %129 : vector<64x16xf32>
    %cst_131 = arith.constant dense<0.000000e+00> : vector<8x16xf32>
    %242 = tpu.matmul %213, %113, %cst_131 {dimension_numbers = #tpu.dot_dimension_numbers<[1], [0], [0], [1], [0, 0, 1, 1], [], []>} : vector<8x32xf32>, vector<32x16xf32>, vector<8x16xf32> -> vector<8x16xf32>
    %cst_132 = arith.constant dense<0.000000e+00> : vector<64x16xf32>
    %243 = tpu.matmul %0, %242, %cst_132 {dimension_numbers = #tpu.dot_dimension_numbers<[1], [0], [0], [1], [0, 0, 1, 1], [], []>} : vector<64x8xf32>, vector<8x16xf32>, vector<64x16xf32> -> vector<64x16xf32>
    %244 = arith.addf %241, %243 : vector<64x16xf32>
    %cst_133 = arith.constant dense<0.000000e+00> : vector<8x16xf32>
    %245 = tpu.matmul %225, %114, %cst_133 {dimension_numbers = #tpu.dot_dimension_numbers<[1], [0], [0], [1], [0, 0, 1, 1], [], []>} : vector<8x32xf32>, vector<32x16xf32>, vector<8x16xf32> -> vector<8x16xf32>
    %cst_134 = arith.constant dense<0.000000e+00> : vector<64x16xf32>
    %246 = tpu.matmul %1, %245, %cst_134 {dimension_numbers = #tpu.dot_dimension_numbers<[1], [0], [0], [1], [0, 0, 1, 1], [], []>} : vector<64x8xf32>, vector<8x16xf32>, vector<64x16xf32> -> vector<64x16xf32>
    %247 = arith.addf %244, %246 : vector<64x16xf32>
    %cst_135 = arith.constant 0.000000e+00 : f32
    %248 = vector.broadcast %cst_135 : f32 to vector<64x16xf32>
    %249 = arith.maximumf %247, %248 : vector<64x16xf32>
    %cst_136 = arith.constant dense<0.000000e+00> : vector<64x16xf32>
    %250 = tpu.matmul %249, %116, %cst_136 {dimension_numbers = #tpu.dot_dimension_numbers<[1], [0], [0], [1], [0, 0, 1, 1], [], []>} : vector<64x16xf32>, vector<16x16xf32>, vector<64x16xf32> -> vector<64x16xf32>
    %251 = vector.broadcast %117 : vector<1x16xf32> to vector<64x16xf32>
    %252 = arith.addf %250, %251 : vector<64x16xf32>
    %cst_137 = arith.constant 0.000000e+00 : f32
    %253 = vector.broadcast %cst_137 : f32 to vector<64x16xf32>
    %254 = arith.maximumf %252, %253 : vector<64x16xf32>
    %cst_138 = arith.constant dense<0.000000e+00> : vector<64x16xf32>
    %255 = tpu.matmul %254, %123, %cst_138 {dimension_numbers = #tpu.dot_dimension_numbers<[1], [0], [0], [1], [0, 0, 1, 1], [], []>} : vector<64x16xf32>, vector<16x16xf32>, vector<64x16xf32> -> vector<64x16xf32>
    %256 = vector.broadcast %124 : vector<1x16xf32> to vector<64x16xf32>
    %257 = arith.addf %255, %256 : vector<64x16xf32>
    %cst_139 = arith.constant 0.000000e+00 : f32
    %258 = vector.broadcast %cst_139 : f32 to vector<64x16xf32>
    %259 = arith.maximumf %257, %258 : vector<64x16xf32>
    %cst_140 = arith.constant dense<0.000000e+00> : vector<64x1xf32>
    %260 = tpu.matmul %259, %125, %cst_140 {dimension_numbers = #tpu.dot_dimension_numbers<[1], [0], [0], [1], [0, 0, 1, 1], [], []>} : vector<64x16xf32>, vector<16x1xf32>, vector<64x1xf32> -> vector<64x1xf32>
    %261 = vector.broadcast %126 : vector<1x1xf32> to vector<64x1xf32>
    %262 = arith.addf %260, %261 : vector<64x1xf32>
    %263 = vector.broadcast %262 : vector<64x1xf32> to vector<64x8xf32>
    %264 = arith.mulf %263, %1 : vector<64x8xf32>
    %cst_141 = arith.constant dense<0.000000e+00> : vector<8x8xf32>
    %265 = tpu.matmul %2, %264, %cst_141 {dimension_numbers = #tpu.dot_dimension_numbers<[1], [0], [0], [1], [0, 0, 1, 1], [], []>} : vector<8x64xf32>, vector<64x8xf32>, vector<8x8xf32> -> vector<8x8xf32>
    %c2 = arith.constant 2 : index
    %c0_142 = arith.constant 0 : index
    %c0_143 = arith.constant 0 : index
    %266 = vector.load %arg31[%c2, %c0_142, %c0_143] : memref<3x8x8xf32, #tpu.memory_space<vmem>>, vector<1x8x8xf32>
    %267 = vector.shape_cast %266 : vector<1x8x8xf32> to vector<8x8xf32>
    %268 = vector.shape_cast %265 : vector<8x8xf32> to vector<1x8x8xf32>
    tpu.vector_store %arg31[%c2, %c0_142, %c0_143], %268 {strides = array<i32>} : memref<3x8x8xf32, #tpu.memory_space<vmem>>, vector<1x8x8xf32>,
    return
  }
  func.func @transform_0(%arg0: i32) -> (i32, i32) {
    %c0_i32 = arith.constant 0 : i32
    %c0_i32_0 = arith.constant 0 : i32
    %c0_i32_1 = arith.constant 0 : i32
    return %c0_i32, %c0_i32_0 : i32, i32
  }
  func.func @transform_1(%arg0: i32) -> (i32, i32) {
    %c0_i32 = arith.constant 0 : i32
    %c0_i32_0 = arith.constant 0 : i32
    %c0_i32_1 = arith.constant 0 : i32
    return %c0_i32, %c0_i32_0 : i32, i32
  }
  func.func @transform_2(%arg0: i32) -> (i32, i32) {
    %c0_i32 = arith.constant 0 : i32
    %c0_i32_0 = arith.constant 0 : i32
    %c0_i32_1 = arith.constant 0 : i32
    return %c0_i32, %c0_i32_0 : i32, i32
  }
  func.func @transform_3(%arg0: i32) -> (i32, i32) {
    %c0_i32 = arith.constant 0 : i32
    %c0_i32_0 = arith.constant 0 : i32
    %c0_i32_1 = arith.constant 0 : i32
    return %c0_i32, %c0_i32_0 : i32, i32
  }
  func.func @transform_4(%arg0: i32) -> (i32, i32) {
    %c0_i32 = arith.constant 0 : i32
    %c0_i32_0 = arith.constant 0 : i32
    %c0_i32_1 = arith.constant 0 : i32
    return %c0_i32, %c0_i32_0 : i32, i32
  }
  func.func @transform_5(%arg0: i32) -> (i32, i32) {
    %c0_i32 = arith.constant 0 : i32
    %c0_i32_0 = arith.constant 0 : i32
    %c0_i32_1 = arith.constant 0 : i32
    return %c0_i32, %c0_i32_0 : i32, i32
  }
  func.func @transform_6(%arg0: i32) -> (i32, i32) {
    %c0_i32 = arith.constant 0 : i32
    %c0_i32_0 = arith.constant 0 : i32
    %c0_i32_1 = arith.constant 0 : i32
    return %c0_i32, %c0_i32_0 : i32, i32
  }
  func.func @transform_7(%arg0: i32) -> (i32, i32) {
    %c0_i32 = arith.constant 0 : i32
    %c0_i32_0 = arith.constant 0 : i32
    %c0_i32_1 = arith.constant 0 : i32
    return %c0_i32, %c0_i32_0 : i32, i32
  }
  func.func @transform_8(%arg0: i32) -> (i32, i32) {
    %c0_i32 = arith.constant 0 : i32
    %c0_i32_0 = arith.constant 0 : i32
    %c0_i32_1 = arith.constant 0 : i32
    return %c0_i32, %c0_i32_0 : i32, i32
  }
  func.func @transform_9(%arg0: i32) -> (i32, i32) {
    %c0_i32 = arith.constant 0 : i32
    %c0_i32_0 = arith.constant 0 : i32
    %c0_i32_1 = arith.constant 0 : i32
    return %c0_i32, %c0_i32_0 : i32, i32
  }
  func.func @transform_10(%arg0: i32) -> (i32, i32) {
    %c0_i32 = arith.constant 0 : i32
    %c0_i32_0 = arith.constant 0 : i32
    %c0_i32_1 = arith.constant 0 : i32
    return %c0_i32, %c0_i32_0 : i32, i32
  }
  func.func @transform_11(%arg0: i32) -> (i32, i32) {
    %c0_i32 = arith.constant 0 : i32
    %c0_i32_0 = arith.constant 0 : i32
    %c0_i32_1 = arith.constant 0 : i32
    return %c0_i32, %c0_i32_0 : i32, i32
  }
  func.func @transform_12(%arg0: i32) -> (i32, i32) {
    %c0_i32 = arith.constant 0 : i32
    %c0_i32_0 = arith.constant 0 : i32
    %c0_i32_1 = arith.constant 0 : i32
    return %c0_i32, %c0_i32_0 : i32, i32
  }
  func.func @transform_13(%arg0: i32) -> (i32, i32) {
    %c0_i32 = arith.constant 0 : i32
    %c0_i32_0 = arith.constant 0 : i32
    %c0_i32_1 = arith.constant 0 : i32
    return %c0_i32, %c0_i32_0 : i32, i32
  }
  func.func @transform_14(%arg0: i32) -> (i32, i32) {
    %c0_i32 = arith.constant 0 : i32
    %c0_i32_0 = arith.constant 0 : i32
    %c0_i32_1 = arith.constant 0 : i32
    return %c0_i32, %c0_i32_0 : i32, i32
  }
  func.func @transform_15(%arg0: i32) -> (i32, i32) {
    %c0_i32 = arith.constant 0 : i32
    %c0_i32_0 = arith.constant 0 : i32
    %c0_i32_1 = arith.constant 0 : i32
    return %c0_i32, %c0_i32_0 : i32, i32
  }
  func.func @transform_16(%arg0: i32) -> (i32, i32) {
    %c0_i32 = arith.constant 0 : i32
    %c0_i32_0 = arith.constant 0 : i32
    %c0_i32_1 = arith.constant 0 : i32
    return %c0_i32, %c0_i32_0 : i32, i32
  }
  func.func @transform_17(%arg0: i32) -> (i32, i32) {
    %c0_i32 = arith.constant 0 : i32
    %c0_i32_0 = arith.constant 0 : i32
    %c0_i32_1 = arith.constant 0 : i32
    return %c0_i32, %c0_i32_0 : i32, i32
  }
  func.func @transform_18(%arg0: i32) -> (i32, i32) {
    %c0_i32 = arith.constant 0 : i32
    %c0_i32_0 = arith.constant 0 : i32
    %c0_i32_1 = arith.constant 0 : i32
    return %c0_i32, %c0_i32_0 : i32, i32
  }
  func.func @transform_19(%arg0: i32) -> (i32, i32) {
    %c0_i32 = arith.constant 0 : i32
    %c0_i32_0 = arith.constant 0 : i32
    %c0_i32_1 = arith.constant 0 : i32
    return %c0_i32, %c0_i32_0 : i32, i32
  }
  func.func @transform_20(%arg0: i32) -> (i32, i32) {
    %c0_i32 = arith.constant 0 : i32
    %c0_i32_0 = arith.constant 0 : i32
    %c0_i32_1 = arith.constant 0 : i32
    return %c0_i32, %c0_i32_0 : i32, i32
  }
  func.func @transform_21(%arg0: i32) -> (i32, i32) {
    %c0_i32 = arith.constant 0 : i32
    %c0_i32_0 = arith.constant 0 : i32
    %c0_i32_1 = arith.constant 0 : i32
    return %c0_i32, %c0_i32_0 : i32, i32
  }
  func.func @transform_22(%arg0: i32) -> (i32, i32) {
    %c0_i32 = arith.constant 0 : i32
    %c0_i32_0 = arith.constant 0 : i32
    %c0_i32_1 = arith.constant 0 : i32
    return %c0_i32, %c0_i32_0 : i32, i32
  }
  func.func @transform_23(%arg0: i32) -> (i32, i32) {
    %c0_i32 = arith.constant 0 : i32
    %c0_i32_0 = arith.constant 0 : i32
    %c0_i32_1 = arith.constant 0 : i32
    return %c0_i32, %c0_i32_0 : i32, i32
  }
  func.func @transform_24(%arg0: i32) -> (i32, i32) {
    %c0_i32 = arith.constant 0 : i32
    %c0_i32_0 = arith.constant 0 : i32
    %c0_i32_1 = arith.constant 0 : i32
    return %c0_i32, %c0_i32_0 : i32, i32
  }
  func.func @transform_25(%arg0: i32) -> (i32, i32) {
    %c0_i32 = arith.constant 0 : i32
    %c0_i32_0 = arith.constant 0 : i32
    %c0_i32_1 = arith.constant 0 : i32
    return %c0_i32, %c0_i32_0 : i32, i32
  }
  func.func @transform_26(%arg0: i32) -> (i32, i32) {
    %c0_i32 = arith.constant 0 : i32
    %c0_i32_0 = arith.constant 0 : i32
    %c0_i32_1 = arith.constant 0 : i32
    return %c0_i32, %c0_i32_0 : i32, i32
  }
  func.func @transform_27(%arg0: i32) -> (i32, i32) {
    %c0_i32 = arith.constant 0 : i32
    %c0_i32_0 = arith.constant 0 : i32
    %c0_i32_1 = arith.constant 0 : i32
    return %c0_i32, %c0_i32_0 : i32, i32
  }
  func.func @transform_28(%arg0: i32) -> (i32, i32) {
    %c0_i32 = arith.constant 0 : i32
    %c0_i32_0 = arith.constant 0 : i32
    %c0_i32_1 = arith.constant 0 : i32
    return %c0_i32, %c0_i32_0 : i32, i32
  }
  func.func @transform_29(%arg0: i32) -> (i32, i32) {
    %c0_i32 = arith.constant 0 : i32
    %c0_i32_0 = arith.constant 0 : i32
    %c0_i32_1 = arith.constant 0 : i32
    return %c0_i32, %c0_i32_0 : i32, i32
  }
  func.func @transform_30(%arg0: i32) -> (i32, i32, i32) {
    %c0_i32 = arith.constant 0 : i32
    %c0_i32_0 = arith.constant 0 : i32
    %c0_i32_1 = arith.constant 0 : i32
    %c0_i32_2 = arith.constant 0 : i32
    return %c0_i32, %c0_i32_0, %c0_i32_1 : i32, i32, i32
  }
}

</mosaic_0001>

<llo_original>
// kernel: sub.2
$region0: #{sub.2}
  #allocation0 [shape = 's32[1]{0}', space=sflag, size = 0x4, scoped, tag = 'scoped memory for sub.2']
  %s0 = inlined_call_operand.vmem [shape: f32[8,1], index: 0, kind: input, shape index: {}]
  %s1 = inlined_call_operand.vmem [shape: f32[8,1], index: 1, kind: input, shape index: {}]
  %s2 = inlined_call_operand.vmem [shape: f32[8,1], index: 2, kind: output, shape index: {}]
  %v3 = vld [vmem:[%s0] sm:$0xff]
  %v4 = vld [vmem:[%s1] sm:$0xff]
  %5 = xla_tuple %v3, %v4
  %6 = xla_tuple %5
  %v7 = vsub.f32 %v3, %v4
  %8 = xla_tuple %v7
  %9 = vst [vmem:[%s2] sm:$0xff] %v7

// kernel: assignment_similarity_forward.1
$region0: #{assignment_similarity_forward.1}
  #allocation0 [shape = 'u32[]', space=smem, size = 0x4, offset = 0x4, fixed_abs, tag = 'smem constant byte address 0x4 - core index']
  #allocation1 [shape = 'u32[144,128]{1,0:T(1,128)}', space=vmem, size = 0x12000, scoped, tag = 'internal scratch']
  #allocation2 [shape = 'f32[1,1]{1,0:T(1,128)S(1)}', space=vmem, size = 0x200, scoped, tag = 'scoped memory for assignment_similarity_forward.1']
  %s0 = inlined_call_operand.smem [shape: u32[31], index: -1, kind: input, shape index: {}]
  %s1 = sld [smem:[%s0]]
  %s2 = scalar_lea.smem %s0, 1
  %s3 = sld [smem:[%s2]]
  %s4 = scalar_lea.smem %s0, 2
  %s5 = sld [smem:[%s4]]
  %s6 = scalar_lea.smem %s0, 3
  %s7 = sld [smem:[%s6]]
  %s8 = scalar_lea.smem %s0, 4
  %s9 = sld [smem:[%s8]]
  %s10 = scalar_lea.smem %s0, 5
  %s11 = sld [smem:[%s10]]
  %s12 = scalar_lea.smem %s0, 6
  %s13 = sld [smem:[%s12]]
  %s14 = scalar_lea.smem %s0, 7
  %s15 = sld [smem:[%s14]]
  %s16 = scalar_lea.smem %s0, 8
  %s17 = sld [smem:[%s16]]
  %s18 = scalar_lea.smem %s0, 9
  %s19 = sld [smem:[%s18]]
  %s20 = scalar_lea.smem %s0, 10
  %s21 = sld [smem:[%s20]]
  %s22 = scalar_lea.smem %s0, 11
  %s23 = sld [smem:[%s22]]
  %s24 = scalar_lea.smem %s0, 12
  %s25 = sld [smem:[%s24]]
  %s26 = scalar_lea.smem %s0, 13
  %s27 = sld [smem:[%s26]]
  %s28 = scalar_lea.smem %s0, 14
  %s29 = sld [smem:[%s28]]
  %s30 = scalar_lea.smem %s0, 15
  %s31 = sld [smem:[%s30]]
  %s32 = scalar_lea.smem %s0, 16
  %s33 = sld [smem:[%s32]]
  %s34 = scalar_lea.smem %s0, 17
  %s35 = sld [smem:[%s34]]
  %s36 = scalar_lea.smem %s0, 18
  %s37 = sld [smem:[%s36]]
  %s38 = scalar_lea.smem %s0, 19
  %s39 = sld [smem:[%s38]]
  %s40 = scalar_lea.smem %s0, 20
  %s41 = sld [smem:[%s40]]
  %s42 = scalar_lea.smem %s0, 21
  %s43 = sld [smem:[%s42]]
  %s44 = scalar_lea.smem %s0, 22
  %s45 = sld [smem:[%s44]]
  %s46 = scalar_lea.smem %s0, 23
  %s47 = sld [smem:[%s46]]
  %s48 = scalar_lea.smem %s0, 24
  %s49 = sld [smem:[%s48]]
  %s50 = scalar_lea.smem %s0, 25
  %s51 = sld [smem:[%s50]]
  %s52 = scalar_lea.smem %s0, 26
  %s53 = sld [smem:[%s52]]
  %s54 = scalar_lea.smem %s0, 27
  %s55 = sld [smem:[%s54]]
  %s56 = scalar_lea.smem %s0, 28
  %s57 = sld [smem:[%s56]]
  %s58 = scalar_lea.smem %s0, 29
  %s59 = sld [smem:[%s58]]
  %s60 = scalar_lea.smem %s0, 30
  %s61 = sld [smem:[%s60]]
  %s62 = sld [smem:[#allocation0]]
  $region130: #{assignment_similarity_forward.1} parent=0
    _
  %s64 = ssub.s32 1, %s62
  %s65 = scalar_select 0, %s64, %s62
  %v66 = vstv %s59
  %67 = vst [vmem:[#allocation2] sm:$0x1] %v66
  $region1: #{assignment_similarity_forward.1} parent=0
    #allocation3 [shape = 'u8[12288]{0}', space=vmem, size = 0x3000, scoped, tag = 'output window, operand 0, single buffered']
    #allocation4 [shape = 's32[1]{0}', space=sflag, size = 0x4, scoped, tag = 'scoped memory for assignment_similarity_forward.1']
    %68 = vsyncpa [#allocation4], 0
    // Predicated region
    $region2: #{assignment_similarity_forward.1} parent=1 // pred_check
      _
    $region3: #{assignment_similarity_forward.1} parent=1 // pred_check_branch
      %70 = sbr.rel (0) target = $region5
    $region4: #{assignment_similarity_forward.1} parent=1 // pred_region
      _
    $region5: #{assignment_similarity_forward.1} parent=1 // pred_fallthru
      _
    // Predicated region
    $region6: #{assignment_similarity_forward.1} parent=1 // pred_check
      _
    $region7: #{assignment_similarity_forward.1} parent=1 // pred_check_branch
      %72 = sbr.rel (0) target = $region9
    $region8: #{assignment_similarity_forward.1} parent=1 // pred_region
      _
    $region9: #{assignment_similarity_forward.1} parent=1 // pred_fallthru
      _
    // Predicated region
    $region10: #{assignment_similarity_forward.1} parent=1 // pred_check
      _
    $region11: #{assignment_similarity_forward.1} parent=1 // pred_check_branch
      %74 = sbr.rel (0) target = $region13
    $region12: #{assignment_similarity_forward.1} parent=1 // pred_region
      _
    $region13: #{assignment_similarity_forward.1} parent=1 // pred_fallthru
      _
    // Predicated region
    $region14: #{assignment_similarity_forward.1} parent=1 // pred_check
      _
    $region15: #{assignment_similarity_forward.1} parent=1 // pred_check_branch
      %76 = sbr.rel (0) target = $region17
    $region16: #{assignment_similarity_forward.1} parent=1 // pred_region
      _
    $region17: #{assignment_similarity_forward.1} parent=1 // pred_fallthru
      _
    // Predicated region
    $region18: #{assignment_similarity_forward.1} parent=1 // pred_check
      _
    $region19: #{assignment_similarity_forward.1} parent=1 // pred_check_branch
      %78 = sbr.rel (0) target = $region21
    $region20: #{assignment_similarity_forward.1} parent=1 // pred_region
      _
    $region21: #{assignment_similarity_forward.1} parent=1 // pred_fallthru
      _
    // Predicated region
    $region22: #{assignment_similarity_forward.1} parent=1 // pred_check
      _
    $region23: #{assignment_similarity_forward.1} parent=1 // pred_check_branch
      %80 = sbr.rel (0) target = $region25
    $region24: #{assignment_similarity_forward.1} parent=1 // pred_region
      _
    $region25: #{assignment_similarity_forward.1} parent=1 // pred_fallthru
      _
    // Predicated region
    $region26: #{assignment_similarity_forward.1} parent=1 // pred_check
      _
    $region27: #{assignment_similarity_forward.1} parent=1 // pred_check_branch
      %82 = sbr.rel (0) target = $region29
    $region28: #{assignment_similarity_forward.1} parent=1 // pred_region
      _
    $region29: #{assignment_similarity_forward.1} parent=1 // pred_fallthru
      _
    // Predicated region
    $region30: #{assignment_similarity_forward.1} parent=1 // pred_check
      _
    $region31: #{assignment_similarity_forward.1} parent=1 // pred_check_branch
      %84 = sbr.rel (0) target = $region33
    $region32: #{assignment_similarity_forward.1} parent=1 // pred_region
      _
    $region33: #{assignment_similarity_forward.1} parent=1 // pred_fallthru
      _
    // Predicated region
    $region34: #{assignment_similarity_forward.1} parent=1 // pred_check
      _
    $region35: #{assignment_similarity_forward.1} parent=1 // pred_check_branch
      %86 = sbr.rel (0) target = $region37
    $region36: #{assignment_similarity_forward.1} parent=1 // pred_region
      _
    $region37: #{assignment_similarity_forward.1} parent=1 // pred_fallthru
      _
    // Predicated region
    $region38: #{assignment_similarity_forward.1} parent=1 // pred_check
      _
    $region39: #{assignment_similarity_forward.1} parent=1 // pred_check_branch
      %88 = sbr.rel (0) target = $region41
    $region40: #{assignment_similarity_forward.1} parent=1 // pred_region
      _
    $region41: #{assignment_similarity_forward.1} parent=1 // pred_fallthru
      _
    // Predicated region
    $region42: #{assignment_similarity_forward.1} parent=1 // pred_check
      _
    $region43: #{assignment_similarity_forward.1} parent=1 // pred_check_branch
      %90 = sbr.rel (0) target = $region45
    $region44: #{assignment_similarity_forward.1} parent=1 // pred_region
      _
    $region45: #{assignment_similarity_forward.1} parent=1 // pred_fallthru
      _
    // Predicated region
    $region46: #{assignment_similarity_forward.1} parent=1 // pred_check
      _
    $region47: #{assignment_similarity_forward.1} parent=1 // pred_check_branch
      %92 = sbr.rel (0) target = $region49
    $region48: #{assignment_similarity_forward.1} parent=1 // pred_region
      _
    $region49: #{assignment_similarity_forward.1} parent=1 // pred_fallthru
      _
    // Predicated region
    $region50: #{assignment_similarity_forward.1} parent=1 // pred_check
      _
    $region51: #{assignment_similarity_forward.1} parent=1 // pred_check_branch
      %94 = sbr.rel (0) target = $region53
    $region52: #{assignment_similarity_forward.1} parent=1 // pred_region
      _
    $region53: #{assignment_similarity_forward.1} parent=1 // pred_fallthru
      _
    // Predicated region
    $region54: #{assignment_similarity_forward.1} parent=1 // pred_check
      _
    $region55: #{assignment_similarity_forward.1} parent=1 // pred_check_branch
      %96 = sbr.rel (0) target = $region57
    $region56: #{assignment_similarity_forward.1} parent=1 // pred_region
      _
    $region57: #{assignment_similarity_forward.1} parent=1 // pred_fallthru
      _
    // Predicated region
    $region58: #{assignment_similarity_forward.1} parent=1 // pred_check
      _
    $region59: #{assignment_similarity_forward.1} parent=1 // pred_check_branch
      %98 = sbr.rel (0) target = $region61
    $region60: #{assignment_similarity_forward.1} parent=1 // pred_region
      _
    $region61: #{assignment_similarity_forward.1} parent=1 // pred_fallthru
      _
    // Predicated region
    $region62: #{assignment_similarity_forward.1} parent=1 // pred_check
      _
    $region63: #{assignment_similarity_forward.1} parent=1 // pred_check_branch
      %100 = sbr.rel (0) target = $region65
    $region64: #{assignment_similarity_forward.1} parent=1 // pred_region
      _
    $region65: #{assignment_similarity_forward.1} parent=1 // pred_fallthru
      _
    // Predicated region
    $region66: #{assignment_similarity_forward.1} parent=1 // pred_check
      _
    $region67: #{assignment_similarity_forward.1} parent=1 // pred_check_branch
      %102 = sbr.rel (0) target = $region69
    $region68: #{assignment_similarity_forward.1} parent=1 // pred_region
      _
    $region69: #{assignment_similarity_forward.1} parent=1 // pred_fallthru
      _
    // Predicated region
    $region70: #{assignment_similarity_forward.1} parent=1 // pred_check
      _
    $region71: #{assignment_similarity_forward.1} parent=1 // pred_check_branch
      %104 = sbr.rel (0) target = $region73
    $region72: #{assignment_similarity_forward.1} parent=1 // pred_region
      _
    $region73: #{assignment_similarity_forward.1} parent=1 // pred_fallthru
      _
    // Predicated region
    $region74: #{assignment_similarity_forward.1} parent=1 // pred_check
      _
    $region75: #{assignment_similarity_forward.1} parent=1 // pred_check_branch
      %106 = sbr.rel (0) target = $region77
    $region76: #{assignment_similarity_forward.1} parent=1 // pred_region
      _
    $region77: #{assignment_similarity_forward.1} parent=1 // pred_fallthru
      _
    // Predicated region
    $region78: #{assignment_similarity_forward.1} parent=1 // pred_check
      _
    $region79: #{assignment_similarity_forward.1} parent=1 // pred_check_branch
      %108 = sbr.rel (0) target = $region81
    $region80: #{assignment_similarity_forward.1} parent=1 // pred_region
      _
    $region81: #{assignment_similarity_forward.1} parent=1 // pred_fallthru
      _
    // Predicated region
    $region82: #{assignment_similarity_forward.1} parent=1 // pred_check
      _
    $region83: #{assignment_similarity_forward.1} parent=1 // pred_check_branch
      %110 = sbr.rel (0) target = $region85
    $region84: #{assignment_similarity_forward.1} parent=1 // pred_region
      _
    $region85: #{assignment_similarity_forward.1} parent=1 // pred_fallthru
      _
    // Predicated region
    $region86: #{assignment_similarity_forward.1} parent=1 // pred_check
      _
    $region87: #{assignment_similarity_forward.1} parent=1 // pred_check_branch
      %112 = sbr.rel (0) target = $region89
    $region88: #{assignment_similarity_forward.1} parent=1 // pred_region
      _
    $region89: #{assignment_similarity_forward.1} parent=1 // pred_fallthru
      _
    // Predicated region
    $region90: #{assignment_similarity_forward.1} parent=1 // pred_check
      _
    $region91: #{assignment_similarity_forward.1} parent=1 // pred_check_branch
      %114 = sbr.rel (0) target = $region93
    $region92: #{assignment_similarity_forward.1} parent=1 // pred_region
      _
    $region93: #{assignment_similarity_forward.1} parent=1 // pred_fallthru
      _
    // Predicated region
    $region94: #{assignment_similarity_forward.1} parent=1 // pred_check
      _
    $region95: #{assignment_similarity_forward.1} parent=1 // pred_check_branch
      %116 = sbr.rel (0) target = $region97
    $region96: #{assignment_similarity_forward.1} parent=1 // pred_region
      _
    $region97: #{assignment_similarity_forward.1} parent=1 // pred_fallthru
      _
    // Predicated region
    $region98: #{assignment_similarity_forward.1} parent=1 // pred_check
      _
    $region99: #{assignment_similarity_forward.1} parent=1 // pred_check_branch
      %118 = sbr.rel (0) target = $region101
    $region100: #{assignment_similarity_forward.1} parent=1 // pred_region
      _
    $region101: #{assignment_similarity_forward.1} parent=1 // pred_fallthru
      _
    // Predicated region
    $region102: #{assignment_similarity_forward.1} parent=1 // pred_check
      _
    $region103: #{assignment_similarity_forward.1} parent=1 // pred_check_branch
      %120 = sbr.rel (0) target = $region105
    $region104: #{assignment_similarity_forward.1} parent=1 // pred_region
      _
    $region105: #{assignment_similarity_forward.1} parent=1 // pred_fallthru
      _
    // Predicated region
    $region106: #{assignment_similarity_forward.1} parent=1 // pred_check
      _
    $region107: #{assignment_similarity_forward.1} parent=1 // pred_check_branch
      %122 = sbr.rel (0) target = $region109
    $region108: #{assignment_similarity_forward.1} parent=1 // pred_region
      _
    $region109: #{assignment_similarity_forward.1} parent=1 // pred_fallthru
      _
    // Predicated region
    $region110: #{assignment_similarity_forward.1} parent=1 // pred_check
      _
    $region111: #{assignment_similarity_forward.1} parent=1 // pred_check_branch
      %124 = sbr.rel (0) target = $region113
    $region112: #{assignment_similarity_forward.1} parent=1 // pred_region
      _
    $region113: #{assignment_similarity_forward.1} parent=1 // pred_fallthru
      _
    // Predicated region
    $region114: #{assignment_similarity_forward.1} parent=1 // pred_check
      _
    $region115: #{assignment_similarity_forward.1} parent=1 // pred_check_branch
      %126 = sbr.rel (0) target = $region117
    $region116: #{assignment_similarity_forward.1} parent=1 // pred_region
      _
    $region117: #{assignment_similarity_forward.1} parent=1 // pred_fallthru
      _
    // Predicated region
    $region118: #{assignment_similarity_forward.1} parent=1 // pred_check
      _
    $region119: #{assignment_similarity_forward.1} parent=1 // pred_check_branch
      %128 = sbr.rel (0) target = $region121
    $region120: #{assignment_similarity_forward.1} parent=1 // pred_region
      _
    $region121: #{assignment_similarity_forward.1} parent=1 // pred_fallthru
      _
    %v129 = vld [vmem:[%s9] sm:$0xff]
    %v130 = vld [vmem:[%s9 + $0x8] sm:$0xff]
    %v131 = vld [vmem:[%s9 + $0x10] sm:$0xff]
    %v132 = vld [vmem:[%s9 + $0x18] sm:$0xff]
    %v133 = vld [vmem:[%s9 + $0x20] sm:$0xff]
    %v134 = vld [vmem:[%s9 + $0x28] sm:$0xff]
    %v135 = vld [vmem:[%s9 + $0x30] sm:$0xff]
    %v136 = vld [vmem:[%s9 + $0x38] sm:$0xff]
    %v137 = vld [vmem:[%s11] sm:$0xff]
    %v138 = vld [vmem:[%s11 + $0x8] sm:$0xff]
    %v139 = vld [vmem:[%s11 + $0x10] sm:$0xff]
    %v140 = vld [vmem:[%s11 + $0x18] sm:$0xff]
    %v141 = vld [vmem:[%s11 + $0x20] sm:$0xff]
    %v142 = vld [vmem:[%s11 + $0x28] sm:$0xff]
    %v143 = vld [vmem:[%s11 + $0x30] sm:$0xff]
    %v144 = vld [vmem:[%s11 + $0x38] sm:$0xff]
    %v145 = vld [vmem:[%s13] sm:$0xff]
    %v146 = vld [vmem:[%s15] sm:$0xff]
    %v147 = vld [vmem:[%s1] sm:$0xff]
    %v148 = vld [vmem:[%s3] sm:$0xff]
    %v149 = vmul.f32 %v147, %v147
    %vm150 = vcmask 261120
    %v151 = vsel %vm150, %v149, 0.0
    %152 = vadd.xlane.f32.xlu0 %v151
    %v153 = vpop.xlane.xlu0 %152
    %v154 = vmax.f32 %v153, 1e-24
    %v155 = vrsqrt.pop %v154
    %v156 = vmul.f32 %v147, %v155
    %v157 = vmul.f32 %v148, %v148
    %v158 = vsel %vm150, %v157, 0.0
    %159 = vadd.xlane.f32.xlu0 %v158
    %v160 = vpop.xlane.xlu0 %159
    %v161 = vmax.f32 %v160, 1e-24
    %v162 = vrsqrt.pop %v161
    %v163 = vmul.f32 %v148, %v162
    %v165 = vsel %vm150, %v156, 0
    %v168 = vsel %vm150, %v163, 0
    %170 = vmatprep.subr.mxu0 0.0
    %171 = vmatpush1.xpose.msra.mxu0 0.0
    %172 = vmatprep.subr.mxu0 0.0
    %173 = vmatpush1.xpose.msra.mxu0 0.0
    %174 = vmatprep.subr.mxu0 0.0
    %175 = vmatpush1.xpose.msra.mxu0 0.0
    %176 = vmatprep.subr.mxu0 0.0
    %177 = vmatpush1.xpose.msra.mxu0 0.0
    %178 = vmatprep.subr.mxu0 0.0
    %179 = vmatpush1.xpose.msra.mxu0 0.0
    %180 = vmatprep.subr.mxu0 0.0
    %181 = vmatpush1.xpose.msra.mxu0 0.0
    %182 = vmatprep.subr.mxu0 0.0
    %183 = vmatpush1.xpose.msra.mxu0 0.0
    %184 = vmatprep.subr.mxu0 0.0
    %185 = vmatpush1.xpose.msra.mxu0 0.0
    %186 = vmatprep.subr.mxu0 0.0
    %187 = vmatpush1.xpose.msra.mxu0 0.0
    %188 = vmatprep.subr.mxu0 0.0
    %189 = vmatpush1.xpose.msra.mxu0 0.0
    %190 = vmatprep.subr.mxu0 0.0
    %191 = vmatpush1.xpose.msra.mxu0 0.0
    %192 = vmatprep.subr.mxu0 0.0
    %193 = vmatpush1.xpose.msra.mxu0 0.0
    %194 = vmatprep.subr.mxu0 0.0
    %195 = vmatpush1.xpose.msra.mxu0 0.0
    %196 = vmatprep.subr.mxu0 0.0
    %197 = vmatpush1.xpose.msra.mxu0 0.0
    %198 = vmatprep.subr.mxu0 0.0
    %199 = vmatpush1.xpose.msra.mxu0 0.0
    %200 = vmatprep.subr.mxu0 0.0
    %201 = vmatpush1.xpose.msra.mxu0 %v168
    %202 = vmatprep.subr.mxu0 0.0
    %203 = vmatpush2.xpose.msra.mxu0 0.0
    %204 = vmatprep.subr.mxu0 0.0
    %205 = vmatpush2.xpose.msra.mxu0 0.0
    %206 = vmatprep.subr.mxu0 0.0
    %207 = vmatpush2.xpose.msra.mxu0 0.0
    %208 = vmatprep.subr.mxu0 0.0
    %209 = vmatpush2.xpose.msra.mxu0 0.0
    %210 = vmatprep.subr.mxu0 0.0
    %211 = vmatpush2.xpose.msra.mxu0 0.0
    %212 = vmatprep.subr.mxu0 0.0
    %213 = vmatpush2.xpose.msra.mxu0 0.0
    %214 = vmatprep.subr.mxu0 0.0
    %215 = vmatpush2.xpose.msra.mxu0 0.0
    %216 = vmatprep.subr.mxu0 0.0
    %217 = vmatpush2.xpose.msra.mxu0 0.0
    %218 = vmatprep.subr.mxu0 0.0
    %219 = vmatpush2.xpose.msra.mxu0 0.0
    %220 = vmatprep.subr.mxu0 0.0
    %221 = vmatpush2.xpose.msra.mxu0 0.0
    %222 = vmatprep.subr.mxu0 0.0
    %223 = vmatpush2.xpose.msra.mxu0 0.0
    %224 = vmatprep.subr.mxu0 0.0
    %225 = vmatpush2.xpose.msra.mxu0 0.0
    %226 = vmatprep.subr.mxu0 0.0
    %227 = vmatpush2.xpose.msra.mxu0 0.0
    %228 = vmatprep.subr.mxu0 0.0
    %229 = vmatpush2.xpose.msra.mxu0 0.0
    %230 = vmatprep.subr.mxu0 0.0
    %231 = vmatpush2.xpose.msra.mxu0 0.0
    %232 = vmatprep.subr.mxu0 0.0
    %233 = vmatpush2.xpose.msra.mxu0 0.0
    %234 = vmatprep.mubr.f32.mxu0 0.0
    %235 = vmatmul.mubr.f32.gmra.mxu0 %v165
    %v236 = vpop.f32.mrf.mxu0
    %v237 = vadd.f32 0.0, %v236
    %v238 = vpop.f32.mrf.mxu0
    %239 = vdwg.mxu0
    %vm240 = vcmask 64512
    %v242 = vsel %vm240, %v129, 0
    %v245 = vsel %vm240, %v130, 0
    %v248 = vsel %vm240, %v131, 0
    %v251 = vsel %vm240, %v132, 0
    %v254 = vsel %vm240, %v133, 0
    %v257 = vsel %vm240, %v134, 0
    %v260 = vsel %vm240, %v135, 0
    %v263 = vsel %vm240, %v136, 0
    %265 = vmatprep.subr.mxu0 0.0
    %266 = vmatpush1.msra.mxu0 0.0
    %267 = vmatprep.subr.mxu0 0.0
    %268 = vmatpush1.msra.mxu0 0.0
    %269 = vmatprep.subr.mxu0 0.0
    %270 = vmatpush1.msra.mxu0 0.0
    %271 = vmatprep.subr.mxu0 0.0
    %272 = vmatpush1.msra.mxu0 0.0
    %273 = vmatprep.subr.mxu0 0.0
    %274 = vmatpush1.msra.mxu0 0.0
    %275 = vmatprep.subr.mxu0 0.0
    %276 = vmatpush1.msra.mxu0 0.0
    %277 = vmatprep.subr.mxu0 0.0
    %278 = vmatpush1.msra.mxu0 0.0
    %279 = vmatprep.subr.mxu0 0.0
    %280 = vmatpush1.msra.mxu0 0.0
    %281 = vmatprep.subr.mxu0 0.0
    %282 = vmatpush1.msra.mxu0 0.0
    %283 = vmatprep.subr.mxu0 0.0
    %284 = vmatpush1.msra.mxu0 0.0
    %285 = vmatprep.subr.mxu0 0.0
    %286 = vmatpush1.msra.mxu0 0.0
    %287 = vmatprep.subr.mxu0 0.0
    %288 = vmatpush1.msra.mxu0 0.0
    %289 = vmatprep.subr.mxu0 0.0
    %290 = vmatpush1.msra.mxu0 0.0
    %291 = vmatprep.subr.mxu0 0.0
    %292 = vmatpush1.msra.mxu0 0.0
    %293 = vmatprep.subr.mxu0 0.0
    %294 = vmatpush1.msra.mxu0 0.0
    %295 = vmatprep.subr.mxu0 0.0
    %296 = vmatpush1.msra.mxu0 %v237
    %297 = vmatprep.subr.mxu0 0.0
    %298 = vmatpush2.msra.mxu0 0.0
    %299 = vmatprep.subr.mxu0 0.0
    %300 = vmatpush2.msra.mxu0 0.0
    %301 = vmatprep.subr.mxu0 0.0
    %302 = vmatpush2.msra.mxu0 0.0
    %303 = vmatprep.subr.mxu0 0.0
    %304 = vmatpush2.msra.mxu0 0.0
    %305 = vmatprep.subr.mxu0 0.0
    %306 = vmatpush2.msra.mxu0 0.0
    %307 = vmatprep.subr.mxu0 0.0
    %308 = vmatpush2.msra.mxu0 0.0
    %309 = vmatprep.subr.mxu0 0.0
    %310 = vmatpush2.msra.mxu0 0.0
    %311 = vmatprep.subr.mxu0 0.0
    %312 = vmatpush2.msra.mxu0 0.0
    %313 = vmatprep.subr.mxu0 0.0
    %314 = vmatpush2.msra.mxu0 0.0
    %315 = vmatprep.subr.mxu0 0.0
    %316 = vmatpush2.msra.mxu0 0.0
    %317 = vmatprep.subr.mxu0 0.0
    %318 = vmatpush2.msra.mxu0 0.0
    %319 = vmatprep.subr.mxu0 0.0
    %320 = vmatpush2.msra.mxu0 0.0
    %321 = vmatprep.subr.mxu0 0.0
    %322 = vmatpush2.msra.mxu0 0.0
    %323 = vmatprep.subr.mxu0 0.0
    %324 = vmatpush2.msra.mxu0 0.0
    %325 = vmatprep.subr.mxu0 0.0
    %326 = vmatpush2.msra.mxu0 0.0
    %327 = vmatprep.subr.mxu0 0.0
    %328 = vmatpush2.msra.mxu0 0.0
    %329 = vmatprep.mubr.f32.mxu0 0.0
    %330 = vmatmul.mubr.f32.gmra.mxu0 %v242
    %v331 = vpop.f32.mrf.mxu0
    %v332 = vadd.f32 0.0, %v331
    %v333 = vpop.f32.mrf.mxu0
    %334 = vmatprep.mubr.f32.mxu0 0.0
    %335 = vmatmul.mubr.f32.gmra.mxu0 %v245
    %v336 = vpop.f32.mrf.mxu0
    %v337 = vadd.f32 0.0, %v336
    %v338 = vpop.f32.mrf.mxu0
    %339 = vmatprep.mubr.f32.mxu0 0.0
    %340 = vmatmul.mubr.f32.gmra.mxu0 %v248
    %v341 = vpop.f32.mrf.mxu0
    %v342 = vadd.f32 0.0, %v341
    %v343 = vpop.f32.mrf.mxu0
    %344 = vmatprep.mubr.f32.mxu0 0.0
    %345 = vmatmul.mubr.f32.gmra.mxu0 %v251
    %v346 = vpop.f32.mrf.mxu0
    %v347 = vadd.f32 0.0, %v346
    %v348 = vpop.f32.mrf.mxu0
    %349 = vmatprep.mubr.f32.mxu0 0.0
    %350 = vmatmul.mubr.f32.gmra.mxu0 %v254
    %v351 = vpop.f32.mrf.mxu0
    %v352 = vadd.f32 0.0, %v351
    %v353 = vpop.f32.mrf.mxu0
    %354 = vmatprep.mubr.f32.mxu0 0.0
    %355 = vmatmul.mubr.f32.gmra.mxu0 %v257
    %v356 = vpop.f32.mrf.mxu0
    %v357 = vadd.f32 0.0, %v356
    %v358 = vpop.f32.mrf.mxu0
    %359 = vmatprep.mubr.f32.mxu0 0.0
    %360 = vmatmul.mubr.f32.gmra.mxu0 %v260
    %v361 = vpop.f32.mrf.mxu0
    %v362 = vadd.f32 0.0, %v361
    %v363 = vpop.f32.mrf.mxu0
    %364 = vmatprep.mubr.f32.mxu0 0.0
    %365 = vmatmul.mubr.f32.gmra.mxu0 %v263
    %v366 = vpop.f32.mrf.mxu0
    %v367 = vadd.f32 0.0, %v366
    %v368 = vpop.f32.mrf.mxu0
    %369 = vdwg.mxu0
    %v370 = vmul.f32 %v332, %v137
    %v371 = vmul.f32 %v337, %v138
    %v372 = vmul.f32 %v342, %v139
    %v373 = vmul.f32 %v347, %v140
    %v374 = vmul.f32 %v352, %v141
    %v375 = vmul.f32 %v357, %v142
    %v376 = vmul.f32 %v362, %v143
    %v377 = vmul.f32 %v367, %v144
    %v378 = vsel %vm240, %v370, 0.0
    %379 = vadd.xlane.f32.xlu0 %v378
    %v380 = vpop.xlane.xlu0 %379
    %v381 = vsel %vm240, %v371, 0.0
    %382 = vadd.xlane.f32.xlu0 %v381
    %v383 = vpop.xlane.xlu0 %382
    %v384 = vsel %vm240, %v372, 0.0
    %385 = vadd.xlane.f32.xlu0 %v384
    %v386 = vpop.xlane.xlu0 %385
    %v387 = vsel %vm240, %v373, 0.0
    %388 = vadd.xlane.f32.xlu0 %v387
    %v389 = vpop.xlane.xlu0 %388
    %v390 = vsel %vm240, %v374, 0.0
    %391 = vadd.xlane.f32.xlu0 %v390
    %v392 = vpop.xlane.xlu0 %391
    %v393 = vsel %vm240, %v375, 0.0
    %394 = vadd.xlane.f32.xlu0 %v393
    %v395 = vpop.xlane.xlu0 %394
    %v396 = vsel %vm240, %v376, 0.0
    %397 = vadd.xlane.f32.xlu0 %v396
    %v398 = vpop.xlane.xlu0 %397
    %v399 = vsel %vm240, %v377, 0.0
    %400 = vadd.xlane.f32.xlu0 %v399
    %v401 = vpop.xlane.xlu0 %400
    %v402 = vsub.f32 1.0, %v380
    %v403 = vsub.f32 1.0, %v383
    %v404 = vsub.f32 1.0, %v386
    %v405 = vsub.f32 1.0, %v389
    %v406 = vsub.f32 1.0, %v392
    %v407 = vsub.f32 1.0, %v395
    %v408 = vsub.f32 1.0, %v398
    %v409 = vsub.f32 1.0, %v401
    %v410 = vld [vmem:[%s5] sm:$0xff]
    %411 = vmatprep.subr.mxu0 0.0
    %412 = vmatpush1.msra.mxu0 0.0
    %413 = vmatprep.subr.mxu0 0.0
    %414 = vmatpush1.msra.mxu0 0.0
    %415 = vmatprep.subr.mxu0 0.0
    %416 = vmatpush1.msra.mxu0 0.0
    %417 = vmatprep.subr.mxu0 0.0
    %418 = vmatpush1.msra.mxu0 0.0
    %419 = vmatprep.subr.mxu0 0.0
    %420 = vmatpush1.msra.mxu0 0.0
    %421 = vmatprep.subr.mxu0 0.0
    %422 = vmatpush1.msra.mxu0 0.0
    %423 = vmatprep.subr.mxu0 0.0
    %424 = vmatpush1.msra.mxu0 0.0
    %425 = vmatprep.subr.mxu0 0.0
    %426 = vmatpush1.msra.mxu0 0.0
    %427 = vmatprep.subr.mxu0 0.0
    %428 = vmatpush1.msra.mxu0 0.0
    %429 = vmatprep.subr.mxu0 0.0
    %430 = vmatpush1.msra.mxu0 0.0
    %431 = vmatprep.subr.mxu0 0.0
    %432 = vmatpush1.msra.mxu0 0.0
    %433 = vmatprep.subr.mxu0 0.0
    %434 = vmatpush1.msra.mxu0 0.0
    %435 = vmatprep.subr.mxu0 0.0
    %436 = vmatpush1.msra.mxu0 0.0
    %437 = vmatprep.subr.mxu0 0.0
    %438 = vmatpush1.msra.mxu0 0.0
    %439 = vmatprep.subr.mxu0 0.0
    %440 = vmatpush1.msra.mxu0 0.0
    %441 = vmatprep.subr.mxu0 0.0
    %442 = vmatpush1.msra.mxu0 %v410
    %443 = vmatprep.subr.mxu0 0.0
    %444 = vmatpush2.msra.mxu0 0.0
    %445 = vmatprep.subr.mxu0 0.0
    %446 = vmatpush2.msra.mxu0 0.0
    %447 = vmatprep.subr.mxu0 0.0
    %448 = vmatpush2.msra.mxu0 0.0
    %449 = vmatprep.subr.mxu0 0.0
    %450 = vmatpush2.msra.mxu0 0.0
    %451 = vmatprep.subr.mxu0 0.0
    %452 = vmatpush2.msra.mxu0 0.0
    %453 = vmatprep.subr.mxu0 0.0
    %454 = vmatpush2.msra.mxu0 0.0
    %455 = vmatprep.subr.mxu0 0.0
    %456 = vmatpush2.msra.mxu0 0.0
    %457 = vmatprep.subr.mxu0 0.0
    %458 = vmatpush2.msra.mxu0 0.0
    %459 = vmatprep.subr.mxu0 0.0
    %460 = vmatpush2.msra.mxu0 0.0
    %461 = vmatprep.subr.mxu0 0.0
    %462 = vmatpush2.msra.mxu0 0.0
    %463 = vmatprep.subr.mxu0 0.0
    %464 = vmatpush2.msra.mxu0 0.0
    %465 = vmatprep.subr.mxu0 0.0
    %466 = vmatpush2.msra.mxu0 0.0
    %467 = vmatprep.subr.mxu0 0.0
    %468 = vmatpush2.msra.mxu0 0.0
    %469 = vmatprep.subr.mxu0 0.0
    %470 = vmatpush2.msra.mxu0 0.0
    %471 = vmatprep.subr.mxu0 0.0
    %472 = vmatpush2.msra.mxu0 0.0
    %473 = vmatprep.subr.mxu0 0.0
    %474 = vmatpush2.msra.mxu0 0.0
    %475 = vmatprep.mubr.f32.mxu0 0.0
    %476 = vmatmul.mubr.f32.gmra.mxu0 %v242
    %v477 = vpop.f32.mrf.mxu0
    %v478 = vadd.f32 0.0, %v477
    %v479 = vpop.f32.mrf.mxu0
    %480 = vmatprep.mubr.f32.mxu0 0.0
    %481 = vmatmul.mubr.f32.gmra.mxu0 %v245
    %v482 = vpop.f32.mrf.mxu0
    %v483 = vadd.f32 0.0, %v482
    %v484 = vpop.f32.mrf.mxu0
    %485 = vmatprep.mubr.f32.mxu0 0.0
    %486 = vmatmul.mubr.f32.gmra.mxu0 %v248
    %v487 = vpop.f32.mrf.mxu0
    %v488 = vadd.f32 0.0, %v487
    %v489 = vpop.f32.mrf.mxu0
    %490 = vmatprep.mubr.f32.mxu0 0.0
    %491 = vmatmul.mubr.f32.gmra.mxu0 %v251
    %v492 = vpop.f32.mrf.mxu0
    %v493 = vadd.f32 0.0, %v492
    %v494 = vpop.f32.mrf.mxu0
    %495 = vmatprep.mubr.f32.mxu0 0.0
    %496 = vmatmul.mubr.f32.gmra.mxu0 %v254
    %v497 = vpop.f32.mrf.mxu0
    %v498 = vadd.f32 0.0, %v497
    %v499 = vpop.f32.mrf.mxu0
    %500 = vmatprep.mubr.f32.mxu0 0.0
    %501 = vmatmul.mubr.f32.gmra.mxu0 %v257
    %v502 = vpop.f32.mrf.mxu0
    %v503 = vadd.f32 0.0, %v502
    %v504 = vpop.f32.mrf.mxu0
    %505 = vmatprep.mubr.f32.mxu0 0.0
    %506 = vmatmul.mubr.f32.gmra.mxu0 %v260
    %v507 = vpop.f32.mrf.mxu0
    %v508 = vadd.f32 0.0, %v507
    %v509 = vpop.f32.mrf.mxu0
    %510 = vmatprep.mubr.f32.mxu0 0.0
    %511 = vmatmul.mubr.f32.gmra.mxu0 %v263
    %v512 = vpop.f32.mrf.mxu0
    %v513 = vadd.f32 0.0, %v512
    %v514 = vpop.f32.mrf.mxu0
    %515 = vdwg.mxu0
    %v516 = vld [vmem:[%s7] sm:$0xff]
    %v518 = vsel %vm240, %v137, 0
    %v521 = vsel %vm240, %v138, 0
    %v524 = vsel %vm240, %v139, 0
    %v527 = vsel %vm240, %v140, 0
    %v530 = vsel %vm240, %v141, 0
    %v533 = vsel %vm240, %v142, 0
    %v536 = vsel %vm240, %v143, 0
    %v539 = vsel %vm240, %v144, 0
    %541 = vmatprep.subr.mxu0 0.0
    %542 = vmatpush1.msra.mxu0 0.0
    %543 = vmatprep.subr.mxu0 0.0
    %544 = vmatpush1.msra.mxu0 0.0
    %545 = vmatprep.subr.mxu0 0.0
    %546 = vmatpush1.msra.mxu0 0.0
    %547 = vmatprep.subr.mxu0 0.0
    %548 = vmatpush1.msra.mxu0 0.0
    %549 = vmatprep.subr.mxu0 0.0
    %550 = vmatpush1.msra.mxu0 0.0
    %551 = vmatprep.subr.mxu0 0.0
    %552 = vmatpush1.msra.mxu0 0.0
    %553 = vmatprep.subr.mxu0 0.0
    %554 = vmatpush1.msra.mxu0 0.0
    %555 = vmatprep.subr.mxu0 0.0
    %556 = vmatpush1.msra.mxu0 0.0
    %557 = vmatprep.subr.mxu0 0.0
    %558 = vmatpush1.msra.mxu0 0.0
    %559 = vmatprep.subr.mxu0 0.0
    %560 = vmatpush1.msra.mxu0 0.0
    %561 = vmatprep.subr.mxu0 0.0
    %562 = vmatpush1.msra.mxu0 0.0
    %563 = vmatprep.subr.mxu0 0.0
    %564 = vmatpush1.msra.mxu0 0.0
    %565 = vmatprep.subr.mxu0 0.0
    %566 = vmatpush1.msra.mxu0 0.0
    %567 = vmatprep.subr.mxu0 0.0
    %568 = vmatpush1.msra.mxu0 0.0
    %569 = vmatprep.subr.mxu0 0.0
    %570 = vmatpush1.msra.mxu0 0.0
    %571 = vmatprep.subr.mxu0 0.0
    %572 = vmatpush1.msra.mxu0 %v516
    %573 = vmatprep.subr.mxu0 0.0
    %574 = vmatpush2.msra.mxu0 0.0
    %575 = vmatprep.subr.mxu0 0.0
    %576 = vmatpush2.msra.mxu0 0.0
    %577 = vmatprep.subr.mxu0 0.0
    %578 = vmatpush2.msra.mxu0 0.0
    %579 = vmatprep.subr.mxu0 0.0
    %580 = vmatpush2.msra.mxu0 0.0
    %581 = vmatprep.subr.mxu0 0.0
    %582 = vmatpush2.msra.mxu0 0.0
    %583 = vmatprep.subr.mxu0 0.0
    %584 = vmatpush2.msra.mxu0 0.0
    %585 = vmatprep.subr.mxu0 0.0
    %586 = vmatpush2.msra.mxu0 0.0
    %587 = vmatprep.subr.mxu0 0.0
    %588 = vmatpush2.msra.mxu0 0.0
    %589 = vmatprep.subr.mxu0 0.0
    %590 = vmatpush2.msra.mxu0 0.0
    %591 = vmatprep.subr.mxu0 0.0
    %592 = vmatpush2.msra.mxu0 0.0
    %593 = vmatprep.subr.mxu0 0.0
    %594 = vmatpush2.msra.mxu0 0.0
    %595 = vmatprep.subr.mxu0 0.0
    %596 = vmatpush2.msra.mxu0 0.0
    %597 = vmatprep.subr.mxu0 0.0
    %598 = vmatpush2.msra.mxu0 0.0
    %599 = vmatprep.subr.mxu0 0.0
    %600 = vmatpush2.msra.mxu0 0.0
    %601 = vmatprep.subr.mxu0 0.0
    %602 = vmatpush2.msra.mxu0 0.0
    %603 = vmatprep.subr.mxu0 0.0
    %604 = vmatpush2.msra.mxu0 0.0
    %605 = vmatprep.mubr.f32.mxu0 0.0
    %606 = vmatmul.mubr.f32.gmra.mxu0 %v518
    %v607 = vpop.f32.mrf.mxu0
    %v608 = vadd.f32 0.0, %v607
    %v609 = vpop.f32.mrf.mxu0
    %610 = vmatprep.mubr.f32.mxu0 0.0
    %611 = vmatmul.mubr.f32.gmra.mxu0 %v521
    %v612 = vpop.f32.mrf.mxu0
    %v613 = vadd.f32 0.0, %v612
    %v614 = vpop.f32.mrf.mxu0
    %615 = vmatprep.mubr.f32.mxu0 0.0
    %616 = vmatmul.mubr.f32.gmra.mxu0 %v524
    %v617 = vpop.f32.mrf.mxu0
    %v618 = vadd.f32 0.0, %v617
    %v619 = vpop.f32.mrf.mxu0
    %620 = vmatprep.mubr.f32.mxu0 0.0
    %621 = vmatmul.mubr.f32.gmra.mxu0 %v527
    %v622 = vpop.f32.mrf.mxu0
    %v623 = vadd.f32 0.0, %v622
    %v624 = vpop.f32.mrf.mxu0
    %625 = vmatprep.mubr.f32.mxu0 0.0
    %626 = vmatmul.mubr.f32.gmra.mxu0 %v530
    %v627 = vpop.f32.mrf.mxu0
    %v628 = vadd.f32 0.0, %v627
    %v629 = vpop.f32.mrf.mxu0
    %630 = vmatprep.mubr.f32.mxu0 0.0
    %631 = vmatmul.mubr.f32.gmra.mxu0 %v533
    %v632 = vpop.f32.mrf.mxu0
    %v633 = vadd.f32 0.0, %v632
    %v634 = vpop.f32.mrf.mxu0
    %635 = vmatprep.mubr.f32.mxu0 0.0
    %636 = vmatmul.mubr.f32.gmra.mxu0 %v536
    %v637 = vpop.f32.mrf.mxu0
    %v638 = vadd.f32 0.0, %v637
    %v639 = vpop.f32.mrf.mxu0
    %640 = vmatprep.mubr.f32.mxu0 0.0
    %641 = vmatmul.mubr.f32.gmra.mxu0 %v539
    %v642 = vpop.f32.mrf.mxu0
    %v643 = vadd.f32 0.0, %v642
    %v644 = vpop.f32.mrf.mxu0
    %645 = vdwg.mxu0
    %v646 = vadd.f32 %v478, %v608
    %v647 = vadd.f32 %v483, %v613
    %v648 = vadd.f32 %v488, %v618
    %v649 = vadd.f32 %v493, %v623
    %v650 = vadd.f32 %v498, %v628
    %v651 = vadd.f32 %v503, %v633
    %v652 = vadd.f32 %v508, %v638
    %v653 = vadd.f32 %v513, %v643
    %v654 = vrcp.pop %v646
    %v655 = vmul.f32 2.0, %v654
    %v656 = vrcp.pop %v647
    %v657 = vmul.f32 2.0, %v656
    %v658 = vrcp.pop %v648
    %v659 = vmul.f32 2.0, %v658
    %v660 = vrcp.pop %v649
    %v661 = vmul.f32 2.0, %v660
    %v662 = vrcp.pop %v650
    %v663 = vmul.f32 2.0, %v662
    %v664 = vrcp.pop %v651
    %v665 = vmul.f32 2.0, %v664
    %v666 = vrcp.pop %v652
    %v667 = vmul.f32 2.0, %v666
    %v668 = vrcp.pop %v653
    %v669 = vmul.f32 2.0, %v668
    %v670 = vsub.f32 %v478, %v608
    %v671 = vsub.f32 %v483, %v613
    %v672 = vsub.f32 %v488, %v618
    %v673 = vsub.f32 %v493, %v623
    %v674 = vsub.f32 %v498, %v628
    %v675 = vsub.f32 %v503, %v633
    %v676 = vsub.f32 %v508, %v638
    %v677 = vsub.f32 %v513, %v643
    %686 = vrot.lane.b32.xlu0 %v655, 126
    %v687 = vpop.permute.xlu0 %686
    %688 = vrot.lane.b32.xlu0 %v657, 126
    %v689 = vpop.permute.xlu0 %688
    %690 = vrot.lane.b32.xlu0 %v659, 126
    %v691 = vpop.permute.xlu0 %690
    %692 = vrot.lane.b32.xlu0 %v661, 126
    %v693 = vpop.permute.xlu0 %692
    %694 = vrot.lane.b32.xlu0 %v663, 126
    %v695 = vpop.permute.xlu0 %694
    %696 = vrot.lane.b32.xlu0 %v665, 126
    %v697 = vpop.permute.xlu0 %696
    %698 = vrot.lane.b32.xlu0 %v667, 126
    %v699 = vpop.permute.xlu0 %698
    %700 = vrot.lane.b32.xlu0 %v669, 126
    %v701 = vpop.permute.xlu0 %700
    %v710 = vmul.f32 %v670, %v687
    %v711 = vmul.f32 %v671, %v689
    %v712 = vmul.f32 %v672, %v691
    %v713 = vmul.f32 %v673, %v693
    %v714 = vmul.f32 %v674, %v695
    %v715 = vmul.f32 %v675, %v697
    %v716 = vmul.f32 %v676, %v699
    %v717 = vmul.f32 %v677, %v701
    %718 = vrot.lane.b32.xlu0 %v655, 127
    %v719 = vpop.permute.xlu0 %718
    %720 = vrot.lane.b32.xlu0 %v657, 127
    %v721 = vpop.permute.xlu0 %720
    %722 = vrot.lane.b32.xlu0 %v659, 127
    %v723 = vpop.permute.xlu0 %722
    %724 = vrot.lane.b32.xlu0 %v661, 127
    %v725 = vpop.permute.xlu0 %724
    %726 = vrot.lane.b32.xlu0 %v663, 127
    %v727 = vpop.permute.xlu0 %726
    %728 = vrot.lane.b32.xlu0 %v665, 127
    %v729 = vpop.permute.xlu0 %728
    %730 = vrot.lane.b32.xlu0 %v667, 127
    %v731 = vpop.permute.xlu0 %730
    %732 = vrot.lane.b32.xlu0 %v669, 127
    %v733 = vpop.permute.xlu0 %732
    %v742 = vmul.f32 %v670, %v719
    %v743 = vmul.f32 %v671, %v721
    %v744 = vmul.f32 %v672, %v723
    %v745 = vmul.f32 %v673, %v725
    %v746 = vmul.f32 %v674, %v727
    %v747 = vmul.f32 %v675, %v729
    %v748 = vmul.f32 %v676, %v731
    %v749 = vmul.f32 %v677, %v733
    %v750 = vrcp.pop %v608
    %v751 = vmul.f32 %v478, %v750
    %v752 = vrcp.pop %v613
    %v753 = vmul.f32 %v483, %v752
    %v754 = vrcp.pop %v618
    %v755 = vmul.f32 %v488, %v754
    %v756 = vrcp.pop %v623
    %v757 = vmul.f32 %v493, %v756
    %v758 = vrcp.pop %v628
    %v759 = vmul.f32 %v498, %v758
    %v760 = vrcp.pop %v633
    %v761 = vmul.f32 %v503, %v760
    %v762 = vrcp.pop %v638
    %v763 = vmul.f32 %v508, %v762
    %v764 = vrcp.pop %v643
    %v765 = vmul.f32 %v513, %v764
    %v766 = vlog2.pop %v751
    %v767 = vmul.f32 %v766, 0.6931472
    %v768 = vlog2.pop %v753
    %v769 = vmul.f32 %v768, 0.6931472
    %v770 = vlog2.pop %v755
    %v771 = vmul.f32 %v770, 0.6931472
    %v772 = vlog2.pop %v757
    %v773 = vmul.f32 %v772, 0.6931472
    %v774 = vlog2.pop %v759
    %v775 = vmul.f32 %v774, 0.6931472
    %v776 = vlog2.pop %v761
    %v777 = vmul.f32 %v776, 0.6931472
    %v778 = vlog2.pop %v763
    %v779 = vmul.f32 %v778, 0.6931472
    %v780 = vlog2.pop %v765
    %v781 = vmul.f32 %v780, 0.6931472
    %v782 = vld [vmem:[%s21] sm:$0x3f]
    %v783 = vld [vmem:[%s23] sm:$0x1]
    %785 = vset.pattern.permute.xlu0 0
    %786 = vperm.xlu0 %785, %v710
    %v787 = vpop.permute.xlu0 %786
    %790 = vset.pattern.permute.xlu0 0
    %791 = vperm.xlu0 %790, %v711
    %v792 = vpop.permute.xlu0 %791
    %795 = vset.pattern.permute.xlu0 0
    %796 = vperm.xlu0 %795, %v712
    %v797 = vpop.permute.xlu0 %796
    %800 = vset.pattern.permute.xlu0 0
    %801 = vperm.xlu0 %800, %v713
    %v802 = vpop.permute.xlu0 %801
    %805 = vset.pattern.permute.xlu0 0
    %806 = vperm.xlu0 %805, %v714
    %v807 = vpop.permute.xlu0 %806
    %810 = vset.pattern.permute.xlu0 0
    %811 = vperm.xlu0 %810, %v715
    %v812 = vpop.permute.xlu0 %811
    %815 = vset.pattern.permute.xlu0 0
    %816 = vperm.xlu0 %815, %v716
    %v817 = vpop.permute.xlu0 %816
    %820 = vset.pattern.permute.xlu0 0
    %821 = vperm.xlu0 %820, %v717
    %v822 = vpop.permute.xlu0 %821
    %v824 = vlaneseq
    %v825 = vshrl.u32 %v824, 7
    %v826 = vsub.s32 0, %v825
    %v827 = vrot.slane %v782, %v826
    %v828 = vmul.f32 %v787, %v827
    %v829 = vmul.f32 %v792, %v827
    %v830 = vmul.f32 %v797, %v827
    %v831 = vmul.f32 %v802, %v827
    %v832 = vmul.f32 %v807, %v827
    %v833 = vmul.f32 %v812, %v827
    %v834 = vmul.f32 %v817, %v827
    %v835 = vmul.f32 %v822, %v827
    %v837 = vlaneseq
    %v838 = vshrl.u32 %v837, 7
    %v839 = vsub.s32 0, %v838
    %v840 = vrot.slane %v783, %v839
    %v842 = vadd.f32 %v840, %v828
    %v843 = vadd.f32 %v840, %v829
    %v844 = vadd.f32 %v840, %v830
    %v845 = vadd.f32 %v840, %v831
    %v846 = vadd.f32 %v840, %v832
    %v847 = vadd.f32 %v840, %v833
    %v848 = vadd.f32 %v840, %v834
    %v849 = vadd.f32 %v840, %v835
    %851 = vset.pattern.permute.xlu0 1
    %852 = vperm.xlu0 %851, %v742
    %v853 = vpop.permute.xlu0 %852
    %856 = vset.pattern.permute.xlu0 1
    %857 = vperm.xlu0 %856, %v743
    %v858 = vpop.permute.xlu0 %857
    %861 = vset.pattern.permute.xlu0 1
    %862 = vperm.xlu0 %861, %v744
    %v863 = vpop.permute.xlu0 %862
    %866 = vset.pattern.permute.xlu0 1
    %867 = vperm.xlu0 %866, %v745
    %v868 = vpop.permute.xlu0 %867
    %871 = vset.pattern.permute.xlu0 1
    %872 = vperm.xlu0 %871, %v746
    %v873 = vpop.permute.xlu0 %872
    %876 = vset.pattern.permute.xlu0 1
    %877 = vperm.xlu0 %876, %v747
    %v878 = vpop.permute.xlu0 %877
    %881 = vset.pattern.permute.xlu0 1
    %882 = vperm.xlu0 %881, %v748
    %v883 = vpop.permute.xlu0 %882
    %886 = vset.pattern.permute.xlu0 1
    %887 = vperm.xlu0 %886, %v749
    %v888 = vpop.permute.xlu0 %887
    %v890 = vlaneseq
    %v891 = vshrl.u32 %v890, 7
    %v892 = vsub.s32 1, %v891
    %v893 = vrot.slane %v782, %v892
    %v894 = vmul.f32 %v853, %v893
    %v895 = vmul.f32 %v858, %v893
    %v896 = vmul.f32 %v863, %v893
    %v897 = vmul.f32 %v868, %v893
    %v898 = vmul.f32 %v873, %v893
    %v899 = vmul.f32 %v878, %v893
    %v900 = vmul.f32 %v883, %v893
    %v901 = vmul.f32 %v888, %v893
    %v902 = vadd.f32 %v842, %v894
    %v903 = vadd.f32 %v843, %v895
    %v904 = vadd.f32 %v844, %v896
    %v905 = vadd.f32 %v845, %v897
    %v906 = vadd.f32 %v846, %v898
    %v907 = vadd.f32 %v847, %v899
    %v908 = vadd.f32 %v848, %v900
    %v909 = vadd.f32 %v849, %v901
    %911 = vset.pattern.permute.xlu0 2
    %912 = vperm.xlu0 %911, %v767
    %v913 = vpop.permute.xlu0 %912
    %916 = vset.pattern.permute.xlu0 2
    %917 = vperm.xlu0 %916, %v769
    %v918 = vpop.permute.xlu0 %917
    %921 = vset.pattern.permute.xlu0 2
    %922 = vperm.xlu0 %921, %v771
    %v923 = vpop.permute.xlu0 %922
    %926 = vset.pattern.permute.xlu0 2
    %927 = vperm.xlu0 %926, %v773
    %v928 = vpop.permute.xlu0 %927
    %931 = vset.pattern.permute.xlu0 2
    %932 = vperm.xlu0 %931, %v775
    %v933 = vpop.permute.xlu0 %932
    %936 = vset.pattern.permute.xlu0 2
    %937 = vperm.xlu0 %936, %v777
    %v938 = vpop.permute.xlu0 %937
    %941 = vset.pattern.permute.xlu0 2
    %942 = vperm.xlu0 %941, %v779
    %v943 = vpop.permute.xlu0 %942
    %946 = vset.pattern.permute.xlu0 2
    %947 = vperm.xlu0 %946, %v781
    %v948 = vpop.permute.xlu0 %947
    %v950 = vlaneseq
    %v951 = vshrl.u32 %v950, 7
    %v952 = vsub.s32 2, %v951
    %v953 = vrot.slane %v782, %v952
    %v954 = vmul.f32 %v913, %v953
    %v955 = vmul.f32 %v918, %v953
    %v956 = vmul.f32 %v923, %v953
    %v957 = vmul.f32 %v928, %v953
    %v958 = vmul.f32 %v933, %v953
    %v959 = vmul.f32 %v938, %v953
    %v960 = vmul.f32 %v943, %v953
    %v961 = vmul.f32 %v948, %v953
    %v962 = vadd.f32 %v902, %v954
    %v963 = vadd.f32 %v903, %v955
    %v964 = vadd.f32 %v904, %v956
    %v965 = vadd.f32 %v905, %v957
    %v966 = vadd.f32 %v906, %v958
    %v967 = vadd.f32 %v907, %v959
    %v968 = vadd.f32 %v908, %v960
    %v969 = vadd.f32 %v909, %v961
    %970 = vset.pattern.permute.xlu0 3
    %971 = vperm.xlu0 %970, %v767
    %v972 = vpop.permute.xlu0 %971
    %974 = vset.pattern.permute.xlu0 3
    %975 = vperm.xlu0 %974, %v769
    %v976 = vpop.permute.xlu0 %975
    %978 = vset.pattern.permute.xlu0 3
    %979 = vperm.xlu0 %978, %v771
    %v980 = vpop.permute.xlu0 %979
    %982 = vset.pattern.permute.xlu0 3
    %983 = vperm.xlu0 %982, %v773
    %v984 = vpop.permute.xlu0 %983
    %986 = vset.pattern.permute.xlu0 3
    %987 = vperm.xlu0 %986, %v775
    %v988 = vpop.permute.xlu0 %987
    %990 = vset.pattern.permute.xlu0 3
    %991 = vperm.xlu0 %990, %v777
    %v992 = vpop.permute.xlu0 %991
    %994 = vset.pattern.permute.xlu0 3
    %995 = vperm.xlu0 %994, %v779
    %v996 = vpop.permute.xlu0 %995
    %998 = vset.pattern.permute.xlu0 3
    %999 = vperm.xlu0 %998, %v781
    %v1000 = vpop.permute.xlu0 %999
    %v1002 = vlaneseq
    %v1003 = vshrl.u32 %v1002, 7
    %v1004 = vsub.s32 3, %v1003
    %v1005 = vrot.slane %v782, %v1004
    %v1006 = vmul.f32 %v972, %v1005
    %v1007 = vmul.f32 %v976, %v1005
    %v1008 = vmul.f32 %v980, %v1005
    %v1009 = vmul.f32 %v984, %v1005
    %v1010 = vmul.f32 %v988, %v1005
    %v1011 = vmul.f32 %v992, %v1005
    %v1012 = vmul.f32 %v996, %v1005
    %v1013 = vmul.f32 %v1000, %v1005
    %v1014 = vadd.f32 %v962, %v1006
    %v1015 = vadd.f32 %v963, %v1007
    %v1016 = vadd.f32 %v964, %v1008
    %v1017 = vadd.f32 %v965, %v1009
    %v1018 = vadd.f32 %v966, %v1010
    %v1019 = vadd.f32 %v967, %v1011
    %v1020 = vadd.f32 %v968, %v1012
    %v1021 = vadd.f32 %v969, %v1013
    %1023 = vset.pattern.permute.xlu0 4
    %1024 = vperm.xlu0 %1023, %v670
    %v1025 = vpop.permute.xlu0 %1024
    %1028 = vset.pattern.permute.xlu0 4
    %1029 = vperm.xlu0 %1028, %v671
    %v1030 = vpop.permute.xlu0 %1029
    %1033 = vset.pattern.permute.xlu0 4
    %1034 = vperm.xlu0 %1033, %v672
    %v1035 = vpop.permute.xlu0 %1034
    %1038 = vset.pattern.permute.xlu0 4
    %1039 = vperm.xlu0 %1038, %v673
    %v1040 = vpop.permute.xlu0 %1039
    %1043 = vset.pattern.permute.xlu0 4
    %1044 = vperm.xlu0 %1043, %v674
    %v1045 = vpop.permute.xlu0 %1044
    %1048 = vset.pattern.permute.xlu0 4
    %1049 = vperm.xlu0 %1048, %v675
    %v1050 = vpop.permute.xlu0 %1049
    %1053 = vset.pattern.permute.xlu0 4
    %1054 = vperm.xlu0 %1053, %v676
    %v1055 = vpop.permute.xlu0 %1054
    %1058 = vset.pattern.permute.xlu0 4
    %1059 = vperm.xlu0 %1058, %v677
    %v1060 = vpop.permute.xlu0 %1059
    %v1062 = vlaneseq
    %v1063 = vshrl.u32 %v1062, 7
    %v1064 = vsub.s32 4, %v1063
    %v1065 = vrot.slane %v782, %v1064
    %v1066 = vmul.f32 %v1025, %v1065
    %v1067 = vmul.f32 %v1030, %v1065
    %v1068 = vmul.f32 %v1035, %v1065
    %v1069 = vmul.f32 %v1040, %v1065
    %v1070 = vmul.f32 %v1045, %v1065
    %v1071 = vmul.f32 %v1050, %v1065
    %v1072 = vmul.f32 %v1055, %v1065
    %v1073 = vmul.f32 %v1060, %v1065
    %v1074 = vadd.f32 %v1014, %v1066
    %v1075 = vadd.f32 %v1015, %v1067
    %v1076 = vadd.f32 %v1016, %v1068
    %v1077 = vadd.f32 %v1017, %v1069
    %v1078 = vadd.f32 %v1018, %v1070
    %v1079 = vadd.f32 %v1019, %v1071
    %v1080 = vadd.f32 %v1020, %v1072
    %v1081 = vadd.f32 %v1021, %v1073
    %v1082 = vlaneseq
    %v1083 = vshrl.u32 %v1082, 7
    %v1084 = vsub.s32 5, %v1083
    %v1085 = vrot.slane %v782, %v1084
    %v1086 = vmul.f32 %v402, %v1085
    %v1087 = vmul.f32 %v403, %v1085
    %v1088 = vmul.f32 %v404, %v1085
    %v1089 = vmul.f32 %v405, %v1085
    %v1090 = vmul.f32 %v406, %v1085
    %v1091 = vmul.f32 %v407, %v1085
    %v1092 = vmul.f32 %v408, %v1085
    %v1093 = vmul.f32 %v409, %v1085
    %v1094 = vadd.f32 %v1074, %v1086
    %v1095 = vadd.f32 %v1075, %v1087
    %v1096 = vadd.f32 %v1076, %v1088
    %v1097 = vadd.f32 %v1077, %v1089
    %v1098 = vadd.f32 %v1078, %v1090
    %v1099 = vadd.f32 %v1079, %v1091
    %v1100 = vadd.f32 %v1080, %v1092
    %v1101 = vadd.f32 %v1081, %v1093
    %v1102 = vmax.f32 %v1094, 0.0
    %v1103 = vmax.f32 %v1095, 0.0
    %v1104 = vmax.f32 %v1096, 0.0
    %v1105 = vmax.f32 %v1097, 0.0
    %v1106 = vmax.f32 %v1098, 0.0
    %v1107 = vmax.f32 %v1099, 0.0
    %v1108 = vmax.f32 %v1100, 0.0
    %v1109 = vmax.f32 %v1101, 0.0
    %v1110 = vld [vmem:[%s25] sm:$0xff]
    %v1111 = vld [vmem:[%s25 + $0x8] sm:$0xff]
    %v1112 = vld [vmem:[%s27] sm:$0x1]
    %v1114 = vlaneseq
    %v1115 = vshrl.u32 %v1114, 7
    %v1116 = vsub.s32 0, %v1115
    %v1117 = vrot.slane %v1112, %v1116
    %vm1119 = vcmask 130048
    %v1121 = vsel %vm1119, %v1102, 0
    %v1124 = vsel %vm1119, %v1103, 0
    %v1127 = vsel %vm1119, %v1104, 0
    %v1130 = vsel %vm1119, %v1105, 0
    %v1133 = vsel %vm1119, %v1106, 0
    %v1136 = vsel %vm1119, %v1107, 0
    %v1139 = vsel %vm1119, %v1108, 0
    %v1142 = vsel %vm1119, %v1109, 0
    %1144 = vmatprep.subr.mxu0 0.0
    %1145 = vmatpush1.msra.mxu0 0.0
    %1146 = vmatprep.subr.mxu0 0.0
    %1147 = vmatpush1.msra.mxu0 0.0
    %1148 = vmatprep.subr.mxu0 0.0
    %1149 = vmatpush1.msra.mxu0 0.0
    %1150 = vmatprep.subr.mxu0 0.0
    %1151 = vmatpush1.msra.mxu0 0.0
    %1152 = vmatprep.subr.mxu0 0.0
    %1153 = vmatpush1.msra.mxu0 0.0
    %1154 = vmatprep.subr.mxu0 0.0
    %1155 = vmatpush1.msra.mxu0 0.0
    %1156 = vmatprep.subr.mxu0 0.0
    %1157 = vmatpush1.msra.mxu0 0.0
    %1158 = vmatprep.subr.mxu0 0.0
    %1159 = vmatpush1.msra.mxu0 0.0
    %1160 = vmatprep.subr.mxu0 0.0
    %1161 = vmatpush1.msra.mxu0 0.0
    %1162 = vmatprep.subr.mxu0 0.0
    %1163 = vmatpush1.msra.mxu0 0.0
    %1164 = vmatprep.subr.mxu0 0.0
    %1165 = vmatpush1.msra.mxu0 0.0
    %1166 = vmatprep.subr.mxu0 0.0
    %1167 = vmatpush1.msra.mxu0 0.0
    %1168 = vmatprep.subr.mxu0 0.0
    %1169 = vmatpush1.msra.mxu0 0.0
    %1170 = vmatprep.subr.mxu0 0.0
    %1171 = vmatpush1.msra.mxu0 0.0
    %1172 = vmatprep.subr.mxu0 0.0
    %1173 = vmatpush1.msra.mxu0 %v1111
    %1174 = vmatprep.subr.mxu0 0.0
    %1175 = vmatpush1.msra.mxu0 %v1110
    %1176 = vmatprep.subr.mxu0 0.0
    %1177 = vmatpush2.msra.mxu0 0.0
    %1178 = vmatprep.subr.mxu0 0.0
    %1179 = vmatpush2.msra.mxu0 0.0
    %1180 = vmatprep.subr.mxu0 0.0
    %1181 = vmatpush2.msra.mxu0 0.0
    %1182 = vmatprep.subr.mxu0 0.0
    %1183 = vmatpush2.msra.mxu0 0.0
    %1184 = vmatprep.subr.mxu0 0.0
    %1185 = vmatpush2.msra.mxu0 0.0
    %1186 = vmatprep.subr.mxu0 0.0
    %1187 = vmatpush2.msra.mxu0 0.0
    %1188 = vmatprep.subr.mxu0 0.0
    %1189 = vmatpush2.msra.mxu0 0.0
    %1190 = vmatprep.subr.mxu0 0.0
    %1191 = vmatpush2.msra.mxu0 0.0
    %1192 = vmatprep.subr.mxu0 0.0
    %1193 = vmatpush2.msra.mxu0 0.0
    %1194 = vmatprep.subr.mxu0 0.0
    %1195 = vmatpush2.msra.mxu0 0.0
    %1196 = vmatprep.subr.mxu0 0.0
    %1197 = vmatpush2.msra.mxu0 0.0
    %1198 = vmatprep.subr.mxu0 0.0
    %1199 = vmatpush2.msra.mxu0 0.0
    %1200 = vmatprep.subr.mxu0 0.0
    %1201 = vmatpush2.msra.mxu0 0.0
    %1202 = vmatprep.subr.mxu0 0.0
    %1203 = vmatpush2.msra.mxu0 0.0
    %1204 = vmatprep.subr.mxu0 0.0
    %1205 = vmatpush2.msra.mxu0 0.0
    %1206 = vmatprep.subr.mxu0 0.0
    %1207 = vmatpush2.msra.mxu0 0.0
    %1208 = vmatprep.mubr.f32.mxu0 0.0
    %1209 = vmatmul.mubr.f32.gmra.mxu0 %v1121
    %v1210 = vpop.f32.mrf.mxu0
    %v1211 = vadd.f32 %v1117, %v1210
    %v1212 = vpop.f32.mrf.mxu0
    %1213 = vmatprep.mubr.f32.mxu0 0.0
    %1214 = vmatmul.mubr.f32.gmra.mxu0 %v1124
    %v1215 = vpop.f32.mrf.mxu0
    %v1216 = vadd.f32 %v1117, %v1215
    %v1217 = vpop.f32.mrf.mxu0
    %1218 = vmatprep.mubr.f32.mxu0 0.0
    %1219 = vmatmul.mubr.f32.gmra.mxu0 %v1127
    %v1220 = vpop.f32.mrf.mxu0
    %v1221 = vadd.f32 %v1117, %v1220
    %v1222 = vpop.f32.mrf.mxu0
    %1223 = vmatprep.mubr.f32.mxu0 0.0
    %1224 = vmatmul.mubr.f32.gmra.mxu0 %v1130
    %v1225 = vpop.f32.mrf.mxu0
    %v1226 = vadd.f32 %v1117, %v1225
    %v1227 = vpop.f32.mrf.mxu0
    %1228 = vmatprep.mubr.f32.mxu0 0.0
    %1229 = vmatmul.mubr.f32.gmra.mxu0 %v1133
    %v1230 = vpop.f32.mrf.mxu0
    %v1231 = vadd.f32 %v1117, %v1230
    %v1232 = vpop.f32.mrf.mxu0
    %1233 = vmatprep.mubr.f32.mxu0 0.0
    %1234 = vmatmul.mubr.f32.gmra.mxu0 %v1136
    %v1235 = vpop.f32.mrf.mxu0
    %v1236 = vadd.f32 %v1117, %v1235
    %v1237 = vpop.f32.mrf.mxu0
    %1238 = vmatprep.mubr.f32.mxu0 0.0
    %1239 = vmatmul.mubr.f32.gmra.mxu0 %v1139
    %v1240 = vpop.f32.mrf.mxu0
    %v1241 = vadd.f32 %v1117, %v1240
    %v1242 = vpop.f32.mrf.mxu0
    %1243 = vmatprep.mubr.f32.mxu0 0.0
    %1244 = vmatmul.mubr.f32.gmra.mxu0 %v1142
    %v1245 = vpop.f32.mrf.mxu0
    %v1246 = vadd.f32 %v1117, %v1245
    %v1247 = vpop.f32.mrf.mxu0
    %1248 = vdwg.mxu0
    %v1249 = vmax.f32 %v1211, 0.0
    %v1250 = vmax.f32 %v1216, 0.0
    %v1251 = vmax.f32 %v1221, 0.0
    %v1252 = vmax.f32 %v1226, 0.0
    %v1253 = vmax.f32 %v1231, 0.0
    %v1254 = vmax.f32 %v1236, 0.0
    %v1255 = vmax.f32 %v1241, 0.0
    %v1256 = vmax.f32 %v1246, 0.0
    %v1257 = vld [vmem:[%s17] sm:$0xff]
    %v1258 = vld [vmem:[%s17 + $0x8] sm:$0xff]
    %v1259 = vld [vmem:[%s17 + $0x10] sm:$0xff]
    %v1260 = vld [vmem:[%s17 + $0x18] sm:$0xff]
    %v1261 = vld [vmem:[%s19] sm:$0x1]
    %v1263 = vlaneseq
    %v1264 = vshrl.u32 %v1263, 7
    %v1265 = vsub.s32 0, %v1264
    %v1266 = vrot.slane %v1261, %v1265
    %v1269 = vsel %vm150, %v147, 0
    %1271 = vmatprep.subr.mxu0 0.0
    %1272 = vmatpush1.msra.mxu0 0.0
    %1273 = vmatprep.subr.mxu0 0.0
    %1274 = vmatpush1.msra.mxu0 0.0
    %1275 = vmatprep.subr.mxu0 0.0
    %1276 = vmatpush1.msra.mxu0 0.0
    %1277 = vmatprep.subr.mxu0 0.0
    %1278 = vmatpush1.msra.mxu0 0.0
    %1279 = vmatprep.subr.mxu0 0.0
    %1280 = vmatpush1.msra.mxu0 0.0
    %1281 = vmatprep.subr.mxu0 0.0
    %1282 = vmatpush1.msra.mxu0 0.0
    %1283 = vmatprep.subr.mxu0 0.0
    %1284 = vmatpush1.msra.mxu0 0.0
    %1285 = vmatprep.subr.mxu0 0.0
    %1286 = vmatpush1.msra.mxu0 0.0
    %1287 = vmatprep.subr.mxu0 0.0
    %1288 = vmatpush1.msra.mxu0 0.0
    %1289 = vmatprep.subr.mxu0 0.0
    %1290 = vmatpush1.msra.mxu0 0.0
    %1291 = vmatprep.subr.mxu0 0.0
    %1292 = vmatpush1.msra.mxu0 0.0
    %1293 = vmatprep.subr.mxu0 0.0
    %1294 = vmatpush1.msra.mxu0 0.0
    %1295 = vmatprep.subr.mxu0 0.0
    %1296 = vmatpush1.msra.mxu0 %v1260
    %1297 = vmatprep.subr.mxu0 0.0
    %1298 = vmatpush1.msra.mxu0 %v1259
    %1299 = vmatprep.subr.mxu0 0.0
    %1300 = vmatpush1.msra.mxu0 %v1258
    %1301 = vmatprep.subr.mxu0 0.0
    %1302 = vmatpush1.msra.mxu0 %v1257
    %1303 = vmatprep.subr.mxu0 0.0
    %1304 = vmatpush2.msra.mxu0 0.0
    %1305 = vmatprep.subr.mxu0 0.0
    %1306 = vmatpush2.msra.mxu0 0.0
    %1307 = vmatprep.subr.mxu0 0.0
    %1308 = vmatpush2.msra.mxu0 0.0
    %1309 = vmatprep.subr.mxu0 0.0
    %1310 = vmatpush2.msra.mxu0 0.0
    %1311 = vmatprep.subr.mxu0 0.0
    %1312 = vmatpush2.msra.mxu0 0.0
    %1313 = vmatprep.subr.mxu0 0.0
    %1314 = vmatpush2.msra.mxu0 0.0
    %1315 = vmatprep.subr.mxu0 0.0
    %1316 = vmatpush2.msra.mxu0 0.0
    %1317 = vmatprep.subr.mxu0 0.0
    %1318 = vmatpush2.msra.mxu0 0.0
    %1319 = vmatprep.subr.mxu0 0.0
    %1320 = vmatpush2.msra.mxu0 0.0
    %1321 = vmatprep.subr.mxu0 0.0
    %1322 = vmatpush2.msra.mxu0 0.0
    %1323 = vmatprep.subr.mxu0 0.0
    %1324 = vmatpush2.msra.mxu0 0.0
    %1325 = vmatprep.subr.mxu0 0.0
    %1326 = vmatpush2.msra.mxu0 0.0
    %1327 = vmatprep.subr.mxu0 0.0
    %1328 = vmatpush2.msra.mxu0 0.0
    %1329 = vmatprep.subr.mxu0 0.0
    %1330 = vmatpush2.msra.mxu0 0.0
    %1331 = vmatprep.subr.mxu0 0.0
    %1332 = vmatpush2.msra.mxu0 0.0
    %1333 = vmatprep.subr.mxu0 0.0
    %1334 = vmatpush2.msra.mxu0 0.0
    %1335 = vmatprep.mubr.f32.mxu0 0.0
    %1336 = vmatmul.mubr.f32.gmra.mxu0 %v1269
    %v1337 = vpop.f32.mrf.mxu0
    %v1338 = vadd.f32 %v1266, %v1337
    %v1339 = vpop.f32.mrf.mxu0
    %1340 = vdwg.mxu0
    %v1341 = vmax.f32 %v1338, 0.0
    %v1343 = vsel %vm150, %v148, 0
    %1345 = vmatprep.subr.mxu0 0.0
    %1346 = vmatpush1.msra.mxu0 0.0
    %1347 = vmatprep.subr.mxu0 0.0
    %1348 = vmatpush1.msra.mxu0 0.0
    %1349 = vmatprep.subr.mxu0 0.0
    %1350 = vmatpush1.msra.mxu0 0.0
    %1351 = vmatprep.subr.mxu0 0.0
    %1352 = vmatpush1.msra.mxu0 0.0
    %1353 = vmatprep.subr.mxu0 0.0
    %1354 = vmatpush1.msra.mxu0 0.0
    %1355 = vmatprep.subr.mxu0 0.0
    %1356 = vmatpush1.msra.mxu0 0.0
    %1357 = vmatprep.subr.mxu0 0.0
    %1358 = vmatpush1.msra.mxu0 0.0
    %1359 = vmatprep.subr.mxu0 0.0
    %1360 = vmatpush1.msra.mxu0 0.0
    %1361 = vmatprep.subr.mxu0 0.0
    %1362 = vmatpush1.msra.mxu0 0.0
    %1363 = vmatprep.subr.mxu0 0.0
    %1364 = vmatpush1.msra.mxu0 0.0
    %1365 = vmatprep.subr.mxu0 0.0
    %1366 = vmatpush1.msra.mxu0 0.0
    %1367 = vmatprep.subr.mxu0 0.0
    %1368 = vmatpush1.msra.mxu0 0.0
    %1369 = vmatprep.subr.mxu0 0.0
    %1370 = vmatpush1.msra.mxu0 %v1260
    %1371 = vmatprep.subr.mxu0 0.0
    %1372 = vmatpush1.msra.mxu0 %v1259
    %1373 = vmatprep.subr.mxu0 0.0
    %1374 = vmatpush1.msra.mxu0 %v1258
    %1375 = vmatprep.subr.mxu0 0.0
    %1376 = vmatpush1.msra.mxu0 %v1257
    %1377 = vmatprep.subr.mxu0 0.0
    %1378 = vmatpush2.msra.mxu0 0.0
    %1379 = vmatprep.subr.mxu0 0.0
    %1380 = vmatpush2.msra.mxu0 0.0
    %1381 = vmatprep.subr.mxu0 0.0
    %1382 = vmatpush2.msra.mxu0 0.0
    %1383 = vmatprep.subr.mxu0 0.0
    %1384 = vmatpush2.msra.mxu0 0.0
    %1385 = vmatprep.subr.mxu0 0.0
    %1386 = vmatpush2.msra.mxu0 0.0
    %1387 = vmatprep.subr.mxu0 0.0
    %1388 = vmatpush2.msra.mxu0 0.0
    %1389 = vmatprep.subr.mxu0 0.0
    %1390 = vmatpush2.msra.mxu0 0.0
    %1391 = vmatprep.subr.mxu0 0.0
    %1392 = vmatpush2.msra.mxu0 0.0
    %1393 = vmatprep.subr.mxu0 0.0
    %1394 = vmatpush2.msra.mxu0 0.0
    %1395 = vmatprep.subr.mxu0 0.0
    %1396 = vmatpush2.msra.mxu0 0.0
    %1397 = vmatprep.subr.mxu0 0.0
    %1398 = vmatpush2.msra.mxu0 0.0
    %1399 = vmatprep.subr.mxu0 0.0
    %1400 = vmatpush2.msra.mxu0 0.0
    %1401 = vmatprep.subr.mxu0 0.0
    %1402 = vmatpush2.msra.mxu0 0.0
    %1403 = vmatprep.subr.mxu0 0.0
    %1404 = vmatpush2.msra.mxu0 0.0
    %1405 = vmatprep.subr.mxu0 0.0
    %1406 = vmatpush2.msra.mxu0 0.0
    %1407 = vmatprep.subr.mxu0 0.0
    %1408 = vmatpush2.msra.mxu0 0.0
    %1409 = vmatprep.mubr.f32.mxu0 0.0
    %1410 = vmatmul.mubr.f32.gmra.mxu0 %v1343
    %v1411 = vpop.f32.mrf.mxu0
    %v1412 = vadd.f32 %v1266, %v1411
    %v1413 = vpop.f32.mrf.mxu0
    %1414 = vdwg.mxu0
    %v1415 = vmax.f32 %v1412, 0.0
    %v1416 = vld [vmem:[%s29] sm:$0xff]
    %v1417 = vld [vmem:[%s29 + $0x8] sm:$0xff]
    %v1418 = vld [vmem:[%s31] sm:$0xff]
    %v1419 = vld [vmem:[%s31 + $0x8] sm:$0xff]
    %v1420 = vld [vmem:[%s33] sm:$0xff]
    %v1421 = vld [vmem:[%s33 + $0x8] sm:$0xff]
    %v1422 = vld [vmem:[%s33 + $0x10] sm:$0xff]
    %v1423 = vld [vmem:[%s33 + $0x18] sm:$0xff]
    %v1424 = vld [vmem:[%s35] sm:$0xff]
    %v1425 = vld [vmem:[%s35 + $0x8] sm:$0xff]
    %v1426 = vld [vmem:[%s35 + $0x10] sm:$0xff]
    %v1427 = vld [vmem:[%s35 + $0x18] sm:$0xff]
    %v1428 = vld [vmem:[%s37] sm:$0x1]
    %v1429 = vld [vmem:[%s39] sm:$0xff]
    %v1430 = vld [vmem:[%s39 + $0x8] sm:$0xff]
    %v1431 = vld [vmem:[%s41] sm:$0x1]
    %v1432 = vld [vmem:[%s43] sm:$0xff]
    %v1433 = vld [vmem:[%s43 + $0x8] sm:$0xff]
    %v1434 = vld [vmem:[%s45] sm:$0xff]
    %v1435 = vld [vmem:[%s45 + $0x8] sm:$0xff]
    %v1436 = vld [vmem:[%s45 + $0x10] sm:$0xff]
    %v1437 = vld [vmem:[%s45 + $0x18] sm:$0xff]
    %v1438 = vld [vmem:[%s47] sm:$0x1]
    %v1439 = vld [vmem:[%s49] sm:$0xff]
    %v1440 = vld [vmem:[%s49 + $0x8] sm:$0xff]
    %v1441 = vld [vmem:[%s49 + $0x10] sm:$0xff]
    %v1442 = vld [vmem:[%s49 + $0x18] sm:$0xff]
    %v1443 = vld [vmem:[%s51] sm:$0x1]
    %v1444 = vld [vmem:[%s53] sm:$0xff]
    %v1445 = vld [vmem:[%s53 + $0x8] sm:$0xff]
    %v1446 = vld [vmem:[%s55] sm:$0x1]
    %v1447 = vld [vmem:[%s57] sm:$0xff]
    %v1448 = vld [vmem:[%s57 + $0x8] sm:$0xff]
    %v1449 = vld [vmem:[#allocation2] sm:$0x1]
    %v1451 = vlaneseq
    %v1452 = vshrl.u32 %v1451, 7
    %v1453 = vsub.s32 0, %v1452
    %v1454 = vrot.slane %v1428, %v1453
    %v1457 = vsel %vm1119, %v1249, 0
    %v1460 = vsel %vm1119, %v1250, 0
    %v1463 = vsel %vm1119, %v1251, 0
    %v1466 = vsel %vm1119, %v1252, 0
    %v1469 = vsel %vm1119, %v1253, 0
    %v1472 = vsel %vm1119, %v1254, 0
    %v1475 = vsel %vm1119, %v1255, 0
    %v1478 = vsel %vm1119, %v1256, 0
    %1480 = vmatprep.subr.mxu0 0.0
    %1481 = vmatpush1.msra.mxu0 0.0
    %1482 = vmatprep.subr.mxu0 0.0
    %1483 = vmatpush1.msra.mxu0 0.0
    %1484 = vmatprep.subr.mxu0 0.0
    %1485 = vmatpush1.msra.mxu0 0.0
    %1486 = vmatprep.subr.mxu0 0.0
    %1487 = vmatpush1.msra.mxu0 0.0
    %1488 = vmatprep.subr.mxu0 0.0
    %1489 = vmatpush1.msra.mxu0 0.0
    %1490 = vmatprep.subr.mxu0 0.0
    %1491 = vmatpush1.msra.mxu0 0.0
    %1492 = vmatprep.subr.mxu0 0.0
    %1493 = vmatpush1.msra.mxu0 0.0
    %1494 = vmatprep.subr.mxu0 0.0
    %1495 = vmatpush1.msra.mxu0 0.0
    %1496 = vmatprep.subr.mxu0 0.0
    %1497 = vmatpush1.msra.mxu0 0.0
    %1498 = vmatprep.subr.mxu0 0.0
    %1499 = vmatpush1.msra.mxu0 0.0
    %1500 = vmatprep.subr.mxu0 0.0
    %1501 = vmatpush1.msra.mxu0 0.0
    %1502 = vmatprep.subr.mxu0 0.0
    %1503 = vmatpush1.msra.mxu0 0.0
    %1504 = vmatprep.subr.mxu0 0.0
    %1505 = vmatpush1.msra.mxu0 0.0
    %1506 = vmatprep.subr.mxu0 0.0
    %1507 = vmatpush1.msra.mxu0 0.0
    %1508 = vmatprep.subr.mxu0 0.0
    %1509 = vmatpush1.msra.mxu0 %v1419
    %1510 = vmatprep.subr.mxu0 0.0
    %1511 = vmatpush1.msra.mxu0 %v1418
    %1512 = vmatprep.subr.mxu0 0.0
    %1513 = vmatpush2.msra.mxu0 0.0
    %1514 = vmatprep.subr.mxu0 0.0
    %1515 = vmatpush2.msra.mxu0 0.0
    %1516 = vmatprep.subr.mxu0 0.0
    %1517 = vmatpush2.msra.mxu0 0.0
    %1518 = vmatprep.subr.mxu0 0.0
    %1519 = vmatpush2.msra.mxu0 0.0
    %1520 = vmatprep.subr.mxu0 0.0
    %1521 = vmatpush2.msra.mxu0 0.0
    %1522 = vmatprep.subr.mxu0 0.0
    %1523 = vmatpush2.msra.mxu0 0.0
    %1524 = vmatprep.subr.mxu0 0.0
    %1525 = vmatpush2.msra.mxu0 0.0
    %1526 = vmatprep.subr.mxu0 0.0
    %1527 = vmatpush2.msra.mxu0 0.0
    %1528 = vmatprep.subr.mxu0 0.0
    %1529 = vmatpush2.msra.mxu0 0.0
    %1530 = vmatprep.subr.mxu0 0.0
    %1531 = vmatpush2.msra.mxu0 0.0
    %1532 = vmatprep.subr.mxu0 0.0
    %1533 = vmatpush2.msra.mxu0 0.0
    %1534 = vmatprep.subr.mxu0 0.0
    %1535 = vmatpush2.msra.mxu0 0.0
    %1536 = vmatprep.subr.mxu0 0.0
    %1537 = vmatpush2.msra.mxu0 0.0
    %1538 = vmatprep.subr.mxu0 0.0
    %1539 = vmatpush2.msra.mxu0 0.0
    %1540 = vmatprep.subr.mxu0 0.0
    %1541 = vmatpush2.msra.mxu0 0.0
    %1542 = vmatprep.subr.mxu0 0.0
    %1543 = vmatpush2.msra.mxu0 0.0
    %1544 = vmatprep.mubr.f32.mxu0 0.0
    %1545 = vmatmul.mubr.f32.gmra.mxu0 %v1457
    %v1546 = vpop.f32.mrf.mxu0
    %v1547 = vadd.f32 %v1454, %v1546
    %v1548 = vpop.f32.mrf.mxu0
    %1549 = vmatprep.mubr.f32.mxu0 0.0
    %1550 = vmatmul.mubr.f32.gmra.mxu0 %v1460
    %v1551 = vpop.f32.mrf.mxu0
    %v1552 = vadd.f32 %v1454, %v1551
    %v1553 = vpop.f32.mrf.mxu0
    %1554 = vmatprep.mubr.f32.mxu0 0.0
    %1555 = vmatmul.mubr.f32.gmra.mxu0 %v1463
    %v1556 = vpop.f32.mrf.mxu0
    %v1557 = vadd.f32 %v1454, %v1556
    %v1558 = vpop.f32.mrf.mxu0
    %1559 = vmatprep.mubr.f32.mxu0 0.0
    %1560 = vmatmul.mubr.f32.gmra.mxu0 %v1466
    %v1561 = vpop.f32.mrf.mxu0
    %v1562 = vadd.f32 %v1454, %v1561
    %v1563 = vpop.f32.mrf.mxu0
    %1564 = vmatprep.mubr.f32.mxu0 0.0
    %1565 = vmatmul.mubr.f32.gmra.mxu0 %v1469
    %v1566 = vpop.f32.mrf.mxu0
    %v1567 = vadd.f32 %v1454, %v1566
    %v1568 = vpop.f32.mrf.mxu0
    %1569 = vmatprep.mubr.f32.mxu0 0.0
    %1570 = vmatmul.mubr.f32.gmra.mxu0 %v1472
    %v1571 = vpop.f32.mrf.mxu0
    %v1572 = vadd.f32 %v1454, %v1571
    %v1573 = vpop.f32.mrf.mxu0
    %1574 = vmatprep.mubr.f32.mxu0 0.0
    %1575 = vmatmul.mubr.f32.gmra.mxu0 %v1475
    %v1576 = vpop.f32.mrf.mxu0
    %v1577 = vadd.f32 %v1454, %v1576
    %v1578 = vpop.f32.mrf.mxu0
    %1579 = vmatprep.mubr.f32.mxu0 0.0
    %1580 = vmatmul.mubr.f32.gmra.mxu0 %v1478
    %v1581 = vpop.f32.mrf.mxu0
    %v1582 = vadd.f32 %v1454, %v1581
    %v1583 = vpop.f32.mrf.mxu0
    %1584 = vdwg.mxu0
    %1585 = vmatprep.subr.mxu0 0.0
    %1586 = vmatpush1.msra.mxu0 0.0
    %1587 = vmatprep.subr.mxu0 0.0
    %1588 = vmatpush1.msra.mxu0 0.0
    %1589 = vmatprep.subr.mxu0 0.0
    %1590 = vmatpush1.msra.mxu0 0.0
    %1591 = vmatprep.subr.mxu0 0.0
    %1592 = vmatpush1.msra.mxu0 0.0
    %1593 = vmatprep.subr.mxu0 0.0
    %1594 = vmatpush1.msra.mxu0 0.0
    %1595 = vmatprep.subr.mxu0 0.0
    %1596 = vmatpush1.msra.mxu0 0.0
    %1597 = vmatprep.subr.mxu0 0.0
    %1598 = vmatpush1.msra.mxu0 0.0
    %1599 = vmatprep.subr.mxu0 0.0
    %1600 = vmatpush1.msra.mxu0 0.0
    %1601 = vmatprep.subr.mxu0 0.0
    %1602 = vmatpush1.msra.mxu0 0.0
    %1603 = vmatprep.subr.mxu0 0.0
    %1604 = vmatpush1.msra.mxu0 0.0
    %1605 = vmatprep.subr.mxu0 0.0
    %1606 = vmatpush1.msra.mxu0 0.0
    %1607 = vmatprep.subr.mxu0 0.0
    %1608 = vmatpush1.msra.mxu0 0.0
    %1609 = vmatprep.subr.mxu0 0.0
    %1610 = vmatpush1.msra.mxu0 0.0
    %1611 = vmatprep.subr.mxu0 0.0
    %1612 = vmatpush1.msra.mxu0 0.0
    %1613 = vmatprep.subr.mxu0 0.0
    %1614 = vmatpush1.msra.mxu0 %v1417
    %1615 = vmatprep.subr.mxu0 0.0
    %1616 = vmatpush1.msra.mxu0 %v1416
    %1617 = vmatprep.subr.mxu0 0.0
    %1618 = vmatpush2.msra.mxu0 0.0
    %1619 = vmatprep.subr.mxu0 0.0
    %1620 = vmatpush2.msra.mxu0 0.0
    %1621 = vmatprep.subr.mxu0 0.0
    %1622 = vmatpush2.msra.mxu0 0.0
    %1623 = vmatprep.subr.mxu0 0.0
    %1624 = vmatpush2.msra.mxu0 0.0
    %1625 = vmatprep.subr.mxu0 0.0
    %1626 = vmatpush2.msra.mxu0 0.0
    %1627 = vmatprep.subr.mxu0 0.0
    %1628 = vmatpush2.msra.mxu0 0.0
    %1629 = vmatprep.subr.mxu0 0.0
    %1630 = vmatpush2.msra.mxu0 0.0
    %1631 = vmatprep.subr.mxu0 0.0
    %1632 = vmatpush2.msra.mxu0 0.0
    %1633 = vmatprep.subr.mxu0 0.0
    %1634 = vmatpush2.msra.mxu0 0.0
    %1635 = vmatprep.subr.mxu0 0.0
    %1636 = vmatpush2.msra.mxu0 0.0
    %1637 = vmatprep.subr.mxu0 0.0
    %1638 = vmatpush2.msra.mxu0 0.0
    %1639 = vmatprep.subr.mxu0 0.0
    %1640 = vmatpush2.msra.mxu0 0.0
    %1641 = vmatprep.subr.mxu0 0.0
    %1642 = vmatpush2.msra.mxu0 0.0
    %1643 = vmatprep.subr.mxu0 0.0
    %1644 = vmatpush2.msra.mxu0 0.0
    %1645 = vmatprep.subr.mxu0 0.0
    %1646 = vmatpush2.msra.mxu0 0.0
    %1647 = vmatprep.subr.mxu0 0.0
    %1648 = vmatpush2.msra.mxu0 0.0
    %1649 = vmatprep.mubr.f32.mxu0 0.0
    %1650 = vmatmul.mubr.f32.gmra.mxu0 %v1457
    %v1651 = vpop.f32.mrf.mxu0
    %v1652 = vadd.f32 %v1547, %v1651
    %v1653 = vpop.f32.mrf.mxu0
    %1654 = vmatprep.mubr.f32.mxu0 0.0
    %1655 = vmatmul.mubr.f32.gmra.mxu0 %v1460
    %v1656 = vpop.f32.mrf.mxu0
    %v1657 = vadd.f32 %v1552, %v1656
    %v1658 = vpop.f32.mrf.mxu0
    %1659 = vmatprep.mubr.f32.mxu0 0.0
    %1660 = vmatmul.mubr.f32.gmra.mxu0 %v1463
    %v1661 = vpop.f32.mrf.mxu0
    %v1662 = vadd.f32 %v1557, %v1661
    %v1663 = vpop.f32.mrf.mxu0
    %1664 = vmatprep.mubr.f32.mxu0 0.0
    %1665 = vmatmul.mubr.f32.gmra.mxu0 %v1466
    %v1666 = vpop.f32.mrf.mxu0
    %v1667 = vadd.f32 %v1562, %v1666
    %v1668 = vpop.f32.mrf.mxu0
    %1669 = vmatprep.mubr.f32.mxu0 0.0
    %1670 = vmatmul.mubr.f32.gmra.mxu0 %v1469
    %v1671 = vpop.f32.mrf.mxu0
    %v1672 = vadd.f32 %v1567, %v1671
    %v1673 = vpop.f32.mrf.mxu0
    %1674 = vmatprep.mubr.f32.mxu0 0.0
    %1675 = vmatmul.mubr.f32.gmra.mxu0 %v1472
    %v1676 = vpop.f32.mrf.mxu0
    %v1677 = vadd.f32 %v1572, %v1676
    %v1678 = vpop.f32.mrf.mxu0
    %1679 = vmatprep.mubr.f32.mxu0 0.0
    %1680 = vmatmul.mubr.f32.gmra.mxu0 %v1475
    %v1681 = vpop.f32.mrf.mxu0
    %v1682 = vadd.f32 %v1577, %v1681
    %v1683 = vpop.f32.mrf.mxu0
    %1684 = vmatprep.mubr.f32.mxu0 0.0
    %1685 = vmatmul.mubr.f32.gmra.mxu0 %v1478
    %v1686 = vpop.f32.mrf.mxu0
    %v1687 = vadd.f32 %v1582, %v1686
    %v1688 = vpop.f32.mrf.mxu0
    %1689 = vdwg.mxu0
    %v1691 = vsel %vm150, %v1341, 0
    %1693 = vmatprep.subr.mxu0 0.0
    %1694 = vmatpush1.msra.mxu0 0.0
    %1695 = vmatprep.subr.mxu0 0.0
    %1696 = vmatpush1.msra.mxu0 0.0
    %1697 = vmatprep.subr.mxu0 0.0
    %1698 = vmatpush1.msra.mxu0 0.0
    %1699 = vmatprep.subr.mxu0 0.0
    %1700 = vmatpush1.msra.mxu0 0.0
    %1701 = vmatprep.subr.mxu0 0.0
    %1702 = vmatpush1.msra.mxu0 0.0
    %1703 = vmatprep.subr.mxu0 0.0
    %1704 = vmatpush1.msra.mxu0 0.0
    %1705 = vmatprep.subr.mxu0 0.0
    %1706 = vmatpush1.msra.mxu0 0.0
    %1707 = vmatprep.subr.mxu0 0.0
    %1708 = vmatpush1.msra.mxu0 0.0
    %1709 = vmatprep.subr.mxu0 0.0
    %1710 = vmatpush1.msra.mxu0 0.0
    %1711 = vmatprep.subr.mxu0 0.0
    %1712 = vmatpush1.msra.mxu0 0.0
    %1713 = vmatprep.subr.mxu0 0.0
    %1714 = vmatpush1.msra.mxu0 0.0
    %1715 = vmatprep.subr.mxu0 0.0
    %1716 = vmatpush1.msra.mxu0 0.0
    %1717 = vmatprep.subr.mxu0 0.0
    %1718 = vmatpush1.msra.mxu0 %v1423
    %1719 = vmatprep.subr.mxu0 0.0
    %1720 = vmatpush1.msra.mxu0 %v1422
    %1721 = vmatprep.subr.mxu0 0.0
    %1722 = vmatpush1.msra.mxu0 %v1421
    %1723 = vmatprep.subr.mxu0 0.0
    %1724 = vmatpush1.msra.mxu0 %v1420
    %1725 = vmatprep.subr.mxu0 0.0
    %1726 = vmatpush2.msra.mxu0 0.0
    %1727 = vmatprep.subr.mxu0 0.0
    %1728 = vmatpush2.msra.mxu0 0.0
    %1729 = vmatprep.subr.mxu0 0.0
    %1730 = vmatpush2.msra.mxu0 0.0
    %1731 = vmatprep.subr.mxu0 0.0
    %1732 = vmatpush2.msra.mxu0 0.0
    %1733 = vmatprep.subr.mxu0 0.0
    %1734 = vmatpush2.msra.mxu0 0.0
    %1735 = vmatprep.subr.mxu0 0.0
    %1736 = vmatpush2.msra.mxu0 0.0
    %1737 = vmatprep.subr.mxu0 0.0
    %1738 = vmatpush2.msra.mxu0 0.0
    %1739 = vmatprep.subr.mxu0 0.0
    %1740 = vmatpush2.msra.mxu0 0.0
    %1741 = vmatprep.subr.mxu0 0.0
    %1742 = vmatpush2.msra.mxu0 0.0
    %1743 = vmatprep.subr.mxu0 0.0
    %1744 = vmatpush2.msra.mxu0 0.0
    %1745 = vmatprep.subr.mxu0 0.0
    %1746 = vmatpush2.msra.mxu0 0.0
    %1747 = vmatprep.subr.mxu0 0.0
    %1748 = vmatpush2.msra.mxu0 0.0
    %1749 = vmatprep.subr.mxu0 0.0
    %1750 = vmatpush2.msra.mxu0 0.0
    %1751 = vmatprep.subr.mxu0 0.0
    %1752 = vmatpush2.msra.mxu0 0.0
    %1753 = vmatprep.subr.mxu0 0.0
    %1754 = vmatpush2.msra.mxu0 0.0
    %1755 = vmatprep.subr.mxu0 0.0
    %1756 = vmatpush2.msra.mxu0 0.0
    %1757 = vmatprep.mubr.f32.mxu0 0.0
    %1758 = vmatmul.mubr.f32.gmra.mxu0 %v1691
    %v1759 = vpop.f32.mrf.mxu0
    %v1760 = vadd.f32 0.0, %v1759
    %v1761 = vpop.f32.mrf.mxu0
    %1762 = vdwg.mxu0
    %1763 = vmatprep.subr.mxu0 0.0
    %1764 = vmatpush1.msra.mxu0 0.0
    %1765 = vmatprep.subr.mxu0 0.0
    %1766 = vmatpush1.msra.mxu0 0.0
    %1767 = vmatprep.subr.mxu0 0.0
    %1768 = vmatpush1.msra.mxu0 0.0
    %1769 = vmatprep.subr.mxu0 0.0
    %1770 = vmatpush1.msra.mxu0 0.0
    %1771 = vmatprep.subr.mxu0 0.0
    %1772 = vmatpush1.msra.mxu0 0.0
    %1773 = vmatprep.subr.mxu0 0.0
    %1774 = vmatpush1.msra.mxu0 0.0
    %1775 = vmatprep.subr.mxu0 0.0
    %1776 = vmatpush1.msra.mxu0 0.0
    %1777 = vmatprep.subr.mxu0 0.0
    %1778 = vmatpush1.msra.mxu0 0.0
    %1779 = vmatprep.subr.mxu0 0.0
    %1780 = vmatpush1.msra.mxu0 0.0
    %1781 = vmatprep.subr.mxu0 0.0
    %1782 = vmatpush1.msra.mxu0 0.0
    %1783 = vmatprep.subr.mxu0 0.0
    %1784 = vmatpush1.msra.mxu0 0.0
    %1785 = vmatprep.subr.mxu0 0.0
    %1786 = vmatpush1.msra.mxu0 0.0
    %1787 = vmatprep.subr.mxu0 0.0
    %1788 = vmatpush1.msra.mxu0 0.0
    %1789 = vmatprep.subr.mxu0 0.0
    %1790 = vmatpush1.msra.mxu0 0.0
    %1791 = vmatprep.subr.mxu0 0.0
    %1792 = vmatpush1.msra.mxu0 0.0
    %1793 = vmatprep.subr.mxu0 0.0
    %1794 = vmatpush1.msra.mxu0 %v1760
    %1795 = vmatprep.subr.mxu0 0.0
    %1796 = vmatpush2.msra.mxu0 0.0
    %1797 = vmatprep.subr.mxu0 0.0
    %1798 = vmatpush2.msra.mxu0 0.0
    %1799 = vmatprep.subr.mxu0 0.0
    %1800 = vmatpush2.msra.mxu0 0.0
    %1801 = vmatprep.subr.mxu0 0.0
    %1802 = vmatpush2.msra.mxu0 0.0
    %1803 = vmatprep.subr.mxu0 0.0
    %1804 = vmatpush2.msra.mxu0 0.0
    %1805 = vmatprep.subr.mxu0 0.0
    %1806 = vmatpush2.msra.mxu0 0.0
    %1807 = vmatprep.subr.mxu0 0.0
    %1808 = vmatpush2.msra.mxu0 0.0
    %1809 = vmatprep.subr.mxu0 0.0
    %1810 = vmatpush2.msra.mxu0 0.0
    %1811 = vmatprep.subr.mxu0 0.0
    %1812 = vmatpush2.msra.mxu0 0.0
    %1813 = vmatprep.subr.mxu0 0.0
    %1814 = vmatpush2.msra.mxu0 0.0
    %1815 = vmatprep.subr.mxu0 0.0
    %1816 = vmatpush2.msra.mxu0 0.0
    %1817 = vmatprep.subr.mxu0 0.0
    %1818 = vmatpush2.msra.mxu0 0.0
    %1819 = vmatprep.subr.mxu0 0.0
    %1820 = vmatpush2.msra.mxu0 0.0
    %1821 = vmatprep.subr.mxu0 0.0
    %1822 = vmatpush2.msra.mxu0 0.0
    %1823 = vmatprep.subr.mxu0 0.0
    %1824 = vmatpush2.msra.mxu0 0.0
    %1825 = vmatprep.subr.mxu0 0.0
    %1826 = vmatpush2.msra.mxu0 0.0
    %1827 = vmatprep.mubr.f32.mxu0 0.0
    %1828 = vmatmul.mubr.f32.gmra.mxu0 %v242
    %v1829 = vpop.f32.mrf.mxu0
    %v1830 = vadd.f32 0.0, %v1829
    %v1831 = vpop.f32.mrf.mxu0
    %1832 = vmatprep.mubr.f32.mxu0 0.0
    %1833 = vmatmul.mubr.f32.gmra.mxu0 %v245
    %v1834 = vpop.f32.mrf.mxu0
    %v1835 = vadd.f32 0.0, %v1834
    %v1836 = vpop.f32.mrf.mxu0
    %1837 = vmatprep.mubr.f32.mxu0 0.0
    %1838 = vmatmul.mubr.f32.gmra.mxu0 %v248
    %v1839 = vpop.f32.mrf.mxu0
    %v1840 = vadd.f32 0.0, %v1839
    %v1841 = vpop.f32.mrf.mxu0
    %1842 = vmatprep.mubr.f32.mxu0 0.0
    %1843 = vmatmul.mubr.f32.gmra.mxu0 %v251
    %v1844 = vpop.f32.mrf.mxu0
    %v1845 = vadd.f32 0.0, %v1844
    %v1846 = vpop.f32.mrf.mxu0
    %1847 = vmatprep.mubr.f32.mxu0 0.0
    %1848 = vmatmul.mubr.f32.gmra.mxu0 %v254
    %v1849 = vpop.f32.mrf.mxu0
    %v1850 = vadd.f32 0.0, %v1849
    %v1851 = vpop.f32.mrf.mxu0
    %1852 = vmatprep.mubr.f32.mxu0 0.0
    %1853 = vmatmul.mubr.f32.gmra.mxu0 %v257
    %v1854 = vpop.f32.mrf.mxu0
    %v1855 = vadd.f32 0.0, %v1854
    %v1856 = vpop.f32.mrf.mxu0
    %1857 = vmatprep.mubr.f32.mxu0 0.0
    %1858 = vmatmul.mubr.f32.gmra.mxu0 %v260
    %v1859 = vpop.f32.mrf.mxu0
    %v1860 = vadd.f32 0.0, %v1859
    %v1861 = vpop.f32.mrf.mxu0
    %1862 = vmatprep.mubr.f32.mxu0 0.0
    %1863 = vmatmul.mubr.f32.gmra.mxu0 %v263
    %v1864 = vpop.f32.mrf.mxu0
    %v1865 = vadd.f32 0.0, %v1864
    %v1866 = vpop.f32.mrf.mxu0
    %1867 = vdwg.mxu0
    %v1868 = vadd.f32 %v1652, %v1830
    %v1869 = vadd.f32 %v1657, %v1835
    %v1870 = vadd.f32 %v1662, %v1840
    %v1871 = vadd.f32 %v1667, %v1845
    %v1872 = vadd.f32 %v1672, %v1850
    %v1873 = vadd.f32 %v1677, %v1855
    %v1874 = vadd.f32 %v1682, %v1860
    %v1875 = vadd.f32 %v1687, %v1865
    %v1877 = vsel %vm150, %v1415, 0
    %1879 = vmatprep.subr.mxu0 0.0
    %1880 = vmatpush1.msra.mxu0 0.0
    %1881 = vmatprep.subr.mxu0 0.0
    %1882 = vmatpush1.msra.mxu0 0.0
    %1883 = vmatprep.subr.mxu0 0.0
    %1884 = vmatpush1.msra.mxu0 0.0
    %1885 = vmatprep.subr.mxu0 0.0
    %1886 = vmatpush1.msra.mxu0 0.0
    %1887 = vmatprep.subr.mxu0 0.0
    %1888 = vmatpush1.msra.mxu0 0.0
    %1889 = vmatprep.subr.mxu0 0.0
    %1890 = vmatpush1.msra.mxu0 0.0
    %1891 = vmatprep.subr.mxu0 0.0
    %1892 = vmatpush1.msra.mxu0 0.0
    %1893 = vmatprep.subr.mxu0 0.0
    %1894 = vmatpush1.msra.mxu0 0.0
    %1895 = vmatprep.subr.mxu0 0.0
    %1896 = vmatpush1.msra.mxu0 0.0
    %1897 = vmatprep.subr.mxu0 0.0
    %1898 = vmatpush1.msra.mxu0 0.0
    %1899 = vmatprep.subr.mxu0 0.0
    %1900 = vmatpush1.msra.mxu0 0.0
    %1901 = vmatprep.subr.mxu0 0.0
    %1902 = vmatpush1.msra.mxu0 0.0
    %1903 = vmatprep.subr.mxu0 0.0
    %1904 = vmatpush1.msra.mxu0 %v1427
    %1905 = vmatprep.subr.mxu0 0.0
    %1906 = vmatpush1.msra.mxu0 %v1426
    %1907 = vmatprep.subr.mxu0 0.0
    %1908 = vmatpush1.msra.mxu0 %v1425
    %1909 = vmatprep.subr.mxu0 0.0
    %1910 = vmatpush1.msra.mxu0 %v1424
    %1911 = vmatprep.subr.mxu0 0.0
    %1912 = vmatpush2.msra.mxu0 0.0
    %1913 = vmatprep.subr.mxu0 0.0
    %1914 = vmatpush2.msra.mxu0 0.0
    %1915 = vmatprep.subr.mxu0 0.0
    %1916 = vmatpush2.msra.mxu0 0.0
    %1917 = vmatprep.subr.mxu0 0.0
    %1918 = vmatpush2.msra.mxu0 0.0
    %1919 = vmatprep.subr.mxu0 0.0
    %1920 = vmatpush2.msra.mxu0 0.0
    %1921 = vmatprep.subr.mxu0 0.0
    %1922 = vmatpush2.msra.mxu0 0.0
    %1923 = vmatprep.subr.mxu0 0.0
    %1924 = vmatpush2.msra.mxu0 0.0
    %1925 = vmatprep.subr.mxu0 0.0
    %1926 = vmatpush2.msra.mxu0 0.0
    %1927 = vmatprep.subr.mxu0 0.0
    %1928 = vmatpush2.msra.mxu0 0.0
    %1929 = vmatprep.subr.mxu0 0.0
    %1930 = vmatpush2.msra.mxu0 0.0
    %1931 = vmatprep.subr.mxu0 0.0
    %1932 = vmatpush2.msra.mxu0 0.0
    %1933 = vmatprep.subr.mxu0 0.0
    %1934 = vmatpush2.msra.mxu0 0.0
    %1935 = vmatprep.subr.mxu0 0.0
    %1936 = vmatpush2.msra.mxu0 0.0
    %1937 = vmatprep.subr.mxu0 0.0
    %1938 = vmatpush2.msra.mxu0 0.0
    %1939 = vmatprep.subr.mxu0 0.0
    %1940 = vmatpush2.msra.mxu0 0.0
    %1941 = vmatprep.subr.mxu0 0.0
    %1942 = vmatpush2.msra.mxu0 0.0
    %1943 = vmatprep.mubr.f32.mxu0 0.0
    %1944 = vmatmul.mubr.f32.gmra.mxu0 %v1877
    %v1945 = vpop.f32.mrf.mxu0
    %v1946 = vadd.f32 0.0, %v1945
    %v1947 = vpop.f32.mrf.mxu0
    %1948 = vdwg.mxu0
    %1949 = vmatprep.subr.mxu0 0.0
    %1950 = vmatpush1.msra.mxu0 0.0
    %1951 = vmatprep.subr.mxu0 0.0
    %1952 = vmatpush1.msra.mxu0 0.0
    %1953 = vmatprep.subr.mxu0 0.0
    %1954 = vmatpush1.msra.mxu0 0.0
    %1955 = vmatprep.subr.mxu0 0.0
    %1956 = vmatpush1.msra.mxu0 0.0
    %1957 = vmatprep.subr.mxu0 0.0
    %1958 = vmatpush1.msra.mxu0 0.0
    %1959 = vmatprep.subr.mxu0 0.0
    %1960 = vmatpush1.msra.mxu0 0.0
    %1961 = vmatprep.subr.mxu0 0.0
    %1962 = vmatpush1.msra.mxu0 0.0
    %1963 = vmatprep.subr.mxu0 0.0
    %1964 = vmatpush1.msra.mxu0 0.0
    %1965 = vmatprep.subr.mxu0 0.0
    %1966 = vmatpush1.msra.mxu0 0.0
    %1967 = vmatprep.subr.mxu0 0.0
    %1968 = vmatpush1.msra.mxu0 0.0
    %1969 = vmatprep.subr.mxu0 0.0
    %1970 = vmatpush1.msra.mxu0 0.0
    %1971 = vmatprep.subr.mxu0 0.0
    %1972 = vmatpush1.msra.mxu0 0.0
    %1973 = vmatprep.subr.mxu0 0.0
    %1974 = vmatpush1.msra.mxu0 0.0
    %1975 = vmatprep.subr.mxu0 0.0
    %1976 = vmatpush1.msra.mxu0 0.0
    %1977 = vmatprep.subr.mxu0 0.0
    %1978 = vmatpush1.msra.mxu0 0.0
    %1979 = vmatprep.subr.mxu0 0.0
    %1980 = vmatpush1.msra.mxu0 %v1946
    %1981 = vmatprep.subr.mxu0 0.0
    %1982 = vmatpush2.msra.mxu0 0.0
    %1983 = vmatprep.subr.mxu0 0.0
    %1984 = vmatpush2.msra.mxu0 0.0
    %1985 = vmatprep.subr.mxu0 0.0
    %1986 = vmatpush2.msra.mxu0 0.0
    %1987 = vmatprep.subr.mxu0 0.0
    %1988 = vmatpush2.msra.mxu0 0.0
    %1989 = vmatprep.subr.mxu0 0.0
    %1990 = vmatpush2.msra.mxu0 0.0
    %1991 = vmatprep.subr.mxu0 0.0
    %1992 = vmatpush2.msra.mxu0 0.0
    %1993 = vmatprep.subr.mxu0 0.0
    %1994 = vmatpush2.msra.mxu0 0.0
    %1995 = vmatprep.subr.mxu0 0.0
    %1996 = vmatpush2.msra.mxu0 0.0
    %1997 = vmatprep.subr.mxu0 0.0
    %1998 = vmatpush2.msra.mxu0 0.0
    %1999 = vmatprep.subr.mxu0 0.0
    %2000 = vmatpush2.msra.mxu0 0.0
    %2001 = vmatprep.subr.mxu0 0.0
    %2002 = vmatpush2.msra.mxu0 0.0
    %2003 = vmatprep.subr.mxu0 0.0
    %2004 = vmatpush2.msra.mxu0 0.0
    %2005 = vmatprep.subr.mxu0 0.0
    %2006 = vmatpush2.msra.mxu0 0.0
    %2007 = vmatprep.subr.mxu0 0.0
    %2008 = vmatpush2.msra.mxu0 0.0
    %2009 = vmatprep.subr.mxu0 0.0
    %2010 = vmatpush2.msra.mxu0 0.0
    %2011 = vmatprep.subr.mxu0 0.0
    %2012 = vmatpush2.msra.mxu0 0.0
    %2013 = vmatprep.mubr.f32.mxu0 0.0
    %2014 = vmatmul.mubr.f32.gmra.mxu0 %v518
    %v2015 = vpop.f32.mrf.mxu0
    %v2016 = vadd.f32 0.0, %v2015
    %v2017 = vpop.f32.mrf.mxu0
    %2018 = vmatprep.mubr.f32.mxu0 0.0
    %2019 = vmatmul.mubr.f32.gmra.mxu0 %v521
    %v2020 = vpop.f32.mrf.mxu0
    %v2021 = vadd.f32 0.0, %v2020
    %v2022 = vpop.f32.mrf.mxu0
    %2023 = vmatprep.mubr.f32.mxu0 0.0
    %2024 = vmatmul.mubr.f32.gmra.mxu0 %v524
    %v2025 = vpop.f32.mrf.mxu0
    %v2026 = vadd.f32 0.0, %v2025
    %v2027 = vpop.f32.mrf.mxu0
    %2028 = vmatprep.mubr.f32.mxu0 0.0
    %2029 = vmatmul.mubr.f32.gmra.mxu0 %v527
    %v2030 = vpop.f32.mrf.mxu0
    %v2031 = vadd.f32 0.0, %v2030
    %v2032 = vpop.f32.mrf.mxu0
    %2033 = vmatprep.mubr.f32.mxu0 0.0
    %2034 = vmatmul.mubr.f32.gmra.mxu0 %v530
    %v2035 = vpop.f32.mrf.mxu0
    %v2036 = vadd.f32 0.0, %v2035
    %v2037 = vpop.f32.mrf.mxu0
    %2038 = vmatprep.mubr.f32.mxu0 0.0
    %2039 = vmatmul.mubr.f32.gmra.mxu0 %v533
    %v2040 = vpop.f32.mrf.mxu0
    %v2041 = vadd.f32 0.0, %v2040
    %v2042 = vpop.f32.mrf.mxu0
    %2043 = vmatprep.mubr.f32.mxu0 0.0
    %2044 = vmatmul.mubr.f32.gmra.mxu0 %v536
    %v2045 = vpop.f32.mrf.mxu0
    %v2046 = vadd.f32 0.0, %v2045
    %v2047 = vpop.f32.mrf.mxu0
    %2048 = vmatprep.mubr.f32.mxu0 0.0
    %2049 = vmatmul.mubr.f32.gmra.mxu0 %v539
    %v2050 = vpop.f32.mrf.mxu0
    %v2051 = vadd.f32 0.0, %v2050
    %v2052 = vpop.f32.mrf.mxu0
    %2053 = vdwg.mxu0
    %v2054 = vadd.f32 %v1868, %v2016
    %v2055 = vadd.f32 %v1869, %v2021
    %v2056 = vadd.f32 %v1870, %v2026
    %v2057 = vadd.f32 %v1871, %v2031
    %v2058 = vadd.f32 %v1872, %v2036
    %v2059 = vadd.f32 %v1873, %v2041
    %v2060 = vadd.f32 %v1874, %v2046
    %v2061 = vadd.f32 %v1875, %v2051
    %v2062 = vmax.f32 %v2054, 0.0
    %v2063 = vmax.f32 %v2055, 0.0
    %v2064 = vmax.f32 %v2056, 0.0
    %v2065 = vmax.f32 %v2057, 0.0
    %v2066 = vmax.f32 %v2058, 0.0
    %v2067 = vmax.f32 %v2059, 0.0
    %v2068 = vmax.f32 %v2060, 0.0
    %v2069 = vmax.f32 %v2061, 0.0
    %v2071 = vlaneseq
    %v2072 = vshrl.u32 %v2071, 7
    %v2073 = vsub.s32 0, %v2072
    %v2074 = vrot.slane %v1431, %v2073
    %v2077 = vsel %vm1119, %v2062, 0
    %v2080 = vsel %vm1119, %v2063, 0
    %v2083 = vsel %vm1119, %v2064, 0
    %v2086 = vsel %vm1119, %v2065, 0
    %v2089 = vsel %vm1119, %v2066, 0
    %v2092 = vsel %vm1119, %v2067, 0
    %v2095 = vsel %vm1119, %v2068, 0
    %v2098 = vsel %vm1119, %v2069, 0
    %2100 = vmatprep.subr.mxu0 0.0
    %2101 = vmatpush1.msra.mxu0 0.0
    %2102 = vmatprep.subr.mxu0 0.0
    %2103 = vmatpush1.msra.mxu0 0.0
    %2104 = vmatprep.subr.mxu0 0.0
    %2105 = vmatpush1.msra.mxu0 0.0
    %2106 = vmatprep.subr.mxu0 0.0
    %2107 = vmatpush1.msra.mxu0 0.0
    %2108 = vmatprep.subr.mxu0 0.0
    %2109 = vmatpush1.msra.mxu0 0.0
    %2110 = vmatprep.subr.mxu0 0.0
    %2111 = vmatpush1.msra.mxu0 0.0
    %2112 = vmatprep.subr.mxu0 0.0
    %2113 = vmatpush1.msra.mxu0 0.0
    %2114 = vmatprep.subr.mxu0 0.0
    %2115 = vmatpush1.msra.mxu0 0.0
    %2116 = vmatprep.subr.mxu0 0.0
    %2117 = vmatpush1.msra.mxu0 0.0
    %2118 = vmatprep.subr.mxu0 0.0
    %2119 = vmatpush1.msra.mxu0 0.0
    %2120 = vmatprep.subr.mxu0 0.0
    %2121 = vmatpush1.msra.mxu0 0.0
    %2122 = vmatprep.subr.mxu0 0.0
    %2123 = vmatpush1.msra.mxu0 0.0
    %2124 = vmatprep.subr.mxu0 0.0
    %2125 = vmatpush1.msra.mxu0 0.0
    %2126 = vmatprep.subr.mxu0 0.0
    %2127 = vmatpush1.msra.mxu0 0.0
    %2128 = vmatprep.subr.mxu0 0.0
    %2129 = vmatpush1.msra.mxu0 %v1430
    %2130 = vmatprep.subr.mxu0 0.0
    %2131 = vmatpush1.msra.mxu0 %v1429
    %2132 = vmatprep.subr.mxu0 0.0
    %2133 = vmatpush2.msra.mxu0 0.0
    %2134 = vmatprep.subr.mxu0 0.0
    %2135 = vmatpush2.msra.mxu0 0.0
    %2136 = vmatprep.subr.mxu0 0.0
    %2137 = vmatpush2.msra.mxu0 0.0
    %2138 = vmatprep.subr.mxu0 0.0
    %2139 = vmatpush2.msra.mxu0 0.0
    %2140 = vmatprep.subr.mxu0 0.0
    %2141 = vmatpush2.msra.mxu0 0.0
    %2142 = vmatprep.subr.mxu0 0.0
    %2143 = vmatpush2.msra.mxu0 0.0
    %2144 = vmatprep.subr.mxu0 0.0
    %2145 = vmatpush2.msra.mxu0 0.0
    %2146 = vmatprep.subr.mxu0 0.0
    %2147 = vmatpush2.msra.mxu0 0.0
    %2148 = vmatprep.subr.mxu0 0.0
    %2149 = vmatpush2.msra.mxu0 0.0
    %2150 = vmatprep.subr.mxu0 0.0
    %2151 = vmatpush2.msra.mxu0 0.0
    %2152 = vmatprep.subr.mxu0 0.0
    %2153 = vmatpush2.msra.mxu0 0.0
    %2154 = vmatprep.subr.mxu0 0.0
    %2155 = vmatpush2.msra.mxu0 0.0
    %2156 = vmatprep.subr.mxu0 0.0
    %2157 = vmatpush2.msra.mxu0 0.0
    %2158 = vmatprep.subr.mxu0 0.0
    %2159 = vmatpush2.msra.mxu0 0.0
    %2160 = vmatprep.subr.mxu0 0.0
    %2161 = vmatpush2.msra.mxu0 0.0
    %2162 = vmatprep.subr.mxu0 0.0
    %2163 = vmatpush2.msra.mxu0 0.0
    %2164 = vmatprep.mubr.f32.mxu0 0.0
    %2165 = vmatmul.mubr.f32.gmra.mxu0 %v2077
    %v2166 = vpop.f32.mrf.mxu0
    %v2167 = vadd.f32 %v2074, %v2166
    %v2168 = vpop.f32.mrf.mxu0
    %2169 = vmatprep.mubr.f32.mxu0 0.0
    %2170 = vmatmul.mubr.f32.gmra.mxu0 %v2080
    %v2171 = vpop.f32.mrf.mxu0
    %v2172 = vadd.f32 %v2074, %v2171
    %v2173 = vpop.f32.mrf.mxu0
    %2174 = vmatprep.mubr.f32.mxu0 0.0
    %2175 = vmatmul.mubr.f32.gmra.mxu0 %v2083
    %v2176 = vpop.f32.mrf.mxu0
    %v2177 = vadd.f32 %v2074, %v2176
    %v2178 = vpop.f32.mrf.mxu0
    %2179 = vmatprep.mubr.f32.mxu0 0.0
    %2180 = vmatmul.mubr.f32.gmra.mxu0 %v2086
    %v2181 = vpop.f32.mrf.mxu0
    %v2182 = vadd.f32 %v2074, %v2181
    %v2183 = vpop.f32.mrf.mxu0
    %2184 = vmatprep.mubr.f32.mxu0 0.0
    %2185 = vmatmul.mubr.f32.gmra.mxu0 %v2089
    %v2186 = vpop.f32.mrf.mxu0
    %v2187 = vadd.f32 %v2074, %v2186
    %v2188 = vpop.f32.mrf.mxu0
    %2189 = vmatprep.mubr.f32.mxu0 0.0
    %2190 = vmatmul.mubr.f32.gmra.mxu0 %v2092
    %v2191 = vpop.f32.mrf.mxu0
    %v2192 = vadd.f32 %v2074, %v2191
    %v2193 = vpop.f32.mrf.mxu0
    %2194 = vmatprep.mubr.f32.mxu0 0.0
    %2195 = vmatmul.mubr.f32.gmra.mxu0 %v2095
    %v2196 = vpop.f32.mrf.mxu0
    %v2197 = vadd.f32 %v2074, %v2196
    %v2198 = vpop.f32.mrf.mxu0
    %2199 = vmatprep.mubr.f32.mxu0 0.0
    %2200 = vmatmul.mubr.f32.gmra.mxu0 %v2098
    %v2201 = vpop.f32.mrf.mxu0
    %v2202 = vadd.f32 %v2074, %v2201
    %v2203 = vpop.f32.mrf.mxu0
    %2204 = vdwg.mxu0
    %v2205 = vmax.f32 %v2167, 0.0
    %v2206 = vmax.f32 %v2172, 0.0
    %v2207 = vmax.f32 %v2177, 0.0
    %v2208 = vmax.f32 %v2182, 0.0
    %v2209 = vmax.f32 %v2187, 0.0
    %v2210 = vmax.f32 %v2192, 0.0
    %v2211 = vmax.f32 %v2197, 0.0
    %v2212 = vmax.f32 %v2202, 0.0
    %vm2213 = vcmask 523264
    %v2215 = vsel %vm2213, %v145, 0
    %2217 = vmatprep.subr.mxu0 0.0
    %2218 = vmatpush1.msra.mxu0 0.0
    %2219 = vmatprep.subr.mxu0 0.0
    %2220 = vmatpush1.msra.mxu0 0.0
    %2221 = vmatprep.subr.mxu0 0.0
    %2222 = vmatpush1.msra.mxu0 0.0
    %2223 = vmatprep.subr.mxu0 0.0
    %2224 = vmatpush1.msra.mxu0 0.0
    %2225 = vmatprep.subr.mxu0 0.0
    %2226 = vmatpush1.msra.mxu0 0.0
    %2227 = vmatprep.subr.mxu0 0.0
    %2228 = vmatpush1.msra.mxu0 0.0
    %2229 = vmatprep.subr.mxu0 0.0
    %2230 = vmatpush1.msra.mxu0 0.0
    %2231 = vmatprep.subr.mxu0 0.0
    %2232 = vmatpush1.msra.mxu0 0.0
    %2233 = vmatprep.subr.mxu0 0.0
    %2234 = vmatpush1.msra.mxu0 %v2212
    %2235 = vmatprep.subr.mxu0 0.0
    %2236 = vmatpush1.msra.mxu0 %v2211
    %2237 = vmatprep.subr.mxu0 0.0
    %2238 = vmatpush1.msra.mxu0 %v2210
    %2239 = vmatprep.subr.mxu0 0.0
    %2240 = vmatpush1.msra.mxu0 %v2209
    %2241 = vmatprep.subr.mxu0 0.0
    %2242 = vmatpush1.msra.mxu0 %v2208
    %2243 = vmatprep.subr.mxu0 0.0
    %2244 = vmatpush1.msra.mxu0 %v2207
    %2245 = vmatprep.subr.mxu0 0.0
    %2246 = vmatpush1.msra.mxu0 %v2206
    %2247 = vmatprep.subr.mxu0 0.0
    %2248 = vmatpush1.msra.mxu0 %v2205
    %2249 = vmatprep.subr.mxu0 0.0
    %2250 = vmatpush2.msra.mxu0 0.0
    %2251 = vmatprep.subr.mxu0 0.0
    %2252 = vmatpush2.msra.mxu0 0.0
    %2253 = vmatprep.subr.mxu0 0.0
    %2254 = vmatpush2.msra.mxu0 0.0
    %2255 = vmatprep.subr.mxu0 0.0
    %2256 = vmatpush2.msra.mxu0 0.0
    %2257 = vmatprep.subr.mxu0 0.0
    %2258 = vmatpush2.msra.mxu0 0.0
    %2259 = vmatprep.subr.mxu0 0.0
    %2260 = vmatpush2.msra.mxu0 0.0
    %2261 = vmatprep.subr.mxu0 0.0
    %2262 = vmatpush2.msra.mxu0 0.0
    %2263 = vmatprep.subr.mxu0 0.0
    %2264 = vmatpush2.msra.mxu0 0.0
    %2265 = vmatprep.subr.mxu0 0.0
    %2266 = vmatpush2.msra.mxu0 0.0
    %2267 = vmatprep.subr.mxu0 0.0
    %2268 = vmatpush2.msra.mxu0 0.0
    %2269 = vmatprep.subr.mxu0 0.0
    %2270 = vmatpush2.msra.mxu0 0.0
    %2271 = vmatprep.subr.mxu0 0.0
    %2272 = vmatpush2.msra.mxu0 0.0
    %2273 = vmatprep.subr.mxu0 0.0
    %2274 = vmatpush2.msra.mxu0 0.0
    %2275 = vmatprep.subr.mxu0 0.0
    %2276 = vmatpush2.msra.mxu0 0.0
    %2277 = vmatprep.subr.mxu0 0.0
    %2278 = vmatpush2.msra.mxu0 0.0
    %2279 = vmatprep.subr.mxu0 0.0
    %2280 = vmatpush2.msra.mxu0 0.0
    %2281 = vmatprep.mubr.f32.mxu0 0.0
    %2282 = vmatmul.mubr.f32.gmra.mxu0 %v2215
    %v2283 = vpop.f32.mrf.mxu0
    %v2284 = vadd.f32 0.0, %v2283
    %v2285 = vpop.f32.mrf.mxu0
    %2286 = vdwg.mxu0
    %v2288 = vsel %vm2213, %v146, 0
    %2290 = vmatprep.subr.mxu0 0.0
    %2291 = vmatpush1.msra.mxu0 0.0
    %2292 = vmatprep.subr.mxu0 0.0
    %2293 = vmatpush1.msra.mxu0 0.0
    %2294 = vmatprep.subr.mxu0 0.0
    %2295 = vmatpush1.msra.mxu0 0.0
    %2296 = vmatprep.subr.mxu0 0.0
    %2297 = vmatpush1.msra.mxu0 0.0
    %2298 = vmatprep.subr.mxu0 0.0
    %2299 = vmatpush1.msra.mxu0 0.0
    %2300 = vmatprep.subr.mxu0 0.0
    %2301 = vmatpush1.msra.mxu0 0.0
    %2302 = vmatprep.subr.mxu0 0.0
    %2303 = vmatpush1.msra.mxu0 0.0
    %2304 = vmatprep.subr.mxu0 0.0
    %2305 = vmatpush1.msra.mxu0 0.0
    %2306 = vmatprep.subr.mxu0 0.0
    %2307 = vmatpush1.msra.mxu0 %v2212
    %2308 = vmatprep.subr.mxu0 0.0
    %2309 = vmatpush1.msra.mxu0 %v2211
    %2310 = vmatprep.subr.mxu0 0.0
    %2311 = vmatpush1.msra.mxu0 %v2210
    %2312 = vmatprep.subr.mxu0 0.0
    %2313 = vmatpush1.msra.mxu0 %v2209
    %2314 = vmatprep.subr.mxu0 0.0
    %2315 = vmatpush1.msra.mxu0 %v2208
    %2316 = vmatprep.subr.mxu0 0.0
    %2317 = vmatpush1.msra.mxu0 %v2207
    %2318 = vmatprep.subr.mxu0 0.0
    %2319 = vmatpush1.msra.mxu0 %v2206
    %2320 = vmatprep.subr.mxu0 0.0
    %2321 = vmatpush1.msra.mxu0 %v2205
    %2322 = vmatprep.subr.mxu0 0.0
    %2323 = vmatpush2.msra.mxu0 0.0
    %2324 = vmatprep.subr.mxu0 0.0
    %2325 = vmatpush2.msra.mxu0 0.0
    %2326 = vmatprep.subr.mxu0 0.0
    %2327 = vmatpush2.msra.mxu0 0.0
    %2328 = vmatprep.subr.mxu0 0.0
    %2329 = vmatpush2.msra.mxu0 0.0
    %2330 = vmatprep.subr.mxu0 0.0
    %2331 = vmatpush2.msra.mxu0 0.0
    %2332 = vmatprep.subr.mxu0 0.0
    %2333 = vmatpush2.msra.mxu0 0.0
    %2334 = vmatprep.subr.mxu0 0.0
    %2335 = vmatpush2.msra.mxu0 0.0
    %2336 = vmatprep.subr.mxu0 0.0
    %2337 = vmatpush2.msra.mxu0 0.0
    %2338 = vmatprep.subr.mxu0 0.0
    %2339 = vmatpush2.msra.mxu0 0.0
    %2340 = vmatprep.subr.mxu0 0.0
    %2341 = vmatpush2.msra.mxu0 0.0
    %2342 = vmatprep.subr.mxu0 0.0
    %2343 = vmatpush2.msra.mxu0 0.0
    %2344 = vmatprep.subr.mxu0 0.0
    %2345 = vmatpush2.msra.mxu0 0.0
    %2346 = vmatprep.subr.mxu0 0.0
    %2347 = vmatpush2.msra.mxu0 0.0
    %2348 = vmatprep.subr.mxu0 0.0
    %2349 = vmatpush2.msra.mxu0 0.0
    %2350 = vmatprep.subr.mxu0 0.0
    %2351 = vmatpush2.msra.mxu0 0.0
    %2352 = vmatprep.subr.mxu0 0.0
    %2353 = vmatpush2.msra.mxu0 0.0
    %2354 = vmatprep.mubr.f32.mxu0 0.0
    %2355 = vmatmul.mubr.f32.gmra.mxu0 %v2288
    %v2356 = vpop.f32.mrf.mxu0
    %v2357 = vadd.f32 0.0, %v2356
    %v2358 = vpop.f32.mrf.mxu0
    %2359 = vdwg.mxu0
    %2360 = vmatprep.subr.mxu0 0.0
    %2361 = vmatpush1.msra.mxu0 0.0
    %2362 = vmatprep.subr.mxu0 0.0
    %2363 = vmatpush1.msra.mxu0 0.0
    %2364 = vmatprep.subr.mxu0 0.0
    %2365 = vmatpush1.msra.mxu0 0.0
    %2366 = vmatprep.subr.mxu0 0.0
    %2367 = vmatpush1.msra.mxu0 0.0
    %2368 = vmatprep.subr.mxu0 0.0
    %2369 = vmatpush1.msra.mxu0 0.0
    %2370 = vmatprep.subr.mxu0 0.0
    %2371 = vmatpush1.msra.mxu0 0.0
    %2372 = vmatprep.subr.mxu0 0.0
    %2373 = vmatpush1.msra.mxu0 0.0
    %2374 = vmatprep.subr.mxu0 0.0
    %2375 = vmatpush1.msra.mxu0 0.0
    %2376 = vmatprep.subr.mxu0 0.0
    %2377 = vmatpush1.msra.mxu0 0.0
    %2378 = vmatprep.subr.mxu0 0.0
    %2379 = vmatpush1.msra.mxu0 0.0
    %2380 = vmatprep.subr.mxu0 0.0
    %2381 = vmatpush1.msra.mxu0 0.0
    %2382 = vmatprep.subr.mxu0 0.0
    %2383 = vmatpush1.msra.mxu0 0.0
    %2384 = vmatprep.subr.mxu0 0.0
    %2385 = vmatpush1.msra.mxu0 %v1437
    %2386 = vmatprep.subr.mxu0 0.0
    %2387 = vmatpush1.msra.mxu0 %v1436
    %2388 = vmatprep.subr.mxu0 0.0
    %2389 = vmatpush1.msra.mxu0 %v1435
    %2390 = vmatprep.subr.mxu0 0.0
    %2391 = vmatpush1.msra.mxu0 %v1434
    %2392 = vmatprep.subr.mxu0 0.0
    %2393 = vmatpush2.msra.mxu0 0.0
    %2394 = vmatprep.subr.mxu0 0.0
    %2395 = vmatpush2.msra.mxu0 0.0
    %2396 = vmatprep.subr.mxu0 0.0
    %2397 = vmatpush2.msra.mxu0 0.0
    %2398 = vmatprep.subr.mxu0 0.0
    %2399 = vmatpush2.msra.mxu0 0.0
    %2400 = vmatprep.subr.mxu0 0.0
    %2401 = vmatpush2.msra.mxu0 0.0
    %2402 = vmatprep.subr.mxu0 0.0
    %2403 = vmatpush2.msra.mxu0 0.0
    %2404 = vmatprep.subr.mxu0 0.0
    %2405 = vmatpush2.msra.mxu0 0.0
    %2406 = vmatprep.subr.mxu0 0.0
    %2407 = vmatpush2.msra.mxu0 0.0
    %2408 = vmatprep.subr.mxu0 0.0
    %2409 = vmatpush2.msra.mxu0 0.0
    %2410 = vmatprep.subr.mxu0 0.0
    %2411 = vmatpush2.msra.mxu0 0.0
    %2412 = vmatprep.subr.mxu0 0.0
    %2413 = vmatpush2.msra.mxu0 0.0
    %2414 = vmatprep.subr.mxu0 0.0
    %2415 = vmatpush2.msra.mxu0 0.0
    %2416 = vmatprep.subr.mxu0 0.0
    %2417 = vmatpush2.msra.mxu0 0.0
    %2418 = vmatprep.subr.mxu0 0.0
    %2419 = vmatpush2.msra.mxu0 0.0
    %2420 = vmatprep.subr.mxu0 0.0
    %2421 = vmatpush2.msra.mxu0 0.0
    %2422 = vmatprep.subr.mxu0 0.0
    %2423 = vmatpush2.msra.mxu0 0.0
    %2424 = vmatprep.mubr.f32.mxu0 0.0
    %2425 = vmatmul.mubr.f32.gmra.mxu0 %v1691
    %v2426 = vpop.f32.mrf.mxu0
    %v2427 = vadd.f32 0.0, %v2426
    %v2428 = vpop.f32.mrf.mxu0
    %2429 = vdwg.mxu0
    %v2431 = vsel %vm1119, %v2284, 0
    %2433 = vmatprep.subr.mxu0 0.0
    %2434 = vmatpush1.msra.mxu0 0.0
    %2435 = vmatprep.subr.mxu0 0.0
    %2436 = vmatpush1.msra.mxu0 0.0
    %2437 = vmatprep.subr.mxu0 0.0
    %2438 = vmatpush1.msra.mxu0 0.0
    %2439 = vmatprep.subr.mxu0 0.0
    %2440 = vmatpush1.msra.mxu0 0.0
    %2441 = vmatprep.subr.mxu0 0.0
    %2442 = vmatpush1.msra.mxu0 0.0
    %2443 = vmatprep.subr.mxu0 0.0
    %2444 = vmatpush1.msra.mxu0 0.0
    %2445 = vmatprep.subr.mxu0 0.0
    %2446 = vmatpush1.msra.mxu0 0.0
    %2447 = vmatprep.subr.mxu0 0.0
    %2448 = vmatpush1.msra.mxu0 0.0
    %2449 = vmatprep.subr.mxu0 0.0
    %2450 = vmatpush1.msra.mxu0 0.0
    %2451 = vmatprep.subr.mxu0 0.0
    %2452 = vmatpush1.msra.mxu0 0.0
    %2453 = vmatprep.subr.mxu0 0.0
    %2454 = vmatpush1.msra.mxu0 0.0
    %2455 = vmatprep.subr.mxu0 0.0
    %2456 = vmatpush1.msra.mxu0 0.0
    %2457 = vmatprep.subr.mxu0 0.0
    %2458 = vmatpush1.msra.mxu0 0.0
    %2459 = vmatprep.subr.mxu0 0.0
    %2460 = vmatpush1.msra.mxu0 0.0
    %2461 = vmatprep.subr.mxu0 0.0
    %2462 = vmatpush1.msra.mxu0 %v1433
    %2463 = vmatprep.subr.mxu0 0.0
    %2464 = vmatpush1.msra.mxu0 %v1432
    %2465 = vmatprep.subr.mxu0 0.0
    %2466 = vmatpush2.msra.mxu0 0.0
    %2467 = vmatprep.subr.mxu0 0.0
    %2468 = vmatpush2.msra.mxu0 0.0
    %2469 = vmatprep.subr.mxu0 0.0
    %2470 = vmatpush2.msra.mxu0 0.0
    %2471 = vmatprep.subr.mxu0 0.0
    %2472 = vmatpush2.msra.mxu0 0.0
    %2473 = vmatprep.subr.mxu0 0.0
    %2474 = vmatpush2.msra.mxu0 0.0
    %2475 = vmatprep.subr.mxu0 0.0
    %2476 = vmatpush2.msra.mxu0 0.0
    %2477 = vmatprep.subr.mxu0 0.0
    %2478 = vmatpush2.msra.mxu0 0.0
    %2479 = vmatprep.subr.mxu0 0.0
    %2480 = vmatpush2.msra.mxu0 0.0
    %2481 = vmatprep.subr.mxu0 0.0
    %2482 = vmatpush2.msra.mxu0 0.0
    %2483 = vmatprep.subr.mxu0 0.0
    %2484 = vmatpush2.msra.mxu0 0.0
    %2485 = vmatprep.subr.mxu0 0.0
    %2486 = vmatpush2.msra.mxu0 0.0
    %2487 = vmatprep.subr.mxu0 0.0
    %2488 = vmatpush2.msra.mxu0 0.0
    %2489 = vmatprep.subr.mxu0 0.0
    %2490 = vmatpush2.msra.mxu0 0.0
    %2491 = vmatprep.subr.mxu0 0.0
    %2492 = vmatpush2.msra.mxu0 0.0
    %2493 = vmatprep.subr.mxu0 0.0
    %2494 = vmatpush2.msra.mxu0 0.0
    %2495 = vmatprep.subr.mxu0 0.0
    %2496 = vmatpush2.msra.mxu0 0.0
    %2497 = vmatprep.mubr.f32.mxu0 0.0
    %2498 = vmatmul.mubr.f32.gmra.mxu0 %v2431
    %v2499 = vpop.f32.mrf.mxu0
    %v2500 = vadd.f32 %v2427, %v2499
    %v2501 = vpop.f32.mrf.mxu0
    %2502 = vdwg.mxu0
    %v2504 = vlaneseq
    %v2505 = vshrl.u32 %v2504, 7
    %v2506 = vsub.s32 0, %v2505
    %v2507 = vrot.slane %v1438, %v2506
    %v2509 = vadd.f32 %v2500, %v2507
    %v2510 = vmax.f32 %v2509, 0.0
    %v2512 = vlaneseq
    %v2513 = vshrl.u32 %v2512, 7
    %v2514 = vsub.s32 0, %v2513
    %v2515 = vrot.slane %v1443, %v2514
    %v2518 = vsel %vm150, %v2510, 0
    %2520 = vmatprep.subr.mxu0 0.0
    %2521 = vmatpush1.msra.mxu0 0.0
    %2522 = vmatprep.subr.mxu0 0.0
    %2523 = vmatpush1.msra.mxu0 0.0
    %2524 = vmatprep.subr.mxu0 0.0
    %2525 = vmatpush1.msra.mxu0 0.0
    %2526 = vmatprep.subr.mxu0 0.0
    %2527 = vmatpush1.msra.mxu0 0.0
    %2528 = vmatprep.subr.mxu0 0.0
    %2529 = vmatpush1.msra.mxu0 0.0
    %2530 = vmatprep.subr.mxu0 0.0
    %2531 = vmatpush1.msra.mxu0 0.0
    %2532 = vmatprep.subr.mxu0 0.0
    %2533 = vmatpush1.msra.mxu0 0.0
    %2534 = vmatprep.subr.mxu0 0.0
    %2535 = vmatpush1.msra.mxu0 0.0
    %2536 = vmatprep.subr.mxu0 0.0
    %2537 = vmatpush1.msra.mxu0 0.0
    %2538 = vmatprep.subr.mxu0 0.0
    %2539 = vmatpush1.msra.mxu0 0.0
    %2540 = vmatprep.subr.mxu0 0.0
    %2541 = vmatpush1.msra.mxu0 0.0
    %2542 = vmatprep.subr.mxu0 0.0
    %2543 = vmatpush1.msra.mxu0 0.0
    %2544 = vmatprep.subr.mxu0 0.0
    %2545 = vmatpush1.msra.mxu0 %v1442
    %2546 = vmatprep.subr.mxu0 0.0
    %2547 = vmatpush1.msra.mxu0 %v1441
    %2548 = vmatprep.subr.mxu0 0.0
    %2549 = vmatpush1.msra.mxu0 %v1440
    %2550 = vmatprep.subr.mxu0 0.0
    %2551 = vmatpush1.msra.mxu0 %v1439
    %2552 = vmatprep.subr.mxu0 0.0
    %2553 = vmatpush2.msra.mxu0 0.0
    %2554 = vmatprep.subr.mxu0 0.0
    %2555 = vmatpush2.msra.mxu0 0.0
    %2556 = vmatprep.subr.mxu0 0.0
    %2557 = vmatpush2.msra.mxu0 0.0
    %2558 = vmatprep.subr.mxu0 0.0
    %2559 = vmatpush2.msra.mxu0 0.0
    %2560 = vmatprep.subr.mxu0 0.0
    %2561 = vmatpush2.msra.mxu0 0.0
    %2562 = vmatprep.subr.mxu0 0.0
    %2563 = vmatpush2.msra.mxu0 0.0
    %2564 = vmatprep.subr.mxu0 0.0
    %2565 = vmatpush2.msra.mxu0 0.0
    %2566 = vmatprep.subr.mxu0 0.0
    %2567 = vmatpush2.msra.mxu0 0.0
    %2568 = vmatprep.subr.mxu0 0.0
    %2569 = vmatpush2.msra.mxu0 0.0
    %2570 = vmatprep.subr.mxu0 0.0
    %2571 = vmatpush2.msra.mxu0 0.0
    %2572 = vmatprep.subr.mxu0 0.0
    %2573 = vmatpush2.msra.mxu0 0.0
    %2574 = vmatprep.subr.mxu0 0.0
    %2575 = vmatpush2.msra.mxu0 0.0
    %2576 = vmatprep.subr.mxu0 0.0
    %2577 = vmatpush2.msra.mxu0 0.0
    %2578 = vmatprep.subr.mxu0 0.0
    %2579 = vmatpush2.msra.mxu0 0.0
    %2580 = vmatprep.subr.mxu0 0.0
    %2581 = vmatpush2.msra.mxu0 0.0
    %2582 = vmatprep.subr.mxu0 0.0
    %2583 = vmatpush2.msra.mxu0 0.0
    %2584 = vmatprep.mubr.f32.mxu0 0.0
    %2585 = vmatmul.mubr.f32.gmra.mxu0 %v2518
    %v2586 = vpop.f32.mrf.mxu0
    %v2587 = vadd.f32 %v2515, %v2586
    %v2588 = vpop.f32.mrf.mxu0
    %2589 = vdwg.mxu0
    %v2590 = vmax.f32 %v2587, 0.0
    %2591 = vmatprep.subr.mxu0 0.0
    %2592 = vmatpush1.msra.mxu0 0.0
    %2593 = vmatprep.subr.mxu0 0.0
    %2594 = vmatpush1.msra.mxu0 0.0
    %2595 = vmatprep.subr.mxu0 0.0
    %2596 = vmatpush1.msra.mxu0 0.0
    %2597 = vmatprep.subr.mxu0 0.0
    %2598 = vmatpush1.msra.mxu0 0.0
    %2599 = vmatprep.subr.mxu0 0.0
    %2600 = vmatpush1.msra.mxu0 0.0
    %2601 = vmatprep.subr.mxu0 0.0
    %2602 = vmatpush1.msra.mxu0 0.0
    %2603 = vmatprep.subr.mxu0 0.0
    %2604 = vmatpush1.msra.mxu0 0.0
    %2605 = vmatprep.subr.mxu0 0.0
    %2606 = vmatpush1.msra.mxu0 0.0
    %2607 = vmatprep.subr.mxu0 0.0
    %2608 = vmatpush1.msra.mxu0 0.0
    %2609 = vmatprep.subr.mxu0 0.0
    %2610 = vmatpush1.msra.mxu0 0.0
    %2611 = vmatprep.subr.mxu0 0.0
    %2612 = vmatpush1.msra.mxu0 0.0
    %2613 = vmatprep.subr.mxu0 0.0
    %2614 = vmatpush1.msra.mxu0 0.0
    %2615 = vmatprep.subr.mxu0 0.0
    %2616 = vmatpush1.msra.mxu0 %v1437
    %2617 = vmatprep.subr.mxu0 0.0
    %2618 = vmatpush1.msra.mxu0 %v1436
    %2619 = vmatprep.subr.mxu0 0.0
    %2620 = vmatpush1.msra.mxu0 %v1435
    %2621 = vmatprep.subr.mxu0 0.0
    %2622 = vmatpush1.msra.mxu0 %v1434
    %2623 = vmatprep.subr.mxu0 0.0
    %2624 = vmatpush2.msra.mxu0 0.0
    %2625 = vmatprep.subr.mxu0 0.0
    %2626 = vmatpush2.msra.mxu0 0.0
    %2627 = vmatprep.subr.mxu0 0.0
    %2628 = vmatpush2.msra.mxu0 0.0
    %2629 = vmatprep.subr.mxu0 0.0
    %2630 = vmatpush2.msra.mxu0 0.0
    %2631 = vmatprep.subr.mxu0 0.0
    %2632 = vmatpush2.msra.mxu0 0.0
    %2633 = vmatprep.subr.mxu0 0.0
    %2634 = vmatpush2.msra.mxu0 0.0
    %2635 = vmatprep.subr.mxu0 0.0
    %2636 = vmatpush2.msra.mxu0 0.0
    %2637 = vmatprep.subr.mxu0 0.0
    %2638 = vmatpush2.msra.mxu0 0.0
    %2639 = vmatprep.subr.mxu0 0.0
    %2640 = vmatpush2.msra.mxu0 0.0
    %2641 = vmatprep.subr.mxu0 0.0
    %2642 = vmatpush2.msra.mxu0 0.0
    %2643 = vmatprep.subr.mxu0 0.0
    %2644 = vmatpush2.msra.mxu0 0.0
    %2645 = vmatprep.subr.mxu0 0.0
    %2646 = vmatpush2.msra.mxu0 0.0
    %2647 = vmatprep.subr.mxu0 0.0
    %2648 = vmatpush2.msra.mxu0 0.0
    %2649 = vmatprep.subr.mxu0 0.0
    %2650 = vmatpush2.msra.mxu0 0.0
    %2651 = vmatprep.subr.mxu0 0.0
    %2652 = vmatpush2.msra.mxu0 0.0
    %2653 = vmatprep.subr.mxu0 0.0
    %2654 = vmatpush2.msra.mxu0 0.0
    %2655 = vmatprep.mubr.f32.mxu0 0.0
    %2656 = vmatmul.mubr.f32.gmra.mxu0 %v1877
    %v2657 = vpop.f32.mrf.mxu0
    %v2658 = vadd.f32 0.0, %v2657
    %v2659 = vpop.f32.mrf.mxu0
    %2660 = vdwg.mxu0
    %v2662 = vsel %vm1119, %v2357, 0
    %2664 = vmatprep.subr.mxu0 0.0
    %2665 = vmatpush1.msra.mxu0 0.0
    %2666 = vmatprep.subr.mxu0 0.0
    %2667 = vmatpush1.msra.mxu0 0.0
    %2668 = vmatprep.subr.mxu0 0.0
    %2669 = vmatpush1.msra.mxu0 0.0
    %2670 = vmatprep.subr.mxu0 0.0
    %2671 = vmatpush1.msra.mxu0 0.0
    %2672 = vmatprep.subr.mxu0 0.0
    %2673 = vmatpush1.msra.mxu0 0.0
    %2674 = vmatprep.subr.mxu0 0.0
    %2675 = vmatpush1.msra.mxu0 0.0
    %2676 = vmatprep.subr.mxu0 0.0
    %2677 = vmatpush1.msra.mxu0 0.0
    %2678 = vmatprep.subr.mxu0 0.0
    %2679 = vmatpush1.msra.mxu0 0.0
    %2680 = vmatprep.subr.mxu0 0.0
    %2681 = vmatpush1.msra.mxu0 0.0
    %2682 = vmatprep.subr.mxu0 0.0
    %2683 = vmatpush1.msra.mxu0 0.0
    %2684 = vmatprep.subr.mxu0 0.0
    %2685 = vmatpush1.msra.mxu0 0.0
    %2686 = vmatprep.subr.mxu0 0.0
    %2687 = vmatpush1.msra.mxu0 0.0
    %2688 = vmatprep.subr.mxu0 0.0
    %2689 = vmatpush1.msra.mxu0 0.0
    %2690 = vmatprep.subr.mxu0 0.0
    %2691 = vmatpush1.msra.mxu0 0.0
    %2692 = vmatprep.subr.mxu0 0.0
    %2693 = vmatpush1.msra.mxu0 %v1433
    %2694 = vmatprep.subr.mxu0 0.0
    %2695 = vmatpush1.msra.mxu0 %v1432
    %2696 = vmatprep.subr.mxu0 0.0
    %2697 = vmatpush2.msra.mxu0 0.0
    %2698 = vmatprep.subr.mxu0 0.0
    %2699 = vmatpush2.msra.mxu0 0.0
    %2700 = vmatprep.subr.mxu0 0.0
    %2701 = vmatpush2.msra.mxu0 0.0
    %2702 = vmatprep.subr.mxu0 0.0
    %2703 = vmatpush2.msra.mxu0 0.0
    %2704 = vmatprep.subr.mxu0 0.0
    %2705 = vmatpush2.msra.mxu0 0.0
    %2706 = vmatprep.subr.mxu0 0.0
    %2707 = vmatpush2.msra.mxu0 0.0
    %2708 = vmatprep.subr.mxu0 0.0
    %2709 = vmatpush2.msra.mxu0 0.0
    %2710 = vmatprep.subr.mxu0 0.0
    %2711 = vmatpush2.msra.mxu0 0.0
    %2712 = vmatprep.subr.mxu0 0.0
    %2713 = vmatpush2.msra.mxu0 0.0
    %2714 = vmatprep.subr.mxu0 0.0
    %2715 = vmatpush2.msra.mxu0 0.0
    %2716 = vmatprep.subr.mxu0 0.0
    %2717 = vmatpush2.msra.mxu0 0.0
    %2718 = vmatprep.subr.mxu0 0.0
    %2719 = vmatpush2.msra.mxu0 0.0
    %2720 = vmatprep.subr.mxu0 0.0
    %2721 = vmatpush2.msra.mxu0 0.0
    %2722 = vmatprep.subr.mxu0 0.0
    %2723 = vmatpush2.msra.mxu0 0.0
    %2724 = vmatprep.subr.mxu0 0.0
    %2725 = vmatpush2.msra.mxu0 0.0
    %2726 = vmatprep.subr.mxu0 0.0
    %2727 = vmatpush2.msra.mxu0 0.0
    %2728 = vmatprep.mubr.f32.mxu0 0.0
    %2729 = vmatmul.mubr.f32.gmra.mxu0 %v2662
    %v2730 = vpop.f32.mrf.mxu0
    %v2731 = vadd.f32 %v2658, %v2730
    %v2732 = vpop.f32.mrf.mxu0
    %2733 = vdwg.mxu0
    %v2734 = vadd.f32 %v2731, %v2507
    %v2735 = vmax.f32 %v2734, 0.0
    %v2737 = vsel %vm150, %v2735, 0
    %2739 = vmatprep.subr.mxu0 0.0
    %2740 = vmatpush1.msra.mxu0 0.0
    %2741 = vmatprep.subr.mxu0 0.0
    %2742 = vmatpush1.msra.mxu0 0.0
    %2743 = vmatprep.subr.mxu0 0.0
    %2744 = vmatpush1.msra.mxu0 0.0
    %2745 = vmatprep.subr.mxu0 0.0
    %2746 = vmatpush1.msra.mxu0 0.0
    %2747 = vmatprep.subr.mxu0 0.0
    %2748 = vmatpush1.msra.mxu0 0.0
    %2749 = vmatprep.subr.mxu0 0.0
    %2750 = vmatpush1.msra.mxu0 0.0
    %2751 = vmatprep.subr.mxu0 0.0
    %2752 = vmatpush1.msra.mxu0 0.0
    %2753 = vmatprep.subr.mxu0 0.0
    %2754 = vmatpush1.msra.mxu0 0.0
    %2755 = vmatprep.subr.mxu0 0.0
    %2756 = vmatpush1.msra.mxu0 0.0
    %2757 = vmatprep.subr.mxu0 0.0
    %2758 = vmatpush1.msra.mxu0 0.0
    %2759 = vmatprep.subr.mxu0 0.0
    %2760 = vmatpush1.msra.mxu0 0.0
    %2761 = vmatprep.subr.mxu0 0.0
    %2762 = vmatpush1.msra.mxu0 0.0
    %2763 = vmatprep.subr.mxu0 0.0
    %2764 = vmatpush1.msra.mxu0 %v1442
    %2765 = vmatprep.subr.mxu0 0.0
    %2766 = vmatpush1.msra.mxu0 %v1441
    %2767 = vmatprep.subr.mxu0 0.0
    %2768 = vmatpush1.msra.mxu0 %v1440
    %2769 = vmatprep.subr.mxu0 0.0
    %2770 = vmatpush1.msra.mxu0 %v1439
    %2771 = vmatprep.subr.mxu0 0.0
    %2772 = vmatpush2.msra.mxu0 0.0
    %2773 = vmatprep.subr.mxu0 0.0
    %2774 = vmatpush2.msra.mxu0 0.0
    %2775 = vmatprep.subr.mxu0 0.0
    %2776 = vmatpush2.msra.mxu0 0.0
    %2777 = vmatprep.subr.mxu0 0.0
    %2778 = vmatpush2.msra.mxu0 0.0
    %2779 = vmatprep.subr.mxu0 0.0
    %2780 = vmatpush2.msra.mxu0 0.0
    %2781 = vmatprep.subr.mxu0 0.0
    %2782 = vmatpush2.msra.mxu0 0.0
    %2783 = vmatprep.subr.mxu0 0.0
    %2784 = vmatpush2.msra.mxu0 0.0
    %2785 = vmatprep.subr.mxu0 0.0
    %2786 = vmatpush2.msra.mxu0 0.0
    %2787 = vmatprep.subr.mxu0 0.0
    %2788 = vmatpush2.msra.mxu0 0.0
    %2789 = vmatprep.subr.mxu0 0.0
    %2790 = vmatpush2.msra.mxu0 0.0
    %2791 = vmatprep.subr.mxu0 0.0
    %2792 = vmatpush2.msra.mxu0 0.0
    %2793 = vmatprep.subr.mxu0 0.0
    %2794 = vmatpush2.msra.mxu0 0.0
    %2795 = vmatprep.subr.mxu0 0.0
    %2796 = vmatpush2.msra.mxu0 0.0
    %2797 = vmatprep.subr.mxu0 0.0
    %2798 = vmatpush2.msra.mxu0 0.0
    %2799 = vmatprep.subr.mxu0 0.0
    %2800 = vmatpush2.msra.mxu0 0.0
    %2801 = vmatprep.subr.mxu0 0.0
    %2802 = vmatpush2.msra.mxu0 0.0
    %2803 = vmatprep.mubr.f32.mxu0 0.0
    %2804 = vmatmul.mubr.f32.gmra.mxu0 %v2737
    %v2805 = vpop.f32.mrf.mxu0
    %v2806 = vadd.f32 %v2515, %v2805
    %v2807 = vpop.f32.mrf.mxu0
    %2808 = vdwg.mxu0
    %v2809 = vmax.f32 %v2806, 0.0
    %v2811 = vlaneseq
    %v2812 = vshrl.u32 %v2811, 7
    %v2813 = vsub.s32 0, %v2812
    %v2814 = vrot.slane %v1446, %v2813
    %v2817 = vsel %vm1119, %v2205, 0
    %v2820 = vsel %vm1119, %v2206, 0
    %v2823 = vsel %vm1119, %v2207, 0
    %v2826 = vsel %vm1119, %v2208, 0
    %v2829 = vsel %vm1119, %v2209, 0
    %v2832 = vsel %vm1119, %v2210, 0
    %v2835 = vsel %vm1119, %v2211, 0
    %v2838 = vsel %vm1119, %v2212, 0
    %2840 = vmatprep.subr.mxu0 0.0
    %2841 = vmatpush1.msra.mxu0 0.0
    %2842 = vmatprep.subr.mxu0 0.0
    %2843 = vmatpush1.msra.mxu0 0.0
    %2844 = vmatprep.subr.mxu0 0.0
    %2845 = vmatpush1.msra.mxu0 0.0
    %2846 = vmatprep.subr.mxu0 0.0
    %2847 = vmatpush1.msra.mxu0 0.0
    %2848 = vmatprep.subr.mxu0 0.0
    %2849 = vmatpush1.msra.mxu0 0.0
    %2850 = vmatprep.subr.mxu0 0.0
    %2851 = vmatpush1.msra.mxu0 0.0
    %2852 = vmatprep.subr.mxu0 0.0
    %2853 = vmatpush1.msra.mxu0 0.0
    %2854 = vmatprep.subr.mxu0 0.0
    %2855 = vmatpush1.msra.mxu0 0.0
    %2856 = vmatprep.subr.mxu0 0.0
    %2857 = vmatpush1.msra.mxu0 0.0
    %2858 = vmatprep.subr.mxu0 0.0
    %2859 = vmatpush1.msra.mxu0 0.0
    %2860 = vmatprep.subr.mxu0 0.0
    %2861 = vmatpush1.msra.mxu0 0.0
    %2862 = vmatprep.subr.mxu0 0.0
    %2863 = vmatpush1.msra.mxu0 0.0
    %2864 = vmatprep.subr.mxu0 0.0
    %2865 = vmatpush1.msra.mxu0 0.0
    %2866 = vmatprep.subr.mxu0 0.0
    %2867 = vmatpush1.msra.mxu0 0.0
    %2868 = vmatprep.subr.mxu0 0.0
    %2869 = vmatpush1.msra.mxu0 %v1445
    %2870 = vmatprep.subr.mxu0 0.0
    %2871 = vmatpush1.msra.mxu0 %v1444
    %2872 = vmatprep.subr.mxu0 0.0
    %2873 = vmatpush2.msra.mxu0 0.0
    %2874 = vmatprep.subr.mxu0 0.0
    %2875 = vmatpush2.msra.mxu0 0.0
    %2876 = vmatprep.subr.mxu0 0.0
    %2877 = vmatpush2.msra.mxu0 0.0
    %2878 = vmatprep.subr.mxu0 0.0
    %2879 = vmatpush2.msra.mxu0 0.0
    %2880 = vmatprep.subr.mxu0 0.0
    %2881 = vmatpush2.msra.mxu0 0.0
    %2882 = vmatprep.subr.mxu0 0.0
    %2883 = vmatpush2.msra.mxu0 0.0
    %2884 = vmatprep.subr.mxu0 0.0
    %2885 = vmatpush2.msra.mxu0 0.0
    %2886 = vmatprep.subr.mxu0 0.0
    %2887 = vmatpush2.msra.mxu0 0.0
    %2888 = vmatprep.subr.mxu0 0.0
    %2889 = vmatpush2.msra.mxu0 0.0
    %2890 = vmatprep.subr.mxu0 0.0
    %2891 = vmatpush2.msra.mxu0 0.0
    %2892 = vmatprep.subr.mxu0 0.0
    %2893 = vmatpush2.msra.mxu0 0.0
    %2894 = vmatprep.subr.mxu0 0.0
    %2895 = vmatpush2.msra.mxu0 0.0
    %2896 = vmatprep.subr.mxu0 0.0
    %2897 = vmatpush2.msra.mxu0 0.0
    %2898 = vmatprep.subr.mxu0 0.0
    %2899 = vmatpush2.msra.mxu0 0.0
    %2900 = vmatprep.subr.mxu0 0.0
    %2901 = vmatpush2.msra.mxu0 0.0
    %2902 = vmatprep.subr.mxu0 0.0
    %2903 = vmatpush2.msra.mxu0 0.0
    %2904 = vmatprep.mubr.f32.mxu0 0.0
    %2905 = vmatmul.mubr.f32.gmra.mxu0 %v2817
    %v2906 = vpop.f32.mrf.mxu0
    %v2907 = vadd.f32 %v2814, %v2906
    %v2908 = vpop.f32.mrf.mxu0
    %2909 = vmatprep.mubr.f32.mxu0 0.0
    %2910 = vmatmul.mubr.f32.gmra.mxu0 %v2820
    %v2911 = vpop.f32.mrf.mxu0
    %v2912 = vadd.f32 %v2814, %v2911
    %v2913 = vpop.f32.mrf.mxu0
    %2914 = vmatprep.mubr.f32.mxu0 0.0
    %2915 = vmatmul.mubr.f32.gmra.mxu0 %v2823
    %v2916 = vpop.f32.mrf.mxu0
    %v2917 = vadd.f32 %v2814, %v2916
    %v2918 = vpop.f32.mrf.mxu0
    %2919 = vmatprep.mubr.f32.mxu0 0.0
    %2920 = vmatmul.mubr.f32.gmra.mxu0 %v2826
    %v2921 = vpop.f32.mrf.mxu0
    %v2922 = vadd.f32 %v2814, %v2921
    %v2923 = vpop.f32.mrf.mxu0
    %2924 = vmatprep.mubr.f32.mxu0 0.0
    %2925 = vmatmul.mubr.f32.gmra.mxu0 %v2829
    %v2926 = vpop.f32.mrf.mxu0
    %v2927 = vadd.f32 %v2814, %v2926
    %v2928 = vpop.f32.mrf.mxu0
    %2929 = vmatprep.mubr.f32.mxu0 0.0
    %2930 = vmatmul.mubr.f32.gmra.mxu0 %v2832
    %v2931 = vpop.f32.mrf.mxu0
    %v2932 = vadd.f32 %v2814, %v2931
    %v2933 = vpop.f32.mrf.mxu0
    %2934 = vmatprep.mubr.f32.mxu0 0.0
    %2935 = vmatmul.mubr.f32.gmra.mxu0 %v2835
    %v2936 = vpop.f32.mrf.mxu0
    %v2937 = vadd.f32 %v2814, %v2936
    %v2938 = vpop.f32.mrf.mxu0
    %2939 = vmatprep.mubr.f32.mxu0 0.0
    %2940 = vmatmul.mubr.f32.gmra.mxu0 %v2838
    %v2941 = vpop.f32.mrf.mxu0
    %v2942 = vadd.f32 %v2814, %v2941
    %v2943 = vpop.f32.mrf.mxu0
    %2944 = vdwg.mxu0
    %v2945 = vmax.f32 %v2907, 0.0
    %v2946 = vmax.f32 %v2912, 0.0
    %v2947 = vmax.f32 %v2917, 0.0
    %v2948 = vmax.f32 %v2922, 0.0
    %v2949 = vmax.f32 %v2927, 0.0
    %v2950 = vmax.f32 %v2932, 0.0
    %v2951 = vmax.f32 %v2937, 0.0
    %v2952 = vmax.f32 %v2942, 0.0
    %v2954 = vlaneseq
    %v2955 = vshrl.u32 %v2954, 7
    %v2956 = vsub.s32 0, %v2955
    %v2957 = vrot.slane %v1449, %v2956
    %v2960 = vsel %vm1119, %v2945, 0
    %v2963 = vsel %vm1119, %v2946, 0
    %v2966 = vsel %vm1119, %v2947, 0
    %v2969 = vsel %vm1119, %v2948, 0
    %v2972 = vsel %vm1119, %v2949, 0
    %v2975 = vsel %vm1119, %v2950, 0
    %v2978 = vsel %vm1119, %v2951, 0
    %v2981 = vsel %vm1119, %v2952, 0
    %2983 = vmatprep.subr.mxu0 0.0
    %2984 = vmatpush1.msra.mxu0 0.0
    %2985 = vmatprep.subr.mxu0 0.0
    %2986 = vmatpush1.msra.mxu0 0.0
    %2987 = vmatprep.subr.mxu0 0.0
    %2988 = vmatpush1.msra.mxu0 0.0
    %2989 = vmatprep.subr.mxu0 0.0
    %2990 = vmatpush1.msra.mxu0 0.0
    %2991 = vmatprep.subr.mxu0 0.0
    %2992 = vmatpush1.msra.mxu0 0.0
    %2993 = vmatprep.subr.mxu0 0.0
    %2994 = vmatpush1.msra.mxu0 0.0
    %2995 = vmatprep.subr.mxu0 0.0
    %2996 = vmatpush1.msra.mxu0 0.0
    %2997 = vmatprep.subr.mxu0 0.0
    %2998 = vmatpush1.msra.mxu0 0.0
    %2999 = vmatprep.subr.mxu0 0.0
    %3000 = vmatpush1.msra.mxu0 0.0
    %3001 = vmatprep.subr.mxu0 0.0
    %3002 = vmatpush1.msra.mxu0 0.0
    %3003 = vmatprep.subr.mxu0 0.0
    %3004 = vmatpush1.msra.mxu0 0.0
    %3005 = vmatprep.subr.mxu0 0.0
    %3006 = vmatpush1.msra.mxu0 0.0
    %3007 = vmatprep.subr.mxu0 0.0
    %3008 = vmatpush1.msra.mxu0 0.0
    %3009 = vmatprep.subr.mxu0 0.0
    %3010 = vmatpush1.msra.mxu0 0.0
    %3011 = vmatprep.subr.mxu0 0.0
    %3012 = vmatpush1.msra.mxu0 %v1448
    %3013 = vmatprep.subr.mxu0 0.0
    %3014 = vmatpush1.msra.mxu0 %v1447
    %3015 = vmatprep.subr.mxu0 0.0
    %3016 = vmatpush2.msra.mxu0 0.0
    %3017 = vmatprep.subr.mxu0 0.0
    %3018 = vmatpush2.msra.mxu0 0.0
    %3019 = vmatprep.subr.mxu0 0.0
    %3020 = vmatpush2.msra.mxu0 0.0
    %3021 = vmatprep.subr.mxu0 0.0
    %3022 = vmatpush2.msra.mxu0 0.0
    %3023 = vmatprep.subr.mxu0 0.0
    %3024 = vmatpush2.msra.mxu0 0.0
    %3025 = vmatprep.subr.mxu0 0.0
    %3026 = vmatpush2.msra.mxu0 0.0
    %3027 = vmatprep.subr.mxu0 0.0
    %3028 = vmatpush2.msra.mxu0 0.0
    %3029 = vmatprep.subr.mxu0 0.0
    %3030 = vmatpush2.msra.mxu0 0.0
    %3031 = vmatprep.subr.mxu0 0.0
    %3032 = vmatpush2.msra.mxu0 0.0
    %3033 = vmatprep.subr.mxu0 0.0
    %3034 = vmatpush2.msra.mxu0 0.0
    %3035 = vmatprep.subr.mxu0 0.0
    %3036 = vmatpush2.msra.mxu0 0.0
    %3037 = vmatprep.subr.mxu0 0.0
    %3038 = vmatpush2.msra.mxu0 0.0
    %3039 = vmatprep.subr.mxu0 0.0
    %3040 = vmatpush2.msra.mxu0 0.0
    %3041 = vmatprep.subr.mxu0 0.0
    %3042 = vmatpush2.msra.mxu0 0.0
    %3043 = vmatprep.subr.mxu0 0.0
    %3044 = vmatpush2.msra.mxu0 0.0
    %3045 = vmatprep.subr.mxu0 0.0
    %3046 = vmatpush2.msra.mxu0 0.0
    %3047 = vmatprep.mubr.f32.mxu0 0.0
    %3048 = vmatmul.mubr.f32.gmra.mxu0 %v2960
    %v3049 = vpop.f32.mrf.mxu0
    %v3050 = vadd.f32 %v2957, %v3049
    %v3051 = vpop.f32.mrf.mxu0
    %3052 = vmatprep.mubr.f32.mxu0 0.0
    %3053 = vmatmul.mubr.f32.gmra.mxu0 %v2963
    %v3054 = vpop.f32.mrf.mxu0
    %v3055 = vadd.f32 %v2957, %v3054
    %v3056 = vpop.f32.mrf.mxu0
    %3057 = vmatprep.mubr.f32.mxu0 0.0
    %3058 = vmatmul.mubr.f32.gmra.mxu0 %v2966
    %v3059 = vpop.f32.mrf.mxu0
    %v3060 = vadd.f32 %v2957, %v3059
    %v3061 = vpop.f32.mrf.mxu0
    %3062 = vmatprep.mubr.f32.mxu0 0.0
    %3063 = vmatmul.mubr.f32.gmra.mxu0 %v2969
    %v3064 = vpop.f32.mrf.mxu0
    %v3065 = vadd.f32 %v2957, %v3064
    %v3066 = vpop.f32.mrf.mxu0
    %3067 = vmatprep.mubr.f32.mxu0 0.0
    %3068 = vmatmul.mubr.f32.gmra.mxu0 %v2972
    %v3069 = vpop.f32.mrf.mxu0
    %v3070 = vadd.f32 %v2957, %v3069
    %v3071 = vpop.f32.mrf.mxu0
    %3072 = vmatprep.mubr.f32.mxu0 0.0
    %3073 = vmatmul.mubr.f32.gmra.mxu0 %v2975
    %v3074 = vpop.f32.mrf.mxu0
    %v3075 = vadd.f32 %v2957, %v3074
    %v3076 = vpop.f32.mrf.mxu0
    %3077 = vmatprep.mubr.f32.mxu0 0.0
    %3078 = vmatmul.mubr.f32.gmra.mxu0 %v2978
    %v3079 = vpop.f32.mrf.mxu0
    %v3080 = vadd.f32 %v2957, %v3079
    %v3081 = vpop.f32.mrf.mxu0
    %3082 = vmatprep.mubr.f32.mxu0 0.0
    %3083 = vmatmul.mubr.f32.gmra.mxu0 %v2981
    %v3084 = vpop.f32.mrf.mxu0
    %v3085 = vadd.f32 %v2957, %v3084
    %v3086 = vpop.f32.mrf.mxu0
    %3087 = vdwg.mxu0
    %3089 = vset.pattern.permute.xlu0 0
    %3090 = vperm.xlu0 %3089, %v3050
    %v3091 = vpop.permute.xlu0 %3090
    %3094 = vset.pattern.permute.xlu0 0
    %3095 = vperm.xlu0 %3094, %v3055
    %v3096 = vpop.permute.xlu0 %3095
    %3099 = vset.pattern.permute.xlu0 0
    %3100 = vperm.xlu0 %3099, %v3060
    %v3101 = vpop.permute.xlu0 %3100
    %3104 = vset.pattern.permute.xlu0 0
    %3105 = vperm.xlu0 %3104, %v3065
    %v3106 = vpop.permute.xlu0 %3105
    %3109 = vset.pattern.permute.xlu0 0
    %3110 = vperm.xlu0 %3109, %v3070
    %v3111 = vpop.permute.xlu0 %3110
    %3114 = vset.pattern.permute.xlu0 0
    %3115 = vperm.xlu0 %3114, %v3075
    %v3116 = vpop.permute.xlu0 %3115
    %3119 = vset.pattern.permute.xlu0 0
    %3120 = vperm.xlu0 %3119, %v3080
    %v3121 = vpop.permute.xlu0 %3120
    %3124 = vset.pattern.permute.xlu0 0
    %3125 = vperm.xlu0 %3124, %v3085
    %v3126 = vpop.permute.xlu0 %3125
    %v3128 = vmul.f32 %v3091, %v137
    %v3129 = vmul.f32 %v3096, %v138
    %v3130 = vmul.f32 %v3101, %v139
    %v3131 = vmul.f32 %v3106, %v140
    %v3132 = vmul.f32 %v3111, %v141
    %v3133 = vmul.f32 %v3116, %v142
    %v3134 = vmul.f32 %v3121, %v143
    %v3135 = vmul.f32 %v3126, %v144
    %3136 = vmatprep.subr.mxu0 0.0
    %3137 = vmatpush1.msra.mxu0 0.0
    %3138 = vmatprep.subr.mxu0 0.0
    %3139 = vmatpush1.msra.mxu0 0.0
    %3140 = vmatprep.subr.mxu0 0.0
    %3141 = vmatpush1.msra.mxu0 0.0
    %3142 = vmatprep.subr.mxu0 0.0
    %3143 = vmatpush1.msra.mxu0 0.0
    %3144 = vmatprep.subr.mxu0 0.0
    %3145 = vmatpush1.msra.mxu0 0.0
    %3146 = vmatprep.subr.mxu0 0.0
    %3147 = vmatpush1.msra.mxu0 0.0
    %3148 = vmatprep.subr.mxu0 0.0
    %3149 = vmatpush1.msra.mxu0 0.0
    %3150 = vmatprep.subr.mxu0 0.0
    %3151 = vmatpush1.msra.mxu0 0.0
    %3152 = vmatprep.subr.mxu0 0.0
    %3153 = vmatpush1.msra.mxu0 %v3135
    %3154 = vmatprep.subr.mxu0 0.0
    %3155 = vmatpush1.msra.mxu0 %v3134
    %3156 = vmatprep.subr.mxu0 0.0
    %3157 = vmatpush1.msra.mxu0 %v3133
    %3158 = vmatprep.subr.mxu0 0.0
    %3159 = vmatpush1.msra.mxu0 %v3132
    %3160 = vmatprep.subr.mxu0 0.0
    %3161 = vmatpush1.msra.mxu0 %v3131
    %3162 = vmatprep.subr.mxu0 0.0
    %3163 = vmatpush1.msra.mxu0 %v3130
    %3164 = vmatprep.subr.mxu0 0.0
    %3165 = vmatpush1.msra.mxu0 %v3129
    %3166 = vmatprep.subr.mxu0 0.0
    %3167 = vmatpush1.msra.mxu0 %v3128
    %3168 = vmatprep.subr.mxu0 0.0
    %3169 = vmatpush2.msra.mxu0 0.0
    %3170 = vmatprep.subr.mxu0 0.0
    %3171 = vmatpush2.msra.mxu0 0.0
    %3172 = vmatprep.subr.mxu0 0.0
    %3173 = vmatpush2.msra.mxu0 0.0
    %3174 = vmatprep.subr.mxu0 0.0
    %3175 = vmatpush2.msra.mxu0 0.0
    %3176 = vmatprep.subr.mxu0 0.0
    %3177 = vmatpush2.msra.mxu0 0.0
    %3178 = vmatprep.subr.mxu0 0.0
    %3179 = vmatpush2.msra.mxu0 0.0
    %3180 = vmatprep.subr.mxu0 0.0
    %3181 = vmatpush2.msra.mxu0 0.0
    %3182 = vmatprep.subr.mxu0 0.0
    %3183 = vmatpush2.msra.mxu0 0.0
    %3184 = vmatprep.subr.mxu0 0.0
    %3185 = vmatpush2.msra.mxu0 0.0
    %3186 = vmatprep.subr.mxu0 0.0
    %3187 = vmatpush2.msra.mxu0 0.0
    %3188 = vmatprep.subr.mxu0 0.0
    %3189 = vmatpush2.msra.mxu0 0.0
    %3190 = vmatprep.subr.mxu0 0.0
    %3191 = vmatpush2.msra.mxu0 0.0
    %3192 = vmatprep.subr.mxu0 0.0
    %3193 = vmatpush2.msra.mxu0 0.0
    %3194 = vmatprep.subr.mxu0 0.0
    %3195 = vmatpush2.msra.mxu0 0.0
    %3196 = vmatprep.subr.mxu0 0.0
    %3197 = vmatpush2.msra.mxu0 0.0
    %3198 = vmatprep.subr.mxu0 0.0
    %3199 = vmatpush2.msra.mxu0 0.0
    %3200 = vmatprep.mubr.f32.mxu0 0.0
    %3201 = vmatmul.mubr.f32.gmra.mxu0 %v2215
    %v3202 = vpop.f32.mrf.mxu0
    %v3203 = vadd.f32 0.0, %v3202
    %v3204 = vpop.f32.mrf.mxu0
    %3205 = vdwg.mxu0
    %3206 = vst.msk [vmem:[#allocation3] sm:$0xff] %vm240, %v3203
    %3207 = vmatprep.subr.mxu0 0.0
    %3208 = vmatpush1.msra.mxu0 0.0
    %3209 = vmatprep.subr.mxu0 0.0
    %3210 = vmatpush1.msra.mxu0 0.0
    %3211 = vmatprep.subr.mxu0 0.0
    %3212 = vmatpush1.msra.mxu0 0.0
    %3213 = vmatprep.subr.mxu0 0.0
    %3214 = vmatpush1.msra.mxu0 0.0
    %3215 = vmatprep.subr.mxu0 0.0
    %3216 = vmatpush1.msra.mxu0 0.0
    %3217 = vmatprep.subr.mxu0 0.0
    %3218 = vmatpush1.msra.mxu0 0.0
    %3219 = vmatprep.subr.mxu0 0.0
    %3220 = vmatpush1.msra.mxu0 0.0
    %3221 = vmatprep.subr.mxu0 0.0
    %3222 = vmatpush1.msra.mxu0 0.0
    %3223 = vmatprep.subr.mxu0 0.0
    %3224 = vmatpush1.msra.mxu0 0.0
    %3225 = vmatprep.subr.mxu0 0.0
    %3226 = vmatpush1.msra.mxu0 0.0
    %3227 = vmatprep.subr.mxu0 0.0
    %3228 = vmatpush1.msra.mxu0 0.0
    %3229 = vmatprep.subr.mxu0 0.0
    %3230 = vmatpush1.msra.mxu0 0.0
    %3231 = vmatprep.subr.mxu0 0.0
    %3232 = vmatpush1.msra.mxu0 0.0
    %3233 = vmatprep.subr.mxu0 0.0
    %3234 = vmatpush1.msra.mxu0 0.0
    %3235 = vmatprep.subr.mxu0 0.0
    %3236 = vmatpush1.msra.mxu0 %v1417
    %3237 = vmatprep.subr.mxu0 0.0
    %3238 = vmatpush1.msra.mxu0 %v1416
    %3239 = vmatprep.subr.mxu0 0.0
    %3240 = vmatpush2.msra.mxu0 0.0
    %3241 = vmatprep.subr.mxu0 0.0
    %3242 = vmatpush2.msra.mxu0 0.0
    %3243 = vmatprep.subr.mxu0 0.0
    %3244 = vmatpush2.msra.mxu0 0.0
    %3245 = vmatprep.subr.mxu0 0.0
    %3246 = vmatpush2.msra.mxu0 0.0
    %3247 = vmatprep.subr.mxu0 0.0
    %3248 = vmatpush2.msra.mxu0 0.0
    %3249 = vmatprep.subr.mxu0 0.0
    %3250 = vmatpush2.msra.mxu0 0.0
    %3251 = vmatprep.subr.mxu0 0.0
    %3252 = vmatpush2.msra.mxu0 0.0
    %3253 = vmatprep.subr.mxu0 0.0
    %3254 = vmatpush2.msra.mxu0 0.0
    %3255 = vmatprep.subr.mxu0 0.0
    %3256 = vmatpush2.msra.mxu0 0.0
    %3257 = vmatprep.subr.mxu0 0.0
    %3258 = vmatpush2.msra.mxu0 0.0
    %3259 = vmatprep.subr.mxu0 0.0
    %3260 = vmatpush2.msra.mxu0 0.0
    %3261 = vmatprep.subr.mxu0 0.0
    %3262 = vmatpush2.msra.mxu0 0.0
    %3263 = vmatprep.subr.mxu0 0.0
    %3264 = vmatpush2.msra.mxu0 0.0
    %3265 = vmatprep.subr.mxu0 0.0
    %3266 = vmatpush2.msra.mxu0 0.0
    %3267 = vmatprep.subr.mxu0 0.0
    %3268 = vmatpush2.msra.mxu0 0.0
    %3269 = vmatprep.subr.mxu0 0.0
    %3270 = vmatpush2.msra.mxu0 0.0
    %3271 = vmatprep.mubr.f32.mxu0 0.0
    %3272 = vmatmul.mubr.f32.gmra.mxu0 %v2817
    %v3273 = vpop.f32.mrf.mxu0
    %v3274 = vadd.f32 %v1547, %v3273
    %v3275 = vpop.f32.mrf.mxu0
    %3276 = vmatprep.mubr.f32.mxu0 0.0
    %3277 = vmatmul.mubr.f32.gmra.mxu0 %v2820
    %v3278 = vpop.f32.mrf.mxu0
    %v3279 = vadd.f32 %v1552, %v3278
    %v3280 = vpop.f32.mrf.mxu0
    %3281 = vmatprep.mubr.f32.mxu0 0.0
    %3282 = vmatmul.mubr.f32.gmra.mxu0 %v2823
    %v3283 = vpop.f32.mrf.mxu0
    %v3284 = vadd.f32 %v1557, %v3283
    %v3285 = vpop.f32.mrf.mxu0
    %3286 = vmatprep.mubr.f32.mxu0 0.0
    %3287 = vmatmul.mubr.f32.gmra.mxu0 %v2826
    %v3288 = vpop.f32.mrf.mxu0
    %v3289 = vadd.f32 %v1562, %v3288
    %v3290 = vpop.f32.mrf.mxu0
    %3291 = vmatprep.mubr.f32.mxu0 0.0
    %3292 = vmatmul.mubr.f32.gmra.mxu0 %v2829
    %v3293 = vpop.f32.mrf.mxu0
    %v3294 = vadd.f32 %v1567, %v3293
    %v3295 = vpop.f32.mrf.mxu0
    %3296 = vmatprep.mubr.f32.mxu0 0.0
    %3297 = vmatmul.mubr.f32.gmra.mxu0 %v2832
    %v3298 = vpop.f32.mrf.mxu0
    %v3299 = vadd.f32 %v1572, %v3298
    %v3300 = vpop.f32.mrf.mxu0
    %3301 = vmatprep.mubr.f32.mxu0 0.0
    %3302 = vmatmul.mubr.f32.gmra.mxu0 %v2835
    %v3303 = vpop.f32.mrf.mxu0
    %v3304 = vadd.f32 %v1577, %v3303
    %v3305 = vpop.f32.mrf.mxu0
    %3306 = vmatprep.mubr.f32.mxu0 0.0
    %3307 = vmatmul.mubr.f32.gmra.mxu0 %v2838
    %v3308 = vpop.f32.mrf.mxu0
    %v3309 = vadd.f32 %v1582, %v3308
    %v3310 = vpop.f32.mrf.mxu0
    %3311 = vdwg.mxu0
    %v3313 = vsel %vm150, %v2590, 0
    %3315 = vmatprep.subr.mxu0 0.0
    %3316 = vmatpush1.msra.mxu0 0.0
    %3317 = vmatprep.subr.mxu0 0.0
    %3318 = vmatpush1.msra.mxu0 0.0
    %3319 = vmatprep.subr.mxu0 0.0
    %3320 = vmatpush1.msra.mxu0 0.0
    %3321 = vmatprep.subr.mxu0 0.0
    %3322 = vmatpush1.msra.mxu0 0.0
    %3323 = vmatprep.subr.mxu0 0.0
    %3324 = vmatpush1.msra.mxu0 0.0
    %3325 = vmatprep.subr.mxu0 0.0
    %3326 = vmatpush1.msra.mxu0 0.0
    %3327 = vmatprep.subr.mxu0 0.0
    %3328 = vmatpush1.msra.mxu0 0.0
    %3329 = vmatprep.subr.mxu0 0.0
    %3330 = vmatpush1.msra.mxu0 0.0
    %3331 = vmatprep.subr.mxu0 0.0
    %3332 = vmatpush1.msra.mxu0 0.0
    %3333 = vmatprep.subr.mxu0 0.0
    %3334 = vmatpush1.msra.mxu0 0.0
    %3335 = vmatprep.subr.mxu0 0.0
    %3336 = vmatpush1.msra.mxu0 0.0
    %3337 = vmatprep.subr.mxu0 0.0
    %3338 = vmatpush1.msra.mxu0 0.0
    %3339 = vmatprep.subr.mxu0 0.0
    %3340 = vmatpush1.msra.mxu0 %v1423
    %3341 = vmatprep.subr.mxu0 0.0
    %3342 = vmatpush1.msra.mxu0 %v1422
    %3343 = vmatprep.subr.mxu0 0.0
    %3344 = vmatpush1.msra.mxu0 %v1421
    %3345 = vmatprep.subr.mxu0 0.0
    %3346 = vmatpush1.msra.mxu0 %v1420
    %3347 = vmatprep.subr.mxu0 0.0
    %3348 = vmatpush2.msra.mxu0 0.0
    %3349 = vmatprep.subr.mxu0 0.0
    %3350 = vmatpush2.msra.mxu0 0.0
    %3351 = vmatprep.subr.mxu0 0.0
    %3352 = vmatpush2.msra.mxu0 0.0
    %3353 = vmatprep.subr.mxu0 0.0
    %3354 = vmatpush2.msra.mxu0 0.0
    %3355 = vmatprep.subr.mxu0 0.0
    %3356 = vmatpush2.msra.mxu0 0.0
    %3357 = vmatprep.subr.mxu0 0.0
    %3358 = vmatpush2.msra.mxu0 0.0
    %3359 = vmatprep.subr.mxu0 0.0
    %3360 = vmatpush2.msra.mxu0 0.0
    %3361 = vmatprep.subr.mxu0 0.0
    %3362 = vmatpush2.msra.mxu0 0.0
    %3363 = vmatprep.subr.mxu0 0.0
    %3364 = vmatpush2.msra.mxu0 0.0
    %3365 = vmatprep.subr.mxu0 0.0
    %3366 = vmatpush2.msra.mxu0 0.0
    %3367 = vmatprep.subr.mxu0 0.0
    %3368 = vmatpush2.msra.mxu0 0.0
    %3369 = vmatprep.subr.mxu0 0.0
    %3370 = vmatpush2.msra.mxu0 0.0
    %3371 = vmatprep.subr.mxu0 0.0
    %3372 = vmatpush2.msra.mxu0 0.0
    %3373 = vmatprep.subr.mxu0 0.0
    %3374 = vmatpush2.msra.mxu0 0.0
    %3375 = vmatprep.subr.mxu0 0.0
    %3376 = vmatpush2.msra.mxu0 0.0
    %3377 = vmatprep.subr.mxu0 0.0
    %3378 = vmatpush2.msra.mxu0 0.0
    %3379 = vmatprep.mubr.f32.mxu0 0.0
    %3380 = vmatmul.mubr.f32.gmra.mxu0 %v3313
    %v3381 = vpop.f32.mrf.mxu0
    %v3382 = vadd.f32 0.0, %v3381
    %v3383 = vpop.f32.mrf.mxu0
    %3384 = vdwg.mxu0
    %3385 = vmatprep.subr.mxu0 0.0
    %3386 = vmatpush1.msra.mxu0 0.0
    %3387 = vmatprep.subr.mxu0 0.0
    %3388 = vmatpush1.msra.mxu0 0.0
    %3389 = vmatprep.subr.mxu0 0.0
    %3390 = vmatpush1.msra.mxu0 0.0
    %3391 = vmatprep.subr.mxu0 0.0
    %3392 = vmatpush1.msra.mxu0 0.0
    %3393 = vmatprep.subr.mxu0 0.0
    %3394 = vmatpush1.msra.mxu0 0.0
    %3395 = vmatprep.subr.mxu0 0.0
    %3396 = vmatpush1.msra.mxu0 0.0
    %3397 = vmatprep.subr.mxu0 0.0
    %3398 = vmatpush1.msra.mxu0 0.0
    %3399 = vmatprep.subr.mxu0 0.0
    %3400 = vmatpush1.msra.mxu0 0.0
    %3401 = vmatprep.subr.mxu0 0.0
    %3402 = vmatpush1.msra.mxu0 0.0
    %3403 = vmatprep.subr.mxu0 0.0
    %3404 = vmatpush1.msra.mxu0 0.0
    %3405 = vmatprep.subr.mxu0 0.0
    %3406 = vmatpush1.msra.mxu0 0.0
    %3407 = vmatprep.subr.mxu0 0.0
    %3408 = vmatpush1.msra.mxu0 0.0
    %3409 = vmatprep.subr.mxu0 0.0
    %3410 = vmatpush1.msra.mxu0 0.0
    %3411 = vmatprep.subr.mxu0 0.0
    %3412 = vmatpush1.msra.mxu0 0.0
    %3413 = vmatprep.subr.mxu0 0.0
    %3414 = vmatpush1.msra.mxu0 0.0
    %3415 = vmatprep.subr.mxu0 0.0
    %3416 = vmatpush1.msra.mxu0 %v3382
    %3417 = vmatprep.subr.mxu0 0.0
    %3418 = vmatpush2.msra.mxu0 0.0
    %3419 = vmatprep.subr.mxu0 0.0
    %3420 = vmatpush2.msra.mxu0 0.0
    %3421 = vmatprep.subr.mxu0 0.0
    %3422 = vmatpush2.msra.mxu0 0.0
    %3423 = vmatprep.subr.mxu0 0.0
    %3424 = vmatpush2.msra.mxu0 0.0
    %3425 = vmatprep.subr.mxu0 0.0
    %3426 = vmatpush2.msra.mxu0 0.0
    %3427 = vmatprep.subr.mxu0 0.0
    %3428 = vmatpush2.msra.mxu0 0.0
    %3429 = vmatprep.subr.mxu0 0.0
    %3430 = vmatpush2.msra.mxu0 0.0
    %3431 = vmatprep.subr.mxu0 0.0
    %3432 = vmatpush2.msra.mxu0 0.0
    %3433 = vmatprep.subr.mxu0 0.0
    %3434 = vmatpush2.msra.mxu0 0.0
    %3435 = vmatprep.subr.mxu0 0.0
    %3436 = vmatpush2.msra.mxu0 0.0
    %3437 = vmatprep.subr.mxu0 0.0
    %3438 = vmatpush2.msra.mxu0 0.0
    %3439 = vmatprep.subr.mxu0 0.0
    %3440 = vmatpush2.msra.mxu0 0.0
    %3441 = vmatprep.subr.mxu0 0.0
    %3442 = vmatpush2.msra.mxu0 0.0
    %3443 = vmatprep.subr.mxu0 0.0
    %3444 = vmatpush2.msra.mxu0 0.0
    %3445 = vmatprep.subr.mxu0 0.0
    %3446 = vmatpush2.msra.mxu0 0.0
    %3447 = vmatprep.subr.mxu0 0.0
    %3448 = vmatpush2.msra.mxu0 0.0
    %3449 = vmatprep.mubr.f32.mxu0 0.0
    %3450 = vmatmul.mubr.f32.gmra.mxu0 %v242
    %v3451 = vpop.f32.mrf.mxu0
    %v3452 = vadd.f32 0.0, %v3451
    %v3453 = vpop.f32.mrf.mxu0
    %3454 = vmatprep.mubr.f32.mxu0 0.0
    %3455 = vmatmul.mubr.f32.gmra.mxu0 %v245
    %v3456 = vpop.f32.mrf.mxu0
    %v3457 = vadd.f32 0.0, %v3456
    %v3458 = vpop.f32.mrf.mxu0
    %3459 = vmatprep.mubr.f32.mxu0 0.0
    %3460 = vmatmul.mubr.f32.gmra.mxu0 %v248
    %v3461 = vpop.f32.mrf.mxu0
    %v3462 = vadd.f32 0.0, %v3461
    %v3463 = vpop.f32.mrf.mxu0
    %3464 = vmatprep.mubr.f32.mxu0 0.0
    %3465 = vmatmul.mubr.f32.gmra.mxu0 %v251
    %v3466 = vpop.f32.mrf.mxu0
    %v3467 = vadd.f32 0.0, %v3466
    %v3468 = vpop.f32.mrf.mxu0
    %3469 = vmatprep.mubr.f32.mxu0 0.0
    %3470 = vmatmul.mubr.f32.gmra.mxu0 %v254
    %v3471 = vpop.f32.mrf.mxu0
    %v3472 = vadd.f32 0.0, %v3471
    %v3473 = vpop.f32.mrf.mxu0
    %3474 = vmatprep.mubr.f32.mxu0 0.0
    %3475 = vmatmul.mubr.f32.gmra.mxu0 %v257
    %v3476 = vpop.f32.mrf.mxu0
    %v3477 = vadd.f32 0.0, %v3476
    %v3478 = vpop.f32.mrf.mxu0
    %3479 = vmatprep.mubr.f32.mxu0 0.0
    %3480 = vmatmul.mubr.f32.gmra.mxu0 %v260
    %v3481 = vpop.f32.mrf.mxu0
    %v3482 = vadd.f32 0.0, %v3481
    %v3483 = vpop.f32.mrf.mxu0
    %3484 = vmatprep.mubr.f32.mxu0 0.0
    %3485 = vmatmul.mubr.f32.gmra.mxu0 %v263
    %v3486 = vpop.f32.mrf.mxu0
    %v3487 = vadd.f32 0.0, %v3486
    %v3488 = vpop.f32.mrf.mxu0
    %3489 = vdwg.mxu0
    %v3490 = vadd.f32 %v3274, %v3452
    %v3491 = vadd.f32 %v3279, %v3457
    %v3492 = vadd.f32 %v3284, %v3462
    %v3493 = vadd.f32 %v3289, %v3467
    %v3494 = vadd.f32 %v3294, %v3472
    %v3495 = vadd.f32 %v3299, %v3477
    %v3496 = vadd.f32 %v3304, %v3482
    %v3497 = vadd.f32 %v3309, %v3487
    %v3499 = vsel %vm150, %v2809, 0
    %3501 = vmatprep.subr.mxu0 0.0
    %3502 = vmatpush1.msra.mxu0 0.0
    %3503 = vmatprep.subr.mxu0 0.0
    %3504 = vmatpush1.msra.mxu0 0.0
    %3505 = vmatprep.subr.mxu0 0.0
    %3506 = vmatpush1.msra.mxu0 0.0
    %3507 = vmatprep.subr.mxu0 0.0
    %3508 = vmatpush1.msra.mxu0 0.0
    %3509 = vmatprep.subr.mxu0 0.0
    %3510 = vmatpush1.msra.mxu0 0.0
    %3511 = vmatprep.subr.mxu0 0.0
    %3512 = vmatpush1.msra.mxu0 0.0
    %3513 = vmatprep.subr.mxu0 0.0
    %3514 = vmatpush1.msra.mxu0 0.0
    %3515 = vmatprep.subr.mxu0 0.0
    %3516 = vmatpush1.msra.mxu0 0.0
    %3517 = vmatprep.subr.mxu0 0.0
    %3518 = vmatpush1.msra.mxu0 0.0
    %3519 = vmatprep.subr.mxu0 0.0
    %3520 = vmatpush1.msra.mxu0 0.0
    %3521 = vmatprep.subr.mxu0 0.0
    %3522 = vmatpush1.msra.mxu0 0.0
    %3523 = vmatprep.subr.mxu0 0.0
    %3524 = vmatpush1.msra.mxu0 0.0
    %3525 = vmatprep.subr.mxu0 0.0
    %3526 = vmatpush1.msra.mxu0 %v1427
    %3527 = vmatprep.subr.mxu0 0.0
    %3528 = vmatpush1.msra.mxu0 %v1426
    %3529 = vmatprep.subr.mxu0 0.0
    %3530 = vmatpush1.msra.mxu0 %v1425
    %3531 = vmatprep.subr.mxu0 0.0
    %3532 = vmatpush1.msra.mxu0 %v1424
    %3533 = vmatprep.subr.mxu0 0.0
    %3534 = vmatpush2.msra.mxu0 0.0
    %3535 = vmatprep.subr.mxu0 0.0
    %3536 = vmatpush2.msra.mxu0 0.0
    %3537 = vmatprep.subr.mxu0 0.0
    %3538 = vmatpush2.msra.mxu0 0.0
    %3539 = vmatprep.subr.mxu0 0.0
    %3540 = vmatpush2.msra.mxu0 0.0
    %3541 = vmatprep.subr.mxu0 0.0
    %3542 = vmatpush2.msra.mxu0 0.0
    %3543 = vmatprep.subr.mxu0 0.0
    %3544 = vmatpush2.msra.mxu0 0.0
    %3545 = vmatprep.subr.mxu0 0.0
    %3546 = vmatpush2.msra.mxu0 0.0
    %3547 = vmatprep.subr.mxu0 0.0
    %3548 = vmatpush2.msra.mxu0 0.0
    %3549 = vmatprep.subr.mxu0 0.0
    %3550 = vmatpush2.msra.mxu0 0.0
    %3551 = vmatprep.subr.mxu0 0.0
    %3552 = vmatpush2.msra.mxu0 0.0
    %3553 = vmatprep.subr.mxu0 0.0
    %3554 = vmatpush2.msra.mxu0 0.0
    %3555 = vmatprep.subr.mxu0 0.0
    %3556 = vmatpush2.msra.mxu0 0.0
    %3557 = vmatprep.subr.mxu0 0.0
    %3558 = vmatpush2.msra.mxu0 0.0
    %3559 = vmatprep.subr.mxu0 0.0
    %3560 = vmatpush2.msra.mxu0 0.0
    %3561 = vmatprep.subr.mxu0 0.0
    %3562 = vmatpush2.msra.mxu0 0.0
    %3563 = vmatprep.subr.mxu0 0.0
    %3564 = vmatpush2.msra.mxu0 0.0
    %3565 = vmatprep.mubr.f32.mxu0 0.0
    %3566 = vmatmul.mubr.f32.gmra.mxu0 %v3499
    %v3567 = vpop.f32.mrf.mxu0
    %v3568 = vadd.f32 0.0, %v3567
    %v3569 = vpop.f32.mrf.mxu0
    %3570 = vdwg.mxu0
    %3571 = vmatprep.subr.mxu0 0.0
    %3572 = vmatpush1.msra.mxu0 0.0
    %3573 = vmatprep.subr.mxu0 0.0
    %3574 = vmatpush1.msra.mxu0 0.0
    %3575 = vmatprep.subr.mxu0 0.0
    %3576 = vmatpush1.msra.mxu0 0.0
    %3577 = vmatprep.subr.mxu0 0.0
    %3578 = vmatpush1.msra.mxu0 0.0
    %3579 = vmatprep.subr.mxu0 0.0
    %3580 = vmatpush1.msra.mxu0 0.0
    %3581 = vmatprep.subr.mxu0 0.0
    %3582 = vmatpush1.msra.mxu0 0.0
    %3583 = vmatprep.subr.mxu0 0.0
    %3584 = vmatpush1.msra.mxu0 0.0
    %3585 = vmatprep.subr.mxu0 0.0
    %3586 = vmatpush1.msra.mxu0 0.0
    %3587 = vmatprep.subr.mxu0 0.0
    %3588 = vmatpush1.msra.mxu0 0.0
    %3589 = vmatprep.subr.mxu0 0.0
    %3590 = vmatpush1.msra.mxu0 0.0
    %3591 = vmatprep.subr.mxu0 0.0
    %3592 = vmatpush1.msra.mxu0 0.0
    %3593 = vmatprep.subr.mxu0 0.0
    %3594 = vmatpush1.msra.mxu0 0.0
    %3595 = vmatprep.subr.mxu0 0.0
    %3596 = vmatpush1.msra.mxu0 0.0
    %3597 = vmatprep.subr.mxu0 0.0
    %3598 = vmatpush1.msra.mxu0 0.0
    %3599 = vmatprep.subr.mxu0 0.0
    %3600 = vmatpush1.msra.mxu0 0.0
    %3601 = vmatprep.subr.mxu0 0.0
    %3602 = vmatpush1.msra.mxu0 %v3568
    %3603 = vmatprep.subr.mxu0 0.0
    %3604 = vmatpush2.msra.mxu0 0.0
    %3605 = vmatprep.subr.mxu0 0.0
    %3606 = vmatpush2.msra.mxu0 0.0
    %3607 = vmatprep.subr.mxu0 0.0
    %3608 = vmatpush2.msra.mxu0 0.0
    %3609 = vmatprep.subr.mxu0 0.0
    %3610 = vmatpush2.msra.mxu0 0.0
    %3611 = vmatprep.subr.mxu0 0.0
    %3612 = vmatpush2.msra.mxu0 0.0
    %3613 = vmatprep.subr.mxu0 0.0
    %3614 = vmatpush2.msra.mxu0 0.0
    %3615 = vmatprep.subr.mxu0 0.0
    %3616 = vmatpush2.msra.mxu0 0.0
    %3617 = vmatprep.subr.mxu0 0.0
    %3618 = vmatpush2.msra.mxu0 0.0
    %3619 = vmatprep.subr.mxu0 0.0
    %3620 = vmatpush2.msra.mxu0 0.0
    %3621 = vmatprep.subr.mxu0 0.0
    %3622 = vmatpush2.msra.mxu0 0.0
    %3623 = vmatprep.subr.mxu0 0.0
    %3624 = vmatpush2.msra.mxu0 0.0
    %3625 = vmatprep.subr.mxu0 0.0
    %3626 = vmatpush2.msra.mxu0 0.0
    %3627 = vmatprep.subr.mxu0 0.0
    %3628 = vmatpush2.msra.mxu0 0.0
    %3629 = vmatprep.subr.mxu0 0.0
    %3630 = vmatpush2.msra.mxu0 0.0
    %3631 = vmatprep.subr.mxu0 0.0
    %3632 = vmatpush2.msra.mxu0 0.0
    %3633 = vmatprep.subr.mxu0 0.0
    %3634 = vmatpush2.msra.mxu0 0.0
    %3635 = vmatprep.mubr.f32.mxu0 0.0
    %3636 = vmatmul.mubr.f32.gmra.mxu0 %v518
    %v3637 = vpop.f32.mrf.mxu0
    %v3638 = vadd.f32 0.0, %v3637
    %v3639 = vpop.f32.mrf.mxu0
    %3640 = vmatprep.mubr.f32.mxu0 0.0
    %3641 = vmatmul.mubr.f32.gmra.mxu0 %v521
    %v3642 = vpop.f32.mrf.mxu0
    %v3643 = vadd.f32 0.0, %v3642
    %v3644 = vpop.f32.mrf.mxu0
    %3645 = vmatprep.mubr.f32.mxu0 0.0
    %3646 = vmatmul.mubr.f32.gmra.mxu0 %v524
    %v3647 = vpop.f32.mrf.mxu0
    %v3648 = vadd.f32 0.0, %v3647
    %v3649 = vpop.f32.mrf.mxu0
    %3650 = vmatprep.mubr.f32.mxu0 0.0
    %3651 = vmatmul.mubr.f32.gmra.mxu0 %v527
    %v3652 = vpop.f32.mrf.mxu0
    %v3653 = vadd.f32 0.0, %v3652
    %v3654 = vpop.f32.mrf.mxu0
    %3655 = vmatprep.mubr.f32.mxu0 0.0
    %3656 = vmatmul.mubr.f32.gmra.mxu0 %v530
    %v3657 = vpop.f32.mrf.mxu0
    %v3658 = vadd.f32 0.0, %v3657
    %v3659 = vpop.f32.mrf.mxu0
    %3660 = vmatprep.mubr.f32.mxu0 0.0
    %3661 = vmatmul.mubr.f32.gmra.mxu0 %v533
    %v3662 = vpop.f32.mrf.mxu0
    %v3663 = vadd.f32 0.0, %v3662
    %v3664 = vpop.f32.mrf.mxu0
    %3665 = vmatprep.mubr.f32.mxu0 0.0
    %3666 = vmatmul.mubr.f32.gmra.mxu0 %v536
    %v3667 = vpop.f32.mrf.mxu0
    %v3668 = vadd.f32 0.0, %v3667
    %v3669 = vpop.f32.mrf.mxu0
    %3670 = vmatprep.mubr.f32.mxu0 0.0
    %3671 = vmatmul.mubr.f32.gmra.mxu0 %v539
    %v3672 = vpop.f32.mrf.mxu0
    %v3673 = vadd.f32 0.0, %v3672
    %v3674 = vpop.f32.mrf.mxu0
    %3675 = vdwg.mxu0
    %v3676 = vadd.f32 %v3490, %v3638
    %v3677 = vadd.f32 %v3491, %v3643
    %v3678 = vadd.f32 %v3492, %v3648
    %v3679 = vadd.f32 %v3493, %v3653
    %v3680 = vadd.f32 %v3494, %v3658
    %v3681 = vadd.f32 %v3495, %v3663
    %v3682 = vadd.f32 %v3496, %v3668
    %v3683 = vadd.f32 %v3497, %v3673
    %v3684 = vmax.f32 %v3676, 0.0
    %v3685 = vmax.f32 %v3677, 0.0
    %v3686 = vmax.f32 %v3678, 0.0
    %v3687 = vmax.f32 %v3679, 0.0
    %v3688 = vmax.f32 %v3680, 0.0
    %v3689 = vmax.f32 %v3681, 0.0
    %v3690 = vmax.f32 %v3682, 0.0
    %v3691 = vmax.f32 %v3683, 0.0
    %v3693 = vsel %vm1119, %v3684, 0
    %v3696 = vsel %vm1119, %v3685, 0
    %v3699 = vsel %vm1119, %v3686, 0
    %v3702 = vsel %vm1119, %v3687, 0
    %v3705 = vsel %vm1119, %v3688, 0
    %v3708 = vsel %vm1119, %v3689, 0
    %v3711 = vsel %vm1119, %v3690, 0
    %v3714 = vsel %vm1119, %v3691, 0
    %3716 = vmatprep.subr.mxu0 0.0
    %3717 = vmatpush1.msra.mxu0 0.0
    %3718 = vmatprep.subr.mxu0 0.0
    %3719 = vmatpush1.msra.mxu0 0.0
    %3720 = vmatprep.subr.mxu0 0.0
    %3721 = vmatpush1.msra.mxu0 0.0
    %3722 = vmatprep.subr.mxu0 0.0
    %3723 = vmatpush1.msra.mxu0 0.0
    %3724 = vmatprep.subr.mxu0 0.0
    %3725 = vmatpush1.msra.mxu0 0.0
    %3726 = vmatprep.subr.mxu0 0.0
    %3727 = vmatpush1.msra.mxu0 0.0
    %3728 = vmatprep.subr.mxu0 0.0
    %3729 = vmatpush1.msra.mxu0 0.0
    %3730 = vmatprep.subr.mxu0 0.0
    %3731 = vmatpush1.msra.mxu0 0.0
    %3732 = vmatprep.subr.mxu0 0.0
    %3733 = vmatpush1.msra.mxu0 0.0
    %3734 = vmatprep.subr.mxu0 0.0
    %3735 = vmatpush1.msra.mxu0 0.0
    %3736 = vmatprep.subr.mxu0 0.0
    %3737 = vmatpush1.msra.mxu0 0.0
    %3738 = vmatprep.subr.mxu0 0.0
    %3739 = vmatpush1.msra.mxu0 0.0
    %3740 = vmatprep.subr.mxu0 0.0
    %3741 = vmatpush1.msra.mxu0 0.0
    %3742 = vmatprep.subr.mxu0 0.0
    %3743 = vmatpush1.msra.mxu0 0.0
    %3744 = vmatprep.subr.mxu0 0.0
    %3745 = vmatpush1.msra.mxu0 %v1430
    %3746 = vmatprep.subr.mxu0 0.0
    %3747 = vmatpush1.msra.mxu0 %v1429
    %3748 = vmatprep.subr.mxu0 0.0
    %3749 = vmatpush2.msra.mxu0 0.0
    %3750 = vmatprep.subr.mxu0 0.0
    %3751 = vmatpush2.msra.mxu0 0.0
    %3752 = vmatprep.subr.mxu0 0.0
    %3753 = vmatpush2.msra.mxu0 0.0
    %3754 = vmatprep.subr.mxu0 0.0
    %3755 = vmatpush2.msra.mxu0 0.0
    %3756 = vmatprep.subr.mxu0 0.0
    %3757 = vmatpush2.msra.mxu0 0.0
    %3758 = vmatprep.subr.mxu0 0.0
    %3759 = vmatpush2.msra.mxu0 0.0
    %3760 = vmatprep.subr.mxu0 0.0
    %3761 = vmatpush2.msra.mxu0 0.0
    %3762 = vmatprep.subr.mxu0 0.0
    %3763 = vmatpush2.msra.mxu0 0.0
    %3764 = vmatprep.subr.mxu0 0.0
    %3765 = vmatpush2.msra.mxu0 0.0
    %3766 = vmatprep.subr.mxu0 0.0
    %3767 = vmatpush2.msra.mxu0 0.0
    %3768 = vmatprep.subr.mxu0 0.0
    %3769 = vmatpush2.msra.mxu0 0.0
    %3770 = vmatprep.subr.mxu0 0.0
    %3771 = vmatpush2.msra.mxu0 0.0
    %3772 = vmatprep.subr.mxu0 0.0
    %3773 = vmatpush2.msra.mxu0 0.0
    %3774 = vmatprep.subr.mxu0 0.0
    %3775 = vmatpush2.msra.mxu0 0.0
    %3776 = vmatprep.subr.mxu0 0.0
    %3777 = vmatpush2.msra.mxu0 0.0
    %3778 = vmatprep.subr.mxu0 0.0
    %3779 = vmatpush2.msra.mxu0 0.0
    %3780 = vmatprep.mubr.f32.mxu0 0.0
    %3781 = vmatmul.mubr.f32.gmra.mxu0 %v3693
    %v3782 = vpop.f32.mrf.mxu0
    %v3783 = vadd.f32 %v2074, %v3782
    %v3784 = vpop.f32.mrf.mxu0
    %3785 = vmatprep.mubr.f32.mxu0 0.0
    %3786 = vmatmul.mubr.f32.gmra.mxu0 %v3696
    %v3787 = vpop.f32.mrf.mxu0
    %v3788 = vadd.f32 %v2074, %v3787
    %v3789 = vpop.f32.mrf.mxu0
    %3790 = vmatprep.mubr.f32.mxu0 0.0
    %3791 = vmatmul.mubr.f32.gmra.mxu0 %v3699
    %v3792 = vpop.f32.mrf.mxu0
    %v3793 = vadd.f32 %v2074, %v3792
    %v3794 = vpop.f32.mrf.mxu0
    %3795 = vmatprep.mubr.f32.mxu0 0.0
    %3796 = vmatmul.mubr.f32.gmra.mxu0 %v3702
    %v3797 = vpop.f32.mrf.mxu0
    %v3798 = vadd.f32 %v2074, %v3797
    %v3799 = vpop.f32.mrf.mxu0
    %3800 = vmatprep.mubr.f32.mxu0 0.0
    %3801 = vmatmul.mubr.f32.gmra.mxu0 %v3705
    %v3802 = vpop.f32.mrf.mxu0
    %v3803 = vadd.f32 %v2074, %v3802
    %v3804 = vpop.f32.mrf.mxu0
    %3805 = vmatprep.mubr.f32.mxu0 0.0
    %3806 = vmatmul.mubr.f32.gmra.mxu0 %v3708
    %v3807 = vpop.f32.mrf.mxu0
    %v3808 = vadd.f32 %v2074, %v3807
    %v3809 = vpop.f32.mrf.mxu0
    %3810 = vmatprep.mubr.f32.mxu0 0.0
    %3811 = vmatmul.mubr.f32.gmra.mxu0 %v3711
    %v3812 = vpop.f32.mrf.mxu0
    %v3813 = vadd.f32 %v2074, %v3812
    %v3814 = vpop.f32.mrf.mxu0
    %3815 = vmatprep.mubr.f32.mxu0 0.0
    %3816 = vmatmul.mubr.f32.gmra.mxu0 %v3714
    %v3817 = vpop.f32.mrf.mxu0
    %v3818 = vadd.f32 %v2074, %v3817
    %v3819 = vpop.f32.mrf.mxu0
    %3820 = vdwg.mxu0
    %v3821 = vmax.f32 %v3783, 0.0
    %v3822 = vmax.f32 %v3788, 0.0
    %v3823 = vmax.f32 %v3793, 0.0
    %v3824 = vmax.f32 %v3798, 0.0
    %v3825 = vmax.f32 %v3803, 0.0
    %v3826 = vmax.f32 %v3808, 0.0
    %v3827 = vmax.f32 %v3813, 0.0
    %v3828 = vmax.f32 %v3818, 0.0
    %3829 = vmatprep.subr.mxu0 0.0
    %3830 = vmatpush1.msra.mxu0 0.0
    %3831 = vmatprep.subr.mxu0 0.0
    %3832 = vmatpush1.msra.mxu0 0.0
    %3833 = vmatprep.subr.mxu0 0.0
    %3834 = vmatpush1.msra.mxu0 0.0
    %3835 = vmatprep.subr.mxu0 0.0
    %3836 = vmatpush1.msra.mxu0 0.0
    %3837 = vmatprep.subr.mxu0 0.0
    %3838 = vmatpush1.msra.mxu0 0.0
    %3839 = vmatprep.subr.mxu0 0.0
    %3840 = vmatpush1.msra.mxu0 0.0
    %3841 = vmatprep.subr.mxu0 0.0
    %3842 = vmatpush1.msra.mxu0 0.0
    %3843 = vmatprep.subr.mxu0 0.0
    %3844 = vmatpush1.msra.mxu0 0.0
    %3845 = vmatprep.subr.mxu0 0.0
    %3846 = vmatpush1.msra.mxu0 %v3828
    %3847 = vmatprep.subr.mxu0 0.0
    %3848 = vmatpush1.msra.mxu0 %v3827
    %3849 = vmatprep.subr.mxu0 0.0
    %3850 = vmatpush1.msra.mxu0 %v3826
    %3851 = vmatprep.subr.mxu0 0.0
    %3852 = vmatpush1.msra.mxu0 %v3825
    %3853 = vmatprep.subr.mxu0 0.0
    %3854 = vmatpush1.msra.mxu0 %v3824
    %3855 = vmatprep.subr.mxu0 0.0
    %3856 = vmatpush1.msra.mxu0 %v3823
    %3857 = vmatprep.subr.mxu0 0.0
    %3858 = vmatpush1.msra.mxu0 %v3822
    %3859 = vmatprep.subr.mxu0 0.0
    %3860 = vmatpush1.msra.mxu0 %v3821
    %3861 = vmatprep.subr.mxu0 0.0
    %3862 = vmatpush2.msra.mxu0 0.0
    %3863 = vmatprep.subr.mxu0 0.0
    %3864 = vmatpush2.msra.mxu0 0.0
    %3865 = vmatprep.subr.mxu0 0.0
    %3866 = vmatpush2.msra.mxu0 0.0
    %3867 = vmatprep.subr.mxu0 0.0
    %3868 = vmatpush2.msra.mxu0 0.0
    %3869 = vmatprep.subr.mxu0 0.0
    %3870 = vmatpush2.msra.mxu0 0.0
    %3871 = vmatprep.subr.mxu0 0.0
    %3872 = vmatpush2.msra.mxu0 0.0
    %3873 = vmatprep.subr.mxu0 0.0
    %3874 = vmatpush2.msra.mxu0 0.0
    %3875 = vmatprep.subr.mxu0 0.0
    %3876 = vmatpush2.msra.mxu0 0.0
    %3877 = vmatprep.subr.mxu0 0.0
    %3878 = vmatpush2.msra.mxu0 0.0
    %3879 = vmatprep.subr.mxu0 0.0
    %3880 = vmatpush2.msra.mxu0 0.0
    %3881 = vmatprep.subr.mxu0 0.0
    %3882 = vmatpush2.msra.mxu0 0.0
    %3883 = vmatprep.subr.mxu0 0.0
    %3884 = vmatpush2.msra.mxu0 0.0
    %3885 = vmatprep.subr.mxu0 0.0
    %3886 = vmatpush2.msra.mxu0 0.0
    %3887 = vmatprep.subr.mxu0 0.0
    %3888 = vmatpush2.msra.mxu0 0.0
    %3889 = vmatprep.subr.mxu0 0.0
    %3890 = vmatpush2.msra.mxu0 0.0
    %3891 = vmatprep.subr.mxu0 0.0
    %3892 = vmatpush2.msra.mxu0 0.0
    %3893 = vmatprep.mubr.f32.mxu0 0.0
    %3894 = vmatmul.mubr.f32.gmra.mxu0 %v2215
    %v3895 = vpop.f32.mrf.mxu0
    %v3896 = vadd.f32 0.0, %v3895
    %v3897 = vpop.f32.mrf.mxu0
    %3898 = vdwg.mxu0
    %3899 = vmatprep.subr.mxu0 0.0
    %3900 = vmatpush1.msra.mxu0 0.0
    %3901 = vmatprep.subr.mxu0 0.0
    %3902 = vmatpush1.msra.mxu0 0.0
    %3903 = vmatprep.subr.mxu0 0.0
    %3904 = vmatpush1.msra.mxu0 0.0
    %3905 = vmatprep.subr.mxu0 0.0
    %3906 = vmatpush1.msra.mxu0 0.0
    %3907 = vmatprep.subr.mxu0 0.0
    %3908 = vmatpush1.msra.mxu0 0.0
    %3909 = vmatprep.subr.mxu0 0.0
    %3910 = vmatpush1.msra.mxu0 0.0
    %3911 = vmatprep.subr.mxu0 0.0
    %3912 = vmatpush1.msra.mxu0 0.0
    %3913 = vmatprep.subr.mxu0 0.0
    %3914 = vmatpush1.msra.mxu0 0.0
    %3915 = vmatprep.subr.mxu0 0.0
    %3916 = vmatpush1.msra.mxu0 %v3828
    %3917 = vmatprep.subr.mxu0 0.0
    %3918 = vmatpush1.msra.mxu0 %v3827
    %3919 = vmatprep.subr.mxu0 0.0
    %3920 = vmatpush1.msra.mxu0 %v3826
    %3921 = vmatprep.subr.mxu0 0.0
    %3922 = vmatpush1.msra.mxu0 %v3825
    %3923 = vmatprep.subr.mxu0 0.0
    %3924 = vmatpush1.msra.mxu0 %v3824
    %3925 = vmatprep.subr.mxu0 0.0
    %3926 = vmatpush1.msra.mxu0 %v3823
    %3927 = vmatprep.subr.mxu0 0.0
    %3928 = vmatpush1.msra.mxu0 %v3822
    %3929 = vmatprep.subr.mxu0 0.0
    %3930 = vmatpush1.msra.mxu0 %v3821
    %3931 = vmatprep.subr.mxu0 0.0
    %3932 = vmatpush2.msra.mxu0 0.0
    %3933 = vmatprep.subr.mxu0 0.0
    %3934 = vmatpush2.msra.mxu0 0.0
    %3935 = vmatprep.subr.mxu0 0.0
    %3936 = vmatpush2.msra.mxu0 0.0
    %3937 = vmatprep.subr.mxu0 0.0
    %3938 = vmatpush2.msra.mxu0 0.0
    %3939 = vmatprep.subr.mxu0 0.0
    %3940 = vmatpush2.msra.mxu0 0.0
    %3941 = vmatprep.subr.mxu0 0.0
    %3942 = vmatpush2.msra.mxu0 0.0
    %3943 = vmatprep.subr.mxu0 0.0
    %3944 = vmatpush2.msra.mxu0 0.0
    %3945 = vmatprep.subr.mxu0 0.0
    %3946 = vmatpush2.msra.mxu0 0.0
    %3947 = vmatprep.subr.mxu0 0.0
    %3948 = vmatpush2.msra.mxu0 0.0
    %3949 = vmatprep.subr.mxu0 0.0
    %3950 = vmatpush2.msra.mxu0 0.0
    %3951 = vmatprep.subr.mxu0 0.0
    %3952 = vmatpush2.msra.mxu0 0.0
    %3953 = vmatprep.subr.mxu0 0.0
    %3954 = vmatpush2.msra.mxu0 0.0
    %3955 = vmatprep.subr.mxu0 0.0
    %3956 = vmatpush2.msra.mxu0 0.0
    %3957 = vmatprep.subr.mxu0 0.0
    %3958 = vmatpush2.msra.mxu0 0.0
    %3959 = vmatprep.subr.mxu0 0.0
    %3960 = vmatpush2.msra.mxu0 0.0
    %3961 = vmatprep.subr.mxu0 0.0
    %3962 = vmatpush2.msra.mxu0 0.0
    %3963 = vmatprep.mubr.f32.mxu0 0.0
    %3964 = vmatmul.mubr.f32.gmra.mxu0 %v2288
    %v3965 = vpop.f32.mrf.mxu0
    %v3966 = vadd.f32 0.0, %v3965
    %v3967 = vpop.f32.mrf.mxu0
    %3968 = vdwg.mxu0
    %3969 = vmatprep.subr.mxu0 0.0
    %3970 = vmatpush1.msra.mxu0 0.0
    %3971 = vmatprep.subr.mxu0 0.0
    %3972 = vmatpush1.msra.mxu0 0.0
    %3973 = vmatprep.subr.mxu0 0.0
    %3974 = vmatpush1.msra.mxu0 0.0
    %3975 = vmatprep.subr.mxu0 0.0
    %3976 = vmatpush1.msra.mxu0 0.0
    %3977 = vmatprep.subr.mxu0 0.0
    %3978 = vmatpush1.msra.mxu0 0.0
    %3979 = vmatprep.subr.mxu0 0.0
    %3980 = vmatpush1.msra.mxu0 0.0
    %3981 = vmatprep.subr.mxu0 0.0
    %3982 = vmatpush1.msra.mxu0 0.0
    %3983 = vmatprep.subr.mxu0 0.0
    %3984 = vmatpush1.msra.mxu0 0.0
    %3985 = vmatprep.subr.mxu0 0.0
    %3986 = vmatpush1.msra.mxu0 0.0
    %3987 = vmatprep.subr.mxu0 0.0
    %3988 = vmatpush1.msra.mxu0 0.0
    %3989 = vmatprep.subr.mxu0 0.0
    %3990 = vmatpush1.msra.mxu0 0.0
    %3991 = vmatprep.subr.mxu0 0.0
    %3992 = vmatpush1.msra.mxu0 0.0
    %3993 = vmatprep.subr.mxu0 0.0
    %3994 = vmatpush1.msra.mxu0 %v1437
    %3995 = vmatprep.subr.mxu0 0.0
    %3996 = vmatpush1.msra.mxu0 %v1436
    %3997 = vmatprep.subr.mxu0 0.0
    %3998 = vmatpush1.msra.mxu0 %v1435
    %3999 = vmatprep.subr.mxu0 0.0
    %4000 = vmatpush1.msra.mxu0 %v1434
    %4001 = vmatprep.subr.mxu0 0.0
    %4002 = vmatpush2.msra.mxu0 0.0
    %4003 = vmatprep.subr.mxu0 0.0
    %4004 = vmatpush2.msra.mxu0 0.0
    %4005 = vmatprep.subr.mxu0 0.0
    %4006 = vmatpush2.msra.mxu0 0.0
    %4007 = vmatprep.subr.mxu0 0.0
    %4008 = vmatpush2.msra.mxu0 0.0
    %4009 = vmatprep.subr.mxu0 0.0
    %4010 = vmatpush2.msra.mxu0 0.0
    %4011 = vmatprep.subr.mxu0 0.0
    %4012 = vmatpush2.msra.mxu0 0.0
    %4013 = vmatprep.subr.mxu0 0.0
    %4014 = vmatpush2.msra.mxu0 0.0
    %4015 = vmatprep.subr.mxu0 0.0
    %4016 = vmatpush2.msra.mxu0 0.0
    %4017 = vmatprep.subr.mxu0 0.0
    %4018 = vmatpush2.msra.mxu0 0.0
    %4019 = vmatprep.subr.mxu0 0.0
    %4020 = vmatpush2.msra.mxu0 0.0
    %4021 = vmatprep.subr.mxu0 0.0
    %4022 = vmatpush2.msra.mxu0 0.0
    %4023 = vmatprep.subr.mxu0 0.0
    %4024 = vmatpush2.msra.mxu0 0.0
    %4025 = vmatprep.subr.mxu0 0.0
    %4026 = vmatpush2.msra.mxu0 0.0
    %4027 = vmatprep.subr.mxu0 0.0
    %4028 = vmatpush2.msra.mxu0 0.0
    %4029 = vmatprep.subr.mxu0 0.0
    %4030 = vmatpush2.msra.mxu0 0.0
    %4031 = vmatprep.subr.mxu0 0.0
    %4032 = vmatpush2.msra.mxu0 0.0
    %4033 = vmatprep.mubr.f32.mxu0 0.0
    %4034 = vmatmul.mubr.f32.gmra.mxu0 %v3313
    %v4035 = vpop.f32.mrf.mxu0
    %v4036 = vadd.f32 0.0, %v4035
    %v4037 = vpop.f32.mrf.mxu0
    %4038 = vdwg.mxu0
    %v4040 = vsel %vm1119, %v3896, 0
    %4042 = vmatprep.subr.mxu0 0.0
    %4043 = vmatpush1.msra.mxu0 0.0
    %4044 = vmatprep.subr.mxu0 0.0
    %4045 = vmatpush1.msra.mxu0 0.0
    %4046 = vmatprep.subr.mxu0 0.0
    %4047 = vmatpush1.msra.mxu0 0.0
    %4048 = vmatprep.subr.mxu0 0.0
    %4049 = vmatpush1.msra.mxu0 0.0
    %4050 = vmatprep.subr.mxu0 0.0
    %4051 = vmatpush1.msra.mxu0 0.0
    %4052 = vmatprep.subr.mxu0 0.0
    %4053 = vmatpush1.msra.mxu0 0.0
    %4054 = vmatprep.subr.mxu0 0.0
    %4055 = vmatpush1.msra.mxu0 0.0
    %4056 = vmatprep.subr.mxu0 0.0
    %4057 = vmatpush1.msra.mxu0 0.0
    %4058 = vmatprep.subr.mxu0 0.0
    %4059 = vmatpush1.msra.mxu0 0.0
    %4060 = vmatprep.subr.mxu0 0.0
    %4061 = vmatpush1.msra.mxu0 0.0
    %4062 = vmatprep.subr.mxu0 0.0
    %4063 = vmatpush1.msra.mxu0 0.0
    %4064 = vmatprep.subr.mxu0 0.0
    %4065 = vmatpush1.msra.mxu0 0.0
    %4066 = vmatprep.subr.mxu0 0.0
    %4067 = vmatpush1.msra.mxu0 0.0
    %4068 = vmatprep.subr.mxu0 0.0
    %4069 = vmatpush1.msra.mxu0 0.0
    %4070 = vmatprep.subr.mxu0 0.0
    %4071 = vmatpush1.msra.mxu0 %v1433
    %4072 = vmatprep.subr.mxu0 0.0
    %4073 = vmatpush1.msra.mxu0 %v1432
    %4074 = vmatprep.subr.mxu0 0.0
    %4075 = vmatpush2.msra.mxu0 0.0
    %4076 = vmatprep.subr.mxu0 0.0
    %4077 = vmatpush2.msra.mxu0 0.0
    %4078 = vmatprep.subr.mxu0 0.0
    %4079 = vmatpush2.msra.mxu0 0.0
    %4080 = vmatprep.subr.mxu0 0.0
    %4081 = vmatpush2.msra.mxu0 0.0
    %4082 = vmatprep.subr.mxu0 0.0
    %4083 = vmatpush2.msra.mxu0 0.0
    %4084 = vmatprep.subr.mxu0 0.0
    %4085 = vmatpush2.msra.mxu0 0.0
    %4086 = vmatprep.subr.mxu0 0.0
    %4087 = vmatpush2.msra.mxu0 0.0
    %4088 = vmatprep.subr.mxu0 0.0
    %4089 = vmatpush2.msra.mxu0 0.0
    %4090 = vmatprep.subr.mxu0 0.0
    %4091 = vmatpush2.msra.mxu0 0.0
    %4092 = vmatprep.subr.mxu0 0.0
    %4093 = vmatpush2.msra.mxu0 0.0
    %4094 = vmatprep.subr.mxu0 0.0
    %4095 = vmatpush2.msra.mxu0 0.0
    %4096 = vmatprep.subr.mxu0 0.0
    %4097 = vmatpush2.msra.mxu0 0.0
    %4098 = vmatprep.subr.mxu0 0.0
    %4099 = vmatpush2.msra.mxu0 0.0
    %4100 = vmatprep.subr.mxu0 0.0
    %4101 = vmatpush2.msra.mxu0 0.0
    %4102 = vmatprep.subr.mxu0 0.0
    %4103 = vmatpush2.msra.mxu0 0.0
    %4104 = vmatprep.subr.mxu0 0.0
    %4105 = vmatpush2.msra.mxu0 0.0
    %4106 = vmatprep.mubr.f32.mxu0 0.0
    %4107 = vmatmul.mubr.f32.gmra.mxu0 %v4040
    %v4108 = vpop.f32.mrf.mxu0
    %v4109 = vadd.f32 %v4036, %v4108
    %v4110 = vpop.f32.mrf.mxu0
    %4111 = vdwg.mxu0
    %v4112 = vadd.f32 %v4109, %v2507
    %v4113 = vmax.f32 %v4112, 0.0
    %v4115 = vsel %vm150, %v4113, 0
    %4117 = vmatprep.subr.mxu0 0.0
    %4118 = vmatpush1.msra.mxu0 0.0
    %4119 = vmatprep.subr.mxu0 0.0
    %4120 = vmatpush1.msra.mxu0 0.0
    %4121 = vmatprep.subr.mxu0 0.0
    %4122 = vmatpush1.msra.mxu0 0.0
    %4123 = vmatprep.subr.mxu0 0.0
    %4124 = vmatpush1.msra.mxu0 0.0
    %4125 = vmatprep.subr.mxu0 0.0
    %4126 = vmatpush1.msra.mxu0 0.0
    %4127 = vmatprep.subr.mxu0 0.0
    %4128 = vmatpush1.msra.mxu0 0.0
    %4129 = vmatprep.subr.mxu0 0.0
    %4130 = vmatpush1.msra.mxu0 0.0
    %4131 = vmatprep.subr.mxu0 0.0
    %4132 = vmatpush1.msra.mxu0 0.0
    %4133 = vmatprep.subr.mxu0 0.0
    %4134 = vmatpush1.msra.mxu0 0.0
    %4135 = vmatprep.subr.mxu0 0.0
    %4136 = vmatpush1.msra.mxu0 0.0
    %4137 = vmatprep.subr.mxu0 0.0
    %4138 = vmatpush1.msra.mxu0 0.0
    %4139 = vmatprep.subr.mxu0 0.0
    %4140 = vmatpush1.msra.mxu0 0.0
    %4141 = vmatprep.subr.mxu0 0.0
    %4142 = vmatpush1.msra.mxu0 %v1442
    %4143 = vmatprep.subr.mxu0 0.0
    %4144 = vmatpush1.msra.mxu0 %v1441
    %4145 = vmatprep.subr.mxu0 0.0
    %4146 = vmatpush1.msra.mxu0 %v1440
    %4147 = vmatprep.subr.mxu0 0.0
    %4148 = vmatpush1.msra.mxu0 %v1439
    %4149 = vmatprep.subr.mxu0 0.0
    %4150 = vmatpush2.msra.mxu0 0.0
    %4151 = vmatprep.subr.mxu0 0.0
    %4152 = vmatpush2.msra.mxu0 0.0
    %4153 = vmatprep.subr.mxu0 0.0
    %4154 = vmatpush2.msra.mxu0 0.0
    %4155 = vmatprep.subr.mxu0 0.0
    %4156 = vmatpush2.msra.mxu0 0.0
    %4157 = vmatprep.subr.mxu0 0.0
    %4158 = vmatpush2.msra.mxu0 0.0
    %4159 = vmatprep.subr.mxu0 0.0
    %4160 = vmatpush2.msra.mxu0 0.0
    %4161 = vmatprep.subr.mxu0 0.0
    %4162 = vmatpush2.msra.mxu0 0.0
    %4163 = vmatprep.subr.mxu0 0.0
    %4164 = vmatpush2.msra.mxu0 0.0
    %4165 = vmatprep.subr.mxu0 0.0
    %4166 = vmatpush2.msra.mxu0 0.0
    %4167 = vmatprep.subr.mxu0 0.0
    %4168 = vmatpush2.msra.mxu0 0.0
    %4169 = vmatprep.subr.mxu0 0.0
    %4170 = vmatpush2.msra.mxu0 0.0
    %4171 = vmatprep.subr.mxu0 0.0
    %4172 = vmatpush2.msra.mxu0 0.0
    %4173 = vmatprep.subr.mxu0 0.0
    %4174 = vmatpush2.msra.mxu0 0.0
    %4175 = vmatprep.subr.mxu0 0.0
    %4176 = vmatpush2.msra.mxu0 0.0
    %4177 = vmatprep.subr.mxu0 0.0
    %4178 = vmatpush2.msra.mxu0 0.0
    %4179 = vmatprep.subr.mxu0 0.0
    %4180 = vmatpush2.msra.mxu0 0.0
    %4181 = vmatprep.mubr.f32.mxu0 0.0
    %4182 = vmatmul.mubr.f32.gmra.mxu0 %v4115
    %v4183 = vpop.f32.mrf.mxu0
    %v4184 = vadd.f32 %v2515, %v4183
    %v4185 = vpop.f32.mrf.mxu0
    %4186 = vdwg.mxu0
    %v4187 = vmax.f32 %v4184, 0.0
    %4188 = vmatprep.subr.mxu0 0.0
    %4189 = vmatpush1.msra.mxu0 0.0
    %4190 = vmatprep.subr.mxu0 0.0
    %4191 = vmatpush1.msra.mxu0 0.0
    %4192 = vmatprep.subr.mxu0 0.0
    %4193 = vmatpush1.msra.mxu0 0.0
    %4194 = vmatprep.subr.mxu0 0.0
    %4195 = vmatpush1.msra.mxu0 0.0
    %4196 = vmatprep.subr.mxu0 0.0
    %4197 = vmatpush1.msra.mxu0 0.0
    %4198 = vmatprep.subr.mxu0 0.0
    %4199 = vmatpush1.msra.mxu0 0.0
    %4200 = vmatprep.subr.mxu0 0.0
    %4201 = vmatpush1.msra.mxu0 0.0
    %4202 = vmatprep.subr.mxu0 0.0
    %4203 = vmatpush1.msra.mxu0 0.0
    %4204 = vmatprep.subr.mxu0 0.0
    %4205 = vmatpush1.msra.mxu0 0.0
    %4206 = vmatprep.subr.mxu0 0.0
    %4207 = vmatpush1.msra.mxu0 0.0
    %4208 = vmatprep.subr.mxu0 0.0
    %4209 = vmatpush1.msra.mxu0 0.0
    %4210 = vmatprep.subr.mxu0 0.0
    %4211 = vmatpush1.msra.mxu0 0.0
    %4212 = vmatprep.subr.mxu0 0.0
    %4213 = vmatpush1.msra.mxu0 %v1437
    %4214 = vmatprep.subr.mxu0 0.0
    %4215 = vmatpush1.msra.mxu0 %v1436
    %4216 = vmatprep.subr.mxu0 0.0
    %4217 = vmatpush1.msra.mxu0 %v1435
    %4218 = vmatprep.subr.mxu0 0.0
    %4219 = vmatpush1.msra.mxu0 %v1434
    %4220 = vmatprep.subr.mxu0 0.0
    %4221 = vmatpush2.msra.mxu0 0.0
    %4222 = vmatprep.subr.mxu0 0.0
    %4223 = vmatpush2.msra.mxu0 0.0
    %4224 = vmatprep.subr.mxu0 0.0
    %4225 = vmatpush2.msra.mxu0 0.0
    %4226 = vmatprep.subr.mxu0 0.0
    %4227 = vmatpush2.msra.mxu0 0.0
    %4228 = vmatprep.subr.mxu0 0.0
    %4229 = vmatpush2.msra.mxu0 0.0
    %4230 = vmatprep.subr.mxu0 0.0
    %4231 = vmatpush2.msra.mxu0 0.0
    %4232 = vmatprep.subr.mxu0 0.0
    %4233 = vmatpush2.msra.mxu0 0.0
    %4234 = vmatprep.subr.mxu0 0.0
    %4235 = vmatpush2.msra.mxu0 0.0
    %4236 = vmatprep.subr.mxu0 0.0
    %4237 = vmatpush2.msra.mxu0 0.0
    %4238 = vmatprep.subr.mxu0 0.0
    %4239 = vmatpush2.msra.mxu0 0.0
    %4240 = vmatprep.subr.mxu0 0.0
    %4241 = vmatpush2.msra.mxu0 0.0
    %4242 = vmatprep.subr.mxu0 0.0
    %4243 = vmatpush2.msra.mxu0 0.0
    %4244 = vmatprep.subr.mxu0 0.0
    %4245 = vmatpush2.msra.mxu0 0.0
    %4246 = vmatprep.subr.mxu0 0.0
    %4247 = vmatpush2.msra.mxu0 0.0
    %4248 = vmatprep.subr.mxu0 0.0
    %4249 = vmatpush2.msra.mxu0 0.0
    %4250 = vmatprep.subr.mxu0 0.0
    %4251 = vmatpush2.msra.mxu0 0.0
    %4252 = vmatprep.mubr.f32.mxu0 0.0
    %4253 = vmatmul.mubr.f32.gmra.mxu0 %v3499
    %v4254 = vpop.f32.mrf.mxu0
    %v4255 = vadd.f32 0.0, %v4254
    %v4256 = vpop.f32.mrf.mxu0
    %4257 = vdwg.mxu0
    %v4259 = vsel %vm1119, %v3966, 0
    %4261 = vmatprep.subr.mxu0 0.0
    %4262 = vmatpush1.msra.mxu0 0.0
    %4263 = vmatprep.subr.mxu0 0.0
    %4264 = vmatpush1.msra.mxu0 0.0
    %4265 = vmatprep.subr.mxu0 0.0
    %4266 = vmatpush1.msra.mxu0 0.0
    %4267 = vmatprep.subr.mxu0 0.0
    %4268 = vmatpush1.msra.mxu0 0.0
    %4269 = vmatprep.subr.mxu0 0.0
    %4270 = vmatpush1.msra.mxu0 0.0
    %4271 = vmatprep.subr.mxu0 0.0
    %4272 = vmatpush1.msra.mxu0 0.0
    %4273 = vmatprep.subr.mxu0 0.0
    %4274 = vmatpush1.msra.mxu0 0.0
    %4275 = vmatprep.subr.mxu0 0.0
    %4276 = vmatpush1.msra.mxu0 0.0
    %4277 = vmatprep.subr.mxu0 0.0
    %4278 = vmatpush1.msra.mxu0 0.0
    %4279 = vmatprep.subr.mxu0 0.0
    %4280 = vmatpush1.msra.mxu0 0.0
    %4281 = vmatprep.subr.mxu0 0.0
    %4282 = vmatpush1.msra.mxu0 0.0
    %4283 = vmatprep.subr.mxu0 0.0
    %4284 = vmatpush1.msra.mxu0 0.0
    %4285 = vmatprep.subr.mxu0 0.0
    %4286 = vmatpush1.msra.mxu0 0.0
    %4287 = vmatprep.subr.mxu0 0.0
    %4288 = vmatpush1.msra.mxu0 0.0
    %4289 = vmatprep.subr.mxu0 0.0
    %4290 = vmatpush1.msra.mxu0 %v1433
    %4291 = vmatprep.subr.mxu0 0.0
    %4292 = vmatpush1.msra.mxu0 %v1432
    %4293 = vmatprep.subr.mxu0 0.0
    %4294 = vmatpush2.msra.mxu0 0.0
    %4295 = vmatprep.subr.mxu0 0.0
    %4296 = vmatpush2.msra.mxu0 0.0
    %4297 = vmatprep.subr.mxu0 0.0
    %4298 = vmatpush2.msra.mxu0 0.0
    %4299 = vmatprep.subr.mxu0 0.0
    %4300 = vmatpush2.msra.mxu0 0.0
    %4301 = vmatprep.subr.mxu0 0.0
    %4302 = vmatpush2.msra.mxu0 0.0
    %4303 = vmatprep.subr.mxu0 0.0
    %4304 = vmatpush2.msra.mxu0 0.0
    %4305 = vmatprep.subr.mxu0 0.0
    %4306 = vmatpush2.msra.mxu0 0.0
    %4307 = vmatprep.subr.mxu0 0.0
    %4308 = vmatpush2.msra.mxu0 0.0
    %4309 = vmatprep.subr.mxu0 0.0
    %4310 = vmatpush2.msra.mxu0 0.0
    %4311 = vmatprep.subr.mxu0 0.0
    %4312 = vmatpush2.msra.mxu0 0.0
    %4313 = vmatprep.subr.mxu0 0.0
    %4314 = vmatpush2.msra.mxu0 0.0
    %4315 = vmatprep.subr.mxu0 0.0
    %4316 = vmatpush2.msra.mxu0 0.0
    %4317 = vmatprep.subr.mxu0 0.0
    %4318 = vmatpush2.msra.mxu0 0.0
    %4319 = vmatprep.subr.mxu0 0.0
    %4320 = vmatpush2.msra.mxu0 0.0
    %4321 = vmatprep.subr.mxu0 0.0
    %4322 = vmatpush2.msra.mxu0 0.0
    %4323 = vmatprep.subr.mxu0 0.0
    %4324 = vmatpush2.msra.mxu0 0.0
    %4325 = vmatprep.mubr.f32.mxu0 0.0
    %4326 = vmatmul.mubr.f32.gmra.mxu0 %v4259
    %v4327 = vpop.f32.mrf.mxu0
    %v4328 = vadd.f32 %v4255, %v4327
    %v4329 = vpop.f32.mrf.mxu0
    %4330 = vdwg.mxu0
    %v4331 = vadd.f32 %v4328, %v2507
    %v4332 = vmax.f32 %v4331, 0.0
    %v4334 = vsel %vm150, %v4332, 0
    %4336 = vmatprep.subr.mxu0 0.0
    %4337 = vmatpush1.msra.mxu0 0.0
    %4338 = vmatprep.subr.mxu0 0.0
    %4339 = vmatpush1.msra.mxu0 0.0
    %4340 = vmatprep.subr.mxu0 0.0
    %4341 = vmatpush1.msra.mxu0 0.0
    %4342 = vmatprep.subr.mxu0 0.0
    %4343 = vmatpush1.msra.mxu0 0.0
    %4344 = vmatprep.subr.mxu0 0.0
    %4345 = vmatpush1.msra.mxu0 0.0
    %4346 = vmatprep.subr.mxu0 0.0
    %4347 = vmatpush1.msra.mxu0 0.0
    %4348 = vmatprep.subr.mxu0 0.0
    %4349 = vmatpush1.msra.mxu0 0.0
    %4350 = vmatprep.subr.mxu0 0.0
    %4351 = vmatpush1.msra.mxu0 0.0
    %4352 = vmatprep.subr.mxu0 0.0
    %4353 = vmatpush1.msra.mxu0 0.0
    %4354 = vmatprep.subr.mxu0 0.0
    %4355 = vmatpush1.msra.mxu0 0.0
    %4356 = vmatprep.subr.mxu0 0.0
    %4357 = vmatpush1.msra.mxu0 0.0
    %4358 = vmatprep.subr.mxu0 0.0
    %4359 = vmatpush1.msra.mxu0 0.0
    %4360 = vmatprep.subr.mxu0 0.0
    %4361 = vmatpush1.msra.mxu0 %v1442
    %4362 = vmatprep.subr.mxu0 0.0
    %4363 = vmatpush1.msra.mxu0 %v1441
    %4364 = vmatprep.subr.mxu0 0.0
    %4365 = vmatpush1.msra.mxu0 %v1440
    %4366 = vmatprep.subr.mxu0 0.0
    %4367 = vmatpush1.msra.mxu0 %v1439
    %4368 = vmatprep.subr.mxu0 0.0
    %4369 = vmatpush2.msra.mxu0 0.0
    %4370 = vmatprep.subr.mxu0 0.0
    %4371 = vmatpush2.msra.mxu0 0.0
    %4372 = vmatprep.subr.mxu0 0.0
    %4373 = vmatpush2.msra.mxu0 0.0
    %4374 = vmatprep.subr.mxu0 0.0
    %4375 = vmatpush2.msra.mxu0 0.0
    %4376 = vmatprep.subr.mxu0 0.0
    %4377 = vmatpush2.msra.mxu0 0.0
    %4378 = vmatprep.subr.mxu0 0.0
    %4379 = vmatpush2.msra.mxu0 0.0
    %4380 = vmatprep.subr.mxu0 0.0
    %4381 = vmatpush2.msra.mxu0 0.0
    %4382 = vmatprep.subr.mxu0 0.0
    %4383 = vmatpush2.msra.mxu0 0.0
    %4384 = vmatprep.subr.mxu0 0.0
    %4385 = vmatpush2.msra.mxu0 0.0
    %4386 = vmatprep.subr.mxu0 0.0
    %4387 = vmatpush2.msra.mxu0 0.0
    %4388 = vmatprep.subr.mxu0 0.0
    %4389 = vmatpush2.msra.mxu0 0.0
    %4390 = vmatprep.subr.mxu0 0.0
    %4391 = vmatpush2.msra.mxu0 0.0
    %4392 = vmatprep.subr.mxu0 0.0
    %4393 = vmatpush2.msra.mxu0 0.0
    %4394 = vmatprep.subr.mxu0 0.0
    %4395 = vmatpush2.msra.mxu0 0.0
    %4396 = vmatprep.subr.mxu0 0.0
    %4397 = vmatpush2.msra.mxu0 0.0
    %4398 = vmatprep.subr.mxu0 0.0
    %4399 = vmatpush2.msra.mxu0 0.0
    %4400 = vmatprep.mubr.f32.mxu0 0.0
    %4401 = vmatmul.mubr.f32.gmra.mxu0 %v4334
    %v4402 = vpop.f32.mrf.mxu0
    %v4403 = vadd.f32 %v2515, %v4402
    %v4404 = vpop.f32.mrf.mxu0
    %4405 = vdwg.mxu0
    %v4406 = vmax.f32 %v4403, 0.0
    %v4408 = vsel %vm1119, %v3821, 0
    %v4411 = vsel %vm1119, %v3822, 0
    %v4414 = vsel %vm1119, %v3823, 0
    %v4417 = vsel %vm1119, %v3824, 0
    %v4420 = vsel %vm1119, %v3825, 0
    %v4423 = vsel %vm1119, %v3826, 0
    %v4426 = vsel %vm1119, %v3827, 0
    %v4429 = vsel %vm1119, %v3828, 0
    %4431 = vmatprep.subr.mxu0 0.0
    %4432 = vmatpush1.msra.mxu0 0.0
    %4433 = vmatprep.subr.mxu0 0.0
    %4434 = vmatpush1.msra.mxu0 0.0
    %4435 = vmatprep.subr.mxu0 0.0
    %4436 = vmatpush1.msra.mxu0 0.0
    %4437 = vmatprep.subr.mxu0 0.0
    %4438 = vmatpush1.msra.mxu0 0.0
    %4439 = vmatprep.subr.mxu0 0.0
    %4440 = vmatpush1.msra.mxu0 0.0
    %4441 = vmatprep.subr.mxu0 0.0
    %4442 = vmatpush1.msra.mxu0 0.0
    %4443 = vmatprep.subr.mxu0 0.0
    %4444 = vmatpush1.msra.mxu0 0.0
    %4445 = vmatprep.subr.mxu0 0.0
    %4446 = vmatpush1.msra.mxu0 0.0
    %4447 = vmatprep.subr.mxu0 0.0
    %4448 = vmatpush1.msra.mxu0 0.0
    %4449 = vmatprep.subr.mxu0 0.0
    %4450 = vmatpush1.msra.mxu0 0.0
    %4451 = vmatprep.subr.mxu0 0.0
    %4452 = vmatpush1.msra.mxu0 0.0
    %4453 = vmatprep.subr.mxu0 0.0
    %4454 = vmatpush1.msra.mxu0 0.0
    %4455 = vmatprep.subr.mxu0 0.0
    %4456 = vmatpush1.msra.mxu0 0.0
    %4457 = vmatprep.subr.mxu0 0.0
    %4458 = vmatpush1.msra.mxu0 0.0
    %4459 = vmatprep.subr.mxu0 0.0
    %4460 = vmatpush1.msra.mxu0 %v1445
    %4461 = vmatprep.subr.mxu0 0.0
    %4462 = vmatpush1.msra.mxu0 %v1444
    %4463 = vmatprep.subr.mxu0 0.0
    %4464 = vmatpush2.msra.mxu0 0.0
    %4465 = vmatprep.subr.mxu0 0.0
    %4466 = vmatpush2.msra.mxu0 0.0
    %4467 = vmatprep.subr.mxu0 0.0
    %4468 = vmatpush2.msra.mxu0 0.0
    %4469 = vmatprep.subr.mxu0 0.0
    %4470 = vmatpush2.msra.mxu0 0.0
    %4471 = vmatprep.subr.mxu0 0.0
    %4472 = vmatpush2.msra.mxu0 0.0
    %4473 = vmatprep.subr.mxu0 0.0
    %4474 = vmatpush2.msra.mxu0 0.0
    %4475 = vmatprep.subr.mxu0 0.0
    %4476 = vmatpush2.msra.mxu0 0.0
    %4477 = vmatprep.subr.mxu0 0.0
    %4478 = vmatpush2.msra.mxu0 0.0
    %4479 = vmatprep.subr.mxu0 0.0
    %4480 = vmatpush2.msra.mxu0 0.0
    %4481 = vmatprep.subr.mxu0 0.0
    %4482 = vmatpush2.msra.mxu0 0.0
    %4483 = vmatprep.subr.mxu0 0.0
    %4484 = vmatpush2.msra.mxu0 0.0
    %4485 = vmatprep.subr.mxu0 0.0
    %4486 = vmatpush2.msra.mxu0 0.0
    %4487 = vmatprep.subr.mxu0 0.0
    %4488 = vmatpush2.msra.mxu0 0.0
    %4489 = vmatprep.subr.mxu0 0.0
    %4490 = vmatpush2.msra.mxu0 0.0
    %4491 = vmatprep.subr.mxu0 0.0
    %4492 = vmatpush2.msra.mxu0 0.0
    %4493 = vmatprep.subr.mxu0 0.0
    %4494 = vmatpush2.msra.mxu0 0.0
    %4495 = vmatprep.mubr.f32.mxu0 0.0
    %4496 = vmatmul.mubr.f32.gmra.mxu0 %v4408
    %v4497 = vpop.f32.mrf.mxu0
    %v4498 = vadd.f32 %v2814, %v4497
    %v4499 = vpop.f32.mrf.mxu0
    %4500 = vmatprep.mubr.f32.mxu0 0.0
    %4501 = vmatmul.mubr.f32.gmra.mxu0 %v4411
    %v4502 = vpop.f32.mrf.mxu0
    %v4503 = vadd.f32 %v2814, %v4502
    %v4504 = vpop.f32.mrf.mxu0
    %4505 = vmatprep.mubr.f32.mxu0 0.0
    %4506 = vmatmul.mubr.f32.gmra.mxu0 %v4414
    %v4507 = vpop.f32.mrf.mxu0
    %v4508 = vadd.f32 %v2814, %v4507
    %v4509 = vpop.f32.mrf.mxu0
    %4510 = vmatprep.mubr.f32.mxu0 0.0
    %4511 = vmatmul.mubr.f32.gmra.mxu0 %v4417
    %v4512 = vpop.f32.mrf.mxu0
    %v4513 = vadd.f32 %v2814, %v4512
    %v4514 = vpop.f32.mrf.mxu0
    %4515 = vmatprep.mubr.f32.mxu0 0.0
    %4516 = vmatmul.mubr.f32.gmra.mxu0 %v4420
    %v4517 = vpop.f32.mrf.mxu0
    %v4518 = vadd.f32 %v2814, %v4517
    %v4519 = vpop.f32.mrf.mxu0
    %4520 = vmatprep.mubr.f32.mxu0 0.0
    %4521 = vmatmul.mubr.f32.gmra.mxu0 %v4423
    %v4522 = vpop.f32.mrf.mxu0
    %v4523 = vadd.f32 %v2814, %v4522
    %v4524 = vpop.f32.mrf.mxu0
    %4525 = vmatprep.mubr.f32.mxu0 0.0
    %4526 = vmatmul.mubr.f32.gmra.mxu0 %v4426
    %v4527 = vpop.f32.mrf.mxu0
    %v4528 = vadd.f32 %v2814, %v4527
    %v4529 = vpop.f32.mrf.mxu0
    %4530 = vmatprep.mubr.f32.mxu0 0.0
    %4531 = vmatmul.mubr.f32.gmra.mxu0 %v4429
    %v4532 = vpop.f32.mrf.mxu0
    %v4533 = vadd.f32 %v2814, %v4532
    %v4534 = vpop.f32.mrf.mxu0
    %4535 = vdwg.mxu0
    %v4536 = vmax.f32 %v4498, 0.0
    %v4537 = vmax.f32 %v4503, 0.0
    %v4538 = vmax.f32 %v4508, 0.0
    %v4539 = vmax.f32 %v4513, 0.0
    %v4540 = vmax.f32 %v4518, 0.0
    %v4541 = vmax.f32 %v4523, 0.0
    %v4542 = vmax.f32 %v4528, 0.0
    %v4543 = vmax.f32 %v4533, 0.0
    %v4545 = vsel %vm1119, %v4536, 0
    %v4548 = vsel %vm1119, %v4537, 0
    %v4551 = vsel %vm1119, %v4538, 0
    %v4554 = vsel %vm1119, %v4539, 0
    %v4557 = vsel %vm1119, %v4540, 0
    %v4560 = vsel %vm1119, %v4541, 0
    %v4563 = vsel %vm1119, %v4542, 0
    %v4566 = vsel %vm1119, %v4543, 0
    %4568 = vmatprep.subr.mxu0 0.0
    %4569 = vmatpush1.msra.mxu0 0.0
    %4570 = vmatprep.subr.mxu0 0.0
    %4571 = vmatpush1.msra.mxu0 0.0
    %4572 = vmatprep.subr.mxu0 0.0
    %4573 = vmatpush1.msra.mxu0 0.0
    %4574 = vmatprep.subr.mxu0 0.0
    %4575 = vmatpush1.msra.mxu0 0.0
    %4576 = vmatprep.subr.mxu0 0.0
    %4577 = vmatpush1.msra.mxu0 0.0
    %4578 = vmatprep.subr.mxu0 0.0
    %4579 = vmatpush1.msra.mxu0 0.0
    %4580 = vmatprep.subr.mxu0 0.0
    %4581 = vmatpush1.msra.mxu0 0.0
    %4582 = vmatprep.subr.mxu0 0.0
    %4583 = vmatpush1.msra.mxu0 0.0
    %4584 = vmatprep.subr.mxu0 0.0
    %4585 = vmatpush1.msra.mxu0 0.0
    %4586 = vmatprep.subr.mxu0 0.0
    %4587 = vmatpush1.msra.mxu0 0.0
    %4588 = vmatprep.subr.mxu0 0.0
    %4589 = vmatpush1.msra.mxu0 0.0
    %4590 = vmatprep.subr.mxu0 0.0
    %4591 = vmatpush1.msra.mxu0 0.0
    %4592 = vmatprep.subr.mxu0 0.0
    %4593 = vmatpush1.msra.mxu0 0.0
    %4594 = vmatprep.subr.mxu0 0.0
    %4595 = vmatpush1.msra.mxu0 0.0
    %4596 = vmatprep.subr.mxu0 0.0
    %4597 = vmatpush1.msra.mxu0 %v1448
    %4598 = vmatprep.subr.mxu0 0.0
    %4599 = vmatpush1.msra.mxu0 %v1447
    %4600 = vmatprep.subr.mxu0 0.0
    %4601 = vmatpush2.msra.mxu0 0.0
    %4602 = vmatprep.subr.mxu0 0.0
    %4603 = vmatpush2.msra.mxu0 0.0
    %4604 = vmatprep.subr.mxu0 0.0
    %4605 = vmatpush2.msra.mxu0 0.0
    %4606 = vmatprep.subr.mxu0 0.0
    %4607 = vmatpush2.msra.mxu0 0.0
    %4608 = vmatprep.subr.mxu0 0.0
    %4609 = vmatpush2.msra.mxu0 0.0
    %4610 = vmatprep.subr.mxu0 0.0
    %4611 = vmatpush2.msra.mxu0 0.0
    %4612 = vmatprep.subr.mxu0 0.0
    %4613 = vmatpush2.msra.mxu0 0.0
    %4614 = vmatprep.subr.mxu0 0.0
    %4615 = vmatpush2.msra.mxu0 0.0
    %4616 = vmatprep.subr.mxu0 0.0
    %4617 = vmatpush2.msra.mxu0 0.0
    %4618 = vmatprep.subr.mxu0 0.0
    %4619 = vmatpush2.msra.mxu0 0.0
    %4620 = vmatprep.subr.mxu0 0.0
    %4621 = vmatpush2.msra.mxu0 0.0
    %4622 = vmatprep.subr.mxu0 0.0
    %4623 = vmatpush2.msra.mxu0 0.0
    %4624 = vmatprep.subr.mxu0 0.0
    %4625 = vmatpush2.msra.mxu0 0.0
    %4626 = vmatprep.subr.mxu0 0.0
    %4627 = vmatpush2.msra.mxu0 0.0
    %4628 = vmatprep.subr.mxu0 0.0
    %4629 = vmatpush2.msra.mxu0 0.0
    %4630 = vmatprep.subr.mxu0 0.0
    %4631 = vmatpush2.msra.mxu0 0.0
    %4632 = vmatprep.mubr.f32.mxu0 0.0
    %4633 = vmatmul.mubr.f32.gmra.mxu0 %v4545
    %v4634 = vpop.f32.mrf.mxu0
    %v4635 = vadd.f32 %v2957, %v4634
    %v4636 = vpop.f32.mrf.mxu0
    %4637 = vmatprep.mubr.f32.mxu0 0.0
    %4638 = vmatmul.mubr.f32.gmra.mxu0 %v4548
    %v4639 = vpop.f32.mrf.mxu0
    %v4640 = vadd.f32 %v2957, %v4639
    %v4641 = vpop.f32.mrf.mxu0
    %4642 = vmatprep.mubr.f32.mxu0 0.0
    %4643 = vmatmul.mubr.f32.gmra.mxu0 %v4551
    %v4644 = vpop.f32.mrf.mxu0
    %v4645 = vadd.f32 %v2957, %v4644
    %v4646 = vpop.f32.mrf.mxu0
    %4647 = vmatprep.mubr.f32.mxu0 0.0
    %4648 = vmatmul.mubr.f32.gmra.mxu0 %v4554
    %v4649 = vpop.f32.mrf.mxu0
    %v4650 = vadd.f32 %v2957, %v4649
    %v4651 = vpop.f32.mrf.mxu0
    %4652 = vmatprep.mubr.f32.mxu0 0.0
    %4653 = vmatmul.mubr.f32.gmra.mxu0 %v4557
    %v4654 = vpop.f32.mrf.mxu0
    %v4655 = vadd.f32 %v2957, %v4654
    %v4656 = vpop.f32.mrf.mxu0
    %4657 = vmatprep.mubr.f32.mxu0 0.0
    %4658 = vmatmul.mubr.f32.gmra.mxu0 %v4560
    %v4659 = vpop.f32.mrf.mxu0
    %v4660 = vadd.f32 %v2957, %v4659
    %v4661 = vpop.f32.mrf.mxu0
    %4662 = vmatprep.mubr.f32.mxu0 0.0
    %4663 = vmatmul.mubr.f32.gmra.mxu0 %v4563
    %v4664 = vpop.f32.mrf.mxu0
    %v4665 = vadd.f32 %v2957, %v4664
    %v4666 = vpop.f32.mrf.mxu0
    %4667 = vmatprep.mubr.f32.mxu0 0.0
    %4668 = vmatmul.mubr.f32.gmra.mxu0 %v4566
    %v4669 = vpop.f32.mrf.mxu0
    %v4670 = vadd.f32 %v2957, %v4669
    %v4671 = vpop.f32.mrf.mxu0
    %4672 = vdwg.mxu0
    %4674 = vset.pattern.permute.xlu0 0
    %4675 = vperm.xlu0 %4674, %v4635
    %v4676 = vpop.permute.xlu0 %4675
    %4679 = vset.pattern.permute.xlu0 0
    %4680 = vperm.xlu0 %4679, %v4640
    %v4681 = vpop.permute.xlu0 %4680
    %4684 = vset.pattern.permute.xlu0 0
    %4685 = vperm.xlu0 %4684, %v4645
    %v4686 = vpop.permute.xlu0 %4685
    %4689 = vset.pattern.permute.xlu0 0
    %4690 = vperm.xlu0 %4689, %v4650
    %v4691 = vpop.permute.xlu0 %4690
    %4694 = vset.pattern.permute.xlu0 0
    %4695 = vperm.xlu0 %4694, %v4655
    %v4696 = vpop.permute.xlu0 %4695
    %4699 = vset.pattern.permute.xlu0 0
    %4700 = vperm.xlu0 %4699, %v4660
    %v4701 = vpop.permute.xlu0 %4700
    %4704 = vset.pattern.permute.xlu0 0
    %4705 = vperm.xlu0 %4704, %v4665
    %v4706 = vpop.permute.xlu0 %4705
    %4709 = vset.pattern.permute.xlu0 0
    %4710 = vperm.xlu0 %4709, %v4670
    %v4711 = vpop.permute.xlu0 %4710
    %v4713 = vmul.f32 %v4676, %v137
    %v4714 = vmul.f32 %v4681, %v138
    %v4715 = vmul.f32 %v4686, %v139
    %v4716 = vmul.f32 %v4691, %v140
    %v4717 = vmul.f32 %v4696, %v141
    %v4718 = vmul.f32 %v4701, %v142
    %v4719 = vmul.f32 %v4706, %v143
    %v4720 = vmul.f32 %v4711, %v144
    %4721 = vmatprep.subr.mxu0 0.0
    %4722 = vmatpush1.msra.mxu0 0.0
    %4723 = vmatprep.subr.mxu0 0.0
    %4724 = vmatpush1.msra.mxu0 0.0
    %4725 = vmatprep.subr.mxu0 0.0
    %4726 = vmatpush1.msra.mxu0 0.0
    %4727 = vmatprep.subr.mxu0 0.0
    %4728 = vmatpush1.msra.mxu0 0.0
    %4729 = vmatprep.subr.mxu0 0.0
    %4730 = vmatpush1.msra.mxu0 0.0
    %4731 = vmatprep.subr.mxu0 0.0
    %4732 = vmatpush1.msra.mxu0 0.0
    %4733 = vmatprep.subr.mxu0 0.0
    %4734 = vmatpush1.msra.mxu0 0.0
    %4735 = vmatprep.subr.mxu0 0.0
    %4736 = vmatpush1.msra.mxu0 0.0
    %4737 = vmatprep.subr.mxu0 0.0
    %4738 = vmatpush1.msra.mxu0 %v4720
    %4739 = vmatprep.subr.mxu0 0.0
    %4740 = vmatpush1.msra.mxu0 %v4719
    %4741 = vmatprep.subr.mxu0 0.0
    %4742 = vmatpush1.msra.mxu0 %v4718
    %4743 = vmatprep.subr.mxu0 0.0
    %4744 = vmatpush1.msra.mxu0 %v4717
    %4745 = vmatprep.subr.mxu0 0.0
    %4746 = vmatpush1.msra.mxu0 %v4716
    %4747 = vmatprep.subr.mxu0 0.0
    %4748 = vmatpush1.msra.mxu0 %v4715
    %4749 = vmatprep.subr.mxu0 0.0
    %4750 = vmatpush1.msra.mxu0 %v4714
    %4751 = vmatprep.subr.mxu0 0.0
    %4752 = vmatpush1.msra.mxu0 %v4713
    %4753 = vmatprep.subr.mxu0 0.0
    %4754 = vmatpush2.msra.mxu0 0.0
    %4755 = vmatprep.subr.mxu0 0.0
    %4756 = vmatpush2.msra.mxu0 0.0
    %4757 = vmatprep.subr.mxu0 0.0
    %4758 = vmatpush2.msra.mxu0 0.0
    %4759 = vmatprep.subr.mxu0 0.0
    %4760 = vmatpush2.msra.mxu0 0.0
    %4761 = vmatprep.subr.mxu0 0.0
    %4762 = vmatpush2.msra.mxu0 0.0
    %4763 = vmatprep.subr.mxu0 0.0
    %4764 = vmatpush2.msra.mxu0 0.0
    %4765 = vmatprep.subr.mxu0 0.0
    %4766 = vmatpush2.msra.mxu0 0.0
    %4767 = vmatprep.subr.mxu0 0.0
    %4768 = vmatpush2.msra.mxu0 0.0
    %4769 = vmatprep.subr.mxu0 0.0
    %4770 = vmatpush2.msra.mxu0 0.0
    %4771 = vmatprep.subr.mxu0 0.0
    %4772 = vmatpush2.msra.mxu0 0.0
    %4773 = vmatprep.subr.mxu0 0.0
    %4774 = vmatpush2.msra.mxu0 0.0
    %4775 = vmatprep.subr.mxu0 0.0
    %4776 = vmatpush2.msra.mxu0 0.0
    %4777 = vmatprep.subr.mxu0 0.0
    %4778 = vmatpush2.msra.mxu0 0.0
    %4779 = vmatprep.subr.mxu0 0.0
    %4780 = vmatpush2.msra.mxu0 0.0
    %4781 = vmatprep.subr.mxu0 0.0
    %4782 = vmatpush2.msra.mxu0 0.0
    %4783 = vmatprep.subr.mxu0 0.0
    %4784 = vmatpush2.msra.mxu0 0.0
    %4785 = vmatprep.mubr.f32.mxu0 0.0
    %4786 = vmatmul.mubr.f32.gmra.mxu0 %v2215
    %v4787 = vpop.f32.mrf.mxu0
    %v4788 = vadd.f32 0.0, %v4787
    %v4789 = vpop.f32.mrf.mxu0
    %4790 = vdwg.mxu0
    %s4791 = scalar_lea.vmem [#allocation3], 8
    %4792 = vst.msk [vmem:[%s4791] sm:$0xff] %vm240, %v4788
    %4793 = vmatprep.subr.mxu0 0.0
    %4794 = vmatpush1.msra.mxu0 0.0
    %4795 = vmatprep.subr.mxu0 0.0
    %4796 = vmatpush1.msra.mxu0 0.0
    %4797 = vmatprep.subr.mxu0 0.0
    %4798 = vmatpush1.msra.mxu0 0.0
    %4799 = vmatprep.subr.mxu0 0.0
    %4800 = vmatpush1.msra.mxu0 0.0
    %4801 = vmatprep.subr.mxu0 0.0
    %4802 = vmatpush1.msra.mxu0 0.0
    %4803 = vmatprep.subr.mxu0 0.0
    %4804 = vmatpush1.msra.mxu0 0.0
    %4805 = vmatprep.subr.mxu0 0.0
    %4806 = vmatpush1.msra.mxu0 0.0
    %4807 = vmatprep.subr.mxu0 0.0
    %4808 = vmatpush1.msra.mxu0 0.0
    %4809 = vmatprep.subr.mxu0 0.0
    %4810 = vmatpush1.msra.mxu0 0.0
    %4811 = vmatprep.subr.mxu0 0.0
    %4812 = vmatpush1.msra.mxu0 0.0
    %4813 = vmatprep.subr.mxu0 0.0
    %4814 = vmatpush1.msra.mxu0 0.0
    %4815 = vmatprep.subr.mxu0 0.0
    %4816 = vmatpush1.msra.mxu0 0.0
    %4817 = vmatprep.subr.mxu0 0.0
    %4818 = vmatpush1.msra.mxu0 0.0
    %4819 = vmatprep.subr.mxu0 0.0
    %4820 = vmatpush1.msra.mxu0 0.0
    %4821 = vmatprep.subr.mxu0 0.0
    %4822 = vmatpush1.msra.mxu0 %v1417
    %4823 = vmatprep.subr.mxu0 0.0
    %4824 = vmatpush1.msra.mxu0 %v1416
    %4825 = vmatprep.subr.mxu0 0.0
    %4826 = vmatpush2.msra.mxu0 0.0
    %4827 = vmatprep.subr.mxu0 0.0
    %4828 = vmatpush2.msra.mxu0 0.0
    %4829 = vmatprep.subr.mxu0 0.0
    %4830 = vmatpush2.msra.mxu0 0.0
    %4831 = vmatprep.subr.mxu0 0.0
    %4832 = vmatpush2.msra.mxu0 0.0
    %4833 = vmatprep.subr.mxu0 0.0
    %4834 = vmatpush2.msra.mxu0 0.0
    %4835 = vmatprep.subr.mxu0 0.0
    %4836 = vmatpush2.msra.mxu0 0.0
    %4837 = vmatprep.subr.mxu0 0.0
    %4838 = vmatpush2.msra.mxu0 0.0
    %4839 = vmatprep.subr.mxu0 0.0
    %4840 = vmatpush2.msra.mxu0 0.0
    %4841 = vmatprep.subr.mxu0 0.0
    %4842 = vmatpush2.msra.mxu0 0.0
    %4843 = vmatprep.subr.mxu0 0.0
    %4844 = vmatpush2.msra.mxu0 0.0
    %4845 = vmatprep.subr.mxu0 0.0
    %4846 = vmatpush2.msra.mxu0 0.0
    %4847 = vmatprep.subr.mxu0 0.0
    %4848 = vmatpush2.msra.mxu0 0.0
    %4849 = vmatprep.subr.mxu0 0.0
    %4850 = vmatpush2.msra.mxu0 0.0
    %4851 = vmatprep.subr.mxu0 0.0
    %4852 = vmatpush2.msra.mxu0 0.0
    %4853 = vmatprep.subr.mxu0 0.0
    %4854 = vmatpush2.msra.mxu0 0.0
    %4855 = vmatprep.subr.mxu0 0.0
    %4856 = vmatpush2.msra.mxu0 0.0
    %4857 = vmatprep.mubr.f32.mxu0 0.0
    %4858 = vmatmul.mubr.f32.gmra.mxu0 %v4408
    %v4859 = vpop.f32.mrf.mxu0
    %v4860 = vadd.f32 %v1547, %v4859
    %v4861 = vpop.f32.mrf.mxu0
    %4862 = vmatprep.mubr.f32.mxu0 0.0
    %4863 = vmatmul.mubr.f32.gmra.mxu0 %v4411
    %v4864 = vpop.f32.mrf.mxu0
    %v4865 = vadd.f32 %v1552, %v4864
    %v4866 = vpop.f32.mrf.mxu0
    %4867 = vmatprep.mubr.f32.mxu0 0.0
    %4868 = vmatmul.mubr.f32.gmra.mxu0 %v4414
    %v4869 = vpop.f32.mrf.mxu0
    %v4870 = vadd.f32 %v1557, %v4869
    %v4871 = vpop.f32.mrf.mxu0
    %4872 = vmatprep.mubr.f32.mxu0 0.0
    %4873 = vmatmul.mubr.f32.gmra.mxu0 %v4417
    %v4874 = vpop.f32.mrf.mxu0
    %v4875 = vadd.f32 %v1562, %v4874
    %v4876 = vpop.f32.mrf.mxu0
    %4877 = vmatprep.mubr.f32.mxu0 0.0
    %4878 = vmatmul.mubr.f32.gmra.mxu0 %v4420
    %v4879 = vpop.f32.mrf.mxu0
    %v4880 = vadd.f32 %v1567, %v4879
    %v4881 = vpop.f32.mrf.mxu0
    %4882 = vmatprep.mubr.f32.mxu0 0.0
    %4883 = vmatmul.mubr.f32.gmra.mxu0 %v4423
    %v4884 = vpop.f32.mrf.mxu0
    %v4885 = vadd.f32 %v1572, %v4884
    %v4886 = vpop.f32.mrf.mxu0
    %4887 = vmatprep.mubr.f32.mxu0 0.0
    %4888 = vmatmul.mubr.f32.gmra.mxu0 %v4426
    %v4889 = vpop.f32.mrf.mxu0
    %v4890 = vadd.f32 %v1577, %v4889
    %v4891 = vpop.f32.mrf.mxu0
    %4892 = vmatprep.mubr.f32.mxu0 0.0
    %4893 = vmatmul.mubr.f32.gmra.mxu0 %v4429
    %v4894 = vpop.f32.mrf.mxu0
    %v4895 = vadd.f32 %v1582, %v4894
    %v4896 = vpop.f32.mrf.mxu0
    %4897 = vdwg.mxu0
    %v4899 = vsel %vm150, %v4187, 0
    %4901 = vmatprep.subr.mxu0 0.0
    %4902 = vmatpush1.msra.mxu0 0.0
    %4903 = vmatprep.subr.mxu0 0.0
    %4904 = vmatpush1.msra.mxu0 0.0
    %4905 = vmatprep.subr.mxu0 0.0
    %4906 = vmatpush1.msra.mxu0 0.0
    %4907 = vmatprep.subr.mxu0 0.0
    %4908 = vmatpush1.msra.mxu0 0.0
    %4909 = vmatprep.subr.mxu0 0.0
    %4910 = vmatpush1.msra.mxu0 0.0
    %4911 = vmatprep.subr.mxu0 0.0
    %4912 = vmatpush1.msra.mxu0 0.0
    %4913 = vmatprep.subr.mxu0 0.0
    %4914 = vmatpush1.msra.mxu0 0.0
    %4915 = vmatprep.subr.mxu0 0.0
    %4916 = vmatpush1.msra.mxu0 0.0
    %4917 = vmatprep.subr.mxu0 0.0
    %4918 = vmatpush1.msra.mxu0 0.0
    %4919 = vmatprep.subr.mxu0 0.0
    %4920 = vmatpush1.msra.mxu0 0.0
    %4921 = vmatprep.subr.mxu0 0.0
    %4922 = vmatpush1.msra.mxu0 0.0
    %4923 = vmatprep.subr.mxu0 0.0
    %4924 = vmatpush1.msra.mxu0 0.0
    %4925 = vmatprep.subr.mxu0 0.0
    %4926 = vmatpush1.msra.mxu0 %v1423
    %4927 = vmatprep.subr.mxu0 0.0
    %4928 = vmatpush1.msra.mxu0 %v1422
    %4929 = vmatprep.subr.mxu0 0.0
    %4930 = vmatpush1.msra.mxu0 %v1421
    %4931 = vmatprep.subr.mxu0 0.0
    %4932 = vmatpush1.msra.mxu0 %v1420
    %4933 = vmatprep.subr.mxu0 0.0
    %4934 = vmatpush2.msra.mxu0 0.0
    %4935 = vmatprep.subr.mxu0 0.0
    %4936 = vmatpush2.msra.mxu0 0.0
    %4937 = vmatprep.subr.mxu0 0.0
    %4938 = vmatpush2.msra.mxu0 0.0
    %4939 = vmatprep.subr.mxu0 0.0
    %4940 = vmatpush2.msra.mxu0 0.0
    %4941 = vmatprep.subr.mxu0 0.0
    %4942 = vmatpush2.msra.mxu0 0.0
    %4943 = vmatprep.subr.mxu0 0.0
    %4944 = vmatpush2.msra.mxu0 0.0
    %4945 = vmatprep.subr.mxu0 0.0
    %4946 = vmatpush2.msra.mxu0 0.0
    %4947 = vmatprep.subr.mxu0 0.0
    %4948 = vmatpush2.msra.mxu0 0.0
    %4949 = vmatprep.subr.mxu0 0.0
    %4950 = vmatpush2.msra.mxu0 0.0
    %4951 = vmatprep.subr.mxu0 0.0
    %4952 = vmatpush2.msra.mxu0 0.0
    %4953 = vmatprep.subr.mxu0 0.0
    %4954 = vmatpush2.msra.mxu0 0.0
    %4955 = vmatprep.subr.mxu0 0.0
    %4956 = vmatpush2.msra.mxu0 0.0
    %4957 = vmatprep.subr.mxu0 0.0
    %4958 = vmatpush2.msra.mxu0 0.0
    %4959 = vmatprep.subr.mxu0 0.0
    %4960 = vmatpush2.msra.mxu0 0.0
    %4961 = vmatprep.subr.mxu0 0.0
    %4962 = vmatpush2.msra.mxu0 0.0
    %4963 = vmatprep.subr.mxu0 0.0
    %4964 = vmatpush2.msra.mxu0 0.0
    %4965 = vmatprep.mubr.f32.mxu0 0.0
    %4966 = vmatmul.mubr.f32.gmra.mxu0 %v4899
    %v4967 = vpop.f32.mrf.mxu0
    %v4968 = vadd.f32 0.0, %v4967
    %v4969 = vpop.f32.mrf.mxu0
    %4970 = vdwg.mxu0
    %4971 = vmatprep.subr.mxu0 0.0
    %4972 = vmatpush1.msra.mxu0 0.0
    %4973 = vmatprep.subr.mxu0 0.0
    %4974 = vmatpush1.msra.mxu0 0.0
    %4975 = vmatprep.subr.mxu0 0.0
    %4976 = vmatpush1.msra.mxu0 0.0
    %4977 = vmatprep.subr.mxu0 0.0
    %4978 = vmatpush1.msra.mxu0 0.0
    %4979 = vmatprep.subr.mxu0 0.0
    %4980 = vmatpush1.msra.mxu0 0.0
    %4981 = vmatprep.subr.mxu0 0.0
    %4982 = vmatpush1.msra.mxu0 0.0
    %4983 = vmatprep.subr.mxu0 0.0
    %4984 = vmatpush1.msra.mxu0 0.0
    %4985 = vmatprep.subr.mxu0 0.0
    %4986 = vmatpush1.msra.mxu0 0.0
    %4987 = vmatprep.subr.mxu0 0.0
    %4988 = vmatpush1.msra.mxu0 0.0
    %4989 = vmatprep.subr.mxu0 0.0
    %4990 = vmatpush1.msra.mxu0 0.0
    %4991 = vmatprep.subr.mxu0 0.0
    %4992 = vmatpush1.msra.mxu0 0.0
    %4993 = vmatprep.subr.mxu0 0.0
    %4994 = vmatpush1.msra.mxu0 0.0
    %4995 = vmatprep.subr.mxu0 0.0
    %4996 = vmatpush1.msra.mxu0 0.0
    %4997 = vmatprep.subr.mxu0 0.0
    %4998 = vmatpush1.msra.mxu0 0.0
    %4999 = vmatprep.subr.mxu0 0.0
    %5000 = vmatpush1.msra.mxu0 0.0
    %5001 = vmatprep.subr.mxu0 0.0
    %5002 = vmatpush1.msra.mxu0 %v4968
    %5003 = vmatprep.subr.mxu0 0.0
    %5004 = vmatpush2.msra.mxu0 0.0
    %5005 = vmatprep.subr.mxu0 0.0
    %5006 = vmatpush2.msra.mxu0 0.0
    %5007 = vmatprep.subr.mxu0 0.0
    %5008 = vmatpush2.msra.mxu0 0.0
    %5009 = vmatprep.subr.mxu0 0.0
    %5010 = vmatpush2.msra.mxu0 0.0
    %5011 = vmatprep.subr.mxu0 0.0
    %5012 = vmatpush2.msra.mxu0 0.0
    %5013 = vmatprep.subr.mxu0 0.0
    %5014 = vmatpush2.msra.mxu0 0.0
    %5015 = vmatprep.subr.mxu0 0.0
    %5016 = vmatpush2.msra.mxu0 0.0
    %5017 = vmatprep.subr.mxu0 0.0
    %5018 = vmatpush2.msra.mxu0 0.0
    %5019 = vmatprep.subr.mxu0 0.0
    %5020 = vmatpush2.msra.mxu0 0.0
    %5021 = vmatprep.subr.mxu0 0.0
    %5022 = vmatpush2.msra.mxu0 0.0
    %5023 = vmatprep.subr.mxu0 0.0
    %5024 = vmatpush2.msra.mxu0 0.0
    %5025 = vmatprep.subr.mxu0 0.0
    %5026 = vmatpush2.msra.mxu0 0.0
    %5027 = vmatprep.subr.mxu0 0.0
    %5028 = vmatpush2.msra.mxu0 0.0
    %5029 = vmatprep.subr.mxu0 0.0
    %5030 = vmatpush2.msra.mxu0 0.0
    %5031 = vmatprep.subr.mxu0 0.0
    %5032 = vmatpush2.msra.mxu0 0.0
    %5033 = vmatprep.subr.mxu0 0.0
    %5034 = vmatpush2.msra.mxu0 0.0
    %5035 = vmatprep.mubr.f32.mxu0 0.0
    %5036 = vmatmul.mubr.f32.gmra.mxu0 %v242
    %v5037 = vpop.f32.mrf.mxu0
    %v5038 = vadd.f32 0.0, %v5037
    %v5039 = vpop.f32.mrf.mxu0
    %5040 = vmatprep.mubr.f32.mxu0 0.0
    %5041 = vmatmul.mubr.f32.gmra.mxu0 %v245
    %v5042 = vpop.f32.mrf.mxu0
    %v5043 = vadd.f32 0.0, %v5042
    %v5044 = vpop.f32.mrf.mxu0
    %5045 = vmatprep.mubr.f32.mxu0 0.0
    %5046 = vmatmul.mubr.f32.gmra.mxu0 %v248
    %v5047 = vpop.f32.mrf.mxu0
    %v5048 = vadd.f32 0.0, %v5047
    %v5049 = vpop.f32.mrf.mxu0
    %5050 = vmatprep.mubr.f32.mxu0 0.0
    %5051 = vmatmul.mubr.f32.gmra.mxu0 %v251
    %v5052 = vpop.f32.mrf.mxu0
    %v5053 = vadd.f32 0.0, %v5052
    %v5054 = vpop.f32.mrf.mxu0
    %5055 = vmatprep.mubr.f32.mxu0 0.0
    %5056 = vmatmul.mubr.f32.gmra.mxu0 %v254
    %v5057 = vpop.f32.mrf.mxu0
    %v5058 = vadd.f32 0.0, %v5057
    %v5059 = vpop.f32.mrf.mxu0
    %5060 = vmatprep.mubr.f32.mxu0 0.0
    %5061 = vmatmul.mubr.f32.gmra.mxu0 %v257
    %v5062 = vpop.f32.mrf.mxu0
    %v5063 = vadd.f32 0.0, %v5062
    %v5064 = vpop.f32.mrf.mxu0
    %5065 = vmatprep.mubr.f32.mxu0 0.0
    %5066 = vmatmul.mubr.f32.gmra.mxu0 %v260
    %v5067 = vpop.f32.mrf.mxu0
    %v5068 = vadd.f32 0.0, %v5067
    %v5069 = vpop.f32.mrf.mxu0
    %5070 = vmatprep.mubr.f32.mxu0 0.0
    %5071 = vmatmul.mubr.f32.gmra.mxu0 %v263
    %v5072 = vpop.f32.mrf.mxu0
    %v5073 = vadd.f32 0.0, %v5072
    %v5074 = vpop.f32.mrf.mxu0
    %5075 = vdwg.mxu0
    %v5076 = vadd.f32 %v4860, %v5038
    %v5077 = vadd.f32 %v4865, %v5043
    %v5078 = vadd.f32 %v4870, %v5048
    %v5079 = vadd.f32 %v4875, %v5053
    %v5080 = vadd.f32 %v4880, %v5058
    %v5081 = vadd.f32 %v4885, %v5063
    %v5082 = vadd.f32 %v4890, %v5068
    %v5083 = vadd.f32 %v4895, %v5073
    %v5085 = vsel %vm150, %v4406, 0
    %5087 = vmatprep.subr.mxu0 0.0
    %5088 = vmatpush1.msra.mxu0 0.0
    %5089 = vmatprep.subr.mxu0 0.0
    %5090 = vmatpush1.msra.mxu0 0.0
    %5091 = vmatprep.subr.mxu0 0.0
    %5092 = vmatpush1.msra.mxu0 0.0
    %5093 = vmatprep.subr.mxu0 0.0
    %5094 = vmatpush1.msra.mxu0 0.0
    %5095 = vmatprep.subr.mxu0 0.0
    %5096 = vmatpush1.msra.mxu0 0.0
    %5097 = vmatprep.subr.mxu0 0.0
    %5098 = vmatpush1.msra.mxu0 0.0
    %5099 = vmatprep.subr.mxu0 0.0
    %5100 = vmatpush1.msra.mxu0 0.0
    %5101 = vmatprep.subr.mxu0 0.0
    %5102 = vmatpush1.msra.mxu0 0.0
    %5103 = vmatprep.subr.mxu0 0.0
    %5104 = vmatpush1.msra.mxu0 0.0
    %5105 = vmatprep.subr.mxu0 0.0
    %5106 = vmatpush1.msra.mxu0 0.0
    %5107 = vmatprep.subr.mxu0 0.0
    %5108 = vmatpush1.msra.mxu0 0.0
    %5109 = vmatprep.subr.mxu0 0.0
    %5110 = vmatpush1.msra.mxu0 0.0
    %5111 = vmatprep.subr.mxu0 0.0
    %5112 = vmatpush1.msra.mxu0 %v1427
    %5113 = vmatprep.subr.mxu0 0.0
    %5114 = vmatpush1.msra.mxu0 %v1426
    %5115 = vmatprep.subr.mxu0 0.0
    %5116 = vmatpush1.msra.mxu0 %v1425
    %5117 = vmatprep.subr.mxu0 0.0
    %5118 = vmatpush1.msra.mxu0 %v1424
    %5119 = vmatprep.subr.mxu0 0.0
    %5120 = vmatpush2.msra.mxu0 0.0
    %5121 = vmatprep.subr.mxu0 0.0
    %5122 = vmatpush2.msra.mxu0 0.0
    %5123 = vmatprep.subr.mxu0 0.0
    %5124 = vmatpush2.msra.mxu0 0.0
    %5125 = vmatprep.subr.mxu0 0.0
    %5126 = vmatpush2.msra.mxu0 0.0
    %5127 = vmatprep.subr.mxu0 0.0
    %5128 = vmatpush2.msra.mxu0 0.0
    %5129 = vmatprep.subr.mxu0 0.0
    %5130 = vmatpush2.msra.mxu0 0.0
    %5131 = vmatprep.subr.mxu0 0.0
    %5132 = vmatpush2.msra.mxu0 0.0
    %5133 = vmatprep.subr.mxu0 0.0
    %5134 = vmatpush2.msra.mxu0 0.0
    %5135 = vmatprep.subr.mxu0 0.0
    %5136 = vmatpush2.msra.mxu0 0.0
    %5137 = vmatprep.subr.mxu0 0.0
    %5138 = vmatpush2.msra.mxu0 0.0
    %5139 = vmatprep.subr.mxu0 0.0
    %5140 = vmatpush2.msra.mxu0 0.0
    %5141 = vmatprep.subr.mxu0 0.0
    %5142 = vmatpush2.msra.mxu0 0.0
    %5143 = vmatprep.subr.mxu0 0.0
    %5144 = vmatpush2.msra.mxu0 0.0
    %5145 = vmatprep.subr.mxu0 0.0
    %5146 = vmatpush2.msra.mxu0 0.0
    %5147 = vmatprep.subr.mxu0 0.0
    %5148 = vmatpush2.msra.mxu0 0.0
    %5149 = vmatprep.subr.mxu0 0.0
    %5150 = vmatpush2.msra.mxu0 0.0
    %5151 = vmatprep.mubr.f32.mxu0 0.0
    %5152 = vmatmul.mubr.f32.gmra.mxu0 %v5085
    %v5153 = vpop.f32.mrf.mxu0
    %v5154 = vadd.f32 0.0, %v5153
    %v5155 = vpop.f32.mrf.mxu0
    %5156 = vdwg.mxu0
    %5157 = vmatprep.subr.mxu0 0.0
    %5158 = vmatpush1.msra.mxu0 0.0
    %5159 = vmatprep.subr.mxu0 0.0
    %5160 = vmatpush1.msra.mxu0 0.0
    %5161 = vmatprep.subr.mxu0 0.0
    %5162 = vmatpush1.msra.mxu0 0.0
    %5163 = vmatprep.subr.mxu0 0.0
    %5164 = vmatpush1.msra.mxu0 0.0
    %5165 = vmatprep.subr.mxu0 0.0
    %5166 = vmatpush1.msra.mxu0 0.0
    %5167 = vmatprep.subr.mxu0 0.0
    %5168 = vmatpush1.msra.mxu0 0.0
    %5169 = vmatprep.subr.mxu0 0.0
    %5170 = vmatpush1.msra.mxu0 0.0
    %5171 = vmatprep.subr.mxu0 0.0
    %5172 = vmatpush1.msra.mxu0 0.0
    %5173 = vmatprep.subr.mxu0 0.0
    %5174 = vmatpush1.msra.mxu0 0.0
    %5175 = vmatprep.subr.mxu0 0.0
    %5176 = vmatpush1.msra.mxu0 0.0
    %5177 = vmatprep.subr.mxu0 0.0
    %5178 = vmatpush1.msra.mxu0 0.0
    %5179 = vmatprep.subr.mxu0 0.0
    %5180 = vmatpush1.msra.mxu0 0.0
    %5181 = vmatprep.subr.mxu0 0.0
    %5182 = vmatpush1.msra.mxu0 0.0
    %5183 = vmatprep.subr.mxu0 0.0
    %5184 = vmatpush1.msra.mxu0 0.0
    %5185 = vmatprep.subr.mxu0 0.0
    %5186 = vmatpush1.msra.mxu0 0.0
    %5187 = vmatprep.subr.mxu0 0.0
    %5188 = vmatpush1.msra.mxu0 %v5154
    %5189 = vmatprep.subr.mxu0 0.0
    %5190 = vmatpush2.msra.mxu0 0.0
    %5191 = vmatprep.subr.mxu0 0.0
    %5192 = vmatpush2.msra.mxu0 0.0
    %5193 = vmatprep.subr.mxu0 0.0
    %5194 = vmatpush2.msra.mxu0 0.0
    %5195 = vmatprep.subr.mxu0 0.0
    %5196 = vmatpush2.msra.mxu0 0.0
    %5197 = vmatprep.subr.mxu0 0.0
    %5198 = vmatpush2.msra.mxu0 0.0
    %5199 = vmatprep.subr.mxu0 0.0
    %5200 = vmatpush2.msra.mxu0 0.0
    %5201 = vmatprep.subr.mxu0 0.0
    %5202 = vmatpush2.msra.mxu0 0.0
    %5203 = vmatprep.subr.mxu0 0.0
    %5204 = vmatpush2.msra.mxu0 0.0
    %5205 = vmatprep.subr.mxu0 0.0
    %5206 = vmatpush2.msra.mxu0 0.0
    %5207 = vmatprep.subr.mxu0 0.0
    %5208 = vmatpush2.msra.mxu0 0.0
    %5209 = vmatprep.subr.mxu0 0.0
    %5210 = vmatpush2.msra.mxu0 0.0
    %5211 = vmatprep.subr.mxu0 0.0
    %5212 = vmatpush2.msra.mxu0 0.0
    %5213 = vmatprep.subr.mxu0 0.0
    %5214 = vmatpush2.msra.mxu0 0.0
    %5215 = vmatprep.subr.mxu0 0.0
    %5216 = vmatpush2.msra.mxu0 0.0
    %5217 = vmatprep.subr.mxu0 0.0
    %5218 = vmatpush2.msra.mxu0 0.0
    %5219 = vmatprep.subr.mxu0 0.0
    %5220 = vmatpush2.msra.mxu0 0.0
    %5221 = vmatprep.mubr.f32.mxu0 0.0
    %5222 = vmatmul.mubr.f32.gmra.mxu0 %v518
    %v5223 = vpop.f32.mrf.mxu0
    %v5224 = vadd.f32 0.0, %v5223
    %v5225 = vpop.f32.mrf.mxu0
    %5226 = vmatprep.mubr.f32.mxu0 0.0
    %5227 = vmatmul.mubr.f32.gmra.mxu0 %v521
    %v5228 = vpop.f32.mrf.mxu0
    %v5229 = vadd.f32 0.0, %v5228
    %v5230 = vpop.f32.mrf.mxu0
    %5231 = vmatprep.mubr.f32.mxu0 0.0
    %5232 = vmatmul.mubr.f32.gmra.mxu0 %v524
    %v5233 = vpop.f32.mrf.mxu0
    %v5234 = vadd.f32 0.0, %v5233
    %v5235 = vpop.f32.mrf.mxu0
    %5236 = vmatprep.mubr.f32.mxu0 0.0
    %5237 = vmatmul.mubr.f32.gmra.mxu0 %v527
    %v5238 = vpop.f32.mrf.mxu0
    %v5239 = vadd.f32 0.0, %v5238
    %v5240 = vpop.f32.mrf.mxu0
    %5241 = vmatprep.mubr.f32.mxu0 0.0
    %5242 = vmatmul.mubr.f32.gmra.mxu0 %v530
    %v5243 = vpop.f32.mrf.mxu0
    %v5244 = vadd.f32 0.0, %v5243
    %v5245 = vpop.f32.mrf.mxu0
    %5246 = vmatprep.mubr.f32.mxu0 0.0
    %5247 = vmatmul.mubr.f32.gmra.mxu0 %v533
    %v5248 = vpop.f32.mrf.mxu0
    %v5249 = vadd.f32 0.0, %v5248
    %v5250 = vpop.f32.mrf.mxu0
    %5251 = vmatprep.mubr.f32.mxu0 0.0
    %5252 = vmatmul.mubr.f32.gmra.mxu0 %v536
    %v5253 = vpop.f32.mrf.mxu0
    %v5254 = vadd.f32 0.0, %v5253
    %v5255 = vpop.f32.mrf.mxu0
    %5256 = vmatprep.mubr.f32.mxu0 0.0
    %5257 = vmatmul.mubr.f32.gmra.mxu0 %v539
    %v5258 = vpop.f32.mrf.mxu0
    %v5259 = vadd.f32 0.0, %v5258
    %v5260 = vpop.f32.mrf.mxu0
    %5261 = vdwg.mxu0
    %v5262 = vadd.f32 %v5076, %v5224
    %v5263 = vadd.f32 %v5077, %v5229
    %v5264 = vadd.f32 %v5078, %v5234
    %v5265 = vadd.f32 %v5079, %v5239
    %v5266 = vadd.f32 %v5080, %v5244
    %v5267 = vadd.f32 %v5081, %v5249
    %v5268 = vadd.f32 %v5082, %v5254
    %v5269 = vadd.f32 %v5083, %v5259
    %v5270 = vmax.f32 %v5262, 0.0
    %v5271 = vmax.f32 %v5263, 0.0
    %v5272 = vmax.f32 %v5264, 0.0
    %v5273 = vmax.f32 %v5265, 0.0
    %v5274 = vmax.f32 %v5266, 0.0
    %v5275 = vmax.f32 %v5267, 0.0
    %v5276 = vmax.f32 %v5268, 0.0
    %v5277 = vmax.f32 %v5269, 0.0
    %v5279 = vsel %vm1119, %v5270, 0
    %v5282 = vsel %vm1119, %v5271, 0
    %v5285 = vsel %vm1119, %v5272, 0
    %v5288 = vsel %vm1119, %v5273, 0
    %v5291 = vsel %vm1119, %v5274, 0
    %v5294 = vsel %vm1119, %v5275, 0
    %v5297 = vsel %vm1119, %v5276, 0
    %v5300 = vsel %vm1119, %v5277, 0
    %5302 = vmatprep.subr.mxu0 0.0
    %5303 = vmatpush1.msra.mxu0 0.0
    %5304 = vmatprep.subr.mxu0 0.0
    %5305 = vmatpush1.msra.mxu0 0.0
    %5306 = vmatprep.subr.mxu0 0.0
    %5307 = vmatpush1.msra.mxu0 0.0
    %5308 = vmatprep.subr.mxu0 0.0
    %5309 = vmatpush1.msra.mxu0 0.0
    %5310 = vmatprep.subr.mxu0 0.0
    %5311 = vmatpush1.msra.mxu0 0.0
    %5312 = vmatprep.subr.mxu0 0.0
    %5313 = vmatpush1.msra.mxu0 0.0
    %5314 = vmatprep.subr.mxu0 0.0
    %5315 = vmatpush1.msra.mxu0 0.0
    %5316 = vmatprep.subr.mxu0 0.0
    %5317 = vmatpush1.msra.mxu0 0.0
    %5318 = vmatprep.subr.mxu0 0.0
    %5319 = vmatpush1.msra.mxu0 0.0
    %5320 = vmatprep.subr.mxu0 0.0
    %5321 = vmatpush1.msra.mxu0 0.0
    %5322 = vmatprep.subr.mxu0 0.0
    %5323 = vmatpush1.msra.mxu0 0.0
    %5324 = vmatprep.subr.mxu0 0.0
    %5325 = vmatpush1.msra.mxu0 0.0
    %5326 = vmatprep.subr.mxu0 0.0
    %5327 = vmatpush1.msra.mxu0 0.0
    %5328 = vmatprep.subr.mxu0 0.0
    %5329 = vmatpush1.msra.mxu0 0.0
    %5330 = vmatprep.subr.mxu0 0.0
    %5331 = vmatpush1.msra.mxu0 %v1430
    %5332 = vmatprep.subr.mxu0 0.0
    %5333 = vmatpush1.msra.mxu0 %v1429
    %5334 = vmatprep.subr.mxu0 0.0
    %5335 = vmatpush2.msra.mxu0 0.0
    %5336 = vmatprep.subr.mxu0 0.0
    %5337 = vmatpush2.msra.mxu0 0.0
    %5338 = vmatprep.subr.mxu0 0.0
    %5339 = vmatpush2.msra.mxu0 0.0
    %5340 = vmatprep.subr.mxu0 0.0
    %5341 = vmatpush2.msra.mxu0 0.0
    %5342 = vmatprep.subr.mxu0 0.0
    %5343 = vmatpush2.msra.mxu0 0.0
    %5344 = vmatprep.subr.mxu0 0.0
    %5345 = vmatpush2.msra.mxu0 0.0
    %5346 = vmatprep.subr.mxu0 0.0
    %5347 = vmatpush2.msra.mxu0 0.0
    %5348 = vmatprep.subr.mxu0 0.0
    %5349 = vmatpush2.msra.mxu0 0.0
    %5350 = vmatprep.subr.mxu0 0.0
    %5351 = vmatpush2.msra.mxu0 0.0
    %5352 = vmatprep.subr.mxu0 0.0
    %5353 = vmatpush2.msra.mxu0 0.0
    %5354 = vmatprep.subr.mxu0 0.0
    %5355 = vmatpush2.msra.mxu0 0.0
    %5356 = vmatprep.subr.mxu0 0.0
    %5357 = vmatpush2.msra.mxu0 0.0
    %5358 = vmatprep.subr.mxu0 0.0
    %5359 = vmatpush2.msra.mxu0 0.0
    %5360 = vmatprep.subr.mxu0 0.0
    %5361 = vmatpush2.msra.mxu0 0.0
    %5362 = vmatprep.subr.mxu0 0.0
    %5363 = vmatpush2.msra.mxu0 0.0
    %5364 = vmatprep.subr.mxu0 0.0
    %5365 = vmatpush2.msra.mxu0 0.0
    %5366 = vmatprep.mubr.f32.mxu0 0.0
    %5367 = vmatmul.mubr.f32.gmra.mxu0 %v5279
    %v5368 = vpop.f32.mrf.mxu0
    %v5369 = vadd.f32 %v2074, %v5368
    %v5370 = vpop.f32.mrf.mxu0
    %5371 = vmatprep.mubr.f32.mxu0 0.0
    %5372 = vmatmul.mubr.f32.gmra.mxu0 %v5282
    %v5373 = vpop.f32.mrf.mxu0
    %v5374 = vadd.f32 %v2074, %v5373
    %v5375 = vpop.f32.mrf.mxu0
    %5376 = vmatprep.mubr.f32.mxu0 0.0
    %5377 = vmatmul.mubr.f32.gmra.mxu0 %v5285
    %v5378 = vpop.f32.mrf.mxu0
    %v5379 = vadd.f32 %v2074, %v5378
    %v5380 = vpop.f32.mrf.mxu0
    %5381 = vmatprep.mubr.f32.mxu0 0.0
    %5382 = vmatmul.mubr.f32.gmra.mxu0 %v5288
    %v5383 = vpop.f32.mrf.mxu0
    %v5384 = vadd.f32 %v2074, %v5383
    %v5385 = vpop.f32.mrf.mxu0
    %5386 = vmatprep.mubr.f32.mxu0 0.0
    %5387 = vmatmul.mubr.f32.gmra.mxu0 %v5291
    %v5388 = vpop.f32.mrf.mxu0
    %v5389 = vadd.f32 %v2074, %v5388
    %v5390 = vpop.f32.mrf.mxu0
    %5391 = vmatprep.mubr.f32.mxu0 0.0
    %5392 = vmatmul.mubr.f32.gmra.mxu0 %v5294
    %v5393 = vpop.f32.mrf.mxu0
    %v5394 = vadd.f32 %v2074, %v5393
    %v5395 = vpop.f32.mrf.mxu0
    %5396 = vmatprep.mubr.f32.mxu0 0.0
    %5397 = vmatmul.mubr.f32.gmra.mxu0 %v5297
    %v5398 = vpop.f32.mrf.mxu0
    %v5399 = vadd.f32 %v2074, %v5398
    %v5400 = vpop.f32.mrf.mxu0
    %5401 = vmatprep.mubr.f32.mxu0 0.0
    %5402 = vmatmul.mubr.f32.gmra.mxu0 %v5300
    %v5403 = vpop.f32.mrf.mxu0
    %v5404 = vadd.f32 %v2074, %v5403
    %v5405 = vpop.f32.mrf.mxu0
    %5406 = vdwg.mxu0
    %v5407 = vmax.f32 %v5369, 0.0
    %v5408 = vmax.f32 %v5374, 0.0
    %v5409 = vmax.f32 %v5379, 0.0
    %v5410 = vmax.f32 %v5384, 0.0
    %v5411 = vmax.f32 %v5389, 0.0
    %v5412 = vmax.f32 %v5394, 0.0
    %v5413 = vmax.f32 %v5399, 0.0
    %v5414 = vmax.f32 %v5404, 0.0
    %v5416 = vsel %vm1119, %v5407, 0
    %v5419 = vsel %vm1119, %v5408, 0
    %v5422 = vsel %vm1119, %v5409, 0
    %v5425 = vsel %vm1119, %v5410, 0
    %v5428 = vsel %vm1119, %v5411, 0
    %v5431 = vsel %vm1119, %v5412, 0
    %v5434 = vsel %vm1119, %v5413, 0
    %v5437 = vsel %vm1119, %v5414, 0
    %5439 = vmatprep.subr.mxu0 0.0
    %5440 = vmatpush1.msra.mxu0 0.0
    %5441 = vmatprep.subr.mxu0 0.0
    %5442 = vmatpush1.msra.mxu0 0.0
    %5443 = vmatprep.subr.mxu0 0.0
    %5444 = vmatpush1.msra.mxu0 0.0
    %5445 = vmatprep.subr.mxu0 0.0
    %5446 = vmatpush1.msra.mxu0 0.0
    %5447 = vmatprep.subr.mxu0 0.0
    %5448 = vmatpush1.msra.mxu0 0.0
    %5449 = vmatprep.subr.mxu0 0.0
    %5450 = vmatpush1.msra.mxu0 0.0
    %5451 = vmatprep.subr.mxu0 0.0
    %5452 = vmatpush1.msra.mxu0 0.0
    %5453 = vmatprep.subr.mxu0 0.0
    %5454 = vmatpush1.msra.mxu0 0.0
    %5455 = vmatprep.subr.mxu0 0.0
    %5456 = vmatpush1.msra.mxu0 0.0
    %5457 = vmatprep.subr.mxu0 0.0
    %5458 = vmatpush1.msra.mxu0 0.0
    %5459 = vmatprep.subr.mxu0 0.0
    %5460 = vmatpush1.msra.mxu0 0.0
    %5461 = vmatprep.subr.mxu0 0.0
    %5462 = vmatpush1.msra.mxu0 0.0
    %5463 = vmatprep.subr.mxu0 0.0
    %5464 = vmatpush1.msra.mxu0 0.0
    %5465 = vmatprep.subr.mxu0 0.0
    %5466 = vmatpush1.msra.mxu0 0.0
    %5467 = vmatprep.subr.mxu0 0.0
    %5468 = vmatpush1.msra.mxu0 %v1445
    %5469 = vmatprep.subr.mxu0 0.0
    %5470 = vmatpush1.msra.mxu0 %v1444
    %5471 = vmatprep.subr.mxu0 0.0
    %5472 = vmatpush2.msra.mxu0 0.0
    %5473 = vmatprep.subr.mxu0 0.0
    %5474 = vmatpush2.msra.mxu0 0.0
    %5475 = vmatprep.subr.mxu0 0.0
    %5476 = vmatpush2.msra.mxu0 0.0
    %5477 = vmatprep.subr.mxu0 0.0
    %5478 = vmatpush2.msra.mxu0 0.0
    %5479 = vmatprep.subr.mxu0 0.0
    %5480 = vmatpush2.msra.mxu0 0.0
    %5481 = vmatprep.subr.mxu0 0.0
    %5482 = vmatpush2.msra.mxu0 0.0
    %5483 = vmatprep.subr.mxu0 0.0
    %5484 = vmatpush2.msra.mxu0 0.0
    %5485 = vmatprep.subr.mxu0 0.0
    %5486 = vmatpush2.msra.mxu0 0.0
    %5487 = vmatprep.subr.mxu0 0.0
    %5488 = vmatpush2.msra.mxu0 0.0
    %5489 = vmatprep.subr.mxu0 0.0
    %5490 = vmatpush2.msra.mxu0 0.0
    %5491 = vmatprep.subr.mxu0 0.0
    %5492 = vmatpush2.msra.mxu0 0.0
    %5493 = vmatprep.subr.mxu0 0.0
    %5494 = vmatpush2.msra.mxu0 0.0
    %5495 = vmatprep.subr.mxu0 0.0
    %5496 = vmatpush2.msra.mxu0 0.0
    %5497 = vmatprep.subr.mxu0 0.0
    %5498 = vmatpush2.msra.mxu0 0.0
    %5499 = vmatprep.subr.mxu0 0.0
    %5500 = vmatpush2.msra.mxu0 0.0
    %5501 = vmatprep.subr.mxu0 0.0
    %5502 = vmatpush2.msra.mxu0 0.0
    %5503 = vmatprep.mubr.f32.mxu0 0.0
    %5504 = vmatmul.mubr.f32.gmra.mxu0 %v5416
    %v5505 = vpop.f32.mrf.mxu0
    %v5506 = vadd.f32 %v2814, %v5505
    %v5507 = vpop.f32.mrf.mxu0
    %5508 = vmatprep.mubr.f32.mxu0 0.0
    %5509 = vmatmul.mubr.f32.gmra.mxu0 %v5419
    %v5510 = vpop.f32.mrf.mxu0
    %v5511 = vadd.f32 %v2814, %v5510
    %v5512 = vpop.f32.mrf.mxu0
    %5513 = vmatprep.mubr.f32.mxu0 0.0
    %5514 = vmatmul.mubr.f32.gmra.mxu0 %v5422
    %v5515 = vpop.f32.mrf.mxu0
    %v5516 = vadd.f32 %v2814, %v5515
    %v5517 = vpop.f32.mrf.mxu0
    %5518 = vmatprep.mubr.f32.mxu0 0.0
    %5519 = vmatmul.mubr.f32.gmra.mxu0 %v5425
    %v5520 = vpop.f32.mrf.mxu0
    %v5521 = vadd.f32 %v2814, %v5520
    %v5522 = vpop.f32.mrf.mxu0
    %5523 = vmatprep.mubr.f32.mxu0 0.0
    %5524 = vmatmul.mubr.f32.gmra.mxu0 %v5428
    %v5525 = vpop.f32.mrf.mxu0
    %v5526 = vadd.f32 %v2814, %v5525
    %v5527 = vpop.f32.mrf.mxu0
    %5528 = vmatprep.mubr.f32.mxu0 0.0
    %5529 = vmatmul.mubr.f32.gmra.mxu0 %v5431
    %v5530 = vpop.f32.mrf.mxu0
    %v5531 = vadd.f32 %v2814, %v5530
    %v5532 = vpop.f32.mrf.mxu0
    %5533 = vmatprep.mubr.f32.mxu0 0.0
    %5534 = vmatmul.mubr.f32.gmra.mxu0 %v5434
    %v5535 = vpop.f32.mrf.mxu0
    %v5536 = vadd.f32 %v2814, %v5535
    %v5537 = vpop.f32.mrf.mxu0
    %5538 = vmatprep.mubr.f32.mxu0 0.0
    %5539 = vmatmul.mubr.f32.gmra.mxu0 %v5437
    %v5540 = vpop.f32.mrf.mxu0
    %v5541 = vadd.f32 %v2814, %v5540
    %v5542 = vpop.f32.mrf.mxu0
    %5543 = vdwg.mxu0
    %v5544 = vmax.f32 %v5506, 0.0
    %v5545 = vmax.f32 %v5511, 0.0
    %v5546 = vmax.f32 %v5516, 0.0
    %v5547 = vmax.f32 %v5521, 0.0
    %v5548 = vmax.f32 %v5526, 0.0
    %v5549 = vmax.f32 %v5531, 0.0
    %v5550 = vmax.f32 %v5536, 0.0
    %v5551 = vmax.f32 %v5541, 0.0
    %v5553 = vsel %vm1119, %v5544, 0
    %v5556 = vsel %vm1119, %v5545, 0
    %v5559 = vsel %vm1119, %v5546, 0
    %v5562 = vsel %vm1119, %v5547, 0
    %v5565 = vsel %vm1119, %v5548, 0
    %v5568 = vsel %vm1119, %v5549, 0
    %v5571 = vsel %vm1119, %v5550, 0
    %v5574 = vsel %vm1119, %v5551, 0
    %5576 = vmatprep.subr.mxu0 0.0
    %5577 = vmatpush1.msra.mxu0 0.0
    %5578 = vmatprep.subr.mxu0 0.0
    %5579 = vmatpush1.msra.mxu0 0.0
    %5580 = vmatprep.subr.mxu0 0.0
    %5581 = vmatpush1.msra.mxu0 0.0
    %5582 = vmatprep.subr.mxu0 0.0
    %5583 = vmatpush1.msra.mxu0 0.0
    %5584 = vmatprep.subr.mxu0 0.0
    %5585 = vmatpush1.msra.mxu0 0.0
    %5586 = vmatprep.subr.mxu0 0.0
    %5587 = vmatpush1.msra.mxu0 0.0
    %5588 = vmatprep.subr.mxu0 0.0
    %5589 = vmatpush1.msra.mxu0 0.0
    %5590 = vmatprep.subr.mxu0 0.0
    %5591 = vmatpush1.msra.mxu0 0.0
    %5592 = vmatprep.subr.mxu0 0.0
    %5593 = vmatpush1.msra.mxu0 0.0
    %5594 = vmatprep.subr.mxu0 0.0
    %5595 = vmatpush1.msra.mxu0 0.0
    %5596 = vmatprep.subr.mxu0 0.0
    %5597 = vmatpush1.msra.mxu0 0.0
    %5598 = vmatprep.subr.mxu0 0.0
    %5599 = vmatpush1.msra.mxu0 0.0
    %5600 = vmatprep.subr.mxu0 0.0
    %5601 = vmatpush1.msra.mxu0 0.0
    %5602 = vmatprep.subr.mxu0 0.0
    %5603 = vmatpush1.msra.mxu0 0.0
    %5604 = vmatprep.subr.mxu0 0.0
    %5605 = vmatpush1.msra.mxu0 %v1448
    %5606 = vmatprep.subr.mxu0 0.0
    %5607 = vmatpush1.msra.mxu0 %v1447
    %5608 = vmatprep.subr.mxu0 0.0
    %5609 = vmatpush2.msra.mxu0 0.0
    %5610 = vmatprep.subr.mxu0 0.0
    %5611 = vmatpush2.msra.mxu0 0.0
    %5612 = vmatprep.subr.mxu0 0.0
    %5613 = vmatpush2.msra.mxu0 0.0
    %5614 = vmatprep.subr.mxu0 0.0
    %5615 = vmatpush2.msra.mxu0 0.0
    %5616 = vmatprep.subr.mxu0 0.0
    %5617 = vmatpush2.msra.mxu0 0.0
    %5618 = vmatprep.subr.mxu0 0.0
    %5619 = vmatpush2.msra.mxu0 0.0
    %5620 = vmatprep.subr.mxu0 0.0
    %5621 = vmatpush2.msra.mxu0 0.0
    %5622 = vmatprep.subr.mxu0 0.0
    %5623 = vmatpush2.msra.mxu0 0.0
    %5624 = vmatprep.subr.mxu0 0.0
    %5625 = vmatpush2.msra.mxu0 0.0
    %5626 = vmatprep.subr.mxu0 0.0
    %5627 = vmatpush2.msra.mxu0 0.0
    %5628 = vmatprep.subr.mxu0 0.0
    %5629 = vmatpush2.msra.mxu0 0.0
    %5630 = vmatprep.subr.mxu0 0.0
    %5631 = vmatpush2.msra.mxu0 0.0
    %5632 = vmatprep.subr.mxu0 0.0
    %5633 = vmatpush2.msra.mxu0 0.0
    %5634 = vmatprep.subr.mxu0 0.0
    %5635 = vmatpush2.msra.mxu0 0.0
    %5636 = vmatprep.subr.mxu0 0.0
    %5637 = vmatpush2.msra.mxu0 0.0
    %5638 = vmatprep.subr.mxu0 0.0
    %5639 = vmatpush2.msra.mxu0 0.0
    %5640 = vmatprep.mubr.f32.mxu0 0.0
    %5641 = vmatmul.mubr.f32.gmra.mxu0 %v5553
    %v5642 = vpop.f32.mrf.mxu0
    %v5643 = vadd.f32 %v2957, %v5642
    %v5644 = vpop.f32.mrf.mxu0
    %5645 = vmatprep.mubr.f32.mxu0 0.0
    %5646 = vmatmul.mubr.f32.gmra.mxu0 %v5556
    %v5647 = vpop.f32.mrf.mxu0
    %v5648 = vadd.f32 %v2957, %v5647
    %v5649 = vpop.f32.mrf.mxu0
    %5650 = vmatprep.mubr.f32.mxu0 0.0
    %5651 = vmatmul.mubr.f32.gmra.mxu0 %v5559
    %v5652 = vpop.f32.mrf.mxu0
    %v5653 = vadd.f32 %v2957, %v5652
    %v5654 = vpop.f32.mrf.mxu0
    %5655 = vmatprep.mubr.f32.mxu0 0.0
    %5656 = vmatmul.mubr.f32.gmra.mxu0 %v5562
    %v5657 = vpop.f32.mrf.mxu0
    %v5658 = vadd.f32 %v2957, %v5657
    %v5659 = vpop.f32.mrf.mxu0
    %5660 = vmatprep.mubr.f32.mxu0 0.0
    %5661 = vmatmul.mubr.f32.gmra.mxu0 %v5565
    %v5662 = vpop.f32.mrf.mxu0
    %v5663 = vadd.f32 %v2957, %v5662
    %v5664 = vpop.f32.mrf.mxu0
    %5665 = vmatprep.mubr.f32.mxu0 0.0
    %5666 = vmatmul.mubr.f32.gmra.mxu0 %v5568
    %v5667 = vpop.f32.mrf.mxu0
    %v5668 = vadd.f32 %v2957, %v5667
    %v5669 = vpop.f32.mrf.mxu0
    %5670 = vmatprep.mubr.f32.mxu0 0.0
    %5671 = vmatmul.mubr.f32.gmra.mxu0 %v5571
    %v5672 = vpop.f32.mrf.mxu0
    %v5673 = vadd.f32 %v2957, %v5672
    %v5674 = vpop.f32.mrf.mxu0
    %5675 = vmatprep.mubr.f32.mxu0 0.0
    %5676 = vmatmul.mubr.f32.gmra.mxu0 %v5574
    %v5677 = vpop.f32.mrf.mxu0
    %v5678 = vadd.f32 %v2957, %v5677
    %v5679 = vpop.f32.mrf.mxu0
    %5680 = vdwg.mxu0
    %5682 = vset.pattern.permute.xlu0 0
    %5683 = vperm.xlu0 %5682, %v5643
    %v5684 = vpop.permute.xlu0 %5683
    %5687 = vset.pattern.permute.xlu0 0
    %5688 = vperm.xlu0 %5687, %v5648
    %v5689 = vpop.permute.xlu0 %5688
    %5692 = vset.pattern.permute.xlu0 0
    %5693 = vperm.xlu0 %5692, %v5653
    %v5694 = vpop.permute.xlu0 %5693
    %5697 = vset.pattern.permute.xlu0 0
    %5698 = vperm.xlu0 %5697, %v5658
    %v5699 = vpop.permute.xlu0 %5698
    %5702 = vset.pattern.permute.xlu0 0
    %5703 = vperm.xlu0 %5702, %v5663
    %v5704 = vpop.permute.xlu0 %5703
    %5707 = vset.pattern.permute.xlu0 0
    %5708 = vperm.xlu0 %5707, %v5668
    %v5709 = vpop.permute.xlu0 %5708
    %5712 = vset.pattern.permute.xlu0 0
    %5713 = vperm.xlu0 %5712, %v5673
    %v5714 = vpop.permute.xlu0 %5713
    %5717 = vset.pattern.permute.xlu0 0
    %5718 = vperm.xlu0 %5717, %v5678
    %v5719 = vpop.permute.xlu0 %5718
    %v5721 = vmul.f32 %v5684, %v137
    %v5722 = vmul.f32 %v5689, %v138
    %v5723 = vmul.f32 %v5694, %v139
    %v5724 = vmul.f32 %v5699, %v140
    %v5725 = vmul.f32 %v5704, %v141
    %v5726 = vmul.f32 %v5709, %v142
    %v5727 = vmul.f32 %v5714, %v143
    %v5728 = vmul.f32 %v5719, %v144
    %5729 = vmatprep.subr.mxu0 0.0
    %5730 = vmatpush1.msra.mxu0 0.0
    %5731 = vmatprep.subr.mxu0 0.0
    %5732 = vmatpush1.msra.mxu0 0.0
    %5733 = vmatprep.subr.mxu0 0.0
    %5734 = vmatpush1.msra.mxu0 0.0
    %5735 = vmatprep.subr.mxu0 0.0
    %5736 = vmatpush1.msra.mxu0 0.0
    %5737 = vmatprep.subr.mxu0 0.0
    %5738 = vmatpush1.msra.mxu0 0.0
    %5739 = vmatprep.subr.mxu0 0.0
    %5740 = vmatpush1.msra.mxu0 0.0
    %5741 = vmatprep.subr.mxu0 0.0
    %5742 = vmatpush1.msra.mxu0 0.0
    %5743 = vmatprep.subr.mxu0 0.0
    %5744 = vmatpush1.msra.mxu0 0.0
    %5745 = vmatprep.subr.mxu0 0.0
    %5746 = vmatpush1.msra.mxu0 %v5728
    %5747 = vmatprep.subr.mxu0 0.0
    %5748 = vmatpush1.msra.mxu0 %v5727
    %5749 = vmatprep.subr.mxu0 0.0
    %5750 = vmatpush1.msra.mxu0 %v5726
    %5751 = vmatprep.subr.mxu0 0.0
    %5752 = vmatpush1.msra.mxu0 %v5725
    %5753 = vmatprep.subr.mxu0 0.0
    %5754 = vmatpush1.msra.mxu0 %v5724
    %5755 = vmatprep.subr.mxu0 0.0
    %5756 = vmatpush1.msra.mxu0 %v5723
    %5757 = vmatprep.subr.mxu0 0.0
    %5758 = vmatpush1.msra.mxu0 %v5722
    %5759 = vmatprep.subr.mxu0 0.0
    %5760 = vmatpush1.msra.mxu0 %v5721
    %5761 = vmatprep.subr.mxu0 0.0
    %5762 = vmatpush2.msra.mxu0 0.0
    %5763 = vmatprep.subr.mxu0 0.0
    %5764 = vmatpush2.msra.mxu0 0.0
    %5765 = vmatprep.subr.mxu0 0.0
    %5766 = vmatpush2.msra.mxu0 0.0
    %5767 = vmatprep.subr.mxu0 0.0
    %5768 = vmatpush2.msra.mxu0 0.0
    %5769 = vmatprep.subr.mxu0 0.0
    %5770 = vmatpush2.msra.mxu0 0.0
    %5771 = vmatprep.subr.mxu0 0.0
    %5772 = vmatpush2.msra.mxu0 0.0
    %5773 = vmatprep.subr.mxu0 0.0
    %5774 = vmatpush2.msra.mxu0 0.0
    %5775 = vmatprep.subr.mxu0 0.0
    %5776 = vmatpush2.msra.mxu0 0.0
    %5777 = vmatprep.subr.mxu0 0.0
    %5778 = vmatpush2.msra.mxu0 0.0
    %5779 = vmatprep.subr.mxu0 0.0
    %5780 = vmatpush2.msra.mxu0 0.0
    %5781 = vmatprep.subr.mxu0 0.0
    %5782 = vmatpush2.msra.mxu0 0.0
    %5783 = vmatprep.subr.mxu0 0.0
    %5784 = vmatpush2.msra.mxu0 0.0
    %5785 = vmatprep.subr.mxu0 0.0
    %5786 = vmatpush2.msra.mxu0 0.0
    %5787 = vmatprep.subr.mxu0 0.0
    %5788 = vmatpush2.msra.mxu0 0.0
    %5789 = vmatprep.subr.mxu0 0.0
    %5790 = vmatpush2.msra.mxu0 0.0
    %5791 = vmatprep.subr.mxu0 0.0
    %5792 = vmatpush2.msra.mxu0 0.0
    %5793 = vmatprep.mubr.f32.mxu0 0.0
    %5794 = vmatmul.mubr.f32.gmra.mxu0 %v2215
    %v5795 = vpop.f32.mrf.mxu0
    %v5796 = vadd.f32 0.0, %v5795
    %v5797 = vpop.f32.mrf.mxu0
    %5798 = vdwg.mxu0
    %s5799 = scalar_lea.vmem [#allocation3], 16
    %5800 = vst.msk [vmem:[%s5799] sm:$0xff] %vm240, %v5796
    // Predicated region
    $region122: #{assignment_similarity_forward.1} parent=1 // pred_check
      _
    $region123: #{assignment_similarity_forward.1} parent=1 // pred_check_branch
      %5802 = sbr.rel (0) target = $region125
    $region124: #{assignment_similarity_forward.1} parent=1 // pred_region
      %s5804 = ssub.s32 384, 384
      %5805 = vsyncadd [#allocation4], %s5804
      %s5806 = sshll.u32 [#allocation3], 4
      %s5807 = int_to_ptr.vmem [resolvable:$true] %s5806
      %5812 = dma.vmem_to_hbm [thread:$0]  %s5807, 384, %s61, [#allocation4], 128, 128, 8
    $region125: #{assignment_similarity_forward.1} parent=1 // pred_fallthru
      _
    // Predicated region
    $region126: #{assignment_similarity_forward.1} parent=1 // pred_check
      _
    $region127: #{assignment_similarity_forward.1} parent=1 // pred_check_branch
      %5814 = sbr.rel (0) target = $region129
    $region128: #{assignment_similarity_forward.1} parent=1 // pred_region
      %5815 = dma.done [#allocation4], 384
    $region129: #{assignment_similarity_forward.1} parent=1 // pred_fallthru
      _
    %5816 = vsyncpa [#allocation4], 1

</llo_original>
